<compile_context>
chip_gen: v7x
topology: tpu7x:2x2x1
jax: 0.10.0
libtpu: 0.0.40
codegen_flags: <defaults>
</compile_context>

<pallas_src>
import functools

import jax
import jax.numpy as jnp
from jax.experimental import pallas as pl
from jax.experimental.pallas import tpu as pltpu

_BN_EPS = 1e-5


def _round_up(v, m):
    return -(-v // m) * m


# ----------------------------------------------------------------------------
# Fused matmul kernel:  out = act( x @ w + bias [+ residual] )
#   - bf16 x bf16 on the MXU, f32 VMEM accumulator, f32 epilogue
#   - grid = (M tiles, N tiles, K reduction); epilogue only on the last K step
# ----------------------------------------------------------------------------
def _fused_matmul_kernel(x_ref, w_ref, b_ref, *rest, has_residual, relu):
    if has_residual:
        res_ref, o_ref, acc_ref = rest
    else:
        o_ref, acc_ref = rest
        res_ref = None
    k = pl.program_id(2)

    @pl.when(k == 0)
    def _init():
        acc_ref[...] = jnp.zeros_like(acc_ref)

    acc_ref[...] += jnp.dot(x_ref[...], w_ref[...],
                            preferred_element_type=jnp.float32)

    @pl.when(k == pl.num_programs(2) - 1)
    def _finalize():
        y = acc_ref[...] + b_ref[...]                 # bias broadcast only once, at the end
        if has_residual:
            y = y + res_ref[...].astype(jnp.float32)  # fused residual add
        if relu:
            y = jnp.maximum(y, 0.0)
        o_ref[...] = y.astype(o_ref.dtype)


def _pick_kn_tile(d):
    # d is a multiple of 128; prefer MXU-shaped (>=256) tiles when they divide evenly.
    for t in (512, 256, 128):
        if d % t == 0:
            return t
    return 128


def _pick_m_tile(m):
    if m <= 512:
        return m, m                      # full-dim block (exempt from 8-alignment)
    for t in (256, 128, 64, 32, 16, 8):
        if m % t == 0:
            return t, m
    return 256, _round_up(m, 256)        # rare: pad rows, slice them off afterwards


def fused_matmul(x, w, b, residual=None, *, relu, out_dtype=jnp.bfloat16):
    """x: (M, K) float; w: (K, N_pad) bf16 (BN folded, N_pad % 128 == 0); b: (N_pad,) f32."""
    m, k = x.shape
    k_w, n_pad = w.shape
    assert k == k_w, (k, k_w)
    assert n_pad % 128 == 0, n_pad

    x = x.astype(jnp.bfloat16)
    if residual is not None:
        assert residual.shape == (m, n_pad), (residual.shape, (m, n_pad))
        residual = residual.astype(jnp.bfloat16)

    tn = _pick_kn_tile(n_pad)
    tk = _pick_kn_tile(k) if k % 128 == 0 else k   # ragged-but-small K: single K step
    tm, m_pad = _pick_m_tile(m)
    if m_pad != m:
        x = jnp.pad(x, ((0, m_pad - m), (0, 0)))
        if residual is not None:
            residual = jnp.pad(residual, ((0, m_pad - m), (0, 0)))

    grid = (m_pad // tm, n_pad // tn, k // tk)
    b2 = b.reshape(1, n_pad).astype(jnp.float32)

    in_specs = [
        pl.BlockSpec((tm, tk), lambda i, j, kk: (i, kk)),
        pl.BlockSpec((tk, tn), lambda i, j, kk: (kk, j)),
        pl.BlockSpec((1, tn), lambda i, j, kk: (0, j)),
    ]
    inputs = [x, w, b2]
    if residual is not None:
        in_specs.append(pl.BlockSpec((tm, tn), lambda i, j, kk: (i, j)))
        inputs.append(residual)

    kernel = functools.partial(_fused_matmul_kernel,
                               has_residual=residual is not None, relu=relu)
    out = pl.pallas_call(
        kernel,
        out_shape=jax.ShapeDtypeStruct((m_pad, n_pad), out_dtype),
        grid_spec=pltpu.PrefetchScalarGridSpec(
            num_scalar_prefetch=0,
            grid=grid,
            in_specs=in_specs,
            out_specs=pl.BlockSpec((tm, tn), lambda i, j, kk: (i, j)),
            scratch_shapes=[pltpu.VMEM((tm, tn), jnp.float32)],
        ),
        compiler_params=pltpu.CompilerParams(
            dimension_semantics=("parallel", "parallel", "arbitrary")),
    )(*inputs)
    if m_pad != m:
        out = out[:m]
    return out


# ----------------------------------------------------------------------------
# Convolution = patch extraction (plain-JAX glue) + fused Pallas matmul
# ----------------------------------------------------------------------------
def _im2col(x, cin, kh, kw, stride, pad):
    # x: (N, H, W, C_stored>=cin) -> patches (N, OH, OW, kh*kw, cin); drops padded channels.
    n, h, w, _ = x.shape
    oh = (h + 2 * pad - kh) // stride + 1
    ow = (w + 2 * pad - kw) // stride + 1
    xp = jnp.pad(x[..., :cin], ((0, 0), (pad, pad), (pad, pad), (0, 0)))
    cols = []
    for dh in range(kh):
        for dw in range(kw):
            sl = jax.lax.slice(
                xp,
                (0, dh, dw, 0),
                (n, dh + stride * (oh - 1) + 1, dw + stride * (ow - 1) + 1, cin),
                (1, stride, stride, 1),
            )
            cols.append(sl)
    patches = jnp.stack(cols, axis=3)            # (N, OH, OW, KK, cin), bf16
    return patches, oh, ow


def conv_bn(x, cin, p, *, kh, kw, stride, pad, relu, residual=None):
    # x: NHWC bf16 (channels possibly padded to 128); p["w"]: (kh*kw*cin, cout_pad) bf16
    # with the BN scale folded in; p["b"]: (cout_pad,) f32 folded BN bias.
    n = x.shape[0]
    patches, oh, ow = _im2col(x, cin, kh, kw, stride, pad)
    m = n * oh * ow
    xm = patches.reshape(m, kh * kw * cin)
    res_m = None
    if residual is not None:
        res_m = residual.reshape(m, residual.shape[-1])
    cout_pad = p["w"].shape[1]
    out = fused_matmul(xm, p["w"], p["b"], residual=res_m, relu=relu,
                       out_dtype=jnp.bfloat16)
    return out.reshape(n, oh, ow, cout_pad)


def maxpool_3x3_s2_p1(x):
    # Memory-bound glue; left to XLA per review (padding value -inf matches PyTorch maxpool).
    neg_inf = jnp.asarray(-jnp.inf, dtype=x.dtype)
    return jax.lax.reduce_window(
        x, neg_inf, jax.lax.max,
        (1, 3, 3, 1), (1, 2, 2, 1),
        ((0, 0), (1, 1), (1, 1), (0, 0)))


# ----------------------------------------------------------------------------
# Parameter construction: synthetic weights, BN folded + packed at init
# ----------------------------------------------------------------------------
class _KeyGen:
    def __init__(self, key):
        self._key = key

    def __call__(self):
        self._key, sub = jax.random.split(self._key)
        return sub


def _pack_conv_bn(kg, cout, cin, k):
    fan_in = cin * k * k
    w_pt = jax.random.normal(kg(), (cout, cin, k, k), jnp.float32) * (2.0 / fan_in) ** 0.5
    gamma = 1.0 + 0.1 * jax.random.normal(kg(), (cout,), jnp.float32)
    beta = 0.1 * jax.random.normal(kg(), (cout,), jnp.float32)
    mean = 0.1 * jax.random.normal(kg(), (cout,), jnp.float32)
    var = 1.0 + 0.1 * jnp.abs(jax.random.normal(kg(), (cout,), jnp.float32))
    scale = gamma / jnp.sqrt(var + _BN_EPS)
    bias = beta - mean * scale
    cout_pad = _round_up(cout, 128)
    wm = jnp.transpose(w_pt, (2, 3, 1, 0)).reshape(k * k * cin, cout)  # (KH,KW,Cin)->K major
    wm = wm * scale[None, :]                                           # fold BN scale
    wm = jnp.pad(wm, ((0, 0), (0, cout_pad - cout))).astype(jnp.bfloat16)
    b = jnp.pad(bias, (0, cout_pad - cout)).astype(jnp.float32)
    return {"w": wm, "b": b}


_LAYER_CFG = [(64, 64, 1), (64, 128, 2), (128, 256, 2), (256, 512, 2)]  # (cin, cout, stride)


def init_params(key, in_channels, d_embed):
    kg = _KeyGen(key)
    params = {"stem": _pack_conv_bn(kg, 64, in_channels, 7)}
    for li, (cin, cout, _) in enumerate(_LAYER_CFG, start=1):
        b0 = {"conv1": _pack_conv_bn(kg, cout, cin, 3),
              "conv2": _pack_conv_bn(kg, cout, cout, 3)}
        if cin != cout:
            b0["down"] = _pack_conv_bn(kg, cout, cin, 1)
        b1 = {"conv1": _pack_conv_bn(kg, cout, cout, 3),
              "conv2": _pack_conv_bn(kg, cout, cout, 3)}
        params[f"layer{li}"] = [b0, b1]
    # Linear head: pre-transposed to (512, d_embed_pad), bias padded; no per-forward transpose.
    d_pad = _round_up(d_embed, 128)
    fc_w = jax.random.normal(kg(), (d_embed, 512), jnp.float32) * (1.0 / 512.0) ** 0.5
    fc_b = 0.01 * jax.random.normal(kg(), (d_embed,), jnp.float32)
    params["fc"] = {
        "w": jnp.pad(jnp.transpose(fc_w), ((0, 0), (0, d_pad - d_embed))).astype(jnp.bfloat16),
        "b": jnp.pad(fc_b, (0, d_pad - d_embed)).astype(jnp.float32),
    }
    return params


# ----------------------------------------------------------------------------
# Forward pass (matches CNNDownSamplingResNet.forward for resnet18, eval mode)
# ----------------------------------------------------------------------------
def _basic_block(x, cin, cout, p, stride):
    out = conv_bn(x, cin, p["conv1"], kh=3, kw=3, stride=stride, pad=1, relu=True)
    if "down" in p:
        identity = conv_bn(x, cin, p["down"], kh=1, kw=1, stride=stride, pad=0, relu=False)
    else:
        identity = x
    # Second conv with the residual add + ReLU fused into the matmul epilogue.
    return conv_bn(out, cout, p["conv2"], kh=3, kw=3, stride=1, pad=1, relu=True,
                   residual=identity)


def forward(params, x_nchw, *, d_embed):
    x = jnp.transpose(x_nchw, (0, 2, 3, 1)).astype(jnp.bfloat16)       # NCHW -> NHWC, bf16
    in_channels = x.shape[-1]
    # self.layer1: Conv2d(in, 64, 7x7, s2, p3, bias=False); then resnet children[1:-1]:
    # bn1 + relu (folded/fused into the conv matmul), maxpool, layer1..4, avgpool.
    x = conv_bn(x, in_channels, params["stem"], kh=7, kw=7, stride=2, pad=3, relu=True)
    x = maxpool_3x3_s2_p1(x)
    for li, (cin, cout, stride) in enumerate(_LAYER_CFG, start=1):
        blocks = params[f"layer{li}"]
        x = _basic_block(x, cin, cout, blocks[0], stride)
        x = _basic_block(x, cout, cout, blocks[1], 1)
    feat = jnp.mean(x.astype(jnp.float32), axis=(1, 2))                # global avg pool (N, 512)
    out = fused_matmul(feat, params["fc"]["w"], params["fc"]["b"],
                       relu=False, out_dtype=jnp.float32)
    return out[:, :d_embed]


if __name__ == "__main__":
    B, C_IN, H, W = 2, 4, 16, 16
    D_EMBED = 32

    key = jax.random.PRNGKey(0)
    k_params, k_x = jax.random.split(key)
    params = init_params(k_params, in_channels=C_IN, d_embed=D_EMBED)
    x = jax.random.normal(k_x, (B, C_IN, H, W), jnp.float32)           # PyTorch-style NCHW input

    fwd = jax.jit(functools.partial(forward, d_embed=D_EMBED))
    out = jax.block_until_ready(fwd(params, x))

    assert out.shape == (B, D_EMBED), out.shape
    assert bool(jnp.all(jnp.isfinite(out)))
    print("KERNEL_OK")
</pallas_src>

<mosaic_0001>
module attributes {stable_mosaic.version = 11 : i64} {
  func.func @_fused_matmul_kernel(%arg0: i32, %arg1: i32, %arg2: i32, %arg3: memref<128x196xbf16, #tpu.memory_space<vmem>>, %arg4: memref<196x128xbf16, #tpu.memory_space<vmem>>, %arg5: memref<1x128xf32, #tpu.memory_space<vmem>>, %arg6: memref<128x128xbf16, #tpu.memory_space<vmem>>, %arg7: memref<128x128xf32, #tpu.memory_space<vmem>>) attributes {dimension_semantics = [#tpu.dimension_semantics<parallel>, #tpu.dimension_semantics<parallel>, #tpu.dimension_semantics<arbitrary>], iteration_bounds = array<i64: 1, 1, 1>, scalar_prefetch = 0 : i64, scratch_operands = 1 : i64, tpu.core_type = #tpu.core_type<tc>, window_params = [{transform_indices = @transform_0, window_bounds = array<i64: 128, 196>}, {transform_indices = @transform_1, window_bounds = array<i64: 196, 128>}, {transform_indices = @transform_2, window_bounds = array<i64: 1, 128>}, {transform_indices = @transform_3, window_bounds = array<i64: 128, 128>}]} {
    %c0_i32 = arith.constant 0 : i32
    %0 = arith.cmpi eq, %arg2, %c0_i32 : i32
    %1 = arith.extui %0 : i1 to i32
    %c0_i32_0 = arith.constant 0 : i32
    %2 = arith.cmpi ne, %1, %c0_i32_0 : i32
    scf.if %2 {
      %cst_10 = arith.constant 0.000000e+00 : f32
      %12 = vector.broadcast %cst_10 : f32 to vector<128x128xf32>
      %c0_11 = arith.constant 0 : index
      %c0_12 = arith.constant 0 : index
      %13 = vector.load %arg7[%c0_11, %c0_12] : memref<128x128xf32, #tpu.memory_space<vmem>>, vector<128x128xf32>
      tpu.vector_store %arg7[%c0_11, %c0_12], %12 {strides = array<i32>} : memref<128x128xf32, #tpu.memory_space<vmem>>, vector<128x128xf32>,
    } else {
    }
    %c0 = arith.constant 0 : index
    %c0_1 = arith.constant 0 : index
    %3 = vector.load %arg7[%c0, %c0_1] : memref<128x128xf32, #tpu.memory_space<vmem>>, vector<128x128xf32>
    %c0_2 = arith.constant 0 : index
    %c0_3 = arith.constant 0 : index
    %4 = vector.load %arg3[%c0_2, %c0_3] : memref<128x196xbf16, #tpu.memory_space<vmem>>, vector<128x196xbf16>
    %c0_4 = arith.constant 0 : index
    %c0_5 = arith.constant 0 : index
    %5 = vector.load %arg4[%c0_4, %c0_5] : memref<196x128xbf16, #tpu.memory_space<vmem>>, vector<196x128xbf16>
    %cst = arith.constant dense<0.000000e+00> : vector<128x128xf32>
    %6 = tpu.matmul %4, %5, %cst {dimension_numbers = #tpu.dot_dimension_numbers<[1], [0], [0], [1], [0, 0, 1, 1], [], []>} : vector<128x196xbf16>, vector<196x128xbf16>, vector<128x128xf32> -> vector<128x128xf32>
    %7 = arith.addf %3, %6 : vector<128x128xf32>
    %c0_6 = arith.constant 0 : index
    %c0_7 = arith.constant 0 : index
    %8 = vector.load %arg7[%c0_6, %c0_7] : memref<128x128xf32, #tpu.memory_space<vmem>>, vector<128x128xf32>
    tpu.vector_store %arg7[%c0_6, %c0_7], %7 {strides = array<i32>} : memref<128x128xf32, #tpu.memory_space<vmem>>, vector<128x128xf32>,
    %c0_i32_8 = arith.constant 0 : i32
    %9 = arith.cmpi eq, %arg2, %c0_i32_8 : i32
    %10 = arith.extui %9 : i1 to i32
    %c0_i32_9 = arith.constant 0 : i32
    %11 = arith.cmpi ne, %10, %c0_i32_9 : i32
    scf.if %11 {
      %c0_10 = arith.constant 0 : index
      %c0_11 = arith.constant 0 : index
      %12 = vector.load %arg7[%c0_10, %c0_11] : memref<128x128xf32, #tpu.memory_space<vmem>>, vector<128x128xf32>
      %c0_12 = arith.constant 0 : index
      %c0_13 = arith.constant 0 : index
      %13 = vector.load %arg5[%c0_12, %c0_13] : memref<1x128xf32, #tpu.memory_space<vmem>>, vector<1x128xf32>
      %14 = vector.broadcast %13 : vector<1x128xf32> to vector<128x128xf32>
      %15 = arith.addf %12, %14 : vector<128x128xf32>
      %cst_14 = arith.constant 0.000000e+00 : f32
      %16 = vector.broadcast %cst_14 : f32 to vector<128x128xf32>
      %17 = arith.maximumf %15, %16 : vector<128x128xf32>
      %18 = arith.truncf %17 : vector<128x128xf32> to vector<128x128xbf16>
      %c0_15 = arith.constant 0 : index
      %c0_16 = arith.constant 0 : index
      %19 = vector.load %arg6[%c0_15, %c0_16] : memref<128x128xbf16, #tpu.memory_space<vmem>>, vector<128x128xbf16>
      tpu.vector_store %arg6[%c0_15, %c0_16], %18 {strides = array<i32>} : memref<128x128xbf16, #tpu.memory_space<vmem>>, vector<128x128xbf16>,
    } else {
    }
    return
  }
  func.func @transform_0(%arg0: i32, %arg1: i32, %arg2: i32) -> (i32, i32) {
    %c0_i32 = arith.constant 0 : i32
    return %arg0, %arg2 : i32, i32
  }
  func.func @transform_1(%arg0: i32, %arg1: i32, %arg2: i32) -> (i32, i32) {
    %c0_i32 = arith.constant 0 : i32
    return %arg2, %arg1 : i32, i32
  }
  func.func @transform_2(%arg0: i32, %arg1: i32, %arg2: i32) -> (i32, i32) {
    %c0_i32 = arith.constant 0 : i32
    %c0_i32_0 = arith.constant 0 : i32
    return %c0_i32, %arg1 : i32, i32
  }
  func.func @transform_3(%arg0: i32, %arg1: i32, %arg2: i32) -> (i32, i32) {
    %c0_i32 = arith.constant 0 : i32
    return %arg0, %arg1 : i32, i32
  }
}

module attributes {stable_mosaic.version = 11 : i64} {
  func.func @_fused_matmul_kernel(%arg0: i32, %arg1: i32, %arg2: i32, %arg3: memref<32x576xbf16, #tpu.memory_space<vmem>>, %arg4: memref<576x128xbf16, #tpu.memory_space<vmem>>, %arg5: memref<1x128xf32, #tpu.memory_space<vmem>>, %arg6: memref<32x128xbf16, #tpu.memory_space<vmem>>, %arg7: memref<32x128xf32, #tpu.memory_space<vmem>>) attributes {dimension_semantics = [#tpu.dimension_semantics<parallel>, #tpu.dimension_semantics<parallel>, #tpu.dimension_semantics<arbitrary>], iteration_bounds = array<i64: 1, 1, 1>, scalar_prefetch = 0 : i64, scratch_operands = 1 : i64, tpu.core_type = #tpu.core_type<tc>, window_params = [{transform_indices = @transform_0, window_bounds = array<i64: 32, 576>}, {transform_indices = @transform_1, window_bounds = array<i64: 576, 128>}, {transform_indices = @transform_2, window_bounds = array<i64: 1, 128>}, {transform_indices = @transform_3, window_bounds = array<i64: 32, 128>}]} {
    %c0_i32 = arith.constant 0 : i32
    %0 = arith.cmpi eq, %arg2, %c0_i32 : i32
    %1 = arith.extui %0 : i1 to i32
    %c0_i32_0 = arith.constant 0 : i32
    %2 = arith.cmpi ne, %1, %c0_i32_0 : i32
    scf.if %2 {
      %cst_10 = arith.constant 0.000000e+00 : f32
      %12 = vector.broadcast %cst_10 : f32 to vector<32x128xf32>
      %c0_11 = arith.constant 0 : index
      %c0_12 = arith.constant 0 : index
      %13 = vector.load %arg7[%c0_11, %c0_12] : memref<32x128xf32, #tpu.memory_space<vmem>>, vector<32x128xf32>
      tpu.vector_store %arg7[%c0_11, %c0_12], %12 {strides = array<i32>} : memref<32x128xf32, #tpu.memory_space<vmem>>, vector<32x128xf32>,
    } else {
    }
    %c0 = arith.constant 0 : index
    %c0_1 = arith.constant 0 : index
    %3 = vector.load %arg7[%c0, %c0_1] : memref<32x128xf32, #tpu.memory_space<vmem>>, vector<32x128xf32>
    %c0_2 = arith.constant 0 : index
    %c0_3 = arith.constant 0 : index
    %4 = vector.load %arg3[%c0_2, %c0_3] : memref<32x576xbf16, #tpu.memory_space<vmem>>, vector<32x576xbf16>
    %c0_4 = arith.constant 0 : index
    %c0_5 = arith.constant 0 : index
    %5 = vector.load %arg4[%c0_4, %c0_5] : memref<576x128xbf16, #tpu.memory_space<vmem>>, vector<576x128xbf16>
    %cst = arith.constant dense<0.000000e+00> : vector<32x128xf32>
    %6 = tpu.matmul %4, %5, %cst {dimension_numbers = #tpu.dot_dimension_numbers<[1], [0], [0], [1], [0, 0, 1, 1], [], []>} : vector<32x576xbf16>, vector<576x128xbf16>, vector<32x128xf32> -> vector<32x128xf32>
    %7 = arith.addf %3, %6 : vector<32x128xf32>
    %c0_6 = arith.constant 0 : index
    %c0_7 = arith.constant 0 : index
    %8 = vector.load %arg7[%c0_6, %c0_7] : memref<32x128xf32, #tpu.memory_space<vmem>>, vector<32x128xf32>
    tpu.vector_store %arg7[%c0_6, %c0_7], %7 {strides = array<i32>} : memref<32x128xf32, #tpu.memory_space<vmem>>, vector<32x128xf32>,
    %c0_i32_8 = arith.constant 0 : i32
    %9 = arith.cmpi eq, %arg2, %c0_i32_8 : i32
    %10 = arith.extui %9 : i1 to i32
    %c0_i32_9 = arith.constant 0 : i32
    %11 = arith.cmpi ne, %10, %c0_i32_9 : i32
    scf.if %11 {
      %c0_10 = arith.constant 0 : index
      %c0_11 = arith.constant 0 : index
      %12 = vector.load %arg7[%c0_10, %c0_11] : memref<32x128xf32, #tpu.memory_space<vmem>>, vector<32x128xf32>
      %c0_12 = arith.constant 0 : index
      %c0_13 = arith.constant 0 : index
      %13 = vector.load %arg5[%c0_12, %c0_13] : memref<1x128xf32, #tpu.memory_space<vmem>>, vector<1x128xf32>
      %14 = vector.broadcast %13 : vector<1x128xf32> to vector<32x128xf32>
      %15 = arith.addf %12, %14 : vector<32x128xf32>
      %cst_14 = arith.constant 0.000000e+00 : f32
      %16 = vector.broadcast %cst_14 : f32 to vector<32x128xf32>
      %17 = arith.maximumf %15, %16 : vector<32x128xf32>
      %18 = arith.truncf %17 : vector<32x128xf32> to vector<32x128xbf16>
      %c0_15 = arith.constant 0 : index
      %c0_16 = arith.constant 0 : index
      %19 = vector.load %arg6[%c0_15, %c0_16] : memref<32x128xbf16, #tpu.memory_space<vmem>>, vector<32x128xbf16>
      tpu.vector_store %arg6[%c0_15, %c0_16], %18 {strides = array<i32>} : memref<32x128xbf16, #tpu.memory_space<vmem>>, vector<32x128xbf16>,
    } else {
    }
    return
  }
  func.func @transform_0(%arg0: i32, %arg1: i32, %arg2: i32) -> (i32, i32) {
    %c0_i32 = arith.constant 0 : i32
    return %arg0, %arg2 : i32, i32
  }
  func.func @transform_1(%arg0: i32, %arg1: i32, %arg2: i32) -> (i32, i32) {
    %c0_i32 = arith.constant 0 : i32
    return %arg2, %arg1 : i32, i32
  }
  func.func @transform_2(%arg0: i32, %arg1: i32, %arg2: i32) -> (i32, i32) {
    %c0_i32 = arith.constant 0 : i32
    %c0_i32_0 = arith.constant 0 : i32
    return %c0_i32, %arg1 : i32, i32
  }
  func.func @transform_3(%arg0: i32, %arg1: i32, %arg2: i32) -> (i32, i32) {
    %c0_i32 = arith.constant 0 : i32
    return %arg0, %arg1 : i32, i32
  }
}

module attributes {stable_mosaic.version = 11 : i64} {
  func.func @_fused_matmul_kernel(%arg0: i32, %arg1: i32, %arg2: i32, %arg3: memref<32x576xbf16, #tpu.memory_space<vmem>>, %arg4: memref<576x128xbf16, #tpu.memory_space<vmem>>, %arg5: memref<1x128xf32, #tpu.memory_space<vmem>>, %arg6: memref<32x128xbf16, #tpu.memory_space<vmem>>, %arg7: memref<32x128xbf16, #tpu.memory_space<vmem>>, %arg8: memref<32x128xf32, #tpu.memory_space<vmem>>) attributes {dimension_semantics = [#tpu.dimension_semantics<parallel>, #tpu.dimension_semantics<parallel>, #tpu.dimension_semantics<arbitrary>], iteration_bounds = array<i64: 1, 1, 1>, scalar_prefetch = 0 : i64, scratch_operands = 1 : i64, tpu.core_type = #tpu.core_type<tc>, window_params = [{transform_indices = @transform_0, window_bounds = array<i64: 32, 576>}, {transform_indices = @transform_1, window_bounds = array<i64: 576, 128>}, {transform_indices = @transform_2, window_bounds = array<i64: 1, 128>}, {transform_indices = @transform_3, window_bounds = array<i64: 32, 128>}, {transform_indices = @transform_4, window_bounds = array<i64: 32, 128>}]} {
    %c0_i32 = arith.constant 0 : i32
    %0 = arith.cmpi eq, %arg2, %c0_i32 : i32
    %1 = arith.extui %0 : i1 to i32
    %c0_i32_0 = arith.constant 0 : i32
    %2 = arith.cmpi ne, %1, %c0_i32_0 : i32
    scf.if %2 {
      %cst_10 = arith.constant 0.000000e+00 : f32
      %12 = vector.broadcast %cst_10 : f32 to vector<32x128xf32>
      %c0_11 = arith.constant 0 : index
      %c0_12 = arith.constant 0 : index
      %13 = vector.load %arg8[%c0_11, %c0_12] : memref<32x128xf32, #tpu.memory_space<vmem>>, vector<32x128xf32>
      tpu.vector_store %arg8[%c0_11, %c0_12], %12 {strides = array<i32>} : memref<32x128xf32, #tpu.memory_space<vmem>>, vector<32x128xf32>,
    } else {
    }
    %c0 = arith.constant 0 : index
    %c0_1 = arith.constant 0 : index
    %3 = vector.load %arg8[%c0, %c0_1] : memref<32x128xf32, #tpu.memory_space<vmem>>, vector<32x128xf32>
    %c0_2 = arith.constant 0 : index
    %c0_3 = arith.constant 0 : index
    %4 = vector.load %arg3[%c0_2, %c0_3] : memref<32x576xbf16, #tpu.memory_space<vmem>>, vector<32x576xbf16>
    %c0_4 = arith.constant 0 : index
    %c0_5 = arith.constant 0 : index
    %5 = vector.load %arg4[%c0_4, %c0_5] : memref<576x128xbf16, #tpu.memory_space<vmem>>, vector<576x128xbf16>
    %cst = arith.constant dense<0.000000e+00> : vector<32x128xf32>
    %6 = tpu.matmul %4, %5, %cst {dimension_numbers = #tpu.dot_dimension_numbers<[1], [0], [0], [1], [0, 0, 1, 1], [], []>} : vector<32x576xbf16>, vector<576x128xbf16>, vector<32x128xf32> -> vector<32x128xf32>
    %7 = arith.addf %3, %6 : vector<32x128xf32>
    %c0_6 = arith.constant 0 : index
    %c0_7 = arith.constant 0 : index
    %8 = vector.load %arg8[%c0_6, %c0_7] : memref<32x128xf32, #tpu.memory_space<vmem>>, vector<32x128xf32>
    tpu.vector_store %arg8[%c0_6, %c0_7], %7 {strides = array<i32>} : memref<32x128xf32, #tpu.memory_space<vmem>>, vector<32x128xf32>,
    %c0_i32_8 = arith.constant 0 : i32
    %9 = arith.cmpi eq, %arg2, %c0_i32_8 : i32
    %10 = arith.extui %9 : i1 to i32
    %c0_i32_9 = arith.constant 0 : i32
    %11 = arith.cmpi ne, %10, %c0_i32_9 : i32
    scf.if %11 {
      %c0_10 = arith.constant 0 : index
      %c0_11 = arith.constant 0 : index
      %12 = vector.load %arg8[%c0_10, %c0_11] : memref<32x128xf32, #tpu.memory_space<vmem>>, vector<32x128xf32>
      %c0_12 = arith.constant 0 : index
      %c0_13 = arith.constant 0 : index
      %13 = vector.load %arg5[%c0_12, %c0_13] : memref<1x128xf32, #tpu.memory_space<vmem>>, vector<1x128xf32>
      %14 = vector.broadcast %13 : vector<1x128xf32> to vector<32x128xf32>
      %15 = arith.addf %12, %14 : vector<32x128xf32>
      %c0_14 = arith.constant 0 : index
      %c0_15 = arith.constant 0 : index
      %16 = vector.load %arg6[%c0_14, %c0_15] : memref<32x128xbf16, #tpu.memory_space<vmem>>, vector<32x128xbf16>
      %17 = arith.extf %16 : vector<32x128xbf16> to vector<32x128xf32>
      %18 = arith.addf %15, %17 : vector<32x128xf32>
      %cst_16 = arith.constant 0.000000e+00 : f32
      %19 = vector.broadcast %cst_16 : f32 to vector<32x128xf32>
      %20 = arith.maximumf %18, %19 : vector<32x128xf32>
      %21 = arith.truncf %20 : vector<32x128xf32> to vector<32x128xbf16>
      %c0_17 = arith.constant 0 : index
      %c0_18 = arith.constant 0 : index
      %22 = vector.load %arg7[%c0_17, %c0_18] : memref<32x128xbf16, #tpu.memory_space<vmem>>, vector<32x128xbf16>
      tpu.vector_store %arg7[%c0_17, %c0_18], %21 {strides = array<i32>} : memref<32x128xbf16, #tpu.memory_space<vmem>>, vector<32x128xbf16>,
    } else {
    }
    return
  }
  func.func @transform_0(%arg0: i32, %arg1: i32, %arg2: i32) -> (i32, i32) {
    %c0_i32 = arith.constant 0 : i32
    return %arg0, %arg2 : i32, i32
  }
  func.func @transform_1(%arg0: i32, %arg1: i32, %arg2: i32) -> (i32, i32) {
    %c0_i32 = arith.constant 0 : i32
    return %arg2, %arg1 : i32, i32
  }
  func.func @transform_2(%arg0: i32, %arg1: i32, %arg2: i32) -> (i32, i32) {
    %c0_i32 = arith.constant 0 : i32
    %c0_i32_0 = arith.constant 0 : i32
    return %c0_i32, %arg1 : i32, i32
  }
  func.func @transform_3(%arg0: i32, %arg1: i32, %arg2: i32) -> (i32, i32) {
    %c0_i32 = arith.constant 0 : i32
    return %arg0, %arg1 : i32, i32
  }
  func.func @transform_4(%arg0: i32, %arg1: i32, %arg2: i32) -> (i32, i32) {
    %c0_i32 = arith.constant 0 : i32
    return %arg0, %arg1 : i32, i32
  }
}

module attributes {stable_mosaic.version = 11 : i64} {
  func.func @_fused_matmul_kernel(%arg0: i32, %arg1: i32, %arg2: i32, %arg3: memref<8x576xbf16, #tpu.memory_space<vmem>>, %arg4: memref<576x128xbf16, #tpu.memory_space<vmem>>, %arg5: memref<1x128xf32, #tpu.memory_space<vmem>>, %arg6: memref<8x128xbf16, #tpu.memory_space<vmem>>, %arg7: memref<8x128xf32, #tpu.memory_space<vmem>>) attributes {dimension_semantics = [#tpu.dimension_semantics<parallel>, #tpu.dimension_semantics<parallel>, #tpu.dimension_semantics<arbitrary>], iteration_bounds = array<i64: 1, 1, 1>, scalar_prefetch = 0 : i64, scratch_operands = 1 : i64, tpu.core_type = #tpu.core_type<tc>, window_params = [{transform_indices = @transform_0, window_bounds = array<i64: 8, 576>}, {transform_indices = @transform_1, window_bounds = array<i64: 576, 128>}, {transform_indices = @transform_2, window_bounds = array<i64: 1, 128>}, {transform_indices = @transform_3, window_bounds = array<i64: 8, 128>}]} {
    %c0_i32 = arith.constant 0 : i32
    %0 = arith.cmpi eq, %arg2, %c0_i32 : i32
    %1 = arith.extui %0 : i1 to i32
    %c0_i32_0 = arith.constant 0 : i32
    %2 = arith.cmpi ne, %1, %c0_i32_0 : i32
    scf.if %2 {
      %cst_10 = arith.constant 0.000000e+00 : f32
      %12 = vector.broadcast %cst_10 : f32 to vector<8x128xf32>
      %c0_11 = arith.constant 0 : index
      %c0_12 = arith.constant 0 : index
      %13 = vector.load %arg7[%c0_11, %c0_12] : memref<8x128xf32, #tpu.memory_space<vmem>>, vector<8x128xf32>
      tpu.vector_store %arg7[%c0_11, %c0_12], %12 {strides = array<i32>} : memref<8x128xf32, #tpu.memory_space<vmem>>, vector<8x128xf32>,
    } else {
    }
    %c0 = arith.constant 0 : index
    %c0_1 = arith.constant 0 : index
    %3 = vector.load %arg7[%c0, %c0_1] : memref<8x128xf32, #tpu.memory_space<vmem>>, vector<8x128xf32>
    %c0_2 = arith.constant 0 : index
    %c0_3 = arith.constant 0 : index
    %4 = vector.load %arg3[%c0_2, %c0_3] : memref<8x576xbf16, #tpu.memory_space<vmem>>, vector<8x576xbf16>
    %c0_4 = arith.constant 0 : index
    %c0_5 = arith.constant 0 : index
    %5 = vector.load %arg4[%c0_4, %c0_5] : memref<576x128xbf16, #tpu.memory_space<vmem>>, vector<576x128xbf16>
    %cst = arith.constant dense<0.000000e+00> : vector<8x128xf32>
    %6 = tpu.matmul %4, %5, %cst {dimension_numbers = #tpu.dot_dimension_numbers<[1], [0], [0], [1], [0, 0, 1, 1], [], []>} : vector<8x576xbf16>, vector<576x128xbf16>, vector<8x128xf32> -> vector<8x128xf32>
    %7 = arith.addf %3, %6 : vector<8x128xf32>
    %c0_6 = arith.constant 0 : index
    %c0_7 = arith.constant 0 : index
    %8 = vector.load %arg7[%c0_6, %c0_7] : memref<8x128xf32, #tpu.memory_space<vmem>>, vector<8x128xf32>
    tpu.vector_store %arg7[%c0_6, %c0_7], %7 {strides = array<i32>} : memref<8x128xf32, #tpu.memory_space<vmem>>, vector<8x128xf32>,
    %c0_i32_8 = arith.constant 0 : i32
    %9 = arith.cmpi eq, %arg2, %c0_i32_8 : i32
    %10 = arith.extui %9 : i1 to i32
    %c0_i32_9 = arith.constant 0 : i32
    %11 = arith.cmpi ne, %10, %c0_i32_9 : i32
    scf.if %11 {
      %c0_10 = arith.constant 0 : index
      %c0_11 = arith.constant 0 : index
      %12 = vector.load %arg7[%c0_10, %c0_11] : memref<8x128xf32, #tpu.memory_space<vmem>>, vector<8x128xf32>
      %c0_12 = arith.constant 0 : index
      %c0_13 = arith.constant 0 : index
      %13 = vector.load %arg5[%c0_12, %c0_13] : memref<1x128xf32, #tpu.memory_space<vmem>>, vector<1x128xf32>
      %14 = vector.broadcast %13 : vector<1x128xf32> to vector<8x128xf32>
      %15 = arith.addf %12, %14 : vector<8x128xf32>
      %cst_14 = arith.constant 0.000000e+00 : f32
      %16 = vector.broadcast %cst_14 : f32 to vector<8x128xf32>
      %17 = arith.maximumf %15, %16 : vector<8x128xf32>
      %18 = arith.truncf %17 : vector<8x128xf32> to vector<8x128xbf16>
      %c0_15 = arith.constant 0 : index
      %c0_16 = arith.constant 0 : index
      %19 = vector.load %arg6[%c0_15, %c0_16] : memref<8x128xbf16, #tpu.memory_space<vmem>>, vector<8x128xbf16>
      tpu.vector_store %arg6[%c0_15, %c0_16], %18 {strides = array<i32>} : memref<8x128xbf16, #tpu.memory_space<vmem>>, vector<8x128xbf16>,
    } else {
    }
    return
  }
  func.func @transform_0(%arg0: i32, %arg1: i32, %arg2: i32) -> (i32, i32) {
    %c0_i32 = arith.constant 0 : i32
    return %arg0, %arg2 : i32, i32
  }
  func.func @transform_1(%arg0: i32, %arg1: i32, %arg2: i32) -> (i32, i32) {
    %c0_i32 = arith.constant 0 : i32
    return %arg2, %arg1 : i32, i32
  }
  func.func @transform_2(%arg0: i32, %arg1: i32, %arg2: i32) -> (i32, i32) {
    %c0_i32 = arith.constant 0 : i32
    %c0_i32_0 = arith.constant 0 : i32
    return %c0_i32, %arg1 : i32, i32
  }
  func.func @transform_3(%arg0: i32, %arg1: i32, %arg2: i32) -> (i32, i32) {
    %c0_i32 = arith.constant 0 : i32
    return %arg0, %arg1 : i32, i32
  }
}

module attributes {stable_mosaic.version = 11 : i64} {
  func.func @_fused_matmul_kernel(%arg0: i32, %arg1: i32, %arg2: i32, %arg3: memref<8x64xbf16, #tpu.memory_space<vmem>>, %arg4: memref<64x128xbf16, #tpu.memory_space<vmem>>, %arg5: memref<1x128xf32, #tpu.memory_space<vmem>>, %arg6: memref<8x128xbf16, #tpu.memory_space<vmem>>, %arg7: memref<8x128xf32, #tpu.memory_space<vmem>>) attributes {dimension_semantics = [#tpu.dimension_semantics<parallel>, #tpu.dimension_semantics<parallel>, #tpu.dimension_semantics<arbitrary>], iteration_bounds = array<i64: 1, 1, 1>, scalar_prefetch = 0 : i64, scratch_operands = 1 : i64, tpu.core_type = #tpu.core_type<tc>, window_params = [{transform_indices = @transform_0, window_bounds = array<i64: 8, 64>}, {transform_indices = @transform_1, window_bounds = array<i64: 64, 128>}, {transform_indices = @transform_2, window_bounds = array<i64: 1, 128>}, {transform_indices = @transform_3, window_bounds = array<i64: 8, 128>}]} {
    %c0_i32 = arith.constant 0 : i32
    %0 = arith.cmpi eq, %arg2, %c0_i32 : i32
    %1 = arith.extui %0 : i1 to i32
    %c0_i32_0 = arith.constant 0 : i32
    %2 = arith.cmpi ne, %1, %c0_i32_0 : i32
    scf.if %2 {
      %cst_10 = arith.constant 0.000000e+00 : f32
      %12 = vector.broadcast %cst_10 : f32 to vector<8x128xf32>
      %c0_11 = arith.constant 0 : index
      %c0_12 = arith.constant 0 : index
      %13 = vector.load %arg7[%c0_11, %c0_12] : memref<8x128xf32, #tpu.memory_space<vmem>>, vector<8x128xf32>
      tpu.vector_store %arg7[%c0_11, %c0_12], %12 {strides = array<i32>} : memref<8x128xf32, #tpu.memory_space<vmem>>, vector<8x128xf32>,
    } else {
    }
    %c0 = arith.constant 0 : index
    %c0_1 = arith.constant 0 : index
    %3 = vector.load %arg7[%c0, %c0_1] : memref<8x128xf32, #tpu.memory_space<vmem>>, vector<8x128xf32>
    %c0_2 = arith.constant 0 : index
    %c0_3 = arith.constant 0 : index
    %4 = vector.load %arg3[%c0_2, %c0_3] : memref<8x64xbf16, #tpu.memory_space<vmem>>, vector<8x64xbf16>
    %c0_4 = arith.constant 0 : index
    %c0_5 = arith.constant 0 : index
    %5 = vector.load %arg4[%c0_4, %c0_5] : memref<64x128xbf16, #tpu.memory_space<vmem>>, vector<64x128xbf16>
    %cst = arith.constant dense<0.000000e+00> : vector<8x128xf32>
    %6 = tpu.matmul %4, %5, %cst {dimension_numbers = #tpu.dot_dimension_numbers<[1], [0], [0], [1], [0, 0, 1, 1], [], []>} : vector<8x64xbf16>, vector<64x128xbf16>, vector<8x128xf32> -> vector<8x128xf32>
    %7 = arith.addf %3, %6 : vector<8x128xf32>
    %c0_6 = arith.constant 0 : index
    %c0_7 = arith.constant 0 : index
    %8 = vector.load %arg7[%c0_6, %c0_7] : memref<8x128xf32, #tpu.memory_space<vmem>>, vector<8x128xf32>
    tpu.vector_store %arg7[%c0_6, %c0_7], %7 {strides = array<i32>} : memref<8x128xf32, #tpu.memory_space<vmem>>, vector<8x128xf32>,
    %c0_i32_8 = arith.constant 0 : i32
    %9 = arith.cmpi eq, %arg2, %c0_i32_8 : i32
    %10 = arith.extui %9 : i1 to i32
    %c0_i32_9 = arith.constant 0 : i32
    %11 = arith.cmpi ne, %10, %c0_i32_9 : i32
    scf.if %11 {
      %c0_10 = arith.constant 0 : index
      %c0_11 = arith.constant 0 : index
      %12 = vector.load %arg7[%c0_10, %c0_11] : memref<8x128xf32, #tpu.memory_space<vmem>>, vector<8x128xf32>
      %c0_12 = arith.constant 0 : index
      %c0_13 = arith.constant 0 : index
      %13 = vector.load %arg5[%c0_12, %c0_13] : memref<1x128xf32, #tpu.memory_space<vmem>>, vector<1x128xf32>
      %14 = vector.broadcast %13 : vector<1x128xf32> to vector<8x128xf32>
      %15 = arith.addf %12, %14 : vector<8x128xf32>
      %16 = arith.truncf %15 : vector<8x128xf32> to vector<8x128xbf16>
      %c0_14 = arith.constant 0 : index
      %c0_15 = arith.constant 0 : index
      %17 = vector.load %arg6[%c0_14, %c0_15] : memref<8x128xbf16, #tpu.memory_space<vmem>>, vector<8x128xbf16>
      tpu.vector_store %arg6[%c0_14, %c0_15], %16 {strides = array<i32>} : memref<8x128xbf16, #tpu.memory_space<vmem>>, vector<8x128xbf16>,
    } else {
    }
    return
  }
  func.func @transform_0(%arg0: i32, %arg1: i32, %arg2: i32) -> (i32, i32) {
    %c0_i32 = arith.constant 0 : i32
    return %arg0, %arg2 : i32, i32
  }
  func.func @transform_1(%arg0: i32, %arg1: i32, %arg2: i32) -> (i32, i32) {
    %c0_i32 = arith.constant 0 : i32
    return %arg2, %arg1 : i32, i32
  }
  func.func @transform_2(%arg0: i32, %arg1: i32, %arg2: i32) -> (i32, i32) {
    %c0_i32 = arith.constant 0 : i32
    %c0_i32_0 = arith.constant 0 : i32
    return %c0_i32, %arg1 : i32, i32
  }
  func.func @transform_3(%arg0: i32, %arg1: i32, %arg2: i32) -> (i32, i32) {
    %c0_i32 = arith.constant 0 : i32
    return %arg0, %arg1 : i32, i32
  }
}

module attributes {stable_mosaic.version = 11 : i64} {
  func.func @_fused_matmul_kernel(%arg0: i32, %arg1: i32, %arg2: i32, %arg3: memref<8x128xbf16, #tpu.memory_space<vmem>>, %arg4: memref<128x128xbf16, #tpu.memory_space<vmem>>, %arg5: memref<1x128xf32, #tpu.memory_space<vmem>>, %arg6: memref<8x128xbf16, #tpu.memory_space<vmem>>, %arg7: memref<8x128xbf16, #tpu.memory_space<vmem>>, %arg8: memref<8x128xf32, #tpu.memory_space<vmem>>) attributes {dimension_semantics = [#tpu.dimension_semantics<parallel>, #tpu.dimension_semantics<parallel>, #tpu.dimension_semantics<arbitrary>], iteration_bounds = array<i64: 1, 1, 9>, scalar_prefetch = 0 : i64, scratch_operands = 1 : i64, tpu.core_type = #tpu.core_type<tc>, window_params = [{transform_indices = @transform_0, window_bounds = array<i64: 8, 128>}, {transform_indices = @transform_1, window_bounds = array<i64: 128, 128>}, {transform_indices = @transform_2, window_bounds = array<i64: 1, 128>}, {transform_indices = @transform_3, window_bounds = array<i64: 8, 128>}, {transform_indices = @transform_4, window_bounds = array<i64: 8, 128>}]} {
    %c0_i32 = arith.constant 0 : i32
    %0 = arith.cmpi eq, %arg2, %c0_i32 : i32
    %1 = arith.extui %0 : i1 to i32
    %c0_i32_0 = arith.constant 0 : i32
    %2 = arith.cmpi ne, %1, %c0_i32_0 : i32
    scf.if %2 {
      %cst_9 = arith.constant 0.000000e+00 : f32
      %12 = vector.broadcast %cst_9 : f32 to vector<8x128xf32>
      %c0_10 = arith.constant 0 : index
      %c0_11 = arith.constant 0 : index
      %13 = vector.load %arg8[%c0_10, %c0_11] : memref<8x128xf32, #tpu.memory_space<vmem>>, vector<8x128xf32>
      tpu.vector_store %arg8[%c0_10, %c0_11], %12 {strides = array<i32>} : memref<8x128xf32, #tpu.memory_space<vmem>>, vector<8x128xf32>,
    } else {
    }
    %c0 = arith.constant 0 : index
    %c0_1 = arith.constant 0 : index
    %3 = vector.load %arg8[%c0, %c0_1] : memref<8x128xf32, #tpu.memory_space<vmem>>, vector<8x128xf32>
    %c0_2 = arith.constant 0 : index
    %c0_3 = arith.constant 0 : index
    %4 = vector.load %arg3[%c0_2, %c0_3] : memref<8x128xbf16, #tpu.memory_space<vmem>>, vector<8x128xbf16>
    %c0_4 = arith.constant 0 : index
    %c0_5 = arith.constant 0 : index
    %5 = vector.load %arg4[%c0_4, %c0_5] : memref<128x128xbf16, #tpu.memory_space<vmem>>, vector<128x128xbf16>
    %cst = arith.constant dense<0.000000e+00> : vector<8x128xf32>
    %6 = tpu.matmul %4, %5, %cst {dimension_numbers = #tpu.dot_dimension_numbers<[1], [0], [0], [1], [0, 0, 1, 1], [], []>} : vector<8x128xbf16>, vector<128x128xbf16>, vector<8x128xf32> -> vector<8x128xf32>
    %7 = arith.addf %3, %6 : vector<8x128xf32>
    %c0_6 = arith.constant 0 : index
    %c0_7 = arith.constant 0 : index
    %8 = vector.load %arg8[%c0_6, %c0_7] : memref<8x128xf32, #tpu.memory_space<vmem>>, vector<8x128xf32>
    tpu.vector_store %arg8[%c0_6, %c0_7], %7 {strides = array<i32>} : memref<8x128xf32, #tpu.memory_space<vmem>>, vector<8x128xf32>,
    %c8_i32 = arith.constant 8 : i32
    %9 = arith.cmpi eq, %arg2, %c8_i32 : i32
    %10 = arith.extui %9 : i1 to i32
    %c0_i32_8 = arith.constant 0 : i32
    %11 = arith.cmpi ne, %10, %c0_i32_8 : i32
    scf.if %11 {
      %c0_9 = arith.constant 0 : index
      %c0_10 = arith.constant 0 : index
      %12 = vector.load %arg8[%c0_9, %c0_10] : memref<8x128xf32, #tpu.memory_space<vmem>>, vector<8x128xf32>
      %c0_11 = arith.constant 0 : index
      %c0_12 = arith.constant 0 : index
      %13 = vector.load %arg5[%c0_11, %c0_12] : memref<1x128xf32, #tpu.memory_space<vmem>>, vector<1x128xf32>
      %14 = vector.broadcast %13 : vector<1x128xf32> to vector<8x128xf32>
      %15 = arith.addf %12, %14 : vector<8x128xf32>
      %c0_13 = arith.constant 0 : index
      %c0_14 = arith.constant 0 : index
      %16 = vector.load %arg6[%c0_13, %c0_14] : memref<8x128xbf16, #tpu.memory_space<vmem>>, vector<8x128xbf16>
      %17 = arith.extf %16 : vector<8x128xbf16> to vector<8x128xf32>
      %18 = arith.addf %15, %17 : vector<8x128xf32>
      %cst_15 = arith.constant 0.000000e+00 : f32
      %19 = vector.broadcast %cst_15 : f32 to vector<8x128xf32>
      %20 = arith.maximumf %18, %19 : vector<8x128xf32>
      %21 = arith.truncf %20 : vector<8x128xf32> to vector<8x128xbf16>
      %c0_16 = arith.constant 0 : index
      %c0_17 = arith.constant 0 : index
      %22 = vector.load %arg7[%c0_16, %c0_17] : memref<8x128xbf16, #tpu.memory_space<vmem>>, vector<8x128xbf16>
      tpu.vector_store %arg7[%c0_16, %c0_17], %21 {strides = array<i32>} : memref<8x128xbf16, #tpu.memory_space<vmem>>, vector<8x128xbf16>,
    } else {
    }
    return
  }
  func.func @transform_0(%arg0: i32, %arg1: i32, %arg2: i32) -> (i32, i32) {
    %c0_i32 = arith.constant 0 : i32
    return %arg0, %arg2 : i32, i32
  }
  func.func @transform_1(%arg0: i32, %arg1: i32, %arg2: i32) -> (i32, i32) {
    %c0_i32 = arith.constant 0 : i32
    return %arg2, %arg1 : i32, i32
  }
  func.func @transform_2(%arg0: i32, %arg1: i32, %arg2: i32) -> (i32, i32) {
    %c0_i32 = arith.constant 0 : i32
    %c0_i32_0 = arith.constant 0 : i32
    return %c0_i32, %arg1 : i32, i32
  }
  func.func @transform_3(%arg0: i32, %arg1: i32, %arg2: i32) -> (i32, i32) {
    %c0_i32 = arith.constant 0 : i32
    return %arg0, %arg1 : i32, i32
  }
  func.func @transform_4(%arg0: i32, %arg1: i32, %arg2: i32) -> (i32, i32) {
    %c0_i32 = arith.constant 0 : i32
    return %arg0, %arg1 : i32, i32
  }
}

module attributes {stable_mosaic.version = 11 : i64} {
  func.func @_fused_matmul_kernel(%arg0: i32, %arg1: i32, %arg2: i32, %arg3: memref<8x128xbf16, #tpu.memory_space<vmem>>, %arg4: memref<128x128xbf16, #tpu.memory_space<vmem>>, %arg5: memref<1x128xf32, #tpu.memory_space<vmem>>, %arg6: memref<8x128xbf16, #tpu.memory_space<vmem>>, %arg7: memref<8x128xf32, #tpu.memory_space<vmem>>) attributes {dimension_semantics = [#tpu.dimension_semantics<parallel>, #tpu.dimension_semantics<parallel>, #tpu.dimension_semantics<arbitrary>], iteration_bounds = array<i64: 1, 1, 9>, scalar_prefetch = 0 : i64, scratch_operands = 1 : i64, tpu.core_type = #tpu.core_type<tc>, window_params = [{transform_indices = @transform_0, window_bounds = array<i64: 8, 128>}, {transform_indices = @transform_1, window_bounds = array<i64: 128, 128>}, {transform_indices = @transform_2, window_bounds = array<i64: 1, 128>}, {transform_indices = @transform_3, window_bounds = array<i64: 8, 128>}]} {
    %c0_i32 = arith.constant 0 : i32
    %0 = arith.cmpi eq, %arg2, %c0_i32 : i32
    %1 = arith.extui %0 : i1 to i32
    %c0_i32_0 = arith.constant 0 : i32
    %2 = arith.cmpi ne, %1, %c0_i32_0 : i32
    scf.if %2 {
      %cst_9 = arith.constant 0.000000e+00 : f32
      %12 = vector.broadcast %cst_9 : f32 to vector<8x128xf32>
      %c0_10 = arith.constant 0 : index
      %c0_11 = arith.constant 0 : index
      %13 = vector.load %arg7[%c0_10, %c0_11] : memref<8x128xf32, #tpu.memory_space<vmem>>, vector<8x128xf32>
      tpu.vector_store %arg7[%c0_10, %c0_11], %12 {strides = array<i32>} : memref<8x128xf32, #tpu.memory_space<vmem>>, vector<8x128xf32>,
    } else {
    }
    %c0 = arith.constant 0 : index
    %c0_1 = arith.constant 0 : index
    %3 = vector.load %arg7[%c0, %c0_1] : memref<8x128xf32, #tpu.memory_space<vmem>>, vector<8x128xf32>
    %c0_2 = arith.constant 0 : index
    %c0_3 = arith.constant 0 : index
    %4 = vector.load %arg3[%c0_2, %c0_3] : memref<8x128xbf16, #tpu.memory_space<vmem>>, vector<8x128xbf16>
    %c0_4 = arith.constant 0 : index
    %c0_5 = arith.constant 0 : index
    %5 = vector.load %arg4[%c0_4, %c0_5] : memref<128x128xbf16, #tpu.memory_space<vmem>>, vector<128x128xbf16>
    %cst = arith.constant dense<0.000000e+00> : vector<8x128xf32>
    %6 = tpu.matmul %4, %5, %cst {dimension_numbers = #tpu.dot_dimension_numbers<[1], [0], [0], [1], [0, 0, 1, 1], [], []>} : vector<8x128xbf16>, vector<128x128xbf16>, vector<8x128xf32> -> vector<8x128xf32>
    %7 = arith.addf %3, %6 : vector<8x128xf32>
    %c0_6 = arith.constant 0 : index
    %c0_7 = arith.constant 0 : index
    %8 = vector.load %arg7[%c0_6, %c0_7] : memref<8x128xf32, #tpu.memory_space<vmem>>, vector<8x128xf32>
    tpu.vector_store %arg7[%c0_6, %c0_7], %7 {strides = array<i32>} : memref<8x128xf32, #tpu.memory_space<vmem>>, vector<8x128xf32>,
    %c8_i32 = arith.constant 8 : i32
    %9 = arith.cmpi eq, %arg2, %c8_i32 : i32
    %10 = arith.extui %9 : i1 to i32
    %c0_i32_8 = arith.constant 0 : i32
    %11 = arith.cmpi ne, %10, %c0_i32_8 : i32
    scf.if %11 {
      %c0_9 = arith.constant 0 : index
      %c0_10 = arith.constant 0 : index
      %12 = vector.load %arg7[%c0_9, %c0_10] : memref<8x128xf32, #tpu.memory_space<vmem>>, vector<8x128xf32>
      %c0_11 = arith.constant 0 : index
      %c0_12 = arith.constant 0 : index
      %13 = vector.load %arg5[%c0_11, %c0_12] : memref<1x128xf32, #tpu.memory_space<vmem>>, vector<1x128xf32>
      %14 = vector.broadcast %13 : vector<1x128xf32> to vector<8x128xf32>
      %15 = arith.addf %12, %14 : vector<8x128xf32>
      %cst_13 = arith.constant 0.000000e+00 : f32
      %16 = vector.broadcast %cst_13 : f32 to vector<8x128xf32>
      %17 = arith.maximumf %15, %16 : vector<8x128xf32>
      %18 = arith.truncf %17 : vector<8x128xf32> to vector<8x128xbf16>
      %c0_14 = arith.constant 0 : index
      %c0_15 = arith.constant 0 : index
      %19 = vector.load %arg6[%c0_14, %c0_15] : memref<8x128xbf16, #tpu.memory_space<vmem>>, vector<8x128xbf16>
      tpu.vector_store %arg6[%c0_14, %c0_15], %18 {strides = array<i32>} : memref<8x128xbf16, #tpu.memory_space<vmem>>, vector<8x128xbf16>,
    } else {
    }
    return
  }
  func.func @transform_0(%arg0: i32, %arg1: i32, %arg2: i32) -> (i32, i32) {
    %c0_i32 = arith.constant 0 : i32
    return %arg0, %arg2 : i32, i32
  }
  func.func @transform_1(%arg0: i32, %arg1: i32, %arg2: i32) -> (i32, i32) {
    %c0_i32 = arith.constant 0 : i32
    return %arg2, %arg1 : i32, i32
  }
  func.func @transform_2(%arg0: i32, %arg1: i32, %arg2: i32) -> (i32, i32) {
    %c0_i32 = arith.constant 0 : i32
    %c0_i32_0 = arith.constant 0 : i32
    return %c0_i32, %arg1 : i32, i32
  }
  func.func @transform_3(%arg0: i32, %arg1: i32, %arg2: i32) -> (i32, i32) {
    %c0_i32 = arith.constant 0 : i32
    return %arg0, %arg1 : i32, i32
  }
}

module attributes {stable_mosaic.version = 11 : i64} {
  func.func @_fused_matmul_kernel(%arg0: i32, %arg1: i32, %arg2: i32, %arg3: memref<2x128xbf16, #tpu.memory_space<vmem>>, %arg4: memref<128x256xbf16, #tpu.memory_space<vmem>>, %arg5: memref<1x256xf32, #tpu.memory_space<vmem>>, %arg6: memref<2x256xbf16, #tpu.memory_space<vmem>>, %arg7: memref<2x256xf32, #tpu.memory_space<vmem>>) attributes {dimension_semantics = [#tpu.dimension_semantics<parallel>, #tpu.dimension_semantics<parallel>, #tpu.dimension_semantics<arbitrary>], iteration_bounds = array<i64: 1, 1, 9>, scalar_prefetch = 0 : i64, scratch_operands = 1 : i64, tpu.core_type = #tpu.core_type<tc>, window_params = [{transform_indices = @transform_0, window_bounds = array<i64: 2, 128>}, {transform_indices = @transform_1, window_bounds = array<i64: 128, 256>}, {transform_indices = @transform_2, window_bounds = array<i64: 1, 256>}, {transform_indices = @transform_3, window_bounds = array<i64: 2, 256>}]} {
    %c0_i32 = arith.constant 0 : i32
    %0 = arith.cmpi eq, %arg2, %c0_i32 : i32
    %1 = arith.extui %0 : i1 to i32
    %c0_i32_0 = arith.constant 0 : i32
    %2 = arith.cmpi ne, %1, %c0_i32_0 : i32
    scf.if %2 {
      %cst_9 = arith.constant 0.000000e+00 : f32
      %12 = vector.broadcast %cst_9 : f32 to vector<2x256xf32>
      %c0_10 = arith.constant 0 : index
      %c0_11 = arith.constant 0 : index
      %13 = vector.load %arg7[%c0_10, %c0_11] : memref<2x256xf32, #tpu.memory_space<vmem>>, vector<2x256xf32>
      tpu.vector_store %arg7[%c0_10, %c0_11], %12 {strides = array<i32>} : memref<2x256xf32, #tpu.memory_space<vmem>>, vector<2x256xf32>,
    } else {
    }
    %c0 = arith.constant 0 : index
    %c0_1 = arith.constant 0 : index
    %3 = vector.load %arg7[%c0, %c0_1] : memref<2x256xf32, #tpu.memory_space<vmem>>, vector<2x256xf32>
    %c0_2 = arith.constant 0 : index
    %c0_3 = arith.constant 0 : index
    %4 = vector.load %arg3[%c0_2, %c0_3] : memref<2x128xbf16, #tpu.memory_space<vmem>>, vector<2x128xbf16>
    %c0_4 = arith.constant 0 : index
    %c0_5 = arith.constant 0 : index
    %5 = vector.load %arg4[%c0_4, %c0_5] : memref<128x256xbf16, #tpu.memory_space<vmem>>, vector<128x256xbf16>
    %cst = arith.constant dense<0.000000e+00> : vector<2x256xf32>
    %6 = tpu.matmul %4, %5, %cst {dimension_numbers = #tpu.dot_dimension_numbers<[1], [0], [0], [1], [0, 0, 1, 1], [], []>} : vector<2x128xbf16>, vector<128x256xbf16>, vector<2x256xf32> -> vector<2x256xf32>
    %7 = arith.addf %3, %6 : vector<2x256xf32>
    %c0_6 = arith.constant 0 : index
    %c0_7 = arith.constant 0 : index
    %8 = vector.load %arg7[%c0_6, %c0_7] : memref<2x256xf32, #tpu.memory_space<vmem>>, vector<2x256xf32>
    tpu.vector_store %arg7[%c0_6, %c0_7], %7 {strides = array<i32>} : memref<2x256xf32, #tpu.memory_space<vmem>>, vector<2x256xf32>,
    %c8_i32 = arith.constant 8 : i32
    %9 = arith.cmpi eq, %arg2, %c8_i32 : i32
    %10 = arith.extui %9 : i1 to i32
    %c0_i32_8 = arith.constant 0 : i32
    %11 = arith.cmpi ne, %10, %c0_i32_8 : i32
    scf.if %11 {
      %c0_9 = arith.constant 0 : index
      %c0_10 = arith.constant 0 : index
      %12 = vector.load %arg7[%c0_9, %c0_10] : memref<2x256xf32, #tpu.memory_space<vmem>>, vector<2x256xf32>
      %c0_11 = arith.constant 0 : index
      %c0_12 = arith.constant 0 : index
      %13 = vector.load %arg5[%c0_11, %c0_12] : memref<1x256xf32, #tpu.memory_space<vmem>>, vector<1x256xf32>
      %14 = vector.broadcast %13 : vector<1x256xf32> to vector<2x256xf32>
      %15 = arith.addf %12, %14 : vector<2x256xf32>
      %cst_13 = arith.constant 0.000000e+00 : f32
      %16 = vector.broadcast %cst_13 : f32 to vector<2x256xf32>
      %17 = arith.maximumf %15, %16 : vector<2x256xf32>
      %18 = arith.truncf %17 : vector<2x256xf32> to vector<2x256xbf16>
      %c0_14 = arith.constant 0 : index
      %c0_15 = arith.constant 0 : index
      %19 = vector.load %arg6[%c0_14, %c0_15] : memref<2x256xbf16, #tpu.memory_space<vmem>>, vector<2x256xbf16>
      tpu.vector_store %arg6[%c0_14, %c0_15], %18 {strides = array<i32>} : memref<2x256xbf16, #tpu.memory_space<vmem>>, vector<2x256xbf16>,
    } else {
    }
    return
  }
  func.func @transform_0(%arg0: i32, %arg1: i32, %arg2: i32) -> (i32, i32) {
    %c0_i32 = arith.constant 0 : i32
    return %arg0, %arg2 : i32, i32
  }
  func.func @transform_1(%arg0: i32, %arg1: i32, %arg2: i32) -> (i32, i32) {
    %c0_i32 = arith.constant 0 : i32
    return %arg2, %arg1 : i32, i32
  }
  func.func @transform_2(%arg0: i32, %arg1: i32, %arg2: i32) -> (i32, i32) {
    %c0_i32 = arith.constant 0 : i32
    %c0_i32_0 = arith.constant 0 : i32
    return %c0_i32, %arg1 : i32, i32
  }
  func.func @transform_3(%arg0: i32, %arg1: i32, %arg2: i32) -> (i32, i32) {
    %c0_i32 = arith.constant 0 : i32
    return %arg0, %arg1 : i32, i32
  }
}

module attributes {stable_mosaic.version = 11 : i64} {
  func.func @_fused_matmul_kernel(%arg0: i32, %arg1: i32, %arg2: i32, %arg3: memref<2x256xbf16, #tpu.memory_space<vmem>>, %arg4: memref<256x256xbf16, #tpu.memory_space<vmem>>, %arg5: memref<1x256xf32, #tpu.memory_space<vmem>>, %arg6: memref<2x256xbf16, #tpu.memory_space<vmem>>, %arg7: memref<2x256xbf16, #tpu.memory_space<vmem>>, %arg8: memref<2x256xf32, #tpu.memory_space<vmem>>) attributes {dimension_semantics = [#tpu.dimension_semantics<parallel>, #tpu.dimension_semantics<parallel>, #tpu.dimension_semantics<arbitrary>], iteration_bounds = array<i64: 1, 1, 9>, scalar_prefetch = 0 : i64, scratch_operands = 1 : i64, tpu.core_type = #tpu.core_type<tc>, window_params = [{transform_indices = @transform_0, window_bounds = array<i64: 2, 256>}, {transform_indices = @transform_1, window_bounds = array<i64: 256, 256>}, {transform_indices = @transform_2, window_bounds = array<i64: 1, 256>}, {transform_indices = @transform_3, window_bounds = array<i64: 2, 256>}, {transform_indices = @transform_4, window_bounds = array<i64: 2, 256>}]} {
    %c0_i32 = arith.constant 0 : i32
    %0 = arith.cmpi eq, %arg2, %c0_i32 : i32
    %1 = arith.extui %0 : i1 to i32
    %c0_i32_0 = arith.constant 0 : i32
    %2 = arith.cmpi ne, %1, %c0_i32_0 : i32
    scf.if %2 {
      %cst_9 = arith.constant 0.000000e+00 : f32
      %12 = vector.broadcast %cst_9 : f32 to vector<2x256xf32>
      %c0_10 = arith.constant 0 : index
      %c0_11 = arith.constant 0 : index
      %13 = vector.load %arg8[%c0_10, %c0_11] : memref<2x256xf32, #tpu.memory_space<vmem>>, vector<2x256xf32>
      tpu.vector_store %arg8[%c0_10, %c0_11], %12 {strides = array<i32>} : memref<2x256xf32, #tpu.memory_space<vmem>>, vector<2x256xf32>,
    } else {
    }
    %c0 = arith.constant 0 : index
    %c0_1 = arith.constant 0 : index
    %3 = vector.load %arg8[%c0, %c0_1] : memref<2x256xf32, #tpu.memory_space<vmem>>, vector<2x256xf32>
    %c0_2 = arith.constant 0 : index
    %c0_3 = arith.constant 0 : index
    %4 = vector.load %arg3[%c0_2, %c0_3] : memref<2x256xbf16, #tpu.memory_space<vmem>>, vector<2x256xbf16>
    %c0_4 = arith.constant 0 : index
    %c0_5 = arith.constant 0 : index
    %5 = vector.load %arg4[%c0_4, %c0_5] : memref<256x256xbf16, #tpu.memory_space<vmem>>, vector<256x256xbf16>
    %cst = arith.constant dense<0.000000e+00> : vector<2x256xf32>
    %6 = tpu.matmul %4, %5, %cst {dimension_numbers = #tpu.dot_dimension_numbers<[1], [0], [0], [1], [0, 0, 1, 1], [], []>} : vector<2x256xbf16>, vector<256x256xbf16>, vector<2x256xf32> -> vector<2x256xf32>
    %7 = arith.addf %3, %6 : vector<2x256xf32>
    %c0_6 = arith.constant 0 : index
    %c0_7 = arith.constant 0 : index
    %8 = vector.load %arg8[%c0_6, %c0_7] : memref<2x256xf32, #tpu.memory_space<vmem>>, vector<2x256xf32>
    tpu.vector_store %arg8[%c0_6, %c0_7], %7 {strides = array<i32>} : memref<2x256xf32, #tpu.memory_space<vmem>>, vector<2x256xf32>,
    %c8_i32 = arith.constant 8 : i32
    %9 = arith.cmpi eq, %arg2, %c8_i32 : i32
    %10 = arith.extui %9 : i1 to i32
    %c0_i32_8 = arith.constant 0 : i32
    %11 = arith.cmpi ne, %10, %c0_i32_8 : i32
    scf.if %11 {
      %c0_9 = arith.constant 0 : index
      %c0_10 = arith.constant 0 : index
      %12 = vector.load %arg8[%c0_9, %c0_10] : memref<2x256xf32, #tpu.memory_space<vmem>>, vector<2x256xf32>
      %c0_11 = arith.constant 0 : index
      %c0_12 = arith.constant 0 : index
      %13 = vector.load %arg5[%c0_11, %c0_12] : memref<1x256xf32, #tpu.memory_space<vmem>>, vector<1x256xf32>
      %14 = vector.broadcast %13 : vector<1x256xf32> to vector<2x256xf32>
      %15 = arith.addf %12, %14 : vector<2x256xf32>
      %c0_13 = arith.constant 0 : index
      %c0_14 = arith.constant 0 : index
      %16 = vector.load %arg6[%c0_13, %c0_14] : memref<2x256xbf16, #tpu.memory_space<vmem>>, vector<2x256xbf16>
      %17 = arith.extf %16 : vector<2x256xbf16> to vector<2x256xf32>
      %18 = arith.addf %15, %17 : vector<2x256xf32>
      %cst_15 = arith.constant 0.000000e+00 : f32
      %19 = vector.broadcast %cst_15 : f32 to vector<2x256xf32>
      %20 = arith.maximumf %18, %19 : vector<2x256xf32>
      %21 = arith.truncf %20 : vector<2x256xf32> to vector<2x256xbf16>
      %c0_16 = arith.constant 0 : index
      %c0_17 = arith.constant 0 : index
      %22 = vector.load %arg7[%c0_16, %c0_17] : memref<2x256xbf16, #tpu.memory_space<vmem>>, vector<2x256xbf16>
      tpu.vector_store %arg7[%c0_16, %c0_17], %21 {strides = array<i32>} : memref<2x256xbf16, #tpu.memory_space<vmem>>, vector<2x256xbf16>,
    } else {
    }
    return
  }
  func.func @transform_0(%arg0: i32, %arg1: i32, %arg2: i32) -> (i32, i32) {
    %c0_i32 = arith.constant 0 : i32
    return %arg0, %arg2 : i32, i32
  }
  func.func @transform_1(%arg0: i32, %arg1: i32, %arg2: i32) -> (i32, i32) {
    %c0_i32 = arith.constant 0 : i32
    return %arg2, %arg1 : i32, i32
  }
  func.func @transform_2(%arg0: i32, %arg1: i32, %arg2: i32) -> (i32, i32) {
    %c0_i32 = arith.constant 0 : i32
    %c0_i32_0 = arith.constant 0 : i32
    return %c0_i32, %arg1 : i32, i32
  }
  func.func @transform_3(%arg0: i32, %arg1: i32, %arg2: i32) -> (i32, i32) {
    %c0_i32 = arith.constant 0 : i32
    return %arg0, %arg1 : i32, i32
  }
  func.func @transform_4(%arg0: i32, %arg1: i32, %arg2: i32) -> (i32, i32) {
    %c0_i32 = arith.constant 0 : i32
    return %arg0, %arg1 : i32, i32
  }
}

module attributes {stable_mosaic.version = 11 : i64} {
  func.func @_fused_matmul_kernel(%arg0: i32, %arg1: i32, %arg2: i32, %arg3: memref<2x128xbf16, #tpu.memory_space<vmem>>, %arg4: memref<128x256xbf16, #tpu.memory_space<vmem>>, %arg5: memref<1x256xf32, #tpu.memory_space<vmem>>, %arg6: memref<2x256xbf16, #tpu.memory_space<vmem>>, %arg7: memref<2x256xf32, #tpu.memory_space<vmem>>) attributes {dimension_semantics = [#tpu.dimension_semantics<parallel>, #tpu.dimension_semantics<parallel>, #tpu.dimension_semantics<arbitrary>], iteration_bounds = array<i64: 1, 1, 1>, scalar_prefetch = 0 : i64, scratch_operands = 1 : i64, tpu.core_type = #tpu.core_type<tc>, window_params = [{transform_indices = @transform_0, window_bounds = array<i64: 2, 128>}, {transform_indices = @transform_1, window_bounds = array<i64: 128, 256>}, {transform_indices = @transform_2, window_bounds = array<i64: 1, 256>}, {transform_indices = @transform_3, window_bounds = array<i64: 2, 256>}]} {
    %c0_i32 = arith.constant 0 : i32
    %0 = arith.cmpi eq, %arg2, %c0_i32 : i32
    %1 = arith.extui %0 : i1 to i32
    %c0_i32_0 = arith.constant 0 : i32
    %2 = arith.cmpi ne, %1, %c0_i32_0 : i32
    scf.if %2 {
      %cst_10 = arith.constant 0.000000e+00 : f32
      %12 = vector.broadcast %cst_10 : f32 to vector<2x256xf32>
      %c0_11 = arith.constant 0 : index
      %c0_12 = arith.constant 0 : index
      %13 = vector.load %arg7[%c0_11, %c0_12] : memref<2x256xf32, #tpu.memory_space<vmem>>, vector<2x256xf32>
      tpu.vector_store %arg7[%c0_11, %c0_12], %12 {strides = array<i32>} : memref<2x256xf32, #tpu.memory_space<vmem>>, vector<2x256xf32>,
    } else {
    }
    %c0 = arith.constant 0 : index
    %c0_1 = arith.constant 0 : index
    %3 = vector.load %arg7[%c0, %c0_1] : memref<2x256xf32, #tpu.memory_space<vmem>>, vector<2x256xf32>
    %c0_2 = arith.constant 0 : index
    %c0_3 = arith.constant 0 : index
    %4 = vector.load %arg3[%c0_2, %c0_3] : memref<2x128xbf16, #tpu.memory_space<vmem>>, vector<2x128xbf16>
    %c0_4 = arith.constant 0 : index
    %c0_5 = arith.constant 0 : index
    %5 = vector.load %arg4[%c0_4, %c0_5] : memref<128x256xbf16, #tpu.memory_space<vmem>>, vector<128x256xbf16>
    %cst = arith.constant dense<0.000000e+00> : vector<2x256xf32>
    %6 = tpu.matmul %4, %5, %cst {dimension_numbers = #tpu.dot_dimension_numbers<[1], [0], [0], [1], [0, 0, 1, 1], [], []>} : vector<2x128xbf16>, vector<128x256xbf16>, vector<2x256xf32> -> vector<2x256xf32>
    %7 = arith.addf %3, %6 : vector<2x256xf32>
    %c0_6 = arith.constant 0 : index
    %c0_7 = arith.constant 0 : index
    %8 = vector.load %arg7[%c0_6, %c0_7] : memref<2x256xf32, #tpu.memory_space<vmem>>, vector<2x256xf32>
    tpu.vector_store %arg7[%c0_6, %c0_7], %7 {strides = array<i32>} : memref<2x256xf32, #tpu.memory_space<vmem>>, vector<2x256xf32>,
    %c0_i32_8 = arith.constant 0 : i32
    %9 = arith.cmpi eq, %arg2, %c0_i32_8 : i32
    %10 = arith.extui %9 : i1 to i32
    %c0_i32_9 = arith.constant 0 : i32
    %11 = arith.cmpi ne, %10, %c0_i32_9 : i32
    scf.if %11 {
      %c0_10 = arith.constant 0 : index
      %c0_11 = arith.constant 0 : index
      %12 = vector.load %arg7[%c0_10, %c0_11] : memref<2x256xf32, #tpu.memory_space<vmem>>, vector<2x256xf32>
      %c0_12 = arith.constant 0 : index
      %c0_13 = arith.constant 0 : index
      %13 = vector.load %arg5[%c0_12, %c0_13] : memref<1x256xf32, #tpu.memory_space<vmem>>, vector<1x256xf32>
      %14 = vector.broadcast %13 : vector<1x256xf32> to vector<2x256xf32>
      %15 = arith.addf %12, %14 : vector<2x256xf32>
      %16 = arith.truncf %15 : vector<2x256xf32> to vector<2x256xbf16>
      %c0_14 = arith.constant 0 : index
      %c0_15 = arith.constant 0 : index
      %17 = vector.load %arg6[%c0_14, %c0_15] : memref<2x256xbf16, #tpu.memory_space<vmem>>, vector<2x256xbf16>
      tpu.vector_store %arg6[%c0_14, %c0_15], %16 {strides = array<i32>} : memref<2x256xbf16, #tpu.memory_space<vmem>>, vector<2x256xbf16>,
    } else {
    }
    return
  }
  func.func @transform_0(%arg0: i32, %arg1: i32, %arg2: i32) -> (i32, i32) {
    %c0_i32 = arith.constant 0 : i32
    return %arg0, %arg2 : i32, i32
  }
  func.func @transform_1(%arg0: i32, %arg1: i32, %arg2: i32) -> (i32, i32) {
    %c0_i32 = arith.constant 0 : i32
    return %arg2, %arg1 : i32, i32
  }
  func.func @transform_2(%arg0: i32, %arg1: i32, %arg2: i32) -> (i32, i32) {
    %c0_i32 = arith.constant 0 : i32
    %c0_i32_0 = arith.constant 0 : i32
    return %c0_i32, %arg1 : i32, i32
  }
  func.func @transform_3(%arg0: i32, %arg1: i32, %arg2: i32) -> (i32, i32) {
    %c0_i32 = arith.constant 0 : i32
    return %arg0, %arg1 : i32, i32
  }
}

module attributes {stable_mosaic.version = 11 : i64} {
  func.func @_fused_matmul_kernel(%arg0: i32, %arg1: i32, %arg2: i32, %arg3: memref<2x256xbf16, #tpu.memory_space<vmem>>, %arg4: memref<256x256xbf16, #tpu.memory_space<vmem>>, %arg5: memref<1x256xf32, #tpu.memory_space<vmem>>, %arg6: memref<2x256xbf16, #tpu.memory_space<vmem>>, %arg7: memref<2x256xf32, #tpu.memory_space<vmem>>) attributes {dimension_semantics = [#tpu.dimension_semantics<parallel>, #tpu.dimension_semantics<parallel>, #tpu.dimension_semantics<arbitrary>], iteration_bounds = array<i64: 1, 1, 9>, scalar_prefetch = 0 : i64, scratch_operands = 1 : i64, tpu.core_type = #tpu.core_type<tc>, window_params = [{transform_indices = @transform_0, window_bounds = array<i64: 2, 256>}, {transform_indices = @transform_1, window_bounds = array<i64: 256, 256>}, {transform_indices = @transform_2, window_bounds = array<i64: 1, 256>}, {transform_indices = @transform_3, window_bounds = array<i64: 2, 256>}]} {
    %c0_i32 = arith.constant 0 : i32
    %0 = arith.cmpi eq, %arg2, %c0_i32 : i32
    %1 = arith.extui %0 : i1 to i32
    %c0_i32_0 = arith.constant 0 : i32
    %2 = arith.cmpi ne, %1, %c0_i32_0 : i32
    scf.if %2 {
      %cst_9 = arith.constant 0.000000e+00 : f32
      %12 = vector.broadcast %cst_9 : f32 to vector<2x256xf32>
      %c0_10 = arith.constant 0 : index
      %c0_11 = arith.constant 0 : index
      %13 = vector.load %arg7[%c0_10, %c0_11] : memref<2x256xf32, #tpu.memory_space<vmem>>, vector<2x256xf32>
      tpu.vector_store %arg7[%c0_10, %c0_11], %12 {strides = array<i32>} : memref<2x256xf32, #tpu.memory_space<vmem>>, vector<2x256xf32>,
    } else {
    }
    %c0 = arith.constant 0 : index
    %c0_1 = arith.constant 0 : index
    %3 = vector.load %arg7[%c0, %c0_1] : memref<2x256xf32, #tpu.memory_space<vmem>>, vector<2x256xf32>
    %c0_2 = arith.constant 0 : index
    %c0_3 = arith.constant 0 : index
    %4 = vector.load %arg3[%c0_2, %c0_3] : memref<2x256xbf16, #tpu.memory_space<vmem>>, vector<2x256xbf16>
    %c0_4 = arith.constant 0 : index
    %c0_5 = arith.constant 0 : index
    %5 = vector.load %arg4[%c0_4, %c0_5] : memref<256x256xbf16, #tpu.memory_space<vmem>>, vector<256x256xbf16>
    %cst = arith.constant dense<0.000000e+00> : vector<2x256xf32>
    %6 = tpu.matmul %4, %5, %cst {dimension_numbers = #tpu.dot_dimension_numbers<[1], [0], [0], [1], [0, 0, 1, 1], [], []>} : vector<2x256xbf16>, vector<256x256xbf16>, vector<2x256xf32> -> vector<2x256xf32>
    %7 = arith.addf %3, %6 : vector<2x256xf32>
    %c0_6 = arith.constant 0 : index
    %c0_7 = arith.constant 0 : index
    %8 = vector.load %arg7[%c0_6, %c0_7] : memref<2x256xf32, #tpu.memory_space<vmem>>, vector<2x256xf32>
    tpu.vector_store %arg7[%c0_6, %c0_7], %7 {strides = array<i32>} : memref<2x256xf32, #tpu.memory_space<vmem>>, vector<2x256xf32>,
    %c8_i32 = arith.constant 8 : i32
    %9 = arith.cmpi eq, %arg2, %c8_i32 : i32
    %10 = arith.extui %9 : i1 to i32
    %c0_i32_8 = arith.constant 0 : i32
    %11 = arith.cmpi ne, %10, %c0_i32_8 : i32
    scf.if %11 {
      %c0_9 = arith.constant 0 : index
      %c0_10 = arith.constant 0 : index
      %12 = vector.load %arg7[%c0_9, %c0_10] : memref<2x256xf32, #tpu.memory_space<vmem>>, vector<2x256xf32>
      %c0_11 = arith.constant 0 : index
      %c0_12 = arith.constant 0 : index
      %13 = vector.load %arg5[%c0_11, %c0_12] : memref<1x256xf32, #tpu.memory_space<vmem>>, vector<1x256xf32>
      %14 = vector.broadcast %13 : vector<1x256xf32> to vector<2x256xf32>
      %15 = arith.addf %12, %14 : vector<2x256xf32>
      %cst_13 = arith.constant 0.000000e+00 : f32
      %16 = vector.broadcast %cst_13 : f32 to vector<2x256xf32>
      %17 = arith.maximumf %15, %16 : vector<2x256xf32>
      %18 = arith.truncf %17 : vector<2x256xf32> to vector<2x256xbf16>
      %c0_14 = arith.constant 0 : index
      %c0_15 = arith.constant 0 : index
      %19 = vector.load %arg6[%c0_14, %c0_15] : memref<2x256xbf16, #tpu.memory_space<vmem>>, vector<2x256xbf16>
      tpu.vector_store %arg6[%c0_14, %c0_15], %18 {strides = array<i32>} : memref<2x256xbf16, #tpu.memory_space<vmem>>, vector<2x256xbf16>,
    } else {
    }
    return
  }
  func.func @transform_0(%arg0: i32, %arg1: i32, %arg2: i32) -> (i32, i32) {
    %c0_i32 = arith.constant 0 : i32
    return %arg0, %arg2 : i32, i32
  }
  func.func @transform_1(%arg0: i32, %arg1: i32, %arg2: i32) -> (i32, i32) {
    %c0_i32 = arith.constant 0 : i32
    return %arg2, %arg1 : i32, i32
  }
  func.func @transform_2(%arg0: i32, %arg1: i32, %arg2: i32) -> (i32, i32) {
    %c0_i32 = arith.constant 0 : i32
    %c0_i32_0 = arith.constant 0 : i32
    return %c0_i32, %arg1 : i32, i32
  }
  func.func @transform_3(%arg0: i32, %arg1: i32, %arg2: i32) -> (i32, i32) {
    %c0_i32 = arith.constant 0 : i32
    return %arg0, %arg1 : i32, i32
  }
}

module attributes {stable_mosaic.version = 11 : i64} {
  func.func @_fused_matmul_kernel(%arg0: i32, %arg1: i32, %arg2: i32, %arg3: memref<2x256xbf16, #tpu.memory_space<vmem>>, %arg4: memref<256x512xbf16, #tpu.memory_space<vmem>>, %arg5: memref<1x512xf32, #tpu.memory_space<vmem>>, %arg6: memref<2x512xbf16, #tpu.memory_space<vmem>>, %arg7: memref<2x512xf32, #tpu.memory_space<vmem>>) attributes {dimension_semantics = [#tpu.dimension_semantics<parallel>, #tpu.dimension_semantics<parallel>, #tpu.dimension_semantics<arbitrary>], iteration_bounds = array<i64: 1, 1, 9>, scalar_prefetch = 0 : i64, scratch_operands = 1 : i64, tpu.core_type = #tpu.core_type<tc>, window_params = [{transform_indices = @transform_0, window_bounds = array<i64: 2, 256>}, {transform_indices = @transform_1, window_bounds = array<i64: 256, 512>}, {transform_indices = @transform_2, window_bounds = array<i64: 1, 512>}, {transform_indices = @transform_3, window_bounds = array<i64: 2, 512>}]} {
    %c0_i32 = arith.constant 0 : i32
    %0 = arith.cmpi eq, %arg2, %c0_i32 : i32
    %1 = arith.extui %0 : i1 to i32
    %c0_i32_0 = arith.constant 0 : i32
    %2 = arith.cmpi ne, %1, %c0_i32_0 : i32
    scf.if %2 {
      %cst_9 = arith.constant 0.000000e+00 : f32
      %12 = vector.broadcast %cst_9 : f32 to vector<2x512xf32>
      %c0_10 = arith.constant 0 : index
      %c0_11 = arith.constant 0 : index
      %13 = vector.load %arg7[%c0_10, %c0_11] : memref<2x512xf32, #tpu.memory_space<vmem>>, vector<2x512xf32>
      tpu.vector_store %arg7[%c0_10, %c0_11], %12 {strides = array<i32>} : memref<2x512xf32, #tpu.memory_space<vmem>>, vector<2x512xf32>,
    } else {
    }
    %c0 = arith.constant 0 : index
    %c0_1 = arith.constant 0 : index
    %3 = vector.load %arg7[%c0, %c0_1] : memref<2x512xf32, #tpu.memory_space<vmem>>, vector<2x512xf32>
    %c0_2 = arith.constant 0 : index
    %c0_3 = arith.constant 0 : index
    %4 = vector.load %arg3[%c0_2, %c0_3] : memref<2x256xbf16, #tpu.memory_space<vmem>>, vector<2x256xbf16>
    %c0_4 = arith.constant 0 : index
    %c0_5 = arith.constant 0 : index
    %5 = vector.load %arg4[%c0_4, %c0_5] : memref<256x512xbf16, #tpu.memory_space<vmem>>, vector<256x512xbf16>
    %cst = arith.constant dense<0.000000e+00> : vector<2x512xf32>
    %6 = tpu.matmul %4, %5, %cst {dimension_numbers = #tpu.dot_dimension_numbers<[1], [0], [0], [1], [0, 0, 1, 1], [], []>} : vector<2x256xbf16>, vector<256x512xbf16>, vector<2x512xf32> -> vector<2x512xf32>
    %7 = arith.addf %3, %6 : vector<2x512xf32>
    %c0_6 = arith.constant 0 : index
    %c0_7 = arith.constant 0 : index
    %8 = vector.load %arg7[%c0_6, %c0_7] : memref<2x512xf32, #tpu.memory_space<vmem>>, vector<2x512xf32>
    tpu.vector_store %arg7[%c0_6, %c0_7], %7 {strides = array<i32>} : memref<2x512xf32, #tpu.memory_space<vmem>>, vector<2x512xf32>,
    %c8_i32 = arith.constant 8 : i32
    %9 = arith.cmpi eq, %arg2, %c8_i32 : i32
    %10 = arith.extui %9 : i1 to i32
    %c0_i32_8 = arith.constant 0 : i32
    %11 = arith.cmpi ne, %10, %c0_i32_8 : i32
    scf.if %11 {
      %c0_9 = arith.constant 0 : index
      %c0_10 = arith.constant 0 : index
      %12 = vector.load %arg7[%c0_9, %c0_10] : memref<2x512xf32, #tpu.memory_space<vmem>>, vector<2x512xf32>
      %c0_11 = arith.constant 0 : index
      %c0_12 = arith.constant 0 : index
      %13 = vector.load %arg5[%c0_11, %c0_12] : memref<1x512xf32, #tpu.memory_space<vmem>>, vector<1x512xf32>
      %14 = vector.broadcast %13 : vector<1x512xf32> to vector<2x512xf32>
      %15 = arith.addf %12, %14 : vector<2x512xf32>
      %cst_13 = arith.constant 0.000000e+00 : f32
      %16 = vector.broadcast %cst_13 : f32 to vector<2x512xf32>
      %17 = arith.maximumf %15, %16 : vector<2x512xf32>
      %18 = arith.truncf %17 : vector<2x512xf32> to vector<2x512xbf16>
      %c0_14 = arith.constant 0 : index
      %c0_15 = arith.constant 0 : index
      %19 = vector.load %arg6[%c0_14, %c0_15] : memref<2x512xbf16, #tpu.memory_space<vmem>>, vector<2x512xbf16>
      tpu.vector_store %arg6[%c0_14, %c0_15], %18 {strides = array<i32>} : memref<2x512xbf16, #tpu.memory_space<vmem>>, vector<2x512xbf16>,
    } else {
    }
    return
  }
  func.func @transform_0(%arg0: i32, %arg1: i32, %arg2: i32) -> (i32, i32) {
    %c0_i32 = arith.constant 0 : i32
    return %arg0, %arg2 : i32, i32
  }
  func.func @transform_1(%arg0: i32, %arg1: i32, %arg2: i32) -> (i32, i32) {
    %c0_i32 = arith.constant 0 : i32
    return %arg2, %arg1 : i32, i32
  }
  func.func @transform_2(%arg0: i32, %arg1: i32, %arg2: i32) -> (i32, i32) {
    %c0_i32 = arith.constant 0 : i32
    %c0_i32_0 = arith.constant 0 : i32
    return %c0_i32, %arg1 : i32, i32
  }
  func.func @transform_3(%arg0: i32, %arg1: i32, %arg2: i32) -> (i32, i32) {
    %c0_i32 = arith.constant 0 : i32
    return %arg0, %arg1 : i32, i32
  }
}

module attributes {stable_mosaic.version = 11 : i64} {
  func.func @_fused_matmul_kernel(%arg0: i32, %arg1: i32, %arg2: i32, %arg3: memref<2x256xbf16, #tpu.memory_space<vmem>>, %arg4: memref<256x512xbf16, #tpu.memory_space<vmem>>, %arg5: memref<1x512xf32, #tpu.memory_space<vmem>>, %arg6: memref<2x512xbf16, #tpu.memory_space<vmem>>, %arg7: memref<2x512xf32, #tpu.memory_space<vmem>>) attributes {dimension_semantics = [#tpu.dimension_semantics<parallel>, #tpu.dimension_semantics<parallel>, #tpu.dimension_semantics<arbitrary>], iteration_bounds = array<i64: 1, 1, 1>, scalar_prefetch = 0 : i64, scratch_operands = 1 : i64, tpu.core_type = #tpu.core_type<tc>, window_params = [{transform_indices = @transform_0, window_bounds = array<i64: 2, 256>}, {transform_indices = @transform_1, window_bounds = array<i64: 256, 512>}, {transform_indices = @transform_2, window_bounds = array<i64: 1, 512>}, {transform_indices = @transform_3, window_bounds = array<i64: 2, 512>}]} {
    %c0_i32 = arith.constant 0 : i32
    %0 = arith.cmpi eq, %arg2, %c0_i32 : i32
    %1 = arith.extui %0 : i1 to i32
    %c0_i32_0 = arith.constant 0 : i32
    %2 = arith.cmpi ne, %1, %c0_i32_0 : i32
    scf.if %2 {
      %cst_10 = arith.constant 0.000000e+00 : f32
      %12 = vector.broadcast %cst_10 : f32 to vector<2x512xf32>
      %c0_11 = arith.constant 0 : index
      %c0_12 = arith.constant 0 : index
      %13 = vector.load %arg7[%c0_11, %c0_12] : memref<2x512xf32, #tpu.memory_space<vmem>>, vector<2x512xf32>
      tpu.vector_store %arg7[%c0_11, %c0_12], %12 {strides = array<i32>} : memref<2x512xf32, #tpu.memory_space<vmem>>, vector<2x512xf32>,
    } else {
    }
    %c0 = arith.constant 0 : index
    %c0_1 = arith.constant 0 : index
    %3 = vector.load %arg7[%c0, %c0_1] : memref<2x512xf32, #tpu.memory_space<vmem>>, vector<2x512xf32>
    %c0_2 = arith.constant 0 : index
    %c0_3 = arith.constant 0 : index
    %4 = vector.load %arg3[%c0_2, %c0_3] : memref<2x256xbf16, #tpu.memory_space<vmem>>, vector<2x256xbf16>
    %c0_4 = arith.constant 0 : index
    %c0_5 = arith.constant 0 : index
    %5 = vector.load %arg4[%c0_4, %c0_5] : memref<256x512xbf16, #tpu.memory_space<vmem>>, vector<256x512xbf16>
    %cst = arith.constant dense<0.000000e+00> : vector<2x512xf32>
    %6 = tpu.matmul %4, %5, %cst {dimension_numbers = #tpu.dot_dimension_numbers<[1], [0], [0], [1], [0, 0, 1, 1], [], []>} : vector<2x256xbf16>, vector<256x512xbf16>, vector<2x512xf32> -> vector<2x512xf32>
    %7 = arith.addf %3, %6 : vector<2x512xf32>
    %c0_6 = arith.constant 0 : index
    %c0_7 = arith.constant 0 : index
    %8 = vector.load %arg7[%c0_6, %c0_7] : memref<2x512xf32, #tpu.memory_space<vmem>>, vector<2x512xf32>
    tpu.vector_store %arg7[%c0_6, %c0_7], %7 {strides = array<i32>} : memref<2x512xf32, #tpu.memory_space<vmem>>, vector<2x512xf32>,
    %c0_i32_8 = arith.constant 0 : i32
    %9 = arith.cmpi eq, %arg2, %c0_i32_8 : i32
    %10 = arith.extui %9 : i1 to i32
    %c0_i32_9 = arith.constant 0 : i32
    %11 = arith.cmpi ne, %10, %c0_i32_9 : i32
    scf.if %11 {
      %c0_10 = arith.constant 0 : index
      %c0_11 = arith.constant 0 : index
      %12 = vector.load %arg7[%c0_10, %c0_11] : memref<2x512xf32, #tpu.memory_space<vmem>>, vector<2x512xf32>
      %c0_12 = arith.constant 0 : index
      %c0_13 = arith.constant 0 : index
      %13 = vector.load %arg5[%c0_12, %c0_13] : memref<1x512xf32, #tpu.memory_space<vmem>>, vector<1x512xf32>
      %14 = vector.broadcast %13 : vector<1x512xf32> to vector<2x512xf32>
      %15 = arith.addf %12, %14 : vector<2x512xf32>
      %16 = arith.truncf %15 : vector<2x512xf32> to vector<2x512xbf16>
      %c0_14 = arith.constant 0 : index
      %c0_15 = arith.constant 0 : index
      %17 = vector.load %arg6[%c0_14, %c0_15] : memref<2x512xbf16, #tpu.memory_space<vmem>>, vector<2x512xbf16>
      tpu.vector_store %arg6[%c0_14, %c0_15], %16 {strides = array<i32>} : memref<2x512xbf16, #tpu.memory_space<vmem>>, vector<2x512xbf16>,
    } else {
    }
    return
  }
  func.func @transform_0(%arg0: i32, %arg1: i32, %arg2: i32) -> (i32, i32) {
    %c0_i32 = arith.constant 0 : i32
    return %arg0, %arg2 : i32, i32
  }
  func.func @transform_1(%arg0: i32, %arg1: i32, %arg2: i32) -> (i32, i32) {
    %c0_i32 = arith.constant 0 : i32
    return %arg2, %arg1 : i32, i32
  }
  func.func @transform_2(%arg0: i32, %arg1: i32, %arg2: i32) -> (i32, i32) {
    %c0_i32 = arith.constant 0 : i32
    %c0_i32_0 = arith.constant 0 : i32
    return %c0_i32, %arg1 : i32, i32
  }
  func.func @transform_3(%arg0: i32, %arg1: i32, %arg2: i32) -> (i32, i32) {
    %c0_i32 = arith.constant 0 : i32
    return %arg0, %arg1 : i32, i32
  }
}

module attributes {stable_mosaic.version = 11 : i64} {
  func.func @_fused_matmul_kernel(%arg0: i32, %arg1: i32, %arg2: i32, %arg3: memref<2x512xbf16, #tpu.memory_space<vmem>>, %arg4: memref<512x512xbf16, #tpu.memory_space<vmem>>, %arg5: memref<1x512xf32, #tpu.memory_space<vmem>>, %arg6: memref<2x512xbf16, #tpu.memory_space<vmem>>, %arg7: memref<2x512xbf16, #tpu.memory_space<vmem>>, %arg8: memref<2x512xf32, #tpu.memory_space<vmem>>) attributes {dimension_semantics = [#tpu.dimension_semantics<parallel>, #tpu.dimension_semantics<parallel>, #tpu.dimension_semantics<arbitrary>], iteration_bounds = array<i64: 1, 1, 9>, scalar_prefetch = 0 : i64, scratch_operands = 1 : i64, tpu.core_type = #tpu.core_type<tc>, window_params = [{transform_indices = @transform_0, window_bounds = array<i64: 2, 512>}, {transform_indices = @transform_1, window_bounds = array<i64: 512, 512>}, {transform_indices = @transform_2, window_bounds = array<i64: 1, 512>}, {transform_indices = @transform_3, window_bounds = array<i64: 2, 512>}, {transform_indices = @transform_4, window_bounds = array<i64: 2, 512>}]} {
    %c0_i32 = arith.constant 0 : i32
    %0 = arith.cmpi eq, %arg2, %c0_i32 : i32
    %1 = arith.extui %0 : i1 to i32
    %c0_i32_0 = arith.constant 0 : i32
    %2 = arith.cmpi ne, %1, %c0_i32_0 : i32
    scf.if %2 {
      %cst_9 = arith.constant 0.000000e+00 : f32
      %12 = vector.broadcast %cst_9 : f32 to vector<2x512xf32>
      %c0_10 = arith.constant 0 : index
      %c0_11 = arith.constant 0 : index
      %13 = vector.load %arg8[%c0_10, %c0_11] : memref<2x512xf32, #tpu.memory_space<vmem>>, vector<2x512xf32>
      tpu.vector_store %arg8[%c0_10, %c0_11], %12 {strides = array<i32>} : memref<2x512xf32, #tpu.memory_space<vmem>>, vector<2x512xf32>,
    } else {
    }
    %c0 = arith.constant 0 : index
    %c0_1 = arith.constant 0 : index
    %3 = vector.load %arg8[%c0, %c0_1] : memref<2x512xf32, #tpu.memory_space<vmem>>, vector<2x512xf32>
    %c0_2 = arith.constant 0 : index
    %c0_3 = arith.constant 0 : index
    %4 = vector.load %arg3[%c0_2, %c0_3] : memref<2x512xbf16, #tpu.memory_space<vmem>>, vector<2x512xbf16>
    %c0_4 = arith.constant 0 : index
    %c0_5 = arith.constant 0 : index
    %5 = vector.load %arg4[%c0_4, %c0_5] : memref<512x512xbf16, #tpu.memory_space<vmem>>, vector<512x512xbf16>
    %cst = arith.constant dense<0.000000e+00> : vector<2x512xf32>
    %6 = tpu.matmul %4, %5, %cst {dimension_numbers = #tpu.dot_dimension_numbers<[1], [0], [0], [1], [0, 0, 1, 1], [], []>} : vector<2x512xbf16>, vector<512x512xbf16>, vector<2x512xf32> -> vector<2x512xf32>
    %7 = arith.addf %3, %6 : vector<2x512xf32>
    %c0_6 = arith.constant 0 : index
    %c0_7 = arith.constant 0 : index
    %8 = vector.load %arg8[%c0_6, %c0_7] : memref<2x512xf32, #tpu.memory_space<vmem>>, vector<2x512xf32>
    tpu.vector_store %arg8[%c0_6, %c0_7], %7 {strides = array<i32>} : memref<2x512xf32, #tpu.memory_space<vmem>>, vector<2x512xf32>,
    %c8_i32 = arith.constant 8 : i32
    %9 = arith.cmpi eq, %arg2, %c8_i32 : i32
    %10 = arith.extui %9 : i1 to i32
    %c0_i32_8 = arith.constant 0 : i32
    %11 = arith.cmpi ne, %10, %c0_i32_8 : i32
    scf.if %11 {
      %c0_9 = arith.constant 0 : index
      %c0_10 = arith.constant 0 : index
      %12 = vector.load %arg8[%c0_9, %c0_10] : memref<2x512xf32, #tpu.memory_space<vmem>>, vector<2x512xf32>
      %c0_11 = arith.constant 0 : index
      %c0_12 = arith.constant 0 : index
      %13 = vector.load %arg5[%c0_11, %c0_12] : memref<1x512xf32, #tpu.memory_space<vmem>>, vector<1x512xf32>
      %14 = vector.broadcast %13 : vector<1x512xf32> to vector<2x512xf32>
      %15 = arith.addf %12, %14 : vector<2x512xf32>
      %c0_13 = arith.constant 0 : index
      %c0_14 = arith.constant 0 : index
      %16 = vector.load %arg6[%c0_13, %c0_14] : memref<2x512xbf16, #tpu.memory_space<vmem>>, vector<2x512xbf16>
      %17 = arith.extf %16 : vector<2x512xbf16> to vector<2x512xf32>
      %18 = arith.addf %15, %17 : vector<2x512xf32>
      %cst_15 = arith.constant 0.000000e+00 : f32
      %19 = vector.broadcast %cst_15 : f32 to vector<2x512xf32>
      %20 = arith.maximumf %18, %19 : vector<2x512xf32>
      %21 = arith.truncf %20 : vector<2x512xf32> to vector<2x512xbf16>
      %c0_16 = arith.constant 0 : index
      %c0_17 = arith.constant 0 : index
      %22 = vector.load %arg7[%c0_16, %c0_17] : memref<2x512xbf16, #tpu.memory_space<vmem>>, vector<2x512xbf16>
      tpu.vector_store %arg7[%c0_16, %c0_17], %21 {strides = array<i32>} : memref<2x512xbf16, #tpu.memory_space<vmem>>, vector<2x512xbf16>,
    } else {
    }
    return
  }
  func.func @transform_0(%arg0: i32, %arg1: i32, %arg2: i32) -> (i32, i32) {
    %c0_i32 = arith.constant 0 : i32
    return %arg0, %arg2 : i32, i32
  }
  func.func @transform_1(%arg0: i32, %arg1: i32, %arg2: i32) -> (i32, i32) {
    %c0_i32 = arith.constant 0 : i32
    return %arg2, %arg1 : i32, i32
  }
  func.func @transform_2(%arg0: i32, %arg1: i32, %arg2: i32) -> (i32, i32) {
    %c0_i32 = arith.constant 0 : i32
    %c0_i32_0 = arith.constant 0 : i32
    return %c0_i32, %arg1 : i32, i32
  }
  func.func @transform_3(%arg0: i32, %arg1: i32, %arg2: i32) -> (i32, i32) {
    %c0_i32 = arith.constant 0 : i32
    return %arg0, %arg1 : i32, i32
  }
  func.func @transform_4(%arg0: i32, %arg1: i32, %arg2: i32) -> (i32, i32) {
    %c0_i32 = arith.constant 0 : i32
    return %arg0, %arg1 : i32, i32
  }
}

module attributes {stable_mosaic.version = 11 : i64} {
  func.func @_fused_matmul_kernel(%arg0: i32, %arg1: i32, %arg2: i32, %arg3: memref<2x512xbf16, #tpu.memory_space<vmem>>, %arg4: memref<512x512xbf16, #tpu.memory_space<vmem>>, %arg5: memref<1x512xf32, #tpu.memory_space<vmem>>, %arg6: memref<2x512xbf16, #tpu.memory_space<vmem>>, %arg7: memref<2x512xf32, #tpu.memory_space<vmem>>) attributes {dimension_semantics = [#tpu.dimension_semantics<parallel>, #tpu.dimension_semantics<parallel>, #tpu.dimension_semantics<arbitrary>], iteration_bounds = array<i64: 1, 1, 9>, scalar_prefetch = 0 : i64, scratch_operands = 1 : i64, tpu.core_type = #tpu.core_type<tc>, window_params = [{transform_indices = @transform_0, window_bounds = array<i64: 2, 512>}, {transform_indices = @transform_1, window_bounds = array<i64: 512, 512>}, {transform_indices = @transform_2, window_bounds = array<i64: 1, 512>}, {transform_indices = @transform_3, window_bounds = array<i64: 2, 512>}]} {
    %c0_i32 = arith.constant 0 : i32
    %0 = arith.cmpi eq, %arg2, %c0_i32 : i32
    %1 = arith.extui %0 : i1 to i32
    %c0_i32_0 = arith.constant 0 : i32
    %2 = arith.cmpi ne, %1, %c0_i32_0 : i32
    scf.if %2 {
      %cst_9 = arith.constant 0.000000e+00 : f32
      %12 = vector.broadcast %cst_9 : f32 to vector<2x512xf32>
      %c0_10 = arith.constant 0 : index
      %c0_11 = arith.constant 0 : index
      %13 = vector.load %arg7[%c0_10, %c0_11] : memref<2x512xf32, #tpu.memory_space<vmem>>, vector<2x512xf32>
      tpu.vector_store %arg7[%c0_10, %c0_11], %12 {strides = array<i32>} : memref<2x512xf32, #tpu.memory_space<vmem>>, vector<2x512xf32>,
    } else {
    }
    %c0 = arith.constant 0 : index
    %c0_1 = arith.constant 0 : index
    %3 = vector.load %arg7[%c0, %c0_1] : memref<2x512xf32, #tpu.memory_space<vmem>>, vector<2x512xf32>
    %c0_2 = arith.constant 0 : index
    %c0_3 = arith.constant 0 : index
    %4 = vector.load %arg3[%c0_2, %c0_3] : memref<2x512xbf16, #tpu.memory_space<vmem>>, vector<2x512xbf16>
    %c0_4 = arith.constant 0 : index
    %c0_5 = arith.constant 0 : index
    %5 = vector.load %arg4[%c0_4, %c0_5] : memref<512x512xbf16, #tpu.memory_space<vmem>>, vector<512x512xbf16>
    %cst = arith.constant dense<0.000000e+00> : vector<2x512xf32>
    %6 = tpu.matmul %4, %5, %cst {dimension_numbers = #tpu.dot_dimension_numbers<[1], [0], [0], [1], [0, 0, 1, 1], [], []>} : vector<2x512xbf16>, vector<512x512xbf16>, vector<2x512xf32> -> vector<2x512xf32>
    %7 = arith.addf %3, %6 : vector<2x512xf32>
    %c0_6 = arith.constant 0 : index
    %c0_7 = arith.constant 0 : index
    %8 = vector.load %arg7[%c0_6, %c0_7] : memref<2x512xf32, #tpu.memory_space<vmem>>, vector<2x512xf32>
    tpu.vector_store %arg7[%c0_6, %c0_7], %7 {strides = array<i32>} : memref<2x512xf32, #tpu.memory_space<vmem>>, vector<2x512xf32>,
    %c8_i32 = arith.constant 8 : i32
    %9 = arith.cmpi eq, %arg2, %c8_i32 : i32
    %10 = arith.extui %9 : i1 to i32
    %c0_i32_8 = arith.constant 0 : i32
    %11 = arith.cmpi ne, %10, %c0_i32_8 : i32
    scf.if %11 {
      %c0_9 = arith.constant 0 : index
      %c0_10 = arith.constant 0 : index
      %12 = vector.load %arg7[%c0_9, %c0_10] : memref<2x512xf32, #tpu.memory_space<vmem>>, vector<2x512xf32>
      %c0_11 = arith.constant 0 : index
      %c0_12 = arith.constant 0 : index
      %13 = vector.load %arg5[%c0_11, %c0_12] : memref<1x512xf32, #tpu.memory_space<vmem>>, vector<1x512xf32>
      %14 = vector.broadcast %13 : vector<1x512xf32> to vector<2x512xf32>
      %15 = arith.addf %12, %14 : vector<2x512xf32>
      %cst_13 = arith.constant 0.000000e+00 : f32
      %16 = vector.broadcast %cst_13 : f32 to vector<2x512xf32>
      %17 = arith.maximumf %15, %16 : vector<2x512xf32>
      %18 = arith.truncf %17 : vector<2x512xf32> to vector<2x512xbf16>
      %c0_14 = arith.constant 0 : index
      %c0_15 = arith.constant 0 : index
      %19 = vector.load %arg6[%c0_14, %c0_15] : memref<2x512xbf16, #tpu.memory_space<vmem>>, vector<2x512xbf16>
      tpu.vector_store %arg6[%c0_14, %c0_15], %18 {strides = array<i32>} : memref<2x512xbf16, #tpu.memory_space<vmem>>, vector<2x512xbf16>,
    } else {
    }
    return
  }
  func.func @transform_0(%arg0: i32, %arg1: i32, %arg2: i32) -> (i32, i32) {
    %c0_i32 = arith.constant 0 : i32
    return %arg0, %arg2 : i32, i32
  }
  func.func @transform_1(%arg0: i32, %arg1: i32, %arg2: i32) -> (i32, i32) {
    %c0_i32 = arith.constant 0 : i32
    return %arg2, %arg1 : i32, i32
  }
  func.func @transform_2(%arg0: i32, %arg1: i32, %arg2: i32) -> (i32, i32) {
    %c0_i32 = arith.constant 0 : i32
    %c0_i32_0 = arith.constant 0 : i32
    return %c0_i32, %arg1 : i32, i32
  }
  func.func @transform_3(%arg0: i32, %arg1: i32, %arg2: i32) -> (i32, i32) {
    %c0_i32 = arith.constant 0 : i32
    return %arg0, %arg1 : i32, i32
  }
}

module attributes {stable_mosaic.version = 11 : i64} {
  func.func @_fused_matmul_kernel(%arg0: i32, %arg1: i32, %arg2: i32, %arg3: memref<2x512xbf16, #tpu.memory_space<vmem>>, %arg4: memref<512x128xbf16, #tpu.memory_space<vmem>>, %arg5: memref<1x128xf32, #tpu.memory_space<vmem>>, %arg6: memref<2x128xf32, #tpu.memory_space<vmem>>, %arg7: memref<2x128xf32, #tpu.memory_space<vmem>>) attributes {dimension_semantics = [#tpu.dimension_semantics<parallel>, #tpu.dimension_semantics<parallel>, #tpu.dimension_semantics<arbitrary>], iteration_bounds = array<i64: 1, 1, 1>, scalar_prefetch = 0 : i64, scratch_operands = 1 : i64, tpu.core_type = #tpu.core_type<tc>, window_params = [{transform_indices = @transform_0, window_bounds = array<i64: 2, 512>}, {transform_indices = @transform_1, window_bounds = array<i64: 512, 128>}, {transform_indices = @transform_2, window_bounds = array<i64: 1, 128>}, {transform_indices = @transform_3, window_bounds = array<i64: 2, 128>}]} {
    %c0_i32 = arith.constant 0 : i32
    %0 = arith.cmpi eq, %arg2, %c0_i32 : i32
    %1 = arith.extui %0 : i1 to i32
    %c0_i32_0 = arith.constant 0 : i32
    %2 = arith.cmpi ne, %1, %c0_i32_0 : i32
    scf.if %2 {
      %cst_10 = arith.constant 0.000000e+00 : f32
      %12 = vector.broadcast %cst_10 : f32 to vector<2x128xf32>
      %c0_11 = arith.constant 0 : index
      %c0_12 = arith.constant 0 : index
      %13 = vector.load %arg7[%c0_11, %c0_12] : memref<2x128xf32, #tpu.memory_space<vmem>>, vector<2x128xf32>
      tpu.vector_store %arg7[%c0_11, %c0_12], %12 {strides = array<i32>} : memref<2x128xf32, #tpu.memory_space<vmem>>, vector<2x128xf32>,
    } else {
    }
    %c0 = arith.constant 0 : index
    %c0_1 = arith.constant 0 : index
    %3 = vector.load %arg7[%c0, %c0_1] : memref<2x128xf32, #tpu.memory_space<vmem>>, vector<2x128xf32>
    %c0_2 = arith.constant 0 : index
    %c0_3 = arith.constant 0 : index
    %4 = vector.load %arg3[%c0_2, %c0_3] : memref<2x512xbf16, #tpu.memory_space<vmem>>, vector<2x512xbf16>
    %c0_4 = arith.constant 0 : index
    %c0_5 = arith.constant 0 : index
    %5 = vector.load %arg4[%c0_4, %c0_5] : memref<512x128xbf16, #tpu.memory_space<vmem>>, vector<512x128xbf16>
    %cst = arith.constant dense<0.000000e+00> : vector<2x128xf32>
    %6 = tpu.matmul %4, %5, %cst {dimension_numbers = #tpu.dot_dimension_numbers<[1], [0], [0], [1], [0, 0, 1, 1], [], []>} : vector<2x512xbf16>, vector<512x128xbf16>, vector<2x128xf32> -> vector<2x128xf32>
    %7 = arith.addf %3, %6 : vector<2x128xf32>
    %c0_6 = arith.constant 0 : index
    %c0_7 = arith.constant 0 : index
    %8 = vector.load %arg7[%c0_6, %c0_7] : memref<2x128xf32, #tpu.memory_space<vmem>>, vector<2x128xf32>
    tpu.vector_store %arg7[%c0_6, %c0_7], %7 {strides = array<i32>} : memref<2x128xf32, #tpu.memory_space<vmem>>, vector<2x128xf32>,
    %c0_i32_8 = arith.constant 0 : i32
    %9 = arith.cmpi eq, %arg2, %c0_i32_8 : i32
    %10 = arith.extui %9 : i1 to i32
    %c0_i32_9 = arith.constant 0 : i32
    %11 = arith.cmpi ne, %10, %c0_i32_9 : i32
    scf.if %11 {
      %c0_10 = arith.constant 0 : index
      %c0_11 = arith.constant 0 : index
      %12 = vector.load %arg7[%c0_10, %c0_11] : memref<2x128xf32, #tpu.memory_space<vmem>>, vector<2x128xf32>
      %c0_12 = arith.constant 0 : index
      %c0_13 = arith.constant 0 : index
      %13 = vector.load %arg5[%c0_12, %c0_13] : memref<1x128xf32, #tpu.memory_space<vmem>>, vector<1x128xf32>
      %14 = vector.broadcast %13 : vector<1x128xf32> to vector<2x128xf32>
      %15 = arith.addf %12, %14 : vector<2x128xf32>
      %c0_14 = arith.constant 0 : index
      %c0_15 = arith.constant 0 : index
      %16 = vector.load %arg6[%c0_14, %c0_15] : memref<2x128xf32, #tpu.memory_space<vmem>>, vector<2x128xf32>
      tpu.vector_store %arg6[%c0_14, %c0_15], %15 {strides = array<i32>} : memref<2x128xf32, #tpu.memory_space<vmem>>, vector<2x128xf32>,
    } else {
    }
    return
  }
  func.func @transform_0(%arg0: i32, %arg1: i32, %arg2: i32) -> (i32, i32) {
    %c0_i32 = arith.constant 0 : i32
    return %arg0, %arg2 : i32, i32
  }
  func.func @transform_1(%arg0: i32, %arg1: i32, %arg2: i32) -> (i32, i32) {
    %c0_i32 = arith.constant 0 : i32
    return %arg2, %arg1 : i32, i32
  }
  func.func @transform_2(%arg0: i32, %arg1: i32, %arg2: i32) -> (i32, i32) {
    %c0_i32 = arith.constant 0 : i32
    %c0_i32_0 = arith.constant 0 : i32
    return %c0_i32, %arg1 : i32, i32
  }
  func.func @transform_3(%arg0: i32, %arg1: i32, %arg2: i32) -> (i32, i32) {
    %c0_i32 = arith.constant 0 : i32
    return %arg0, %arg1 : i32, i32
  }
}

</mosaic_0001>

<llo_original>
// kernel: forward.25
$region0: #{forward.25}
  #allocation0 [shape = 'u32[]', space=smem, size = 0x4, offset = 0x4, fixed_abs, tag = 'smem constant byte address 0x4 - core index']
  #allocation1 [shape = 'u32[144,128]{1,0:T(1,128)}', space=vmem, size = 0x12000, scoped, tag = 'internal scratch']
  #allocation2 [shape = 'f32[128,128]{1,0:T(8,128)}', space=vmem, size = 0x10000, scoped, tag = 'scratch operand']
  %s0 = inlined_call_operand.vmem [shape: bf16[128,196], index: 0, kind: input, shape index: {}]
  %s1 = inlined_call_operand.vmem [shape: bf16[196,128], index: 1, kind: input, shape index: {}]
  %s2 = inlined_call_operand.vmem [shape: f32[1,128], index: 2, kind: input, shape index: {}]
  %s3 = inlined_call_operand.vmem [shape: bf16[128,128], index: 3, kind: output, shape index: {}]
  %s4 = sld [smem:[#allocation0]]
  $region30: #{forward.25} parent=0
    _
  %s6 = ssub.s32 1, %s4
  %s7 = scalar_select 0, %s6, %s4
  // Predicated region
  $region2: #{forward.25} parent=0 // pred_check
    _
  $region3: #{forward.25} parent=0 // pred_check_branch
    %9 = sbr.rel (0) target = $region5
  $region4: #{forward.25} parent=0 // pred_region
    _
  $region5: #{forward.25} parent=0 // pred_fallthru
    _
  // Predicated region
  $region6: #{forward.25} parent=0 // pred_check
    _
  $region7: #{forward.25} parent=0 // pred_check_branch
    %11 = sbr.rel (0) target = $region9
  $region8: #{forward.25} parent=0 // pred_region
    _
  $region9: #{forward.25} parent=0 // pred_fallthru
    _
  // Predicated region
  $region10: #{forward.25} parent=0 // pred_check
    _
  $region11: #{forward.25} parent=0 // pred_check_branch
    %13 = sbr.rel (0) target = $region13
  $region12: #{forward.25} parent=0 // pred_region
    _
  $region13: #{forward.25} parent=0 // pred_fallthru
    _
  %p15 = scmp.eq.s32.totalorder 0, 0
  // Predicated region
  $region14: #{forward.25} parent=0 // pred_check
    %p16 = pneg %p15
  $region15: #{forward.25} parent=0 // pred_check_branch
    %18 = sbr.rel (%p16) target = $region17
  $region16: #{forward.25} parent=0 // pred_region
    %19 = vst [vmem:[#allocation2] sm:$0xff] 0.0
    %20 = vst [vmem:[#allocation2 + $0x8] sm:$0xff] 0.0
    %21 = vst [vmem:[#allocation2 + $0x10] sm:$0xff] 0.0
    %22 = vst [vmem:[#allocation2 + $0x18] sm:$0xff] 0.0
    %23 = vst [vmem:[#allocation2 + $0x20] sm:$0xff] 0.0
    %24 = vst [vmem:[#allocation2 + $0x28] sm:$0xff] 0.0
    %25 = vst [vmem:[#allocation2 + $0x30] sm:$0xff] 0.0
    %26 = vst [vmem:[#allocation2 + $0x38] sm:$0xff] 0.0
    %27 = vst [vmem:[#allocation2 + $0x40] sm:$0xff] 0.0
    %28 = vst [vmem:[#allocation2 + $0x48] sm:$0xff] 0.0
    %29 = vst [vmem:[#allocation2 + $0x50] sm:$0xff] 0.0
    %30 = vst [vmem:[#allocation2 + $0x58] sm:$0xff] 0.0
    %31 = vst [vmem:[#allocation2 + $0x60] sm:$0xff] 0.0
    %32 = vst [vmem:[#allocation2 + $0x68] sm:$0xff] 0.0
    %33 = vst [vmem:[#allocation2 + $0x70] sm:$0xff] 0.0
    %34 = vst [vmem:[#allocation2 + $0x78] sm:$0xff] 0.0
  $region17: #{forward.25} parent=0 // pred_fallthru
    _
  %v35 = vld [vmem:[#allocation2] sm:$0xff]
  %v36 = vld [vmem:[#allocation2 + $0x8] sm:$0xff]
  %v37 = vld [vmem:[#allocation2 + $0x10] sm:$0xff]
  %v38 = vld [vmem:[#allocation2 + $0x18] sm:$0xff]
  %v39 = vld [vmem:[#allocation2 + $0x20] sm:$0xff]
  %v40 = vld [vmem:[#allocation2 + $0x28] sm:$0xff]
  %v41 = vld [vmem:[#allocation2 + $0x30] sm:$0xff]
  %v42 = vld [vmem:[#allocation2 + $0x38] sm:$0xff]
  %v43 = vld [vmem:[#allocation2 + $0x40] sm:$0xff]
  %v44 = vld [vmem:[#allocation2 + $0x48] sm:$0xff]
  %v45 = vld [vmem:[#allocation2 + $0x50] sm:$0xff]
  %v46 = vld [vmem:[#allocation2 + $0x58] sm:$0xff]
  %v47 = vld [vmem:[#allocation2 + $0x60] sm:$0xff]
  %v48 = vld [vmem:[#allocation2 + $0x68] sm:$0xff]
  %v49 = vld [vmem:[#allocation2 + $0x70] sm:$0xff]
  %v50 = vld [vmem:[#allocation2 + $0x78] sm:$0xff]
  %v51 = vld [vmem:[%s0] sm:$0xff]
  %v52 = vld [vmem:[%s0 + $0x8] sm:$0xff]
  %v53 = vld [vmem:[%s0 + $0x10] sm:$0xff]
  %v54 = vld [vmem:[%s0 + $0x18] sm:$0xff]
  %v55 = vld [vmem:[%s0 + $0x20] sm:$0xff]
  %v56 = vld [vmem:[%s0 + $0x28] sm:$0xff]
  %v57 = vld [vmem:[%s0 + $0x30] sm:$0xff]
  %v58 = vld [vmem:[%s0 + $0x38] sm:$0xff]
  %v59 = vld [vmem:[%s0 + $0x40] sm:$0xff]
  %v60 = vld [vmem:[%s0 + $0x48] sm:$0xff]
  %v61 = vld [vmem:[%s0 + $0x50] sm:$0xff]
  %v62 = vld [vmem:[%s0 + $0x58] sm:$0xff]
  %v63 = vld [vmem:[%s0 + $0x60] sm:$0xff]
  %v64 = vld [vmem:[%s0 + $0x68] sm:$0xff]
  %v65 = vld [vmem:[%s0 + $0x70] sm:$0xff]
  %v66 = vld [vmem:[%s0 + $0x78] sm:$0xff]
  %v67 = vld [vmem:[%s1] sm:$0xf]
  %v68 = vld [vmem:[%s1 + $0x4] sm:$0xf]
  %v69 = vld [vmem:[%s1 + $0x8] sm:$0xf]
  %v70 = vld [vmem:[%s1 + $0xc] sm:$0xf]
  %v71 = vld [vmem:[%s1 + $0x10] sm:$0xf]
  %v72 = vld [vmem:[%s1 + $0x14] sm:$0xf]
  %v73 = vld [vmem:[%s1 + $0x18] sm:$0xf]
  %v74 = vld [vmem:[%s1 + $0x1c] sm:$0xf]
  %v75 = vld [vmem:[%s1 + $0x20] sm:$0xf]
  %v76 = vld [vmem:[%s1 + $0x24] sm:$0xf]
  %v77 = vld [vmem:[%s1 + $0x28] sm:$0xf]
  %v78 = vld [vmem:[%s1 + $0x2c] sm:$0xf]
  %v79 = vld [vmem:[%s1 + $0x30] sm:$0xf]
  %v80 = vld [vmem:[%s1 + $0x34] sm:$0xf]
  %v81 = vld [vmem:[%s1 + $0x38] sm:$0xf]
  %v82 = vld [vmem:[%s1 + $0x3c] sm:$0xf]
  %v83 = vld [vmem:[%s1 + $0x40] sm:$0xf]
  %v84 = vld [vmem:[%s1 + $0x44] sm:$0xf]
  %v85 = vld [vmem:[%s1 + $0x48] sm:$0xf]
  %v86 = vld [vmem:[%s1 + $0x4c] sm:$0xf]
  %v87 = vld [vmem:[%s1 + $0x50] sm:$0xf]
  %v88 = vld [vmem:[%s1 + $0x54] sm:$0xf]
  %v89 = vld [vmem:[%s1 + $0x58] sm:$0xf]
  %v90 = vld [vmem:[%s1 + $0x5c] sm:$0xf]
  %v91 = vld [vmem:[%s1 + $0x60] sm:$0x3]
  %v108 = vunpack.c.l.b16 %v51
  %v109 = vunpack.c.h.b16 %v51
  %v110 = vunpack.c.l.b16 %v52
  %v111 = vunpack.c.h.b16 %v52
  %v112 = vunpack.c.l.b16 %v53
  %v113 = vunpack.c.h.b16 %v53
  %v114 = vunpack.c.l.b16 %v54
  %v115 = vunpack.c.h.b16 %v54
  %v116 = vunpack.c.l.b16 %v55
  %v117 = vunpack.c.h.b16 %v55
  %v118 = vunpack.c.l.b16 %v56
  %v119 = vunpack.c.h.b16 %v56
  %v120 = vunpack.c.l.b16 %v57
  %v121 = vunpack.c.h.b16 %v57
  %v122 = vunpack.c.l.b16 %v58
  %v123 = vunpack.c.h.b16 %v58
  %v124 = vunpack.c.l.b16 %v59
  %v125 = vunpack.c.h.b16 %v59
  %v126 = vunpack.c.l.b16 %v60
  %v127 = vunpack.c.h.b16 %v60
  %v128 = vunpack.c.l.b16 %v61
  %v129 = vunpack.c.h.b16 %v61
  %v130 = vunpack.c.l.b16 %v62
  %v131 = vunpack.c.h.b16 %v62
  %v132 = vunpack.c.l.b16 %v63
  %v133 = vunpack.c.h.b16 %v63
  %v134 = vunpack.c.l.b16 %v64
  %v135 = vunpack.c.h.b16 %v64
  %v136 = vunpack.c.l.b16 %v65
  %v137 = vunpack.c.h.b16 %v65
  %v138 = vunpack.c.l.b16 %v66
  %v139 = vunpack.c.h.b16 %v66
  %v140 = vpack.c.b16 %v110, %v108
  %v141 = vpack.c.b16 %v111, %v109
  %v142 = vpack.c.b16 %v114, %v112
  %v143 = vpack.c.b16 %v115, %v113
  %v144 = vpack.c.b16 %v118, %v116
  %v145 = vpack.c.b16 %v119, %v117
  %v146 = vpack.c.b16 %v122, %v120
  %v147 = vpack.c.b16 %v123, %v121
  %v148 = vpack.c.b16 %v126, %v124
  %v149 = vpack.c.b16 %v127, %v125
  %v150 = vpack.c.b16 %v130, %v128
  %v151 = vpack.c.b16 %v131, %v129
  %v152 = vpack.c.b16 %v134, %v132
  %v153 = vpack.c.b16 %v135, %v133
  %v154 = vpack.c.b16 %v138, %v136
  %v155 = vpack.c.b16 %v139, %v137
  %v189 = vunpack.c.l.b16 %v67
  %v190 = vunpack.c.l.b16 %v68
  %v191 = vunpack.c.l.b16 %v69
  %v192 = vunpack.c.l.b16 %v70
  %v193 = vunpack.c.l.b16 %v71
  %v194 = vunpack.c.l.b16 %v72
  %v195 = vunpack.c.l.b16 %v73
  %v196 = vunpack.c.l.b16 %v74
  %v197 = vunpack.c.l.b16 %v75
  %v198 = vunpack.c.l.b16 %v76
  %v199 = vunpack.c.l.b16 %v77
  %v200 = vunpack.c.l.b16 %v78
  %v201 = vunpack.c.l.b16 %v79
  %v202 = vunpack.c.l.b16 %v80
  %v203 = vunpack.c.l.b16 %v81
  %v204 = vunpack.c.l.b16 %v82
  %v205 = vunpack.c.l.b16 %v83
  %v206 = vunpack.c.l.b16 %v84
  %v207 = vunpack.c.l.b16 %v85
  %v208 = vunpack.c.l.b16 %v86
  %v209 = vunpack.c.l.b16 %v87
  %v210 = vunpack.c.l.b16 %v88
  %v211 = vunpack.c.l.b16 %v89
  %v212 = vunpack.c.l.b16 %v90
  %v213 = vunpack.c.l.b16 %v91
  %v214 = vpack.c.b16 %v190, %v189
  %v215 = vpack.c.b16 %v192, %v191
  %v216 = vpack.c.b16 %v194, %v193
  %v217 = vpack.c.b16 %v196, %v195
  %v218 = vpack.c.b16 %v198, %v197
  %v219 = vpack.c.b16 %v200, %v199
  %v220 = vpack.c.b16 %v202, %v201
  %v221 = vpack.c.b16 %v204, %v203
  %v222 = vpack.c.b16 %v206, %v205
  %v223 = vpack.c.b16 %v208, %v207
  %v224 = vpack.c.b16 %v210, %v209
  %v225 = vpack.c.b16 %v212, %v211
  %v226 = vpack.c.b16 %v213, %v213
  %vm239 = vcmask 556032
  %v241 = vsel %vm239, %v141, 0
  %v244 = vsel %vm239, %v143, 0
  %v247 = vsel %vm239, %v145, 0
  %v250 = vsel %vm239, %v147, 0
  %v253 = vsel %vm239, %v149, 0
  %v256 = vsel %vm239, %v151, 0
  %v259 = vsel %vm239, %v153, 0
  %v262 = vsel %vm239, %v155, 0
  %vm264 = vcmask 1041408
  %v266 = vsel %vm264, %v226, 0
  %268 = vmatprep.subr.bf16.mxu0 0
  %269 = vmatpush1.bf16.msra.mxu0 %v214
  %270 = vmatprep.subr.bf16.mxu0 0
  %271 = vmatpush1.bf16.msra.mxu0 %v215
  %272 = vmatprep.subr.bf16.mxu0 0
  %273 = vmatpush1.bf16.msra.mxu0 %v216
  %274 = vmatprep.subr.bf16.mxu0 0
  %275 = vmatpush1.bf16.msra.mxu0 %v217
  %276 = vmatprep.subr.bf16.mxu0 0
  %277 = vmatpush1.bf16.msra.mxu0 %v218
  %278 = vmatprep.subr.bf16.mxu0 0
  %279 = vmatpush1.bf16.msra.mxu0 %v219
  %280 = vmatprep.subr.bf16.mxu0 0
  %281 = vmatpush1.bf16.msra.mxu0 %v220
  %282 = vmatprep.subr.bf16.mxu0 0
  %283 = vmatpush1.bf16.msra.mxu0 %v221
  %284 = vmatprep.subr.bf16.mxu0 0
  %285 = vmatpush1.bf16.msra.mxu0 %v222
  %286 = vmatprep.subr.bf16.mxu0 0
  %287 = vmatpush1.bf16.msra.mxu0 %v223
  %288 = vmatprep.subr.bf16.mxu0 0
  %289 = vmatpush1.bf16.msra.mxu0 %v224
  %290 = vmatprep.subr.bf16.mxu0 0
  %291 = vmatpush1.bf16.msra.mxu0 %v225
  %292 = vmatprep.subr.bf16.mxu0 0
  %293 = vmatpush1.bf16.msra.mxu0 %v266
  %294 = vmatprep.subr.bf16.mxu0 0
  %295 = vmatpush1.bf16.msra.mxu0 0
  %296 = vmatprep.subr.bf16.mxu0 0
  %297 = vmatpush1.bf16.msra.mxu0 0
  %298 = vmatprep.subr.bf16.mxu0 0
  %299 = vmatpush1.bf16.msra.mxu0 0
  %300 = vmatprep.mubr.bf16.mxu0 %v241
  %301 = vmatmul.mubr.bf16.gmra.mrb[0].mxu0 %v140
  %v302 = vpop.f32.mrb[0].mxu0
  %v303 = vadd.f32 0.0, %v302
  %v304 = vpop.f32.mrb[0].mxu0
  %v305 = vpop.f32.mrb[0].mxu0
  %v306 = vadd.f32 0.0, %v305
  %v307 = vpop.f32.mrb[0].mxu0
  %308 = vmatprep.mubr.bf16.mxu0 %v244
  %309 = vmatmul.mubr.bf16.gmra.mrb[0].mxu0 %v142
  %v310 = vpop.f32.mrb[0].mxu0
  %v311 = vadd.f32 0.0, %v310
  %v312 = vpop.f32.mrb[0].mxu0
  %v313 = vpop.f32.mrb[0].mxu0
  %v314 = vadd.f32 0.0, %v313
  %v315 = vpop.f32.mrb[0].mxu0
  %316 = vmatprep.mubr.bf16.mxu0 %v247
  %317 = vmatmul.mubr.bf16.gmra.mrb[0].mxu0 %v144
  %v318 = vpop.f32.mrb[0].mxu0
  %v319 = vadd.f32 0.0, %v318
  %v320 = vpop.f32.mrb[0].mxu0
  %v321 = vpop.f32.mrb[0].mxu0
  %v322 = vadd.f32 0.0, %v321
  %v323 = vpop.f32.mrb[0].mxu0
  %324 = vmatprep.mubr.bf16.mxu0 %v250
  %325 = vmatmul.mubr.bf16.gmra.mrb[0].mxu0 %v146
  %v326 = vpop.f32.mrb[0].mxu0
  %v327 = vadd.f32 0.0, %v326
  %v328 = vpop.f32.mrb[0].mxu0
  %v329 = vpop.f32.mrb[0].mxu0
  %v330 = vadd.f32 0.0, %v329
  %v331 = vpop.f32.mrb[0].mxu0
  %332 = vmatprep.mubr.bf16.mxu0 %v253
  %333 = vmatmul.mubr.bf16.gmra.mrb[0].mxu0 %v148
  %v334 = vpop.f32.mrb[0].mxu0
  %v335 = vadd.f32 0.0, %v334
  %v336 = vpop.f32.mrb[0].mxu0
  %v337 = vpop.f32.mrb[0].mxu0
  %v338 = vadd.f32 0.0, %v337
  %v339 = vpop.f32.mrb[0].mxu0
  %340 = vmatprep.mubr.bf16.mxu0 %v256
  %341 = vmatmul.mubr.bf16.gmra.mrb[0].mxu0 %v150
  %v342 = vpop.f32.mrb[0].mxu0
  %v343 = vadd.f32 0.0, %v342
  %v344 = vpop.f32.mrb[0].mxu0
  %v345 = vpop.f32.mrb[0].mxu0
  %v346 = vadd.f32 0.0, %v345
  %v347 = vpop.f32.mrb[0].mxu0
  %348 = vmatprep.mubr.bf16.mxu0 %v259
  %349 = vmatmul.mubr.bf16.gmra.mrb[0].mxu0 %v152
  %v350 = vpop.f32.mrb[0].mxu0
  %v351 = vadd.f32 0.0, %v350
  %v352 = vpop.f32.mrb[0].mxu0
  %v353 = vpop.f32.mrb[0].mxu0
  %v354 = vadd.f32 0.0, %v353
  %v355 = vpop.f32.mrb[0].mxu0
  %356 = vmatprep.mubr.bf16.mxu0 %v262
  %357 = vmatmul.mubr.bf16.gmra.mrb[0].mxu0 %v154
  %v358 = vpop.f32.mrb[0].mxu0
  %v359 = vadd.f32 0.0, %v358
  %v360 = vpop.f32.mrb[0].mxu0
  %v361 = vpop.f32.mrb[0].mxu0
  %v362 = vadd.f32 0.0, %v361
  %v363 = vpop.f32.mrb[0].mxu0
  %364 = vdwg.mxu0
  %v365 = vadd.f32 %v35, %v303
  %v366 = vadd.f32 %v36, %v306
  %v367 = vadd.f32 %v37, %v311
  %v368 = vadd.f32 %v38, %v314
  %v369 = vadd.f32 %v39, %v319
  %v370 = vadd.f32 %v40, %v322
  %v371 = vadd.f32 %v41, %v327
  %v372 = vadd.f32 %v42, %v330
  %v373 = vadd.f32 %v43, %v335
  %v374 = vadd.f32 %v44, %v338
  %v375 = vadd.f32 %v45, %v343
  %v376 = vadd.f32 %v46, %v346
  %v377 = vadd.f32 %v47, %v351
  %v378 = vadd.f32 %v48, %v354
  %v379 = vadd.f32 %v49, %v359
  %v380 = vadd.f32 %v50, %v362
  %381 = vst [vmem:[#allocation2] sm:$0xff] %v365
  %382 = vst [vmem:[#allocation2 + $0x8] sm:$0xff] %v366
  %383 = vst [vmem:[#allocation2 + $0x10] sm:$0xff] %v367
  %384 = vst [vmem:[#allocation2 + $0x18] sm:$0xff] %v368
  %385 = vst [vmem:[#allocation2 + $0x20] sm:$0xff] %v369
  %386 = vst [vmem:[#allocation2 + $0x28] sm:$0xff] %v370
  %387 = vst [vmem:[#allocation2 + $0x30] sm:$0xff] %v371
  %388 = vst [vmem:[#allocation2 + $0x38] sm:$0xff] %v372
  %389 = vst [vmem:[#allocation2 + $0x40] sm:$0xff] %v373
  %390 = vst [vmem:[#allocation2 + $0x48] sm:$0xff] %v374
  %391 = vst [vmem:[#allocation2 + $0x50] sm:$0xff] %v375
  %392 = vst [vmem:[#allocation2 + $0x58] sm:$0xff] %v376
  %393 = vst [vmem:[#allocation2 + $0x60] sm:$0xff] %v377
  %394 = vst [vmem:[#allocation2 + $0x68] sm:$0xff] %v378
  %395 = vst [vmem:[#allocation2 + $0x70] sm:$0xff] %v379
  %396 = vst [vmem:[#allocation2 + $0x78] sm:$0xff] %v380
  // Predicated region
  $region18: #{forward.25} parent=0 // pred_check
    %p397 = pneg %p15
  $region19: #{forward.25} parent=0 // pred_check_branch
    %399 = sbr.rel (%p397) target = $region21
  $region20: #{forward.25} parent=0 // pred_region
    %v400 = vld [vmem:[#allocation2] sm:$0xff]
    %v401 = vld [vmem:[#allocation2 + $0x8] sm:$0xff]
    %v402 = vld [vmem:[#allocation2 + $0x10] sm:$0xff]
    %v403 = vld [vmem:[#allocation2 + $0x18] sm:$0xff]
    %v404 = vld [vmem:[#allocation2 + $0x20] sm:$0xff]
    %v405 = vld [vmem:[#allocation2 + $0x28] sm:$0xff]
    %v406 = vld [vmem:[#allocation2 + $0x30] sm:$0xff]
    %v407 = vld [vmem:[#allocation2 + $0x38] sm:$0xff]
    %v408 = vld [vmem:[#allocation2 + $0x40] sm:$0xff]
    %v409 = vld [vmem:[#allocation2 + $0x48] sm:$0xff]
    %v410 = vld [vmem:[#allocation2 + $0x50] sm:$0xff]
    %v411 = vld [vmem:[#allocation2 + $0x58] sm:$0xff]
    %v412 = vld [vmem:[#allocation2 + $0x60] sm:$0xff]
    %v413 = vld [vmem:[#allocation2 + $0x68] sm:$0xff]
    %v414 = vld [vmem:[#allocation2 + $0x70] sm:$0xff]
    %v415 = vld [vmem:[#allocation2 + $0x78] sm:$0xff]
    %v416 = vld [vmem:[%s2] sm:$0x1]
    %v418 = vlaneseq
    %v419 = vshrl.u32 %v418, 7
    %v420 = vsub.s32 0, %v419
    %v421 = vrot.slane %v416, %v420
    %v423 = vadd.f32 %v400, %v421
    %v424 = vadd.f32 %v401, %v421
    %v425 = vadd.f32 %v402, %v421
    %v426 = vadd.f32 %v403, %v421
    %v427 = vadd.f32 %v404, %v421
    %v428 = vadd.f32 %v405, %v421
    %v429 = vadd.f32 %v406, %v421
    %v430 = vadd.f32 %v407, %v421
    %v431 = vadd.f32 %v408, %v421
    %v432 = vadd.f32 %v409, %v421
    %v433 = vadd.f32 %v410, %v421
    %v434 = vadd.f32 %v411, %v421
    %v435 = vadd.f32 %v412, %v421
    %v436 = vadd.f32 %v413, %v421
    %v437 = vadd.f32 %v414, %v421
    %v438 = vadd.f32 %v415, %v421
    %v439 = vmax.f32 %v423, 0.0
    %v440 = vmax.f32 %v424, 0.0
    %v441 = vmax.f32 %v425, 0.0
    %v442 = vmax.f32 %v426, 0.0
    %v443 = vmax.f32 %v427, 0.0
    %v444 = vmax.f32 %v428, 0.0
    %v445 = vmax.f32 %v429, 0.0
    %v446 = vmax.f32 %v430, 0.0
    %v447 = vmax.f32 %v431, 0.0
    %v448 = vmax.f32 %v432, 0.0
    %v449 = vmax.f32 %v433, 0.0
    %v450 = vmax.f32 %v434, 0.0
    %v451 = vmax.f32 %v435, 0.0
    %v452 = vmax.f32 %v436, 0.0
    %v453 = vmax.f32 %v437, 0.0
    %v454 = vmax.f32 %v438, 0.0
    %v455 = vpack.c.bf16 %v440, %v439
    %v456 = vpack.c.bf16 %v442, %v441
    %v457 = vpack.c.bf16 %v444, %v443
    %v458 = vpack.c.bf16 %v446, %v445
    %v459 = vpack.c.bf16 %v448, %v447
    %v460 = vpack.c.bf16 %v450, %v449
    %v461 = vpack.c.bf16 %v452, %v451
    %v462 = vpack.c.bf16 %v454, %v453
    %v471 = vunpack.c.l.b16 %v455
    %v472 = vunpack.c.h.b16 %v455
    %v473 = vunpack.c.l.b16 %v456
    %v474 = vunpack.c.h.b16 %v456
    %v475 = vunpack.c.l.b16 %v457
    %v476 = vunpack.c.h.b16 %v457
    %v477 = vunpack.c.l.b16 %v458
    %v478 = vunpack.c.h.b16 %v458
    %v479 = vunpack.c.l.b16 %v459
    %v480 = vunpack.c.h.b16 %v459
    %v481 = vunpack.c.l.b16 %v460
    %v482 = vunpack.c.h.b16 %v460
    %v483 = vunpack.c.l.b16 %v461
    %v484 = vunpack.c.h.b16 %v461
    %v485 = vunpack.c.l.b16 %v462
    %v486 = vunpack.c.h.b16 %v462
    %v487 = vpack.c.b16 %v471, %v471
    %v488 = vpack.c.b16 %v472, %v472
    %v489 = vpack.c.b16 %v473, %v473
    %v490 = vpack.c.b16 %v474, %v474
    %v491 = vpack.c.b16 %v475, %v475
    %v492 = vpack.c.b16 %v476, %v476
    %v493 = vpack.c.b16 %v477, %v477
    %v494 = vpack.c.b16 %v478, %v478
    %v495 = vpack.c.b16 %v479, %v479
    %v496 = vpack.c.b16 %v480, %v480
    %v497 = vpack.c.b16 %v481, %v481
    %v498 = vpack.c.b16 %v482, %v482
    %v499 = vpack.c.b16 %v483, %v483
    %v500 = vpack.c.b16 %v484, %v484
    %v501 = vpack.c.b16 %v485, %v485
    %v502 = vpack.c.b16 %v486, %v486
    %519 = vst [vmem:[%s3] sm:$0xf] %v487
    %520 = vst [vmem:[%s3 + $0x4] sm:$0xf] %v488
    %521 = vst [vmem:[%s3 + $0x8] sm:$0xf] %v489
    %522 = vst [vmem:[%s3 + $0xc] sm:$0xf] %v490
    %523 = vst [vmem:[%s3 + $0x10] sm:$0xf] %v491
    %524 = vst [vmem:[%s3 + $0x14] sm:$0xf] %v492
    %525 = vst [vmem:[%s3 + $0x18] sm:$0xf] %v493
    %526 = vst [vmem:[%s3 + $0x1c] sm:$0xf] %v494
    %527 = vst [vmem:[%s3 + $0x20] sm:$0xf] %v495
    %528 = vst [vmem:[%s3 + $0x24] sm:$0xf] %v496
    %529 = vst [vmem:[%s3 + $0x28] sm:$0xf] %v497
    %530 = vst [vmem:[%s3 + $0x2c] sm:$0xf] %v498
    %531 = vst [vmem:[%s3 + $0x30] sm:$0xf] %v499
    %532 = vst [vmem:[%s3 + $0x34] sm:$0xf] %v500
    %533 = vst [vmem:[%s3 + $0x38] sm:$0xf] %v501
    %534 = vst [vmem:[%s3 + $0x3c] sm:$0xf] %v502
  $region21: #{forward.25} parent=0 // pred_fallthru
    _
  // Predicated region
  $region22: #{forward.25} parent=0 // pred_check
    _
  $region23: #{forward.25} parent=0 // pred_check_branch
    %536 = sbr.rel (0) target = $region25
  $region24: #{forward.25} parent=0 // pred_region
    _
  $region25: #{forward.25} parent=0 // pred_fallthru
    _
  // Predicated region
  $region26: #{forward.25} parent=0 // pred_check
    _
  $region27: #{forward.25} parent=0 // pred_check_branch
    %538 = sbr.rel (0) target = $region29
  $region28: #{forward.25} parent=0 // pred_region
    _
  $region29: #{forward.25} parent=0 // pred_fallthru
    _

// kernel: forward.26
$region0: #{forward.26}
  #allocation0 [shape = 'u32[]', space=smem, size = 0x4, offset = 0x4, fixed_abs, tag = 'smem constant byte address 0x4 - core index']
  #allocation1 [shape = 'u32[144,128]{1,0:T(1,128)}', space=vmem, size = 0x12000, scoped, tag = 'internal scratch']
  #allocation2 [shape = 'f32[32,128]{1,0:T(8,128)}', space=vmem, size = 0x4000, scoped, tag = 'scratch operand']
  %s0 = inlined_call_operand.vmem [shape: bf16[32,576], index: 0, kind: input, shape index: {}]
  %s1 = inlined_call_operand.vmem [shape: bf16[576,128], index: 1, kind: input, shape index: {}]
  %s2 = inlined_call_operand.vmem [shape: f32[1,128], index: 2, kind: input, shape index: {}]
  %s3 = inlined_call_operand.vmem [shape: bf16[32,128], index: 3, kind: output, shape index: {}]
  %s4 = sld [smem:[#allocation0]]
  $region30: #{forward.26} parent=0
    _
  %s6 = ssub.s32 1, %s4
  %s7 = scalar_select 0, %s6, %s4
  // Predicated region
  $region2: #{forward.26} parent=0 // pred_check
    _
  $region3: #{forward.26} parent=0 // pred_check_branch
    %9 = sbr.rel (0) target = $region5
  $region4: #{forward.26} parent=0 // pred_region
    _
  $region5: #{forward.26} parent=0 // pred_fallthru
    _
  // Predicated region
  $region6: #{forward.26} parent=0 // pred_check
    _
  $region7: #{forward.26} parent=0 // pred_check_branch
    %11 = sbr.rel (0) target = $region9
  $region8: #{forward.26} parent=0 // pred_region
    _
  $region9: #{forward.26} parent=0 // pred_fallthru
    _
  // Predicated region
  $region10: #{forward.26} parent=0 // pred_check
    _
  $region11: #{forward.26} parent=0 // pred_check_branch
    %13 = sbr.rel (0) target = $region13
  $region12: #{forward.26} parent=0 // pred_region
    _
  $region13: #{forward.26} parent=0 // pred_fallthru
    _
  %p15 = scmp.eq.s32.totalorder 0, 0
  // Predicated region
  $region14: #{forward.26} parent=0 // pred_check
    %p16 = pneg %p15
  $region15: #{forward.26} parent=0 // pred_check_branch
    %18 = sbr.rel (%p16) target = $region17
  $region16: #{forward.26} parent=0 // pred_region
    %19 = vst [vmem:[#allocation2] sm:$0xff] 0.0
    %20 = vst [vmem:[#allocation2 + $0x8] sm:$0xff] 0.0
    %21 = vst [vmem:[#allocation2 + $0x10] sm:$0xff] 0.0
    %22 = vst [vmem:[#allocation2 + $0x18] sm:$0xff] 0.0
  $region17: #{forward.26} parent=0 // pred_fallthru
    _
  %v23 = vld [vmem:[#allocation2] sm:$0xff]
  %v24 = vld [vmem:[#allocation2 + $0x8] sm:$0xff]
  %v25 = vld [vmem:[#allocation2 + $0x10] sm:$0xff]
  %v26 = vld [vmem:[#allocation2 + $0x18] sm:$0xff]
  %v27 = vld [vmem:[%s0] sm:$0xff]
  %v28 = vld [vmem:[%s0 + $0x8] sm:$0xff]
  %v29 = vld [vmem:[%s0 + $0x10] sm:$0xf]
  %v30 = vld [vmem:[%s0 + $0x14] sm:$0xff]
  %v31 = vld [vmem:[%s0 + $0x1c] sm:$0xff]
  %v32 = vld [vmem:[%s0 + $0x24] sm:$0xf]
  %v33 = vld [vmem:[%s0 + $0x28] sm:$0xff]
  %v34 = vld [vmem:[%s0 + $0x30] sm:$0xff]
  %v35 = vld [vmem:[%s0 + $0x38] sm:$0xf]
  %v36 = vld [vmem:[%s0 + $0x3c] sm:$0xff]
  %v37 = vld [vmem:[%s0 + $0x44] sm:$0xff]
  %v38 = vld [vmem:[%s0 + $0x4c] sm:$0xf]
  %v39 = vld [vmem:[%s1] sm:$0xf]
  %v40 = vld [vmem:[%s1 + $0x4] sm:$0xf]
  %v41 = vld [vmem:[%s1 + $0x8] sm:$0xf]
  %v42 = vld [vmem:[%s1 + $0xc] sm:$0xf]
  %v43 = vld [vmem:[%s1 + $0x10] sm:$0xf]
  %v44 = vld [vmem:[%s1 + $0x14] sm:$0xf]
  %v45 = vld [vmem:[%s1 + $0x18] sm:$0xf]
  %v46 = vld [vmem:[%s1 + $0x1c] sm:$0xf]
  %v47 = vld [vmem:[%s1 + $0x20] sm:$0xf]
  %v48 = vld [vmem:[%s1 + $0x24] sm:$0xf]
  %v49 = vld [vmem:[%s1 + $0x28] sm:$0xf]
  %v50 = vld [vmem:[%s1 + $0x2c] sm:$0xf]
  %v51 = vld [vmem:[%s1 + $0x30] sm:$0xf]
  %v52 = vld [vmem:[%s1 + $0x34] sm:$0xf]
  %v53 = vld [vmem:[%s1 + $0x38] sm:$0xf]
  %v54 = vld [vmem:[%s1 + $0x3c] sm:$0xf]
  %v55 = vld [vmem:[%s1 + $0x40] sm:$0xf]
  %v56 = vld [vmem:[%s1 + $0x44] sm:$0xf]
  %v57 = vld [vmem:[%s1 + $0x48] sm:$0xf]
  %v58 = vld [vmem:[%s1 + $0x4c] sm:$0xf]
  %v59 = vld [vmem:[%s1 + $0x50] sm:$0xf]
  %v60 = vld [vmem:[%s1 + $0x54] sm:$0xf]
  %v61 = vld [vmem:[%s1 + $0x58] sm:$0xf]
  %v62 = vld [vmem:[%s1 + $0x5c] sm:$0xf]
  %v63 = vld [vmem:[%s1 + $0x60] sm:$0xf]
  %v64 = vld [vmem:[%s1 + $0x64] sm:$0xf]
  %v65 = vld [vmem:[%s1 + $0x68] sm:$0xf]
  %v66 = vld [vmem:[%s1 + $0x6c] sm:$0xf]
  %v67 = vld [vmem:[%s1 + $0x70] sm:$0xf]
  %v68 = vld [vmem:[%s1 + $0x74] sm:$0xf]
  %v69 = vld [vmem:[%s1 + $0x78] sm:$0xf]
  %v70 = vld [vmem:[%s1 + $0x7c] sm:$0xf]
  %v71 = vld [vmem:[%s1 + $0x80] sm:$0xf]
  %v72 = vld [vmem:[%s1 + $0x84] sm:$0xf]
  %v73 = vld [vmem:[%s1 + $0x88] sm:$0xf]
  %v74 = vld [vmem:[%s1 + $0x8c] sm:$0xf]
  %v75 = vld [vmem:[%s1 + $0x90] sm:$0xf]
  %v76 = vld [vmem:[%s1 + $0x94] sm:$0xf]
  %v77 = vld [vmem:[%s1 + $0x98] sm:$0xf]
  %v78 = vld [vmem:[%s1 + $0x9c] sm:$0xf]
  %v79 = vld [vmem:[%s1 + $0xa0] sm:$0xf]
  %v80 = vld [vmem:[%s1 + $0xa4] sm:$0xf]
  %v81 = vld [vmem:[%s1 + $0xa8] sm:$0xf]
  %v82 = vld [vmem:[%s1 + $0xac] sm:$0xf]
  %v83 = vld [vmem:[%s1 + $0xb0] sm:$0xf]
  %v84 = vld [vmem:[%s1 + $0xb4] sm:$0xf]
  %v85 = vld [vmem:[%s1 + $0xb8] sm:$0xf]
  %v86 = vld [vmem:[%s1 + $0xbc] sm:$0xf]
  %v87 = vld [vmem:[%s1 + $0xc0] sm:$0xf]
  %v88 = vld [vmem:[%s1 + $0xc4] sm:$0xf]
  %v89 = vld [vmem:[%s1 + $0xc8] sm:$0xf]
  %v90 = vld [vmem:[%s1 + $0xcc] sm:$0xf]
  %v91 = vld [vmem:[%s1 + $0xd0] sm:$0xf]
  %v92 = vld [vmem:[%s1 + $0xd4] sm:$0xf]
  %v93 = vld [vmem:[%s1 + $0xd8] sm:$0xf]
  %v94 = vld [vmem:[%s1 + $0xdc] sm:$0xf]
  %v95 = vld [vmem:[%s1 + $0xe0] sm:$0xf]
  %v96 = vld [vmem:[%s1 + $0xe4] sm:$0xf]
  %v97 = vld [vmem:[%s1 + $0xe8] sm:$0xf]
  %v98 = vld [vmem:[%s1 + $0xec] sm:$0xf]
  %v99 = vld [vmem:[%s1 + $0xf0] sm:$0xf]
  %v100 = vld [vmem:[%s1 + $0xf4] sm:$0xf]
  %v101 = vld [vmem:[%s1 + $0xf8] sm:$0xf]
  %v102 = vld [vmem:[%s1 + $0xfc] sm:$0xf]
  %v103 = vld [vmem:[%s1 + $0x100] sm:$0xf]
  %v104 = vld [vmem:[%s1 + $0x104] sm:$0xf]
  %v105 = vld [vmem:[%s1 + $0x108] sm:$0xf]
  %v106 = vld [vmem:[%s1 + $0x10c] sm:$0xf]
  %v107 = vld [vmem:[%s1 + $0x110] sm:$0xf]
  %v108 = vld [vmem:[%s1 + $0x114] sm:$0xf]
  %v109 = vld [vmem:[%s1 + $0x118] sm:$0xf]
  %v110 = vld [vmem:[%s1 + $0x11c] sm:$0xf]
  %v123 = vunpack.c.l.b16 %v27
  %v124 = vunpack.c.h.b16 %v27
  %v125 = vunpack.c.l.b16 %v28
  %v126 = vunpack.c.h.b16 %v28
  %v127 = vunpack.c.l.b16 %v29
  %v128 = vunpack.c.l.b16 %v30
  %v129 = vunpack.c.h.b16 %v30
  %v130 = vunpack.c.l.b16 %v31
  %v131 = vunpack.c.h.b16 %v31
  %v132 = vunpack.c.l.b16 %v32
  %v133 = vunpack.c.l.b16 %v33
  %v134 = vunpack.c.h.b16 %v33
  %v135 = vunpack.c.l.b16 %v34
  %v136 = vunpack.c.h.b16 %v34
  %v137 = vunpack.c.l.b16 %v35
  %v138 = vunpack.c.l.b16 %v36
  %v139 = vunpack.c.h.b16 %v36
  %v140 = vunpack.c.l.b16 %v37
  %v141 = vunpack.c.h.b16 %v37
  %v142 = vunpack.c.l.b16 %v38
  %v143 = vpack.c.b16 %v128, %v123
  %v144 = vpack.c.b16 %v129, %v124
  %v145 = vpack.c.b16 %v130, %v125
  %v146 = vpack.c.b16 %v131, %v126
  %v147 = vpack.c.b16 %v132, %v127
  %v148 = vpack.c.b16 %v138, %v133
  %v149 = vpack.c.b16 %v139, %v134
  %v150 = vpack.c.b16 %v140, %v135
  %v151 = vpack.c.b16 %v141, %v136
  %v152 = vpack.c.b16 %v142, %v137
  %v233 = vunpack.c.l.b16 %v39
  %v234 = vunpack.c.l.b16 %v40
  %v235 = vunpack.c.l.b16 %v41
  %v236 = vunpack.c.l.b16 %v42
  %v237 = vunpack.c.l.b16 %v43
  %v238 = vunpack.c.l.b16 %v44
  %v239 = vunpack.c.l.b16 %v45
  %v240 = vunpack.c.l.b16 %v46
  %v241 = vunpack.c.l.b16 %v47
  %v242 = vunpack.c.l.b16 %v48
  %v243 = vunpack.c.l.b16 %v49
  %v244 = vunpack.c.l.b16 %v50
  %v245 = vunpack.c.l.b16 %v51
  %v246 = vunpack.c.l.b16 %v52
  %v247 = vunpack.c.l.b16 %v53
  %v248 = vunpack.c.l.b16 %v54
  %v249 = vunpack.c.l.b16 %v55
  %v250 = vunpack.c.l.b16 %v56
  %v251 = vunpack.c.l.b16 %v57
  %v252 = vunpack.c.l.b16 %v58
  %v253 = vunpack.c.l.b16 %v59
  %v254 = vunpack.c.l.b16 %v60
  %v255 = vunpack.c.l.b16 %v61
  %v256 = vunpack.c.l.b16 %v62
  %v257 = vunpack.c.l.b16 %v63
  %v258 = vunpack.c.l.b16 %v64
  %v259 = vunpack.c.l.b16 %v65
  %v260 = vunpack.c.l.b16 %v66
  %v261 = vunpack.c.l.b16 %v67
  %v262 = vunpack.c.l.b16 %v68
  %v263 = vunpack.c.l.b16 %v69
  %v264 = vunpack.c.l.b16 %v70
  %v265 = vunpack.c.l.b16 %v71
  %v266 = vunpack.c.l.b16 %v72
  %v267 = vunpack.c.l.b16 %v73
  %v268 = vunpack.c.l.b16 %v74
  %v269 = vunpack.c.l.b16 %v75
  %v270 = vunpack.c.l.b16 %v76
  %v271 = vunpack.c.l.b16 %v77
  %v272 = vunpack.c.l.b16 %v78
  %v273 = vunpack.c.l.b16 %v79
  %v274 = vunpack.c.l.b16 %v80
  %v275 = vunpack.c.l.b16 %v81
  %v276 = vunpack.c.l.b16 %v82
  %v277 = vunpack.c.l.b16 %v83
  %v278 = vunpack.c.l.b16 %v84
  %v279 = vunpack.c.l.b16 %v85
  %v280 = vunpack.c.l.b16 %v86
  %v281 = vunpack.c.l.b16 %v87
  %v282 = vunpack.c.l.b16 %v88
  %v283 = vunpack.c.l.b16 %v89
  %v284 = vunpack.c.l.b16 %v90
  %v285 = vunpack.c.l.b16 %v91
  %v286 = vunpack.c.l.b16 %v92
  %v287 = vunpack.c.l.b16 %v93
  %v288 = vunpack.c.l.b16 %v94
  %v289 = vunpack.c.l.b16 %v95
  %v290 = vunpack.c.l.b16 %v96
  %v291 = vunpack.c.l.b16 %v97
  %v292 = vunpack.c.l.b16 %v98
  %v293 = vunpack.c.l.b16 %v99
  %v294 = vunpack.c.l.b16 %v100
  %v295 = vunpack.c.l.b16 %v101
  %v296 = vunpack.c.l.b16 %v102
  %v297 = vunpack.c.l.b16 %v103
  %v298 = vunpack.c.l.b16 %v104
  %v299 = vunpack.c.l.b16 %v105
  %v300 = vunpack.c.l.b16 %v106
  %v301 = vunpack.c.l.b16 %v107
  %v302 = vunpack.c.l.b16 %v108
  %v303 = vunpack.c.l.b16 %v109
  %v304 = vunpack.c.l.b16 %v110
  %v305 = vpack.c.b16 %v234, %v233
  %v306 = vpack.c.b16 %v236, %v235
  %v307 = vpack.c.b16 %v238, %v237
  %v308 = vpack.c.b16 %v240, %v239
  %v309 = vpack.c.b16 %v242, %v241
  %v310 = vpack.c.b16 %v244, %v243
  %v311 = vpack.c.b16 %v246, %v245
  %v312 = vpack.c.b16 %v248, %v247
  %v313 = vpack.c.b16 %v250, %v249
  %v314 = vpack.c.b16 %v252, %v251
  %v315 = vpack.c.b16 %v254, %v253
  %v316 = vpack.c.b16 %v256, %v255
  %v317 = vpack.c.b16 %v258, %v257
  %v318 = vpack.c.b16 %v260, %v259
  %v319 = vpack.c.b16 %v262, %v261
  %v320 = vpack.c.b16 %v264, %v263
  %v321 = vpack.c.b16 %v266, %v265
  %v322 = vpack.c.b16 %v268, %v267
  %v323 = vpack.c.b16 %v270, %v269
  %v324 = vpack.c.b16 %v272, %v271
  %v325 = vpack.c.b16 %v274, %v273
  %v326 = vpack.c.b16 %v276, %v275
  %v327 = vpack.c.b16 %v278, %v277
  %v328 = vpack.c.b16 %v280, %v279
  %v329 = vpack.c.b16 %v282, %v281
  %v330 = vpack.c.b16 %v284, %v283
  %v331 = vpack.c.b16 %v286, %v285
  %v332 = vpack.c.b16 %v288, %v287
  %v333 = vpack.c.b16 %v290, %v289
  %v334 = vpack.c.b16 %v292, %v291
  %v335 = vpack.c.b16 %v294, %v293
  %v336 = vpack.c.b16 %v296, %v295
  %v337 = vpack.c.b16 %v298, %v297
  %v338 = vpack.c.b16 %v300, %v299
  %v339 = vpack.c.b16 %v302, %v301
  %v340 = vpack.c.b16 %v304, %v303
  %vm377 = vcmask 523264
  %v379 = vsel %vm377, %v147, 0
  %v382 = vsel %vm377, %v152, 0
  %384 = vmatprep.subr.bf16.mxu0 0
  %385 = vmatpush1.bf16.msra.mxu0 %v305
  %386 = vmatprep.subr.bf16.mxu0 0
  %387 = vmatpush1.bf16.msra.mxu0 %v306
  %388 = vmatprep.subr.bf16.mxu0 0
  %389 = vmatpush1.bf16.msra.mxu0 %v307
  %390 = vmatprep.subr.bf16.mxu0 0
  %391 = vmatpush1.bf16.msra.mxu0 %v308
  %392 = vmatprep.subr.bf16.mxu0 0
  %393 = vmatpush1.bf16.msra.mxu0 %v309
  %394 = vmatprep.subr.bf16.mxu0 0
  %395 = vmatpush1.bf16.msra.mxu0 %v310
  %396 = vmatprep.subr.bf16.mxu0 0
  %397 = vmatpush1.bf16.msra.mxu0 %v311
  %398 = vmatprep.subr.bf16.mxu0 0
  %399 = vmatpush1.bf16.msra.mxu0 %v312
  %400 = vmatprep.subr.bf16.mxu0 0
  %401 = vmatpush1.bf16.msra.mxu0 %v313
  %402 = vmatprep.subr.bf16.mxu0 0
  %403 = vmatpush1.bf16.msra.mxu0 %v314
  %404 = vmatprep.subr.bf16.mxu0 0
  %405 = vmatpush1.bf16.msra.mxu0 %v315
  %406 = vmatprep.subr.bf16.mxu0 0
  %407 = vmatpush1.bf16.msra.mxu0 %v316
  %408 = vmatprep.subr.bf16.mxu0 0
  %409 = vmatpush1.bf16.msra.mxu0 %v317
  %410 = vmatprep.subr.bf16.mxu0 0
  %411 = vmatpush1.bf16.msra.mxu0 %v318
  %412 = vmatprep.subr.bf16.mxu0 0
  %413 = vmatpush1.bf16.msra.mxu0 %v319
  %414 = vmatprep.subr.bf16.mxu0 0
  %415 = vmatpush1.bf16.msra.mxu0 %v320
  %416 = vmatprep.mubr.bf16.mxu0 %v144
  %417 = vmatmul.mubr.bf16.gmra.mrb[0].mxu0 %v143
  %v418 = vpop.f32.mrb[0].mxu0
  %v419 = vadd.f32 0.0, %v418
  %v420 = vpop.f32.mrb[0].mxu0
  %v421 = vpop.f32.mrb[0].mxu0
  %v422 = vadd.f32 0.0, %v421
  %v423 = vpop.f32.mrb[0].mxu0
  %424 = vmatprep.mubr.bf16.mxu0 %v149
  %425 = vmatmul.mubr.bf16.gmra.mrb[0].mxu0 %v148
  %v426 = vpop.f32.mrb[0].mxu0
  %v427 = vadd.f32 0.0, %v426
  %v428 = vpop.f32.mrb[0].mxu0
  %v429 = vpop.f32.mrb[0].mxu0
  %v430 = vadd.f32 0.0, %v429
  %v431 = vpop.f32.mrb[0].mxu0
  %432 = vdwg.mxu0
  %433 = vmatprep.subr.bf16.mxu0 0
  %434 = vmatpush1.bf16.msra.mxu0 %v321
  %435 = vmatprep.subr.bf16.mxu0 0
  %436 = vmatpush1.bf16.msra.mxu0 %v322
  %437 = vmatprep.subr.bf16.mxu0 0
  %438 = vmatpush1.bf16.msra.mxu0 %v323
  %439 = vmatprep.subr.bf16.mxu0 0
  %440 = vmatpush1.bf16.msra.mxu0 %v324
  %441 = vmatprep.subr.bf16.mxu0 0
  %442 = vmatpush1.bf16.msra.mxu0 %v325
  %443 = vmatprep.subr.bf16.mxu0 0
  %444 = vmatpush1.bf16.msra.mxu0 %v326
  %445 = vmatprep.subr.bf16.mxu0 0
  %446 = vmatpush1.bf16.msra.mxu0 %v327
  %447 = vmatprep.subr.bf16.mxu0 0
  %448 = vmatpush1.bf16.msra.mxu0 %v328
  %449 = vmatprep.subr.bf16.mxu0 0
  %450 = vmatpush1.bf16.msra.mxu0 %v329
  %451 = vmatprep.subr.bf16.mxu0 0
  %452 = vmatpush1.bf16.msra.mxu0 %v330
  %453 = vmatprep.subr.bf16.mxu0 0
  %454 = vmatpush1.bf16.msra.mxu0 %v331
  %455 = vmatprep.subr.bf16.mxu0 0
  %456 = vmatpush1.bf16.msra.mxu0 %v332
  %457 = vmatprep.subr.bf16.mxu0 0
  %458 = vmatpush1.bf16.msra.mxu0 %v333
  %459 = vmatprep.subr.bf16.mxu0 0
  %460 = vmatpush1.bf16.msra.mxu0 %v334
  %461 = vmatprep.subr.bf16.mxu0 0
  %462 = vmatpush1.bf16.msra.mxu0 %v335
  %463 = vmatprep.subr.bf16.mxu0 0
  %464 = vmatpush1.bf16.msra.mxu0 %v336
  %465 = vmatprep.mubr.bf16.mxu0 %v146
  %466 = vmatmul.mubr.bf16.gmra.mrb[0].mxu0 %v145
  %v467 = vpop.f32.mrb[0].mxu0
  %v468 = vadd.f32 %v419, %v467
  %v469 = vpop.f32.mrb[0].mxu0
  %v470 = vpop.f32.mrb[0].mxu0
  %v471 = vadd.f32 %v422, %v470
  %v472 = vpop.f32.mrb[0].mxu0
  %473 = vmatprep.mubr.bf16.mxu0 %v151
  %474 = vmatmul.mubr.bf16.gmra.mrb[0].mxu0 %v150
  %v475 = vpop.f32.mrb[0].mxu0
  %v476 = vadd.f32 %v427, %v475
  %v477 = vpop.f32.mrb[0].mxu0
  %v478 = vpop.f32.mrb[0].mxu0
  %v479 = vadd.f32 %v430, %v478
  %v480 = vpop.f32.mrb[0].mxu0
  %481 = vdwg.mxu0
  %482 = vmatprep.subr.bf16.mxu0 0
  %483 = vmatpush1.bf16.msra.mxu0 %v337
  %484 = vmatprep.subr.bf16.mxu0 0
  %485 = vmatpush1.bf16.msra.mxu0 %v338
  %486 = vmatprep.subr.bf16.mxu0 0
  %487 = vmatpush1.bf16.msra.mxu0 %v339
  %488 = vmatprep.subr.bf16.mxu0 0
  %489 = vmatpush1.bf16.msra.mxu0 %v340
  %490 = vmatprep.subr.bf16.mxu0 0
  %491 = vmatpush1.bf16.msra.mxu0 0
  %492 = vmatprep.subr.bf16.mxu0 0
  %493 = vmatpush1.bf16.msra.mxu0 0
  %494 = vmatprep.subr.bf16.mxu0 0
  %495 = vmatpush1.bf16.msra.mxu0 0
  %496 = vmatprep.subr.bf16.mxu0 0
  %497 = vmatpush1.bf16.msra.mxu0 0
  %498 = vmatprep.subr.bf16.mxu0 0
  %499 = vmatpush1.bf16.msra.mxu0 0
  %500 = vmatprep.subr.bf16.mxu0 0
  %501 = vmatpush1.bf16.msra.mxu0 0
  %502 = vmatprep.subr.bf16.mxu0 0
  %503 = vmatpush1.bf16.msra.mxu0 0
  %504 = vmatprep.subr.bf16.mxu0 0
  %505 = vmatpush1.bf16.msra.mxu0 0
  %506 = vmatprep.subr.bf16.mxu0 0
  %507 = vmatpush1.bf16.msra.mxu0 0
  %508 = vmatprep.subr.bf16.mxu0 0
  %509 = vmatpush1.bf16.msra.mxu0 0
  %510 = vmatprep.subr.bf16.mxu0 0
  %511 = vmatpush1.bf16.msra.mxu0 0
  %512 = vmatprep.subr.bf16.mxu0 0
  %513 = vmatpush1.bf16.msra.mxu0 0
  %514 = vmatprep.mubr.bf16.mxu0 0
  %515 = vmatmul.mubr.bf16.gmra.mrb[0].mxu0 %v379
  %v516 = vpop.f32.mrb[0].mxu0
  %v517 = vadd.f32 %v468, %v516
  %v518 = vpop.f32.mrb[0].mxu0
  %v519 = vpop.f32.mrb[0].mxu0
  %v520 = vadd.f32 %v471, %v519
  %v521 = vpop.f32.mrb[0].mxu0
  %522 = vmatprep.mubr.bf16.mxu0 0
  %523 = vmatmul.mubr.bf16.gmra.mrb[0].mxu0 %v382
  %v524 = vpop.f32.mrb[0].mxu0
  %v525 = vadd.f32 %v476, %v524
  %v526 = vpop.f32.mrb[0].mxu0
  %v527 = vpop.f32.mrb[0].mxu0
  %v528 = vadd.f32 %v479, %v527
  %v529 = vpop.f32.mrb[0].mxu0
  %530 = vdwg.mxu0
  %v531 = vadd.f32 %v23, %v517
  %v532 = vadd.f32 %v24, %v520
  %v533 = vadd.f32 %v25, %v525
  %v534 = vadd.f32 %v26, %v528
  %535 = vst [vmem:[#allocation2] sm:$0xff] %v531
  %536 = vst [vmem:[#allocation2 + $0x8] sm:$0xff] %v532
  %537 = vst [vmem:[#allocation2 + $0x10] sm:$0xff] %v533
  %538 = vst [vmem:[#allocation2 + $0x18] sm:$0xff] %v534
  // Predicated region
  $region18: #{forward.26} parent=0 // pred_check
    %p539 = pneg %p15
  $region19: #{forward.26} parent=0 // pred_check_branch
    %541 = sbr.rel (%p539) target = $region21
  $region20: #{forward.26} parent=0 // pred_region
    %v542 = vld [vmem:[#allocation2] sm:$0xff]
    %v543 = vld [vmem:[#allocation2 + $0x8] sm:$0xff]
    %v544 = vld [vmem:[#allocation2 + $0x10] sm:$0xff]
    %v545 = vld [vmem:[#allocation2 + $0x18] sm:$0xff]
    %v546 = vld [vmem:[%s2] sm:$0x1]
    %v548 = vlaneseq
    %v549 = vshrl.u32 %v548, 7
    %v550 = vsub.s32 0, %v549
    %v551 = vrot.slane %v546, %v550
    %v553 = vadd.f32 %v542, %v551
    %v554 = vadd.f32 %v543, %v551
    %v555 = vadd.f32 %v544, %v551
    %v556 = vadd.f32 %v545, %v551
    %v557 = vmax.f32 %v553, 0.0
    %v558 = vmax.f32 %v554, 0.0
    %v559 = vmax.f32 %v555, 0.0
    %v560 = vmax.f32 %v556, 0.0
    %v561 = vpack.c.bf16 %v558, %v557
    %v562 = vpack.c.bf16 %v560, %v559
    %v565 = vunpack.c.l.b16 %v561
    %v566 = vunpack.c.h.b16 %v561
    %v567 = vunpack.c.l.b16 %v562
    %v568 = vunpack.c.h.b16 %v562
    %v569 = vpack.c.b16 %v565, %v565
    %v570 = vpack.c.b16 %v566, %v566
    %v571 = vpack.c.b16 %v567, %v567
    %v572 = vpack.c.b16 %v568, %v568
    %577 = vst [vmem:[%s3] sm:$0xf] %v569
    %578 = vst [vmem:[%s3 + $0x4] sm:$0xf] %v570
    %579 = vst [vmem:[%s3 + $0x8] sm:$0xf] %v571
    %580 = vst [vmem:[%s3 + $0xc] sm:$0xf] %v572
  $region21: #{forward.26} parent=0 // pred_fallthru
    _
  // Predicated region
  $region22: #{forward.26} parent=0 // pred_check
    _
  $region23: #{forward.26} parent=0 // pred_check_branch
    %582 = sbr.rel (0) target = $region25
  $region24: #{forward.26} parent=0 // pred_region
    _
  $region25: #{forward.26} parent=0 // pred_fallthru
    _
  // Predicated region
  $region26: #{forward.26} parent=0 // pred_check
    _
  $region27: #{forward.26} parent=0 // pred_check_branch
    %584 = sbr.rel (0) target = $region29
  $region28: #{forward.26} parent=0 // pred_region
    _
  $region29: #{forward.26} parent=0 // pred_fallthru
    _

// kernel: forward.27
$region0: #{forward.27}
  #allocation0 [shape = 'u32[]', space=smem, size = 0x4, offset = 0x4, fixed_abs, tag = 'smem constant byte address 0x4 - core index']
  #allocation1 [shape = 'u32[144,128]{1,0:T(1,128)}', space=vmem, size = 0x12000, scoped, tag = 'internal scratch']
  #allocation2 [shape = 'f32[32,128]{1,0:T(8,128)}', space=vmem, size = 0x4000, scoped, tag = 'scratch operand']
  %s0 = inlined_call_operand.vmem [shape: bf16[32,576], index: 0, kind: input, shape index: {}]
  %s1 = inlined_call_operand.vmem [shape: bf16[576,128], index: 1, kind: input, shape index: {}]
  %s2 = inlined_call_operand.vmem [shape: f32[1,128], index: 2, kind: input, shape index: {}]
  %s3 = inlined_call_operand.vmem [shape: bf16[32,128], index: 3, kind: input, shape index: {}]
  %s4 = inlined_call_operand.vmem [shape: bf16[32,128], index: 4, kind: output, shape index: {}]
  %s5 = sld [smem:[#allocation0]]
  $region34: #{forward.27} parent=0
    _
  %s7 = ssub.s32 1, %s5
  %s8 = scalar_select 0, %s7, %s5
  // Predicated region
  $region2: #{forward.27} parent=0 // pred_check
    _
  $region3: #{forward.27} parent=0 // pred_check_branch
    %10 = sbr.rel (0) target = $region5
  $region4: #{forward.27} parent=0 // pred_region
    _
  $region5: #{forward.27} parent=0 // pred_fallthru
    _
  // Predicated region
  $region6: #{forward.27} parent=0 // pred_check
    _
  $region7: #{forward.27} parent=0 // pred_check_branch
    %12 = sbr.rel (0) target = $region9
  $region8: #{forward.27} parent=0 // pred_region
    _
  $region9: #{forward.27} parent=0 // pred_fallthru
    _
  // Predicated region
  $region10: #{forward.27} parent=0 // pred_check
    _
  $region11: #{forward.27} parent=0 // pred_check_branch
    %14 = sbr.rel (0) target = $region13
  $region12: #{forward.27} parent=0 // pred_region
    _
  $region13: #{forward.27} parent=0 // pred_fallthru
    _
  // Predicated region
  $region14: #{forward.27} parent=0 // pred_check
    _
  $region15: #{forward.27} parent=0 // pred_check_branch
    %16 = sbr.rel (0) target = $region17
  $region16: #{forward.27} parent=0 // pred_region
    _
  $region17: #{forward.27} parent=0 // pred_fallthru
    _
  %p18 = scmp.eq.s32.totalorder 0, 0
  // Predicated region
  $region18: #{forward.27} parent=0 // pred_check
    %p19 = pneg %p18
  $region19: #{forward.27} parent=0 // pred_check_branch
    %21 = sbr.rel (%p19) target = $region21
  $region20: #{forward.27} parent=0 // pred_region
    %22 = vst [vmem:[#allocation2] sm:$0xff] 0.0
    %23 = vst [vmem:[#allocation2 + $0x8] sm:$0xff] 0.0
    %24 = vst [vmem:[#allocation2 + $0x10] sm:$0xff] 0.0
    %25 = vst [vmem:[#allocation2 + $0x18] sm:$0xff] 0.0
  $region21: #{forward.27} parent=0 // pred_fallthru
    _
  %v26 = vld [vmem:[#allocation2] sm:$0xff]
  %v27 = vld [vmem:[#allocation2 + $0x8] sm:$0xff]
  %v28 = vld [vmem:[#allocation2 + $0x10] sm:$0xff]
  %v29 = vld [vmem:[#allocation2 + $0x18] sm:$0xff]
  %v30 = vld [vmem:[%s0] sm:$0xff]
  %v31 = vld [vmem:[%s0 + $0x8] sm:$0xff]
  %v32 = vld [vmem:[%s0 + $0x10] sm:$0xf]
  %v33 = vld [vmem:[%s0 + $0x14] sm:$0xff]
  %v34 = vld [vmem:[%s0 + $0x1c] sm:$0xff]
  %v35 = vld [vmem:[%s0 + $0x24] sm:$0xf]
  %v36 = vld [vmem:[%s0 + $0x28] sm:$0xff]
  %v37 = vld [vmem:[%s0 + $0x30] sm:$0xff]
  %v38 = vld [vmem:[%s0 + $0x38] sm:$0xf]
  %v39 = vld [vmem:[%s0 + $0x3c] sm:$0xff]
  %v40 = vld [vmem:[%s0 + $0x44] sm:$0xff]
  %v41 = vld [vmem:[%s0 + $0x4c] sm:$0xf]
  %v42 = vld [vmem:[%s1] sm:$0xf]
  %v43 = vld [vmem:[%s1 + $0x4] sm:$0xf]
  %v44 = vld [vmem:[%s1 + $0x8] sm:$0xf]
  %v45 = vld [vmem:[%s1 + $0xc] sm:$0xf]
  %v46 = vld [vmem:[%s1 + $0x10] sm:$0xf]
  %v47 = vld [vmem:[%s1 + $0x14] sm:$0xf]
  %v48 = vld [vmem:[%s1 + $0x18] sm:$0xf]
  %v49 = vld [vmem:[%s1 + $0x1c] sm:$0xf]
  %v50 = vld [vmem:[%s1 + $0x20] sm:$0xf]
  %v51 = vld [vmem:[%s1 + $0x24] sm:$0xf]
  %v52 = vld [vmem:[%s1 + $0x28] sm:$0xf]
  %v53 = vld [vmem:[%s1 + $0x2c] sm:$0xf]
  %v54 = vld [vmem:[%s1 + $0x30] sm:$0xf]
  %v55 = vld [vmem:[%s1 + $0x34] sm:$0xf]
  %v56 = vld [vmem:[%s1 + $0x38] sm:$0xf]
  %v57 = vld [vmem:[%s1 + $0x3c] sm:$0xf]
  %v58 = vld [vmem:[%s1 + $0x40] sm:$0xf]
  %v59 = vld [vmem:[%s1 + $0x44] sm:$0xf]
  %v60 = vld [vmem:[%s1 + $0x48] sm:$0xf]
  %v61 = vld [vmem:[%s1 + $0x4c] sm:$0xf]
  %v62 = vld [vmem:[%s1 + $0x50] sm:$0xf]
  %v63 = vld [vmem:[%s1 + $0x54] sm:$0xf]
  %v64 = vld [vmem:[%s1 + $0x58] sm:$0xf]
  %v65 = vld [vmem:[%s1 + $0x5c] sm:$0xf]
  %v66 = vld [vmem:[%s1 + $0x60] sm:$0xf]
  %v67 = vld [vmem:[%s1 + $0x64] sm:$0xf]
  %v68 = vld [vmem:[%s1 + $0x68] sm:$0xf]
  %v69 = vld [vmem:[%s1 + $0x6c] sm:$0xf]
  %v70 = vld [vmem:[%s1 + $0x70] sm:$0xf]
  %v71 = vld [vmem:[%s1 + $0x74] sm:$0xf]
  %v72 = vld [vmem:[%s1 + $0x78] sm:$0xf]
  %v73 = vld [vmem:[%s1 + $0x7c] sm:$0xf]
  %v74 = vld [vmem:[%s1 + $0x80] sm:$0xf]
  %v75 = vld [vmem:[%s1 + $0x84] sm:$0xf]
  %v76 = vld [vmem:[%s1 + $0x88] sm:$0xf]
  %v77 = vld [vmem:[%s1 + $0x8c] sm:$0xf]
  %v78 = vld [vmem:[%s1 + $0x90] sm:$0xf]
  %v79 = vld [vmem:[%s1 + $0x94] sm:$0xf]
  %v80 = vld [vmem:[%s1 + $0x98] sm:$0xf]
  %v81 = vld [vmem:[%s1 + $0x9c] sm:$0xf]
  %v82 = vld [vmem:[%s1 + $0xa0] sm:$0xf]
  %v83 = vld [vmem:[%s1 + $0xa4] sm:$0xf]
  %v84 = vld [vmem:[%s1 + $0xa8] sm:$0xf]
  %v85 = vld [vmem:[%s1 + $0xac] sm:$0xf]
  %v86 = vld [vmem:[%s1 + $0xb0] sm:$0xf]
  %v87 = vld [vmem:[%s1 + $0xb4] sm:$0xf]
  %v88 = vld [vmem:[%s1 + $0xb8] sm:$0xf]
  %v89 = vld [vmem:[%s1 + $0xbc] sm:$0xf]
  %v90 = vld [vmem:[%s1 + $0xc0] sm:$0xf]
  %v91 = vld [vmem:[%s1 + $0xc4] sm:$0xf]
  %v92 = vld [vmem:[%s1 + $0xc8] sm:$0xf]
  %v93 = vld [vmem:[%s1 + $0xcc] sm:$0xf]
  %v94 = vld [vmem:[%s1 + $0xd0] sm:$0xf]
  %v95 = vld [vmem:[%s1 + $0xd4] sm:$0xf]
  %v96 = vld [vmem:[%s1 + $0xd8] sm:$0xf]
  %v97 = vld [vmem:[%s1 + $0xdc] sm:$0xf]
  %v98 = vld [vmem:[%s1 + $0xe0] sm:$0xf]
  %v99 = vld [vmem:[%s1 + $0xe4] sm:$0xf]
  %v100 = vld [vmem:[%s1 + $0xe8] sm:$0xf]
  %v101 = vld [vmem:[%s1 + $0xec] sm:$0xf]
  %v102 = vld [vmem:[%s1 + $0xf0] sm:$0xf]
  %v103 = vld [vmem:[%s1 + $0xf4] sm:$0xf]
  %v104 = vld [vmem:[%s1 + $0xf8] sm:$0xf]
  %v105 = vld [vmem:[%s1 + $0xfc] sm:$0xf]
  %v106 = vld [vmem:[%s1 + $0x100] sm:$0xf]
  %v107 = vld [vmem:[%s1 + $0x104] sm:$0xf]
  %v108 = vld [vmem:[%s1 + $0x108] sm:$0xf]
  %v109 = vld [vmem:[%s1 + $0x10c] sm:$0xf]
  %v110 = vld [vmem:[%s1 + $0x110] sm:$0xf]
  %v111 = vld [vmem:[%s1 + $0x114] sm:$0xf]
  %v112 = vld [vmem:[%s1 + $0x118] sm:$0xf]
  %v113 = vld [vmem:[%s1 + $0x11c] sm:$0xf]
  %v126 = vunpack.c.l.b16 %v30
  %v127 = vunpack.c.h.b16 %v30
  %v128 = vunpack.c.l.b16 %v31
  %v129 = vunpack.c.h.b16 %v31
  %v130 = vunpack.c.l.b16 %v32
  %v131 = vunpack.c.l.b16 %v33
  %v132 = vunpack.c.h.b16 %v33
  %v133 = vunpack.c.l.b16 %v34
  %v134 = vunpack.c.h.b16 %v34
  %v135 = vunpack.c.l.b16 %v35
  %v136 = vunpack.c.l.b16 %v36
  %v137 = vunpack.c.h.b16 %v36
  %v138 = vunpack.c.l.b16 %v37
  %v139 = vunpack.c.h.b16 %v37
  %v140 = vunpack.c.l.b16 %v38
  %v141 = vunpack.c.l.b16 %v39
  %v142 = vunpack.c.h.b16 %v39
  %v143 = vunpack.c.l.b16 %v40
  %v144 = vunpack.c.h.b16 %v40
  %v145 = vunpack.c.l.b16 %v41
  %v146 = vpack.c.b16 %v131, %v126
  %v147 = vpack.c.b16 %v132, %v127
  %v148 = vpack.c.b16 %v133, %v128
  %v149 = vpack.c.b16 %v134, %v129
  %v150 = vpack.c.b16 %v135, %v130
  %v151 = vpack.c.b16 %v141, %v136
  %v152 = vpack.c.b16 %v142, %v137
  %v153 = vpack.c.b16 %v143, %v138
  %v154 = vpack.c.b16 %v144, %v139
  %v155 = vpack.c.b16 %v145, %v140
  %v236 = vunpack.c.l.b16 %v42
  %v237 = vunpack.c.l.b16 %v43
  %v238 = vunpack.c.l.b16 %v44
  %v239 = vunpack.c.l.b16 %v45
  %v240 = vunpack.c.l.b16 %v46
  %v241 = vunpack.c.l.b16 %v47
  %v242 = vunpack.c.l.b16 %v48
  %v243 = vunpack.c.l.b16 %v49
  %v244 = vunpack.c.l.b16 %v50
  %v245 = vunpack.c.l.b16 %v51
  %v246 = vunpack.c.l.b16 %v52
  %v247 = vunpack.c.l.b16 %v53
  %v248 = vunpack.c.l.b16 %v54
  %v249 = vunpack.c.l.b16 %v55
  %v250 = vunpack.c.l.b16 %v56
  %v251 = vunpack.c.l.b16 %v57
  %v252 = vunpack.c.l.b16 %v58
  %v253 = vunpack.c.l.b16 %v59
  %v254 = vunpack.c.l.b16 %v60
  %v255 = vunpack.c.l.b16 %v61
  %v256 = vunpack.c.l.b16 %v62
  %v257 = vunpack.c.l.b16 %v63
  %v258 = vunpack.c.l.b16 %v64
  %v259 = vunpack.c.l.b16 %v65
  %v260 = vunpack.c.l.b16 %v66
  %v261 = vunpack.c.l.b16 %v67
  %v262 = vunpack.c.l.b16 %v68
  %v263 = vunpack.c.l.b16 %v69
  %v264 = vunpack.c.l.b16 %v70
  %v265 = vunpack.c.l.b16 %v71
  %v266 = vunpack.c.l.b16 %v72
  %v267 = vunpack.c.l.b16 %v73
  %v268 = vunpack.c.l.b16 %v74
  %v269 = vunpack.c.l.b16 %v75
  %v270 = vunpack.c.l.b16 %v76
  %v271 = vunpack.c.l.b16 %v77
  %v272 = vunpack.c.l.b16 %v78
  %v273 = vunpack.c.l.b16 %v79
  %v274 = vunpack.c.l.b16 %v80
  %v275 = vunpack.c.l.b16 %v81
  %v276 = vunpack.c.l.b16 %v82
  %v277 = vunpack.c.l.b16 %v83
  %v278 = vunpack.c.l.b16 %v84
  %v279 = vunpack.c.l.b16 %v85
  %v280 = vunpack.c.l.b16 %v86
  %v281 = vunpack.c.l.b16 %v87
  %v282 = vunpack.c.l.b16 %v88
  %v283 = vunpack.c.l.b16 %v89
  %v284 = vunpack.c.l.b16 %v90
  %v285 = vunpack.c.l.b16 %v91
  %v286 = vunpack.c.l.b16 %v92
  %v287 = vunpack.c.l.b16 %v93
  %v288 = vunpack.c.l.b16 %v94
  %v289 = vunpack.c.l.b16 %v95
  %v290 = vunpack.c.l.b16 %v96
  %v291 = vunpack.c.l.b16 %v97
  %v292 = vunpack.c.l.b16 %v98
  %v293 = vunpack.c.l.b16 %v99
  %v294 = vunpack.c.l.b16 %v100
  %v295 = vunpack.c.l.b16 %v101
  %v296 = vunpack.c.l.b16 %v102
  %v297 = vunpack.c.l.b16 %v103
  %v298 = vunpack.c.l.b16 %v104
  %v299 = vunpack.c.l.b16 %v105
  %v300 = vunpack.c.l.b16 %v106
  %v301 = vunpack.c.l.b16 %v107
  %v302 = vunpack.c.l.b16 %v108
  %v303 = vunpack.c.l.b16 %v109
  %v304 = vunpack.c.l.b16 %v110
  %v305 = vunpack.c.l.b16 %v111
  %v306 = vunpack.c.l.b16 %v112
  %v307 = vunpack.c.l.b16 %v113
  %v308 = vpack.c.b16 %v237, %v236
  %v309 = vpack.c.b16 %v239, %v238
  %v310 = vpack.c.b16 %v241, %v240
  %v311 = vpack.c.b16 %v243, %v242
  %v312 = vpack.c.b16 %v245, %v244
  %v313 = vpack.c.b16 %v247, %v246
  %v314 = vpack.c.b16 %v249, %v248
  %v315 = vpack.c.b16 %v251, %v250
  %v316 = vpack.c.b16 %v253, %v252
  %v317 = vpack.c.b16 %v255, %v254
  %v318 = vpack.c.b16 %v257, %v256
  %v319 = vpack.c.b16 %v259, %v258
  %v320 = vpack.c.b16 %v261, %v260
  %v321 = vpack.c.b16 %v263, %v262
  %v322 = vpack.c.b16 %v265, %v264
  %v323 = vpack.c.b16 %v267, %v266
  %v324 = vpack.c.b16 %v269, %v268
  %v325 = vpack.c.b16 %v271, %v270
  %v326 = vpack.c.b16 %v273, %v272
  %v327 = vpack.c.b16 %v275, %v274
  %v328 = vpack.c.b16 %v277, %v276
  %v329 = vpack.c.b16 %v279, %v278
  %v330 = vpack.c.b16 %v281, %v280
  %v331 = vpack.c.b16 %v283, %v282
  %v332 = vpack.c.b16 %v285, %v284
  %v333 = vpack.c.b16 %v287, %v286
  %v334 = vpack.c.b16 %v289, %v288
  %v335 = vpack.c.b16 %v291, %v290
  %v336 = vpack.c.b16 %v293, %v292
  %v337 = vpack.c.b16 %v295, %v294
  %v338 = vpack.c.b16 %v297, %v296
  %v339 = vpack.c.b16 %v299, %v298
  %v340 = vpack.c.b16 %v301, %v300
  %v341 = vpack.c.b16 %v303, %v302
  %v342 = vpack.c.b16 %v305, %v304
  %v343 = vpack.c.b16 %v307, %v306
  %vm380 = vcmask 523264
  %v382 = vsel %vm380, %v150, 0
  %v385 = vsel %vm380, %v155, 0
  %387 = vmatprep.subr.bf16.mxu0 0
  %388 = vmatpush1.bf16.msra.mxu0 %v308
  %389 = vmatprep.subr.bf16.mxu0 0
  %390 = vmatpush1.bf16.msra.mxu0 %v309
  %391 = vmatprep.subr.bf16.mxu0 0
  %392 = vmatpush1.bf16.msra.mxu0 %v310
  %393 = vmatprep.subr.bf16.mxu0 0
  %394 = vmatpush1.bf16.msra.mxu0 %v311
  %395 = vmatprep.subr.bf16.mxu0 0
  %396 = vmatpush1.bf16.msra.mxu0 %v312
  %397 = vmatprep.subr.bf16.mxu0 0
  %398 = vmatpush1.bf16.msra.mxu0 %v313
  %399 = vmatprep.subr.bf16.mxu0 0
  %400 = vmatpush1.bf16.msra.mxu0 %v314
  %401 = vmatprep.subr.bf16.mxu0 0
  %402 = vmatpush1.bf16.msra.mxu0 %v315
  %403 = vmatprep.subr.bf16.mxu0 0
  %404 = vmatpush1.bf16.msra.mxu0 %v316
  %405 = vmatprep.subr.bf16.mxu0 0
  %406 = vmatpush1.bf16.msra.mxu0 %v317
  %407 = vmatprep.subr.bf16.mxu0 0
  %408 = vmatpush1.bf16.msra.mxu0 %v318
  %409 = vmatprep.subr.bf16.mxu0 0
  %410 = vmatpush1.bf16.msra.mxu0 %v319
  %411 = vmatprep.subr.bf16.mxu0 0
  %412 = vmatpush1.bf16.msra.mxu0 %v320
  %413 = vmatprep.subr.bf16.mxu0 0
  %414 = vmatpush1.bf16.msra.mxu0 %v321
  %415 = vmatprep.subr.bf16.mxu0 0
  %416 = vmatpush1.bf16.msra.mxu0 %v322
  %417 = vmatprep.subr.bf16.mxu0 0
  %418 = vmatpush1.bf16.msra.mxu0 %v323
  %419 = vmatprep.mubr.bf16.mxu0 %v147
  %420 = vmatmul.mubr.bf16.gmra.mrb[0].mxu0 %v146
  %v421 = vpop.f32.mrb[0].mxu0
  %v422 = vadd.f32 0.0, %v421
  %v423 = vpop.f32.mrb[0].mxu0
  %v424 = vpop.f32.mrb[0].mxu0
  %v425 = vadd.f32 0.0, %v424
  %v426 = vpop.f32.mrb[0].mxu0
  %427 = vmatprep.mubr.bf16.mxu0 %v152
  %428 = vmatmul.mubr.bf16.gmra.mrb[0].mxu0 %v151
  %v429 = vpop.f32.mrb[0].mxu0
  %v430 = vadd.f32 0.0, %v429
  %v431 = vpop.f32.mrb[0].mxu0
  %v432 = vpop.f32.mrb[0].mxu0
  %v433 = vadd.f32 0.0, %v432
  %v434 = vpop.f32.mrb[0].mxu0
  %435 = vdwg.mxu0
  %436 = vmatprep.subr.bf16.mxu0 0
  %437 = vmatpush1.bf16.msra.mxu0 %v324
  %438 = vmatprep.subr.bf16.mxu0 0
  %439 = vmatpush1.bf16.msra.mxu0 %v325
  %440 = vmatprep.subr.bf16.mxu0 0
  %441 = vmatpush1.bf16.msra.mxu0 %v326
  %442 = vmatprep.subr.bf16.mxu0 0
  %443 = vmatpush1.bf16.msra.mxu0 %v327
  %444 = vmatprep.subr.bf16.mxu0 0
  %445 = vmatpush1.bf16.msra.mxu0 %v328
  %446 = vmatprep.subr.bf16.mxu0 0
  %447 = vmatpush1.bf16.msra.mxu0 %v329
  %448 = vmatprep.subr.bf16.mxu0 0
  %449 = vmatpush1.bf16.msra.mxu0 %v330
  %450 = vmatprep.subr.bf16.mxu0 0
  %451 = vmatpush1.bf16.msra.mxu0 %v331
  %452 = vmatprep.subr.bf16.mxu0 0
  %453 = vmatpush1.bf16.msra.mxu0 %v332
  %454 = vmatprep.subr.bf16.mxu0 0
  %455 = vmatpush1.bf16.msra.mxu0 %v333
  %456 = vmatprep.subr.bf16.mxu0 0
  %457 = vmatpush1.bf16.msra.mxu0 %v334
  %458 = vmatprep.subr.bf16.mxu0 0
  %459 = vmatpush1.bf16.msra.mxu0 %v335
  %460 = vmatprep.subr.bf16.mxu0 0
  %461 = vmatpush1.bf16.msra.mxu0 %v336
  %462 = vmatprep.subr.bf16.mxu0 0
  %463 = vmatpush1.bf16.msra.mxu0 %v337
  %464 = vmatprep.subr.bf16.mxu0 0
  %465 = vmatpush1.bf16.msra.mxu0 %v338
  %466 = vmatprep.subr.bf16.mxu0 0
  %467 = vmatpush1.bf16.msra.mxu0 %v339
  %468 = vmatprep.mubr.bf16.mxu0 %v149
  %469 = vmatmul.mubr.bf16.gmra.mrb[0].mxu0 %v148
  %v470 = vpop.f32.mrb[0].mxu0
  %v471 = vadd.f32 %v422, %v470
  %v472 = vpop.f32.mrb[0].mxu0
  %v473 = vpop.f32.mrb[0].mxu0
  %v474 = vadd.f32 %v425, %v473
  %v475 = vpop.f32.mrb[0].mxu0
  %476 = vmatprep.mubr.bf16.mxu0 %v154
  %477 = vmatmul.mubr.bf16.gmra.mrb[0].mxu0 %v153
  %v478 = vpop.f32.mrb[0].mxu0
  %v479 = vadd.f32 %v430, %v478
  %v480 = vpop.f32.mrb[0].mxu0
  %v481 = vpop.f32.mrb[0].mxu0
  %v482 = vadd.f32 %v433, %v481
  %v483 = vpop.f32.mrb[0].mxu0
  %484 = vdwg.mxu0
  %485 = vmatprep.subr.bf16.mxu0 0
  %486 = vmatpush1.bf16.msra.mxu0 %v340
  %487 = vmatprep.subr.bf16.mxu0 0
  %488 = vmatpush1.bf16.msra.mxu0 %v341
  %489 = vmatprep.subr.bf16.mxu0 0
  %490 = vmatpush1.bf16.msra.mxu0 %v342
  %491 = vmatprep.subr.bf16.mxu0 0
  %492 = vmatpush1.bf16.msra.mxu0 %v343
  %493 = vmatprep.subr.bf16.mxu0 0
  %494 = vmatpush1.bf16.msra.mxu0 0
  %495 = vmatprep.subr.bf16.mxu0 0
  %496 = vmatpush1.bf16.msra.mxu0 0
  %497 = vmatprep.subr.bf16.mxu0 0
  %498 = vmatpush1.bf16.msra.mxu0 0
  %499 = vmatprep.subr.bf16.mxu0 0
  %500 = vmatpush1.bf16.msra.mxu0 0
  %501 = vmatprep.subr.bf16.mxu0 0
  %502 = vmatpush1.bf16.msra.mxu0 0
  %503 = vmatprep.subr.bf16.mxu0 0
  %504 = vmatpush1.bf16.msra.mxu0 0
  %505 = vmatprep.subr.bf16.mxu0 0
  %506 = vmatpush1.bf16.msra.mxu0 0
  %507 = vmatprep.subr.bf16.mxu0 0
  %508 = vmatpush1.bf16.msra.mxu0 0
  %509 = vmatprep.subr.bf16.mxu0 0
  %510 = vmatpush1.bf16.msra.mxu0 0
  %511 = vmatprep.subr.bf16.mxu0 0
  %512 = vmatpush1.bf16.msra.mxu0 0
  %513 = vmatprep.subr.bf16.mxu0 0
  %514 = vmatpush1.bf16.msra.mxu0 0
  %515 = vmatprep.subr.bf16.mxu0 0
  %516 = vmatpush1.bf16.msra.mxu0 0
  %517 = vmatprep.mubr.bf16.mxu0 0
  %518 = vmatmul.mubr.bf16.gmra.mrb[0].mxu0 %v382
  %v519 = vpop.f32.mrb[0].mxu0
  %v520 = vadd.f32 %v471, %v519
  %v521 = vpop.f32.mrb[0].mxu0
  %v522 = vpop.f32.mrb[0].mxu0
  %v523 = vadd.f32 %v474, %v522
  %v524 = vpop.f32.mrb[0].mxu0
  %525 = vmatprep.mubr.bf16.mxu0 0
  %526 = vmatmul.mubr.bf16.gmra.mrb[0].mxu0 %v385
  %v527 = vpop.f32.mrb[0].mxu0
  %v528 = vadd.f32 %v479, %v527
  %v529 = vpop.f32.mrb[0].mxu0
  %v530 = vpop.f32.mrb[0].mxu0
  %v531 = vadd.f32 %v482, %v530
  %v532 = vpop.f32.mrb[0].mxu0
  %533 = vdwg.mxu0
  %v534 = vadd.f32 %v26, %v520
  %v535 = vadd.f32 %v27, %v523
  %v536 = vadd.f32 %v28, %v528
  %v537 = vadd.f32 %v29, %v531
  %538 = vst [vmem:[#allocation2] sm:$0xff] %v534
  %539 = vst [vmem:[#allocation2 + $0x8] sm:$0xff] %v535
  %540 = vst [vmem:[#allocation2 + $0x10] sm:$0xff] %v536
  %541 = vst [vmem:[#allocation2 + $0x18] sm:$0xff] %v537
  // Predicated region
  $region22: #{forward.27} parent=0 // pred_check
    %p542 = pneg %p18
  $region23: #{forward.27} parent=0 // pred_check_branch
    %544 = sbr.rel (%p542) target = $region25
  $region24: #{forward.27} parent=0 // pred_region
    %v545 = vld [vmem:[#allocation2] sm:$0xff]
    %v546 = vld [vmem:[#allocation2 + $0x8] sm:$0xff]
    %v547 = vld [vmem:[#allocation2 + $0x10] sm:$0xff]
    %v548 = vld [vmem:[#allocation2 + $0x18] sm:$0xff]
    %v549 = vld [vmem:[%s2] sm:$0x1]
    %v551 = vlaneseq
    %v552 = vshrl.u32 %v551, 7
    %v553 = vsub.s32 0, %v552
    %v554 = vrot.slane %v549, %v553
    %v556 = vadd.f32 %v545, %v554
    %v557 = vadd.f32 %v546, %v554
    %v558 = vadd.f32 %v547, %v554
    %v559 = vadd.f32 %v548, %v554
    %v560 = vld [vmem:[%s3] sm:$0xf]
    %v561 = vld [vmem:[%s3 + $0x4] sm:$0xf]
    %v562 = vld [vmem:[%s3 + $0x8] sm:$0xf]
    %v563 = vld [vmem:[%s3 + $0xc] sm:$0xf]
    %v564 = vunpack.c.l.bf16 %v560
    %v565 = vunpack.c.l.bf16 %v561
    %v566 = vunpack.c.l.bf16 %v562
    %v567 = vunpack.c.l.bf16 %v563
    %v568 = vadd.f32 %v556, %v564
    %v569 = vadd.f32 %v557, %v565
    %v570 = vadd.f32 %v558, %v566
    %v571 = vadd.f32 %v559, %v567
    %v572 = vmax.f32 %v568, 0.0
    %v573 = vmax.f32 %v569, 0.0
    %v574 = vmax.f32 %v570, 0.0
    %v575 = vmax.f32 %v571, 0.0
    %v576 = vpack.c.bf16 %v573, %v572
    %v577 = vpack.c.bf16 %v575, %v574
    %v580 = vunpack.c.l.b16 %v576
    %v581 = vunpack.c.h.b16 %v576
    %v582 = vunpack.c.l.b16 %v577
    %v583 = vunpack.c.h.b16 %v577
    %v584 = vpack.c.b16 %v580, %v580
    %v585 = vpack.c.b16 %v581, %v581
    %v586 = vpack.c.b16 %v582, %v582
    %v587 = vpack.c.b16 %v583, %v583
    %592 = vst [vmem:[%s4] sm:$0xf] %v584
    %593 = vst [vmem:[%s4 + $0x4] sm:$0xf] %v585
    %594 = vst [vmem:[%s4 + $0x8] sm:$0xf] %v586
    %595 = vst [vmem:[%s4 + $0xc] sm:$0xf] %v587
  $region25: #{forward.27} parent=0 // pred_fallthru
    _
  // Predicated region
  $region26: #{forward.27} parent=0 // pred_check
    _
  $region27: #{forward.27} parent=0 // pred_check_branch
    %597 = sbr.rel (0) target = $region29
  $region28: #{forward.27} parent=0 // pred_region
    _
  $region29: #{forward.27} parent=0 // pred_fallthru
    _
  // Predicated region
  $region30: #{forward.27} parent=0 // pred_check
    _
  $region31: #{forward.27} parent=0 // pred_check_branch
    %599 = sbr.rel (0) target = $region33
  $region32: #{forward.27} parent=0 // pred_region
    _
  $region33: #{forward.27} parent=0 // pred_fallthru
    _

// kernel: forward.30
$region0: #{forward.30}
  #allocation0 [shape = 'u32[]', space=smem, size = 0x4, offset = 0x4, fixed_abs, tag = 'smem constant byte address 0x4 - core index']
  #allocation1 [shape = 'u32[144,128]{1,0:T(1,128)}', space=vmem, size = 0x12000, scoped, tag = 'internal scratch']
  #allocation2 [shape = 'f32[8,128]{1,0:T(8,128)}', space=vmem, size = 0x1000, scoped, tag = 'scratch operand']
  %s0 = inlined_call_operand.vmem [shape: bf16[8,576], index: 0, kind: input, shape index: {}]
  %s1 = inlined_call_operand.vmem [shape: bf16[576,128], index: 1, kind: input, shape index: {}]
  %s2 = inlined_call_operand.vmem [shape: f32[1,128], index: 2, kind: input, shape index: {}]
  %s3 = inlined_call_operand.vmem [shape: bf16[8,128], index: 3, kind: output, shape index: {}]
  %s4 = sld [smem:[#allocation0]]
  $region30: #{forward.30} parent=0
    _
  %s6 = ssub.s32 1, %s4
  %s7 = scalar_select 0, %s6, %s4
  // Predicated region
  $region2: #{forward.30} parent=0 // pred_check
    _
  $region3: #{forward.30} parent=0 // pred_check_branch
    %9 = sbr.rel (0) target = $region5
  $region4: #{forward.30} parent=0 // pred_region
    _
  $region5: #{forward.30} parent=0 // pred_fallthru
    _
  // Predicated region
  $region6: #{forward.30} parent=0 // pred_check
    _
  $region7: #{forward.30} parent=0 // pred_check_branch
    %11 = sbr.rel (0) target = $region9
  $region8: #{forward.30} parent=0 // pred_region
    _
  $region9: #{forward.30} parent=0 // pred_fallthru
    _
  // Predicated region
  $region10: #{forward.30} parent=0 // pred_check
    _
  $region11: #{forward.30} parent=0 // pred_check_branch
    %13 = sbr.rel (0) target = $region13
  $region12: #{forward.30} parent=0 // pred_region
    _
  $region13: #{forward.30} parent=0 // pred_fallthru
    _
  %p15 = scmp.eq.s32.totalorder 0, 0
  // Predicated region
  $region14: #{forward.30} parent=0 // pred_check
    %p16 = pneg %p15
  $region15: #{forward.30} parent=0 // pred_check_branch
    %18 = sbr.rel (%p16) target = $region17
  $region16: #{forward.30} parent=0 // pred_region
    %19 = vst [vmem:[#allocation2] sm:$0xff] 0.0
  $region17: #{forward.30} parent=0 // pred_fallthru
    _
  %v20 = vld [vmem:[#allocation2] sm:$0xff]
  %v21 = vld [vmem:[%s0] sm:$0xff]
  %v22 = vld [vmem:[%s0 + $0x8] sm:$0xff]
  %v23 = vld [vmem:[%s0 + $0x10] sm:$0xf]
  %v24 = vld [vmem:[%s1] sm:$0xf]
  %v25 = vld [vmem:[%s1 + $0x4] sm:$0xf]
  %v26 = vld [vmem:[%s1 + $0x8] sm:$0xf]
  %v27 = vld [vmem:[%s1 + $0xc] sm:$0xf]
  %v28 = vld [vmem:[%s1 + $0x10] sm:$0xf]
  %v29 = vld [vmem:[%s1 + $0x14] sm:$0xf]
  %v30 = vld [vmem:[%s1 + $0x18] sm:$0xf]
  %v31 = vld [vmem:[%s1 + $0x1c] sm:$0xf]
  %v32 = vld [vmem:[%s1 + $0x20] sm:$0xf]
  %v33 = vld [vmem:[%s1 + $0x24] sm:$0xf]
  %v34 = vld [vmem:[%s1 + $0x28] sm:$0xf]
  %v35 = vld [vmem:[%s1 + $0x2c] sm:$0xf]
  %v36 = vld [vmem:[%s1 + $0x30] sm:$0xf]
  %v37 = vld [vmem:[%s1 + $0x34] sm:$0xf]
  %v38 = vld [vmem:[%s1 + $0x38] sm:$0xf]
  %v39 = vld [vmem:[%s1 + $0x3c] sm:$0xf]
  %v40 = vld [vmem:[%s1 + $0x40] sm:$0xf]
  %v41 = vld [vmem:[%s1 + $0x44] sm:$0xf]
  %v42 = vld [vmem:[%s1 + $0x48] sm:$0xf]
  %v43 = vld [vmem:[%s1 + $0x4c] sm:$0xf]
  %v44 = vld [vmem:[%s1 + $0x50] sm:$0xf]
  %v45 = vld [vmem:[%s1 + $0x54] sm:$0xf]
  %v46 = vld [vmem:[%s1 + $0x58] sm:$0xf]
  %v47 = vld [vmem:[%s1 + $0x5c] sm:$0xf]
  %v48 = vld [vmem:[%s1 + $0x60] sm:$0xf]
  %v49 = vld [vmem:[%s1 + $0x64] sm:$0xf]
  %v50 = vld [vmem:[%s1 + $0x68] sm:$0xf]
  %v51 = vld [vmem:[%s1 + $0x6c] sm:$0xf]
  %v52 = vld [vmem:[%s1 + $0x70] sm:$0xf]
  %v53 = vld [vmem:[%s1 + $0x74] sm:$0xf]
  %v54 = vld [vmem:[%s1 + $0x78] sm:$0xf]
  %v55 = vld [vmem:[%s1 + $0x7c] sm:$0xf]
  %v56 = vld [vmem:[%s1 + $0x80] sm:$0xf]
  %v57 = vld [vmem:[%s1 + $0x84] sm:$0xf]
  %v58 = vld [vmem:[%s1 + $0x88] sm:$0xf]
  %v59 = vld [vmem:[%s1 + $0x8c] sm:$0xf]
  %v60 = vld [vmem:[%s1 + $0x90] sm:$0xf]
  %v61 = vld [vmem:[%s1 + $0x94] sm:$0xf]
  %v62 = vld [vmem:[%s1 + $0x98] sm:$0xf]
  %v63 = vld [vmem:[%s1 + $0x9c] sm:$0xf]
  %v64 = vld [vmem:[%s1 + $0xa0] sm:$0xf]
  %v65 = vld [vmem:[%s1 + $0xa4] sm:$0xf]
  %v66 = vld [vmem:[%s1 + $0xa8] sm:$0xf]
  %v67 = vld [vmem:[%s1 + $0xac] sm:$0xf]
  %v68 = vld [vmem:[%s1 + $0xb0] sm:$0xf]
  %v69 = vld [vmem:[%s1 + $0xb4] sm:$0xf]
  %v70 = vld [vmem:[%s1 + $0xb8] sm:$0xf]
  %v71 = vld [vmem:[%s1 + $0xbc] sm:$0xf]
  %v72 = vld [vmem:[%s1 + $0xc0] sm:$0xf]
  %v73 = vld [vmem:[%s1 + $0xc4] sm:$0xf]
  %v74 = vld [vmem:[%s1 + $0xc8] sm:$0xf]
  %v75 = vld [vmem:[%s1 + $0xcc] sm:$0xf]
  %v76 = vld [vmem:[%s1 + $0xd0] sm:$0xf]
  %v77 = vld [vmem:[%s1 + $0xd4] sm:$0xf]
  %v78 = vld [vmem:[%s1 + $0xd8] sm:$0xf]
  %v79 = vld [vmem:[%s1 + $0xdc] sm:$0xf]
  %v80 = vld [vmem:[%s1 + $0xe0] sm:$0xf]
  %v81 = vld [vmem:[%s1 + $0xe4] sm:$0xf]
  %v82 = vld [vmem:[%s1 + $0xe8] sm:$0xf]
  %v83 = vld [vmem:[%s1 + $0xec] sm:$0xf]
  %v84 = vld [vmem:[%s1 + $0xf0] sm:$0xf]
  %v85 = vld [vmem:[%s1 + $0xf4] sm:$0xf]
  %v86 = vld [vmem:[%s1 + $0xf8] sm:$0xf]
  %v87 = vld [vmem:[%s1 + $0xfc] sm:$0xf]
  %v88 = vld [vmem:[%s1 + $0x100] sm:$0xf]
  %v89 = vld [vmem:[%s1 + $0x104] sm:$0xf]
  %v90 = vld [vmem:[%s1 + $0x108] sm:$0xf]
  %v91 = vld [vmem:[%s1 + $0x10c] sm:$0xf]
  %v92 = vld [vmem:[%s1 + $0x110] sm:$0xf]
  %v93 = vld [vmem:[%s1 + $0x114] sm:$0xf]
  %v94 = vld [vmem:[%s1 + $0x118] sm:$0xf]
  %v95 = vld [vmem:[%s1 + $0x11c] sm:$0xf]
  %v99 = vunpack.c.l.b16 %v21
  %v100 = vunpack.c.h.b16 %v21
  %v101 = vunpack.c.l.b16 %v22
  %v102 = vunpack.c.h.b16 %v22
  %v103 = vunpack.c.l.b16 %v23
  %v104 = vpack.c.b16 %v99, %v99
  %v105 = vpack.c.b16 %v100, %v100
  %v106 = vpack.c.b16 %v101, %v101
  %v107 = vpack.c.b16 %v102, %v102
  %v108 = vpack.c.b16 %v103, %v103
  %v185 = vunpack.c.l.b16 %v24
  %v186 = vunpack.c.l.b16 %v25
  %v187 = vunpack.c.l.b16 %v26
  %v188 = vunpack.c.l.b16 %v27
  %v189 = vunpack.c.l.b16 %v28
  %v190 = vunpack.c.l.b16 %v29
  %v191 = vunpack.c.l.b16 %v30
  %v192 = vunpack.c.l.b16 %v31
  %v193 = vunpack.c.l.b16 %v32
  %v194 = vunpack.c.l.b16 %v33
  %v195 = vunpack.c.l.b16 %v34
  %v196 = vunpack.c.l.b16 %v35
  %v197 = vunpack.c.l.b16 %v36
  %v198 = vunpack.c.l.b16 %v37
  %v199 = vunpack.c.l.b16 %v38
  %v200 = vunpack.c.l.b16 %v39
  %v201 = vunpack.c.l.b16 %v40
  %v202 = vunpack.c.l.b16 %v41
  %v203 = vunpack.c.l.b16 %v42
  %v204 = vunpack.c.l.b16 %v43
  %v205 = vunpack.c.l.b16 %v44
  %v206 = vunpack.c.l.b16 %v45
  %v207 = vunpack.c.l.b16 %v46
  %v208 = vunpack.c.l.b16 %v47
  %v209 = vunpack.c.l.b16 %v48
  %v210 = vunpack.c.l.b16 %v49
  %v211 = vunpack.c.l.b16 %v50
  %v212 = vunpack.c.l.b16 %v51
  %v213 = vunpack.c.l.b16 %v52
  %v214 = vunpack.c.l.b16 %v53
  %v215 = vunpack.c.l.b16 %v54
  %v216 = vunpack.c.l.b16 %v55
  %v217 = vunpack.c.l.b16 %v56
  %v218 = vunpack.c.l.b16 %v57
  %v219 = vunpack.c.l.b16 %v58
  %v220 = vunpack.c.l.b16 %v59
  %v221 = vunpack.c.l.b16 %v60
  %v222 = vunpack.c.l.b16 %v61
  %v223 = vunpack.c.l.b16 %v62
  %v224 = vunpack.c.l.b16 %v63
  %v225 = vunpack.c.l.b16 %v64
  %v226 = vunpack.c.l.b16 %v65
  %v227 = vunpack.c.l.b16 %v66
  %v228 = vunpack.c.l.b16 %v67
  %v229 = vunpack.c.l.b16 %v68
  %v230 = vunpack.c.l.b16 %v69
  %v231 = vunpack.c.l.b16 %v70
  %v232 = vunpack.c.l.b16 %v71
  %v233 = vunpack.c.l.b16 %v72
  %v234 = vunpack.c.l.b16 %v73
  %v235 = vunpack.c.l.b16 %v74
  %v236 = vunpack.c.l.b16 %v75
  %v237 = vunpack.c.l.b16 %v76
  %v238 = vunpack.c.l.b16 %v77
  %v239 = vunpack.c.l.b16 %v78
  %v240 = vunpack.c.l.b16 %v79
  %v241 = vunpack.c.l.b16 %v80
  %v242 = vunpack.c.l.b16 %v81
  %v243 = vunpack.c.l.b16 %v82
  %v244 = vunpack.c.l.b16 %v83
  %v245 = vunpack.c.l.b16 %v84
  %v246 = vunpack.c.l.b16 %v85
  %v247 = vunpack.c.l.b16 %v86
  %v248 = vunpack.c.l.b16 %v87
  %v249 = vunpack.c.l.b16 %v88
  %v250 = vunpack.c.l.b16 %v89
  %v251 = vunpack.c.l.b16 %v90
  %v252 = vunpack.c.l.b16 %v91
  %v253 = vunpack.c.l.b16 %v92
  %v254 = vunpack.c.l.b16 %v93
  %v255 = vunpack.c.l.b16 %v94
  %v256 = vunpack.c.l.b16 %v95
  %v257 = vpack.c.b16 %v186, %v185
  %v258 = vpack.c.b16 %v188, %v187
  %v259 = vpack.c.b16 %v190, %v189
  %v260 = vpack.c.b16 %v192, %v191
  %v261 = vpack.c.b16 %v194, %v193
  %v262 = vpack.c.b16 %v196, %v195
  %v263 = vpack.c.b16 %v198, %v197
  %v264 = vpack.c.b16 %v200, %v199
  %v265 = vpack.c.b16 %v202, %v201
  %v266 = vpack.c.b16 %v204, %v203
  %v267 = vpack.c.b16 %v206, %v205
  %v268 = vpack.c.b16 %v208, %v207
  %v269 = vpack.c.b16 %v210, %v209
  %v270 = vpack.c.b16 %v212, %v211
  %v271 = vpack.c.b16 %v214, %v213
  %v272 = vpack.c.b16 %v216, %v215
  %v273 = vpack.c.b16 %v218, %v217
  %v274 = vpack.c.b16 %v220, %v219
  %v275 = vpack.c.b16 %v222, %v221
  %v276 = vpack.c.b16 %v224, %v223
  %v277 = vpack.c.b16 %v226, %v225
  %v278 = vpack.c.b16 %v228, %v227
  %v279 = vpack.c.b16 %v230, %v229
  %v280 = vpack.c.b16 %v232, %v231
  %v281 = vpack.c.b16 %v234, %v233
  %v282 = vpack.c.b16 %v236, %v235
  %v283 = vpack.c.b16 %v238, %v237
  %v284 = vpack.c.b16 %v240, %v239
  %v285 = vpack.c.b16 %v242, %v241
  %v286 = vpack.c.b16 %v244, %v243
  %v287 = vpack.c.b16 %v246, %v245
  %v288 = vpack.c.b16 %v248, %v247
  %v289 = vpack.c.b16 %v250, %v249
  %v290 = vpack.c.b16 %v252, %v251
  %v291 = vpack.c.b16 %v254, %v253
  %v292 = vpack.c.b16 %v256, %v255
  %vm329 = vcmask 523264
  %v331 = vsel %vm329, %v108, 0
  %333 = vmatprep.subr.bf16.mxu0 0
  %334 = vmatpush1.bf16.msra.mxu0 %v257
  %335 = vmatprep.subr.bf16.mxu0 0
  %336 = vmatpush1.bf16.msra.mxu0 %v258
  %337 = vmatprep.subr.bf16.mxu0 0
  %338 = vmatpush1.bf16.msra.mxu0 %v259
  %339 = vmatprep.subr.bf16.mxu0 0
  %340 = vmatpush1.bf16.msra.mxu0 %v260
  %341 = vmatprep.subr.bf16.mxu0 0
  %342 = vmatpush1.bf16.msra.mxu0 %v261
  %343 = vmatprep.subr.bf16.mxu0 0
  %344 = vmatpush1.bf16.msra.mxu0 %v262
  %345 = vmatprep.subr.bf16.mxu0 0
  %346 = vmatpush1.bf16.msra.mxu0 %v263
  %347 = vmatprep.subr.bf16.mxu0 0
  %348 = vmatpush1.bf16.msra.mxu0 %v264
  %349 = vmatprep.subr.bf16.mxu0 0
  %350 = vmatpush1.bf16.msra.mxu0 %v265
  %351 = vmatprep.subr.bf16.mxu0 0
  %352 = vmatpush1.bf16.msra.mxu0 %v266
  %353 = vmatprep.subr.bf16.mxu0 0
  %354 = vmatpush1.bf16.msra.mxu0 %v267
  %355 = vmatprep.subr.bf16.mxu0 0
  %356 = vmatpush1.bf16.msra.mxu0 %v268
  %357 = vmatprep.subr.bf16.mxu0 0
  %358 = vmatpush1.bf16.msra.mxu0 %v269
  %359 = vmatprep.subr.bf16.mxu0 0
  %360 = vmatpush1.bf16.msra.mxu0 %v270
  %361 = vmatprep.subr.bf16.mxu0 0
  %362 = vmatpush1.bf16.msra.mxu0 %v271
  %363 = vmatprep.subr.bf16.mxu0 0
  %364 = vmatpush1.bf16.msra.mxu0 %v272
  %365 = vmatprep.mubr.bf16.mxu0 %v105
  %366 = vmatmul.mubr.bf16.gmra.mrb[0].mxu0 %v104
  %v367 = vpop.f32.mrb[0].mxu0
  %v368 = vadd.f32 0.0, %v367
  %v369 = vpop.f32.mrb[0].mxu0
  %v370 = vpop.f32.mrb[0].mxu0
  %v371 = vpop.f32.mrb[0].mxu0
  %372 = vdwg.mxu0
  %373 = vmatprep.subr.bf16.mxu0 0
  %374 = vmatpush1.bf16.msra.mxu0 %v273
  %375 = vmatprep.subr.bf16.mxu0 0
  %376 = vmatpush1.bf16.msra.mxu0 %v274
  %377 = vmatprep.subr.bf16.mxu0 0
  %378 = vmatpush1.bf16.msra.mxu0 %v275
  %379 = vmatprep.subr.bf16.mxu0 0
  %380 = vmatpush1.bf16.msra.mxu0 %v276
  %381 = vmatprep.subr.bf16.mxu0 0
  %382 = vmatpush1.bf16.msra.mxu0 %v277
  %383 = vmatprep.subr.bf16.mxu0 0
  %384 = vmatpush1.bf16.msra.mxu0 %v278
  %385 = vmatprep.subr.bf16.mxu0 0
  %386 = vmatpush1.bf16.msra.mxu0 %v279
  %387 = vmatprep.subr.bf16.mxu0 0
  %388 = vmatpush1.bf16.msra.mxu0 %v280
  %389 = vmatprep.subr.bf16.mxu0 0
  %390 = vmatpush1.bf16.msra.mxu0 %v281
  %391 = vmatprep.subr.bf16.mxu0 0
  %392 = vmatpush1.bf16.msra.mxu0 %v282
  %393 = vmatprep.subr.bf16.mxu0 0
  %394 = vmatpush1.bf16.msra.mxu0 %v283
  %395 = vmatprep.subr.bf16.mxu0 0
  %396 = vmatpush1.bf16.msra.mxu0 %v284
  %397 = vmatprep.subr.bf16.mxu0 0
  %398 = vmatpush1.bf16.msra.mxu0 %v285
  %399 = vmatprep.subr.bf16.mxu0 0
  %400 = vmatpush1.bf16.msra.mxu0 %v286
  %401 = vmatprep.subr.bf16.mxu0 0
  %402 = vmatpush1.bf16.msra.mxu0 %v287
  %403 = vmatprep.subr.bf16.mxu0 0
  %404 = vmatpush1.bf16.msra.mxu0 %v288
  %405 = vmatprep.mubr.bf16.mxu0 %v107
  %406 = vmatmul.mubr.bf16.gmra.mrb[0].mxu0 %v106
  %v407 = vpop.f32.mrb[0].mxu0
  %v408 = vadd.f32 %v368, %v407
  %v409 = vpop.f32.mrb[0].mxu0
  %v410 = vpop.f32.mrb[0].mxu0
  %v411 = vpop.f32.mrb[0].mxu0
  %412 = vdwg.mxu0
  %413 = vmatprep.subr.bf16.mxu0 0
  %414 = vmatpush1.bf16.msra.mxu0 %v289
  %415 = vmatprep.subr.bf16.mxu0 0
  %416 = vmatpush1.bf16.msra.mxu0 %v290
  %417 = vmatprep.subr.bf16.mxu0 0
  %418 = vmatpush1.bf16.msra.mxu0 %v291
  %419 = vmatprep.subr.bf16.mxu0 0
  %420 = vmatpush1.bf16.msra.mxu0 %v292
  %421 = vmatprep.subr.bf16.mxu0 0
  %422 = vmatpush1.bf16.msra.mxu0 0
  %423 = vmatprep.subr.bf16.mxu0 0
  %424 = vmatpush1.bf16.msra.mxu0 0
  %425 = vmatprep.subr.bf16.mxu0 0
  %426 = vmatpush1.bf16.msra.mxu0 0
  %427 = vmatprep.subr.bf16.mxu0 0
  %428 = vmatpush1.bf16.msra.mxu0 0
  %429 = vmatprep.subr.bf16.mxu0 0
  %430 = vmatpush1.bf16.msra.mxu0 0
  %431 = vmatprep.subr.bf16.mxu0 0
  %432 = vmatpush1.bf16.msra.mxu0 0
  %433 = vmatprep.subr.bf16.mxu0 0
  %434 = vmatpush1.bf16.msra.mxu0 0
  %435 = vmatprep.subr.bf16.mxu0 0
  %436 = vmatpush1.bf16.msra.mxu0 0
  %437 = vmatprep.subr.bf16.mxu0 0
  %438 = vmatpush1.bf16.msra.mxu0 0
  %439 = vmatprep.subr.bf16.mxu0 0
  %440 = vmatpush1.bf16.msra.mxu0 0
  %441 = vmatprep.subr.bf16.mxu0 0
  %442 = vmatpush1.bf16.msra.mxu0 0
  %443 = vmatprep.subr.bf16.mxu0 0
  %444 = vmatpush1.bf16.msra.mxu0 0
  %445 = vmatprep.mubr.bf16.mxu0 0
  %446 = vmatmul.mubr.bf16.gmra.mrb[0].mxu0 %v331
  %v447 = vpop.f32.mrb[0].mxu0
  %v448 = vadd.f32 %v408, %v447
  %v449 = vpop.f32.mrb[0].mxu0
  %v450 = vpop.f32.mrb[0].mxu0
  %v451 = vpop.f32.mrb[0].mxu0
  %452 = vdwg.mxu0
  %v453 = vadd.f32 %v20, %v448
  %454 = vst [vmem:[#allocation2] sm:$0xff] %v453
  // Predicated region
  $region18: #{forward.30} parent=0 // pred_check
    %p455 = pneg %p15
  $region19: #{forward.30} parent=0 // pred_check_branch
    %457 = sbr.rel (%p455) target = $region21
  $region20: #{forward.30} parent=0 // pred_region
    %v458 = vld [vmem:[#allocation2] sm:$0xff]
    %v459 = vld [vmem:[%s2] sm:$0x1]
    %v461 = vlaneseq
    %v462 = vshrl.u32 %v461, 7
    %v463 = vsub.s32 0, %v462
    %v464 = vrot.slane %v459, %v463
    %v466 = vadd.f32 %v458, %v464
    %v467 = vmax.f32 %v466, 0.0
    %v468 = vpack.c.bf16 %v467, %v467
    %469 = vst [vmem:[%s3] sm:$0xf] %v468
  $region21: #{forward.30} parent=0 // pred_fallthru
    _
  // Predicated region
  $region22: #{forward.30} parent=0 // pred_check
    _
  $region23: #{forward.30} parent=0 // pred_check_branch
    %471 = sbr.rel (0) target = $region25
  $region24: #{forward.30} parent=0 // pred_region
    _
  $region25: #{forward.30} parent=0 // pred_fallthru
    _
  // Predicated region
  $region26: #{forward.30} parent=0 // pred_check
    _
  $region27: #{forward.30} parent=0 // pred_check_branch
    %473 = sbr.rel (0) target = $region29
  $region28: #{forward.30} parent=0 // pred_region
    _
  $region29: #{forward.30} parent=0 // pred_fallthru
    _

// kernel: forward.31
$region0: #{forward.31}
  #allocation0 [shape = 'u32[]', space=smem, size = 0x4, offset = 0x4, fixed_abs, tag = 'smem constant byte address 0x4 - core index']
  #allocation1 [shape = 'u32[144,128]{1,0:T(1,128)}', space=vmem, size = 0x12000, scoped, tag = 'internal scratch']
  #allocation2 [shape = 'f32[8,128]{1,0:T(8,128)}', space=vmem, size = 0x1000, scoped, tag = 'scratch operand']
  %s0 = inlined_call_operand.vmem [shape: bf16[8,64], index: 0, kind: input, shape index: {}]
  %s1 = inlined_call_operand.vmem [shape: bf16[64,128], index: 1, kind: input, shape index: {}]
  %s2 = inlined_call_operand.vmem [shape: f32[1,128], index: 2, kind: input, shape index: {}]
  %s3 = inlined_call_operand.vmem [shape: bf16[8,128], index: 3, kind: output, shape index: {}]
  %s4 = sld [smem:[#allocation0]]
  $region30: #{forward.31} parent=0
    _
  %s6 = ssub.s32 1, %s4
  %s7 = scalar_select 0, %s6, %s4
  // Predicated region
  $region2: #{forward.31} parent=0 // pred_check
    _
  $region3: #{forward.31} parent=0 // pred_check_branch
    %9 = sbr.rel (0) target = $region5
  $region4: #{forward.31} parent=0 // pred_region
    _
  $region5: #{forward.31} parent=0 // pred_fallthru
    _
  // Predicated region
  $region6: #{forward.31} parent=0 // pred_check
    _
  $region7: #{forward.31} parent=0 // pred_check_branch
    %11 = sbr.rel (0) target = $region9
  $region8: #{forward.31} parent=0 // pred_region
    _
  $region9: #{forward.31} parent=0 // pred_fallthru
    _
  // Predicated region
  $region10: #{forward.31} parent=0 // pred_check
    _
  $region11: #{forward.31} parent=0 // pred_check_branch
    %13 = sbr.rel (0) target = $region13
  $region12: #{forward.31} parent=0 // pred_region
    _
  $region13: #{forward.31} parent=0 // pred_fallthru
    _
  %p15 = scmp.eq.s32.totalorder 0, 0
  // Predicated region
  $region14: #{forward.31} parent=0 // pred_check
    %p16 = pneg %p15
  $region15: #{forward.31} parent=0 // pred_check_branch
    %18 = sbr.rel (%p16) target = $region17
  $region16: #{forward.31} parent=0 // pred_region
    %19 = vst [vmem:[#allocation2] sm:$0xff] 0.0
  $region17: #{forward.31} parent=0 // pred_fallthru
    _
  %v20 = vld [vmem:[#allocation2] sm:$0xff]
  %v21 = vld [vmem:[%s0] sm:$0xf]
  %v22 = vld [vmem:[%s1] sm:$0xf]
  %v23 = vld [vmem:[%s1 + $0x4] sm:$0xf]
  %v24 = vld [vmem:[%s1 + $0x8] sm:$0xf]
  %v25 = vld [vmem:[%s1 + $0xc] sm:$0xf]
  %v26 = vld [vmem:[%s1 + $0x10] sm:$0xf]
  %v27 = vld [vmem:[%s1 + $0x14] sm:$0xf]
  %v28 = vld [vmem:[%s1 + $0x18] sm:$0xf]
  %v29 = vld [vmem:[%s1 + $0x1c] sm:$0xf]
  %v38 = vunpack.c.l.b16 %v22
  %v39 = vunpack.c.l.b16 %v23
  %v40 = vunpack.c.l.b16 %v24
  %v41 = vunpack.c.l.b16 %v25
  %v42 = vunpack.c.l.b16 %v26
  %v43 = vunpack.c.l.b16 %v27
  %v44 = vunpack.c.l.b16 %v28
  %v45 = vunpack.c.l.b16 %v29
  %v46 = vpack.c.b16 %v39, %v38
  %v47 = vpack.c.b16 %v41, %v40
  %v48 = vpack.c.b16 %v43, %v42
  %v49 = vpack.c.b16 %v45, %v44
  %vm54 = vcmask 523264
  %v56 = vsel %vm54, %v21, 0
  %58 = vmatprep.subr.bf16.mxu0 0
  %59 = vmatpush1.bf16.msra.mxu0 %v46
  %60 = vmatprep.subr.bf16.mxu0 0
  %61 = vmatpush1.bf16.msra.mxu0 %v47
  %62 = vmatprep.subr.bf16.mxu0 0
  %63 = vmatpush1.bf16.msra.mxu0 %v48
  %64 = vmatprep.subr.bf16.mxu0 0
  %65 = vmatpush1.bf16.msra.mxu0 %v49
  %66 = vmatprep.subr.bf16.mxu0 0
  %67 = vmatpush1.bf16.msra.mxu0 0
  %68 = vmatprep.subr.bf16.mxu0 0
  %69 = vmatpush1.bf16.msra.mxu0 0
  %70 = vmatprep.subr.bf16.mxu0 0
  %71 = vmatpush1.bf16.msra.mxu0 0
  %72 = vmatprep.subr.bf16.mxu0 0
  %73 = vmatpush1.bf16.msra.mxu0 0
  %74 = vmatprep.subr.bf16.mxu0 0
  %75 = vmatpush1.bf16.msra.mxu0 0
  %76 = vmatprep.subr.bf16.mxu0 0
  %77 = vmatpush1.bf16.msra.mxu0 0
  %78 = vmatprep.subr.bf16.mxu0 0
  %79 = vmatpush1.bf16.msra.mxu0 0
  %80 = vmatprep.subr.bf16.mxu0 0
  %81 = vmatpush1.bf16.msra.mxu0 0
  %82 = vmatprep.subr.bf16.mxu0 0
  %83 = vmatpush1.bf16.msra.mxu0 0
  %84 = vmatprep.subr.bf16.mxu0 0
  %85 = vmatpush1.bf16.msra.mxu0 0
  %86 = vmatprep.subr.bf16.mxu0 0
  %87 = vmatpush1.bf16.msra.mxu0 0
  %88 = vmatprep.subr.bf16.mxu0 0
  %89 = vmatpush1.bf16.msra.mxu0 0
  %90 = vmatprep.mubr.bf16.mxu0 0
  %91 = vmatmul.mubr.bf16.gmra.mrb[0].mxu0 %v56
  %v92 = vpop.f32.mrb[0].mxu0
  %v93 = vadd.f32 0.0, %v92
  %v94 = vpop.f32.mrb[0].mxu0
  %v95 = vpop.f32.mrb[0].mxu0
  %v96 = vpop.f32.mrb[0].mxu0
  %97 = vdwg.mxu0
  %v98 = vadd.f32 %v20, %v93
  %99 = vst [vmem:[#allocation2] sm:$0xff] %v98
  // Predicated region
  $region18: #{forward.31} parent=0 // pred_check
    %p100 = pneg %p15
  $region19: #{forward.31} parent=0 // pred_check_branch
    %102 = sbr.rel (%p100) target = $region21
  $region20: #{forward.31} parent=0 // pred_region
    %v103 = vld [vmem:[#allocation2] sm:$0xff]
    %v104 = vld [vmem:[%s2] sm:$0x1]
    %v106 = vlaneseq
    %v107 = vshrl.u32 %v106, 7
    %v108 = vsub.s32 0, %v107
    %v109 = vrot.slane %v104, %v108
    %v111 = vadd.f32 %v103, %v109
    %v112 = vpack.c.bf16 %v111, %v111
    %113 = vst [vmem:[%s3] sm:$0xf] %v112
  $region21: #{forward.31} parent=0 // pred_fallthru
    _
  // Predicated region
  $region22: #{forward.31} parent=0 // pred_check
    _
  $region23: #{forward.31} parent=0 // pred_check_branch
    %115 = sbr.rel (0) target = $region25
  $region24: #{forward.31} parent=0 // pred_region
    _
  $region25: #{forward.31} parent=0 // pred_fallthru
    _
  // Predicated region
  $region26: #{forward.31} parent=0 // pred_check
    _
  $region27: #{forward.31} parent=0 // pred_check_branch
    %117 = sbr.rel (0) target = $region29
  $region28: #{forward.31} parent=0 // pred_region
    _
  $region29: #{forward.31} parent=0 // pred_fallthru
    _

// kernel: forward.33
$region0: #{forward.33}
  #allocation0 [shape = 'u32[]', space=smem, size = 0x4, offset = 0x4, fixed_abs, tag = 'smem constant byte address 0x4 - core index']
  #allocation1 [shape = 'u32[144,128]{1,0:T(1,128)}', space=vmem, size = 0x12000, scoped, tag = 'internal scratch']
  #allocation2 [shape = 'f32[8,128]{1,0:T(8,128)}', space=vmem, size = 0x1000, scoped, tag = 'scratch operand']
  %s0 = inlined_call_operand.vmem [shape: bf16[8,1152], index: 0, kind: input, shape index: {}]
  %s1 = inlined_call_operand.vmem [shape: bf16[1152,128], index: 1, kind: input, shape index: {}]
  %s2 = inlined_call_operand.vmem [shape: f32[1,128], index: 2, kind: input, shape index: {}]
  %s3 = inlined_call_operand.vmem [shape: bf16[8,128], index: 3, kind: output, shape index: {}]
  %s4 = sld [smem:[#allocation0]]
  $region53: #{forward.33} parent=0
    _
  %s6 = ssub.s32 1, %s4
  %s7 = scalar_select 0, %s6, %s4
  loop: start=0, step=1, limit=11
  $region2: #{forward.33} parent=0 // loop_pre_header
    _
  $region3: #{forward.33} parent=0 // loop_header
    %s9 = sphi 0, %s13
    %p10 = scmp.ge.s32.totalorder %s9, 11
    %s16 = sphi 0, %s35
    %s17 = sphi 0, %s31
    %s18 = sphi 0, %s27
    %s19 = sphi 0, %s16
    %s20 = sphi 0, %s17
    %s21 = sphi 0, %s18
    %s22 = sphi 0, %s19
    %s23 = sphi 0, %s20
    %s24 = sphi 0, %s21
    %s40 = sphi 0, %s42
    %s43 = sphi 0, %s40
    %s44 = sphi 0, %s43
    %s60 = sphi 0, %s44
    %s68 = sphi 0, %s70
    %s71 = sphi 0, %s68
    %s72 = sphi 0, %s71
    %s88 = sphi 0, %s72
    %s94 = sphi 0, %s96
    %s97 = sphi 0, %s94
    %s98 = sphi 0, %s97
    %s114 = sphi 0, %s98
    %s122 = sphi 0, %s124
    %s125 = sphi 0, %s122
    %s126 = sphi 0, %s125
    %s142 = sphi 0, %s126
  $region4: #{forward.33} parent=0 // loop_header_branch
    %12 = sbr.rel (%p10) target = $region8
  $region5: #{forward.33} parent=0 // loop_body
    %s14 = ssub.s32 %s9, 1
    %s15 = ssub.s32 %s9, 2
    %s25 = sadd.s32 1, %s18
    %p26 = scmp.ge.s32.totalorder %s25, 9
    %s27 = scalar_select %p26, 0, %s25
    %s28 = sadd.s32 1, %s17
    %s29 = scalar_select %p26, %s28, %s17
    %p30 = scmp.ge.s32.totalorder %s29, 1
    %s31 = scalar_select %p30, 0, %s29
    %s32 = sadd.s32 1, %s16
    %s33 = scalar_select %p30, %s32, %s16
    %p34 = scmp.ge.s32.totalorder %s33, 1
    %s35 = scalar_select %p34, 0, %s33
    %s36 = ssub.s32 %s16, %s35
    %s37 = ssub.s32 %s18, %s27
    %s38 = sor.u32 %s36, %s37
    %p39 = scmp.eq.s32.totalorder %s38, 0
    %s41 = sadd.s32 %s40, 1
    %s42 = scalar_select %p39, %s40, %s41
    %p45 = pneg %p39
    %p46 = scmp.eq.s32.totalorder %s9, 8
    %p47 = por %p45, %p46
    %p48 = scmp.ne.s32.totalorder %s40, %s43
    %p49 = scmp.eq.s32.totalorder %s9, 0
    %p50 = por %p48, %p49
    %p51 = scmp.ne.s32.totalorder %s40, %s43
    %p52 = scmp.eq.s32.totalorder %s14, 8
    %p53 = por %p51, %p52
    %p54 = scmp.ne.s32.totalorder %s43, %s44
    %p55 = scmp.eq.s32.totalorder %s14, 0
    %p56 = por %p54, %p55
    %p57 = scmp.ne.s32.totalorder %s43, %s44
    %p58 = scmp.eq.s32.totalorder %s15, 8
    %p59 = por %p57, %p58
    %p61 = scmp.ne.s32.totalorder %s44, %s60
    %p62 = scmp.eq.s32.totalorder %s15, 0
    %p63 = por %p61, %p62
    %s64 = ssub.s32 %s18, %s27
    %s65 = ssub.s32 %s17, %s31
    %s66 = sor.u32 %s64, %s65
    %p67 = scmp.eq.s32.totalorder %s66, 0
    %s69 = sadd.s32 %s68, 1
    %s70 = scalar_select %p67, %s68, %s69
    %p73 = pneg %p67
    %p74 = scmp.eq.s32.totalorder %s9, 8
    %p75 = por %p73, %p74
    %p76 = scmp.ne.s32.totalorder %s68, %s71
    %p77 = scmp.eq.s32.totalorder %s9, 0
    %p78 = por %p76, %p77
    %p79 = scmp.ne.s32.totalorder %s68, %s71
    %p80 = scmp.eq.s32.totalorder %s14, 8
    %p81 = por %p79, %p80
    %p82 = scmp.ne.s32.totalorder %s71, %s72
    %p83 = scmp.eq.s32.totalorder %s14, 0
    %p84 = por %p82, %p83
    %p85 = scmp.ne.s32.totalorder %s71, %s72
    %p86 = scmp.eq.s32.totalorder %s15, 8
    %p87 = por %p85, %p86
    %p89 = scmp.ne.s32.totalorder %s72, %s88
    %p90 = scmp.eq.s32.totalorder %s15, 0
    %p91 = por %p89, %p90
    %s92 = ssub.s32 %s17, %s31
    %p93 = scmp.eq.s32.totalorder %s92, 0
    %s95 = sadd.s32 %s94, 1
    %s96 = scalar_select %p93, %s94, %s95
    %p99 = pneg %p93
    %p100 = scmp.eq.s32.totalorder %s9, 8
    %p101 = por %p99, %p100
    %p102 = scmp.ne.s32.totalorder %s94, %s97
    %p103 = scmp.eq.s32.totalorder %s9, 0
    %p104 = por %p102, %p103
    %p105 = scmp.ne.s32.totalorder %s94, %s97
    %p106 = scmp.eq.s32.totalorder %s14, 8
    %p107 = por %p105, %p106
    %p108 = scmp.ne.s32.totalorder %s97, %s98
    %p109 = scmp.eq.s32.totalorder %s14, 0
    %p110 = por %p108, %p109
    %p111 = scmp.ne.s32.totalorder %s97, %s98
    %p112 = scmp.eq.s32.totalorder %s15, 8
    %p113 = por %p111, %p112
    %p115 = scmp.ne.s32.totalorder %s98, %s114
    %p116 = scmp.eq.s32.totalorder %s15, 0
    %p117 = por %p115, %p116
    %s118 = ssub.s32 %s16, %s35
    %s119 = ssub.s32 %s17, %s31
    %s120 = sor.u32 %s118, %s119
    %p121 = scmp.eq.s32.totalorder %s120, 0
    %s123 = sadd.s32 %s122, 1
    %s124 = scalar_select %p121, %s122, %s123
    %p127 = pneg %p121
    %p128 = scmp.eq.s32.totalorder %s9, 8
    %p129 = por %p127, %p128
    %p130 = scmp.ne.s32.totalorder %s122, %s125
    %p131 = scmp.eq.s32.totalorder %s9, 0
    %p132 = por %p130, %p131
    %p133 = scmp.ne.s32.totalorder %s122, %s125
    %p134 = scmp.eq.s32.totalorder %s14, 8
    %p135 = por %p133, %p134
    %p136 = scmp.ne.s32.totalorder %s125, %s126
    %p137 = scmp.eq.s32.totalorder %s14, 0
    %p138 = por %p136, %p137
    %p139 = scmp.ne.s32.totalorder %s125, %s126
    %p140 = scmp.eq.s32.totalorder %s15, 8
    %p141 = por %p139, %p140
    %p143 = scmp.ne.s32.totalorder %s126, %s142
    %p144 = scmp.eq.s32.totalorder %s15, 0
    %p145 = por %p143, %p144
    %p146 = scmp.le.s32.totalorder 1, %s9
    %p147 = scmp.lt.s32.totalorder %s9, 10
    %p148 = pnand %p146, %p147
    %p149 = pneg %p148
    // Predicated region
    $region9: #{forward.33} parent=5 // pred_check
      _
    $region10: #{forward.33} parent=5 // pred_check_branch
      %151 = sbr.rel (%p148) target = $region12
    $region11: #{forward.33} parent=5 // pred_region
      %s152 = ssub.s32 %s9, 1
      // Predicated region
      $region13: #{forward.33} parent=11 // pred_check
        %p153 = pneg %p110
      $region14: #{forward.33} parent=11 // pred_check_branch
        %155 = sbr.rel (%p153) target = $region16
      $region15: #{forward.33} parent=11 // pred_region
        %p156 = scmp.lt.s32.totalorder %s20, 0
        %s157 = scalar_select %p156, %s20, 0
        %s158 = scalar_lea.vmem %s2, %s157
      $region16: #{forward.33} parent=11 // pred_fallthru
        _
    $region12: #{forward.33} parent=5 // pred_fallthru
      _
    %p159 = scmp.lt.s32.totalorder %s9, 9
    // Predicated region
    $region17: #{forward.33} parent=5 // pred_check
      %p160 = pneg %p159
    $region18: #{forward.33} parent=5 // pred_check_branch
      %162 = sbr.rel (%p160) target = $region20
    $region19: #{forward.33} parent=5 // pred_region
      // Predicated region
      $region21: #{forward.33} parent=19 // pred_check
        %p163 = pneg %p50
      $region22: #{forward.33} parent=19 // pred_check_branch
        %165 = sbr.rel (%p163) target = $region24
      $region23: #{forward.33} parent=19 // pred_region
        %p166 = scmp.lt.s32.totalorder %s16, 0
        %s167 = scalar_select %p166, %s16, 0
        %p168 = scmp.lt.s32.totalorder %s18, 8
        %s169 = scalar_select %p168, %s18, 8
        %s170 = smul.addr %s167, 9
        %s171 = sadd.s32 %s169, %s170
        %s172 = smul.addr %s171, 4
        %s173 = scalar_lea.vmem %s0, %s172
      $region24: #{forward.33} parent=19 // pred_fallthru
        _
      // Predicated region
      $region25: #{forward.33} parent=19 // pred_check
        %p174 = pneg %p78
      $region26: #{forward.33} parent=19 // pred_check_branch
        %176 = sbr.rel (%p174) target = $region28
      $region27: #{forward.33} parent=19 // pred_region
        %s177 = smul.u32 16, %s18
        %p178 = scmp.lt.s32.totalorder %s177, 143
        %s179 = scalar_select %p178, %s177, 143
        %p180 = scmp.lt.s32.totalorder %s17, 0
        %s181 = scalar_select %p180, %s17, 0
        %s182 = sadd.s32 %s181, %s179
        %s183 = smul.addr %s182, 4
        %s184 = scalar_lea.vmem %s1, %s183
        %s185 = smul.u32 16, %s18
      $region28: #{forward.33} parent=19 // pred_fallthru
        _
    $region20: #{forward.33} parent=5 // pred_fallthru
      _
    %p186 = scmp.le.s32.totalorder 1, %s9
    %p187 = scmp.lt.s32.totalorder %s9, 10
    %p188 = pnand %p186, %p187
    %p189 = pneg %p188
    // Predicated region
    $region29: #{forward.33} parent=5 // pred_check
      _
    $region30: #{forward.33} parent=5 // pred_check_branch
      %191 = sbr.rel (%p188) target = $region32
    $region31: #{forward.33} parent=5 // pred_region
      %s192 = ssub.s32 %s9, 1
      %p193 = scmp.lt.s32.totalorder %s19, 0
      %s194 = scalar_select %p193, %s19, 0
      %p195 = scmp.lt.s32.totalorder %s21, 8
      %s196 = scalar_select %p195, %s21, 8
      %s197 = smul.addr %s194, 9
      %s198 = sadd.s32 %s196, %s197
      %s199 = smul.addr %s198, 4
      %s200 = scalar_lea.vmem %s0, %s199
      %p201 = pneg %p56
      %p202 = pneg %p53
      %s203 = smul.u32 16, %s21
      %p204 = scmp.lt.s32.totalorder %s203, 143
      %s205 = scalar_select %p204, %s203, 143
      %p206 = scmp.lt.s32.totalorder %s20, 0
      %s207 = scalar_select %p206, %s20, 0
      %s208 = sadd.s32 %s207, %s205
      %s209 = smul.addr %s208, 4
      %s210 = scalar_lea.vmem %s1, %s209
      %p211 = pneg %p84
      %p212 = pneg %p81
      %p213 = scmp.lt.s32.totalorder %s20, 0
      %s214 = scalar_select %p213, %s20, 0
      %s215 = scalar_lea.vmem %s2, %s214
      %p216 = pneg %p110
      %p217 = pneg %p107
      %p218 = pneg %p138
      %p219 = pneg %p135
      %p220 = scmp.lt.s32.totalorder %s19, 0
      %s221 = scalar_select %p220, %s19, 0
      %p222 = scmp.lt.s32.totalorder %s20, 0
      %s223 = scalar_select %p222, %s20, 0
      %s224 = sadd.s32 %s223, %s221
      %s225 = smul.addr %s224, 4
      %s226 = scalar_lea.vmem %s3, %s225
      %p227 = scmp.lt.s32.totalorder %s19, 0
      %s228 = scalar_select %p227, %s19, 0
      %p229 = scmp.lt.s32.totalorder %s21, 8
      %s230 = scalar_select %p229, %s21, 8
      %s231 = smul.addr %s228, 9
      %s232 = sadd.s32 %s230, %s231
      %s233 = smul.addr %s232, 4
      %s234 = scalar_lea.vmem %s0, %s233
      %s235 = smul.u32 16, %s21
      %p236 = scmp.lt.s32.totalorder %s235, 143
      %s237 = scalar_select %p236, %s235, 143
      %p238 = scmp.lt.s32.totalorder %s20, 0
      %s239 = scalar_select %p238, %s20, 0
      %s240 = sadd.s32 %s239, %s237
      %s241 = smul.addr %s240, 4
      %s242 = scalar_lea.vmem %s1, %s241
      %s243 = smul.u32 16, %s21
      %p244 = scmp.lt.s32.totalorder %s20, 0
      %s245 = scalar_select %p244, %s20, 0
      %s246 = scalar_lea.vmem %s2, %s245
      %p247 = scmp.lt.s32.totalorder %s19, 0
      %s248 = scalar_select %p247, %s19, 0
      %p249 = scmp.lt.s32.totalorder %s20, 0
      %s250 = scalar_select %p249, %s20, 0
      %s251 = sadd.s32 %s250, %s248
      %s252 = smul.addr %s251, 4
      %s253 = scalar_lea.vmem %s3, %s252
      %p255 = scmp.eq.s32.totalorder %s21, 0
      // Predicated region
      $region33: #{forward.33} parent=31 // pred_check
        %p256 = pneg %p255
      $region34: #{forward.33} parent=31 // pred_check_branch
        %258 = sbr.rel (%p256) target = $region36
      $region35: #{forward.33} parent=31 // pred_region
        %259 = vst [vmem:[#allocation2] sm:$0xff] 0.0
      $region36: #{forward.33} parent=31 // pred_fallthru
        _
      %v260 = vld [vmem:[#allocation2] sm:$0xff]
      %v261 = vld [vmem:[%s234] sm:$0xf]
      %v262 = vld [vmem:[%s242] sm:$0xf]
      %v263 = vld [vmem:[%s242 + $0x4] sm:$0xf]
      %v264 = vld [vmem:[%s242 + $0x8] sm:$0xf]
      %v265 = vld [vmem:[%s242 + $0xc] sm:$0xf]
      %v266 = vld [vmem:[%s242 + $0x10] sm:$0xf]
      %v267 = vld [vmem:[%s242 + $0x14] sm:$0xf]
      %v268 = vld [vmem:[%s242 + $0x18] sm:$0xf]
      %v269 = vld [vmem:[%s242 + $0x1c] sm:$0xf]
      %v270 = vld [vmem:[%s242 + $0x20] sm:$0xf]
      %v271 = vld [vmem:[%s242 + $0x24] sm:$0xf]
      %v272 = vld [vmem:[%s242 + $0x28] sm:$0xf]
      %v273 = vld [vmem:[%s242 + $0x2c] sm:$0xf]
      %v274 = vld [vmem:[%s242 + $0x30] sm:$0xf]
      %v275 = vld [vmem:[%s242 + $0x34] sm:$0xf]
      %v276 = vld [vmem:[%s242 + $0x38] sm:$0xf]
      %v277 = vld [vmem:[%s242 + $0x3c] sm:$0xf]
      %v294 = vunpack.c.l.b16 %v262
      %v295 = vunpack.c.l.b16 %v263
      %v296 = vunpack.c.l.b16 %v264
      %v297 = vunpack.c.l.b16 %v265
      %v298 = vunpack.c.l.b16 %v266
      %v299 = vunpack.c.l.b16 %v267
      %v300 = vunpack.c.l.b16 %v268
      %v301 = vunpack.c.l.b16 %v269
      %v302 = vunpack.c.l.b16 %v270
      %v303 = vunpack.c.l.b16 %v271
      %v304 = vunpack.c.l.b16 %v272
      %v305 = vunpack.c.l.b16 %v273
      %v306 = vunpack.c.l.b16 %v274
      %v307 = vunpack.c.l.b16 %v275
      %v308 = vunpack.c.l.b16 %v276
      %v309 = vunpack.c.l.b16 %v277
      %v310 = vpack.c.b16 %v295, %v294
      %v311 = vpack.c.b16 %v297, %v296
      %v312 = vpack.c.b16 %v299, %v298
      %v313 = vpack.c.b16 %v301, %v300
      %v314 = vpack.c.b16 %v303, %v302
      %v315 = vpack.c.b16 %v305, %v304
      %v316 = vpack.c.b16 %v307, %v306
      %v317 = vpack.c.b16 %v309, %v308
      %326 = vmatprep.subr.bf16.mxu0 0
      %327 = vmatpush1.bf16.msra.mxu0 %v310
      %328 = vmatprep.subr.bf16.mxu0 0
      %329 = vmatpush1.bf16.msra.mxu0 %v311
      %330 = vmatprep.subr.bf16.mxu0 0
      %331 = vmatpush1.bf16.msra.mxu0 %v312
      %332 = vmatprep.subr.bf16.mxu0 0
      %333 = vmatpush1.bf16.msra.mxu0 %v313
      %334 = vmatprep.subr.bf16.mxu0 0
      %335 = vmatpush1.bf16.msra.mxu0 %v314
      %336 = vmatprep.subr.bf16.mxu0 0
      %337 = vmatpush1.bf16.msra.mxu0 %v315
      %338 = vmatprep.subr.bf16.mxu0 0
      %339 = vmatpush1.bf16.msra.mxu0 %v316
      %340 = vmatprep.subr.bf16.mxu0 0
      %341 = vmatpush1.bf16.msra.mxu0 %v317
      %342 = vmatprep.subr.bf16.mxu0 0
      %343 = vmatpush1.bf16.msra.mxu0 0
      %344 = vmatprep.subr.bf16.mxu0 0
      %345 = vmatpush1.bf16.msra.mxu0 0
      %346 = vmatprep.subr.bf16.mxu0 0
      %347 = vmatpush1.bf16.msra.mxu0 0
      %348 = vmatprep.subr.bf16.mxu0 0
      %349 = vmatpush1.bf16.msra.mxu0 0
      %350 = vmatprep.subr.bf16.mxu0 0
      %351 = vmatpush1.bf16.msra.mxu0 0
      %352 = vmatprep.subr.bf16.mxu0 0
      %353 = vmatpush1.bf16.msra.mxu0 0
      %354 = vmatprep.subr.bf16.mxu0 0
      %355 = vmatpush1.bf16.msra.mxu0 0
      %356 = vmatprep.subr.bf16.mxu0 0
      %357 = vmatpush1.bf16.msra.mxu0 0
      %358 = vmatprep.mubr.bf16.mxu0 0
      %359 = vmatmul.mubr.bf16.gmra.mrb[0].mxu0 %v261
      %v360 = vpop.f32.mrb[0].mxu0
      %v361 = vadd.f32 0.0, %v360
      %v362 = vpop.f32.mrb[0].mxu0
      %v363 = vpop.f32.mrb[0].mxu0
      %v364 = vpop.f32.mrb[0].mxu0
      %365 = vdwg.mxu0
      %v366 = vadd.f32 %v260, %v361
      %367 = vst [vmem:[#allocation2] sm:$0xff] %v366
      %p368 = scmp.eq.s32.totalorder %s21, 8
      // Predicated region
      $region37: #{forward.33} parent=31 // pred_check
        %p369 = pneg %p368
      $region38: #{forward.33} parent=31 // pred_check_branch
        %371 = sbr.rel (%p369) target = $region40
      $region39: #{forward.33} parent=31 // pred_region
        %v372 = vld [vmem:[#allocation2] sm:$0xff]
        %v373 = vld [vmem:[%s246] sm:$0x1]
        %v375 = vlaneseq
        %v376 = vshrl.u32 %v375, 7
        %v377 = vsub.s32 0, %v376
        %v378 = vrot.slane %v373, %v377
        %v380 = vadd.f32 %v372, %v378
        %v381 = vmax.f32 %v380, 0.0
        %v382 = vpack.c.bf16 %v381, %v381
        %383 = vst [vmem:[%s253] sm:$0xf] %v382
      $region40: #{forward.33} parent=31 // pred_fallthru
        _
      %p384 = scmp.lt.s32.totalorder %s19, 0
      %s385 = scalar_select %p384, %s19, 0
      %p386 = scmp.lt.s32.totalorder %s20, 0
      %s387 = scalar_select %p386, %s20, 0
      %s388 = sadd.s32 %s387, %s385
      %s389 = smul.addr %s388, 4
      %s390 = scalar_lea.vmem %s3, %s389
      // Predicated region
      $region41: #{forward.33} parent=31 // pred_check
        %p391 = pneg %p135
      $region42: #{forward.33} parent=31 // pred_check_branch
        %393 = sbr.rel (%p391) target = $region44
      $region43: #{forward.33} parent=31 // pred_region
        _
      $region44: #{forward.33} parent=31 // pred_fallthru
        _
      // Predicated region
      $region45: #{forward.33} parent=31 // pred_check
        %p394 = pneg %p135
      $region46: #{forward.33} parent=31 // pred_check_branch
        %396 = sbr.rel (%p394) target = $region48
      $region47: #{forward.33} parent=31 // pred_region
        %p397 = scmp.lt.s32.totalorder %s19, 0
        %s398 = scalar_select %p397, %s19, 0
        %p399 = scmp.lt.s32.totalorder %s20, 0
        %s400 = scalar_select %p399, %s20, 0
        %s401 = sadd.s32 %s400, %s398
        %s402 = smul.addr %s401, 4
        %s403 = scalar_lea.vmem %s3, %s402
      $region48: #{forward.33} parent=31 // pred_fallthru
        _
    $region32: #{forward.33} parent=5 // pred_fallthru
      _
    %p404 = scmp.le.s32.totalorder 2, %s9
    // Predicated region
    $region49: #{forward.33} parent=5 // pred_check
      %p405 = pneg %p404
    $region50: #{forward.33} parent=5 // pred_check_branch
      %407 = sbr.rel (%p405) target = $region52
    $region51: #{forward.33} parent=5 // pred_region
      %s408 = ssub.s32 %s9, 2
    $region52: #{forward.33} parent=5 // pred_fallthru
      _
  $region6: #{forward.33} parent=0 // loop_footer
    %s13 = sadd.s32 1, %s9
  $region7: #{forward.33} parent=0 // loop_footer_branch
    %8 = sbr.rel target = $region3
  $region8: #{forward.33} parent=0 // loop_exit
    _

// kernel: forward.32
$region0: #{forward.32}
  #allocation0 [shape = 'u32[]', space=smem, size = 0x4, offset = 0x4, fixed_abs, tag = 'smem constant byte address 0x4 - core index']
  #allocation1 [shape = 'u32[144,128]{1,0:T(1,128)}', space=vmem, size = 0x12000, scoped, tag = 'internal scratch']
  #allocation2 [shape = 'f32[8,128]{1,0:T(8,128)}', space=vmem, size = 0x1000, scoped, tag = 'scratch operand']
  %s0 = inlined_call_operand.vmem [shape: bf16[8,1152], index: 0, kind: input, shape index: {}]
  %s1 = inlined_call_operand.vmem [shape: bf16[1152,128], index: 1, kind: input, shape index: {}]
  %s2 = inlined_call_operand.vmem [shape: f32[1,128], index: 2, kind: input, shape index: {}]
  %s3 = inlined_call_operand.vmem [shape: bf16[8,128], index: 3, kind: input, shape index: {}]
  %s4 = inlined_call_operand.vmem [shape: bf16[8,128], index: 4, kind: output, shape index: {}]
  %s5 = sld [smem:[#allocation0]]
  $region57: #{forward.32} parent=0
    _
  %s7 = ssub.s32 1, %s5
  %s8 = scalar_select 0, %s7, %s5
  loop: start=0, step=1, limit=11
  $region2: #{forward.32} parent=0 // loop_pre_header
    _
  $region3: #{forward.32} parent=0 // loop_header
    %s10 = sphi 0, %s14
    %p11 = scmp.ge.s32.totalorder %s10, 11
    %s17 = sphi 0, %s36
    %s18 = sphi 0, %s32
    %s19 = sphi 0, %s28
    %s20 = sphi 0, %s17
    %s21 = sphi 0, %s18
    %s22 = sphi 0, %s19
    %s23 = sphi 0, %s20
    %s24 = sphi 0, %s21
    %s25 = sphi 0, %s22
    %s41 = sphi 0, %s43
    %s44 = sphi 0, %s41
    %s45 = sphi 0, %s44
    %s61 = sphi 0, %s45
    %s69 = sphi 0, %s71
    %s72 = sphi 0, %s69
    %s73 = sphi 0, %s72
    %s89 = sphi 0, %s73
    %s95 = sphi 0, %s97
    %s98 = sphi 0, %s95
    %s99 = sphi 0, %s98
    %s115 = sphi 0, %s99
    %s123 = sphi 0, %s125
    %s126 = sphi 0, %s123
    %s127 = sphi 0, %s126
    %s143 = sphi 0, %s127
    %s151 = sphi 0, %s153
    %s154 = sphi 0, %s151
    %s155 = sphi 0, %s154
    %s171 = sphi 0, %s155
  $region4: #{forward.32} parent=0 // loop_header_branch
    %13 = sbr.rel (%p11) target = $region8
  $region5: #{forward.32} parent=0 // loop_body
    %s15 = ssub.s32 %s10, 1
    %s16 = ssub.s32 %s10, 2
    %s26 = sadd.s32 1, %s19
    %p27 = scmp.ge.s32.totalorder %s26, 9
    %s28 = scalar_select %p27, 0, %s26
    %s29 = sadd.s32 1, %s18
    %s30 = scalar_select %p27, %s29, %s18
    %p31 = scmp.ge.s32.totalorder %s30, 1
    %s32 = scalar_select %p31, 0, %s30
    %s33 = sadd.s32 1, %s17
    %s34 = scalar_select %p31, %s33, %s17
    %p35 = scmp.ge.s32.totalorder %s34, 1
    %s36 = scalar_select %p35, 0, %s34
    %s37 = ssub.s32 %s17, %s36
    %s38 = ssub.s32 %s19, %s28
    %s39 = sor.u32 %s37, %s38
    %p40 = scmp.eq.s32.totalorder %s39, 0
    %s42 = sadd.s32 %s41, 1
    %s43 = scalar_select %p40, %s41, %s42
    %p46 = pneg %p40
    %p47 = scmp.eq.s32.totalorder %s10, 8
    %p48 = por %p46, %p47
    %p49 = scmp.ne.s32.totalorder %s41, %s44
    %p50 = scmp.eq.s32.totalorder %s10, 0
    %p51 = por %p49, %p50
    %p52 = scmp.ne.s32.totalorder %s41, %s44
    %p53 = scmp.eq.s32.totalorder %s15, 8
    %p54 = por %p52, %p53
    %p55 = scmp.ne.s32.totalorder %s44, %s45
    %p56 = scmp.eq.s32.totalorder %s15, 0
    %p57 = por %p55, %p56
    %p58 = scmp.ne.s32.totalorder %s44, %s45
    %p59 = scmp.eq.s32.totalorder %s16, 8
    %p60 = por %p58, %p59
    %p62 = scmp.ne.s32.totalorder %s45, %s61
    %p63 = scmp.eq.s32.totalorder %s16, 0
    %p64 = por %p62, %p63
    %s65 = ssub.s32 %s19, %s28
    %s66 = ssub.s32 %s18, %s32
    %s67 = sor.u32 %s65, %s66
    %p68 = scmp.eq.s32.totalorder %s67, 0
    %s70 = sadd.s32 %s69, 1
    %s71 = scalar_select %p68, %s69, %s70
    %p74 = pneg %p68
    %p75 = scmp.eq.s32.totalorder %s10, 8
    %p76 = por %p74, %p75
    %p77 = scmp.ne.s32.totalorder %s69, %s72
    %p78 = scmp.eq.s32.totalorder %s10, 0
    %p79 = por %p77, %p78
    %p80 = scmp.ne.s32.totalorder %s69, %s72
    %p81 = scmp.eq.s32.totalorder %s15, 8
    %p82 = por %p80, %p81
    %p83 = scmp.ne.s32.totalorder %s72, %s73
    %p84 = scmp.eq.s32.totalorder %s15, 0
    %p85 = por %p83, %p84
    %p86 = scmp.ne.s32.totalorder %s72, %s73
    %p87 = scmp.eq.s32.totalorder %s16, 8
    %p88 = por %p86, %p87
    %p90 = scmp.ne.s32.totalorder %s73, %s89
    %p91 = scmp.eq.s32.totalorder %s16, 0
    %p92 = por %p90, %p91
    %s93 = ssub.s32 %s18, %s32
    %p94 = scmp.eq.s32.totalorder %s93, 0
    %s96 = sadd.s32 %s95, 1
    %s97 = scalar_select %p94, %s95, %s96
    %p100 = pneg %p94
    %p101 = scmp.eq.s32.totalorder %s10, 8
    %p102 = por %p100, %p101
    %p103 = scmp.ne.s32.totalorder %s95, %s98
    %p104 = scmp.eq.s32.totalorder %s10, 0
    %p105 = por %p103, %p104
    %p106 = scmp.ne.s32.totalorder %s95, %s98
    %p107 = scmp.eq.s32.totalorder %s15, 8
    %p108 = por %p106, %p107
    %p109 = scmp.ne.s32.totalorder %s98, %s99
    %p110 = scmp.eq.s32.totalorder %s15, 0
    %p111 = por %p109, %p110
    %p112 = scmp.ne.s32.totalorder %s98, %s99
    %p113 = scmp.eq.s32.totalorder %s16, 8
    %p114 = por %p112, %p113
    %p116 = scmp.ne.s32.totalorder %s99, %s115
    %p117 = scmp.eq.s32.totalorder %s16, 0
    %p118 = por %p116, %p117
    %s119 = ssub.s32 %s17, %s36
    %s120 = ssub.s32 %s18, %s32
    %s121 = sor.u32 %s119, %s120
    %p122 = scmp.eq.s32.totalorder %s121, 0
    %s124 = sadd.s32 %s123, 1
    %s125 = scalar_select %p122, %s123, %s124
    %p128 = pneg %p122
    %p129 = scmp.eq.s32.totalorder %s10, 8
    %p130 = por %p128, %p129
    %p131 = scmp.ne.s32.totalorder %s123, %s126
    %p132 = scmp.eq.s32.totalorder %s10, 0
    %p133 = por %p131, %p132
    %p134 = scmp.ne.s32.totalorder %s123, %s126
    %p135 = scmp.eq.s32.totalorder %s15, 8
    %p136 = por %p134, %p135
    %p137 = scmp.ne.s32.totalorder %s126, %s127
    %p138 = scmp.eq.s32.totalorder %s15, 0
    %p139 = por %p137, %p138
    %p140 = scmp.ne.s32.totalorder %s126, %s127
    %p141 = scmp.eq.s32.totalorder %s16, 8
    %p142 = por %p140, %p141
    %p144 = scmp.ne.s32.totalorder %s127, %s143
    %p145 = scmp.eq.s32.totalorder %s16, 0
    %p146 = por %p144, %p145
    %s147 = ssub.s32 %s17, %s36
    %s148 = ssub.s32 %s18, %s32
    %s149 = sor.u32 %s147, %s148
    %p150 = scmp.eq.s32.totalorder %s149, 0
    %s152 = sadd.s32 %s151, 1
    %s153 = scalar_select %p150, %s151, %s152
    %p156 = pneg %p150
    %p157 = scmp.eq.s32.totalorder %s10, 8
    %p158 = por %p156, %p157
    %p159 = scmp.ne.s32.totalorder %s151, %s154
    %p160 = scmp.eq.s32.totalorder %s10, 0
    %p161 = por %p159, %p160
    %p162 = scmp.ne.s32.totalorder %s151, %s154
    %p163 = scmp.eq.s32.totalorder %s15, 8
    %p164 = por %p162, %p163
    %p165 = scmp.ne.s32.totalorder %s154, %s155
    %p166 = scmp.eq.s32.totalorder %s15, 0
    %p167 = por %p165, %p166
    %p168 = scmp.ne.s32.totalorder %s154, %s155
    %p169 = scmp.eq.s32.totalorder %s16, 8
    %p170 = por %p168, %p169
    %p172 = scmp.ne.s32.totalorder %s155, %s171
    %p173 = scmp.eq.s32.totalorder %s16, 0
    %p174 = por %p172, %p173
    %p175 = scmp.le.s32.totalorder 1, %s10
    %p176 = scmp.lt.s32.totalorder %s10, 10
    %p177 = pnand %p175, %p176
    %p178 = pneg %p177
    // Predicated region
    $region9: #{forward.32} parent=5 // pred_check
      _
    $region10: #{forward.32} parent=5 // pred_check_branch
      %180 = sbr.rel (%p177) target = $region12
    $region11: #{forward.32} parent=5 // pred_region
      %s181 = ssub.s32 %s10, 1
      // Predicated region
      $region13: #{forward.32} parent=11 // pred_check
        %p182 = pneg %p111
      $region14: #{forward.32} parent=11 // pred_check_branch
        %184 = sbr.rel (%p182) target = $region16
      $region15: #{forward.32} parent=11 // pred_region
        %p185 = scmp.lt.s32.totalorder %s21, 0
        %s186 = scalar_select %p185, %s21, 0
        %s187 = scalar_lea.vmem %s2, %s186
      $region16: #{forward.32} parent=11 // pred_fallthru
        _
      // Predicated region
      $region17: #{forward.32} parent=11 // pred_check
        %p188 = pneg %p139
      $region18: #{forward.32} parent=11 // pred_check_branch
        %190 = sbr.rel (%p188) target = $region20
      $region19: #{forward.32} parent=11 // pred_region
        %p191 = scmp.lt.s32.totalorder %s20, 0
        %s192 = scalar_select %p191, %s20, 0
        %p193 = scmp.lt.s32.totalorder %s21, 0
        %s194 = scalar_select %p193, %s21, 0
        %s195 = sadd.s32 %s194, %s192
        %s196 = smul.addr %s195, 4
        %s197 = scalar_lea.vmem %s3, %s196
      $region20: #{forward.32} parent=11 // pred_fallthru
        _
    $region12: #{forward.32} parent=5 // pred_fallthru
      _
    %p198 = scmp.lt.s32.totalorder %s10, 9
    // Predicated region
    $region21: #{forward.32} parent=5 // pred_check
      %p199 = pneg %p198
    $region22: #{forward.32} parent=5 // pred_check_branch
      %201 = sbr.rel (%p199) target = $region24
    $region23: #{forward.32} parent=5 // pred_region
      // Predicated region
      $region25: #{forward.32} parent=23 // pred_check
        %p202 = pneg %p51
      $region26: #{forward.32} parent=23 // pred_check_branch
        %204 = sbr.rel (%p202) target = $region28
      $region27: #{forward.32} parent=23 // pred_region
        %p205 = scmp.lt.s32.totalorder %s17, 0
        %s206 = scalar_select %p205, %s17, 0
        %p207 = scmp.lt.s32.totalorder %s19, 8
        %s208 = scalar_select %p207, %s19, 8
        %s209 = smul.addr %s206, 9
        %s210 = sadd.s32 %s208, %s209
        %s211 = smul.addr %s210, 4
        %s212 = scalar_lea.vmem %s0, %s211
      $region28: #{forward.32} parent=23 // pred_fallthru
        _
      // Predicated region
      $region29: #{forward.32} parent=23 // pred_check
        %p213 = pneg %p79
      $region30: #{forward.32} parent=23 // pred_check_branch
        %215 = sbr.rel (%p213) target = $region32
      $region31: #{forward.32} parent=23 // pred_region
        %s216 = smul.u32 16, %s19
        %p217 = scmp.lt.s32.totalorder %s216, 143
        %s218 = scalar_select %p217, %s216, 143
        %p219 = scmp.lt.s32.totalorder %s18, 0
        %s220 = scalar_select %p219, %s18, 0
        %s221 = sadd.s32 %s220, %s218
        %s222 = smul.addr %s221, 4
        %s223 = scalar_lea.vmem %s1, %s222
        %s224 = smul.u32 16, %s19
      $region32: #{forward.32} parent=23 // pred_fallthru
        _
    $region24: #{forward.32} parent=5 // pred_fallthru
      _
    %p225 = scmp.le.s32.totalorder 1, %s10
    %p226 = scmp.lt.s32.totalorder %s10, 10
    %p227 = pnand %p225, %p226
    %p228 = pneg %p227
    // Predicated region
    $region33: #{forward.32} parent=5 // pred_check
      _
    $region34: #{forward.32} parent=5 // pred_check_branch
      %230 = sbr.rel (%p227) target = $region36
    $region35: #{forward.32} parent=5 // pred_region
      %s231 = ssub.s32 %s10, 1
      %p232 = scmp.lt.s32.totalorder %s20, 0
      %s233 = scalar_select %p232, %s20, 0
      %p234 = scmp.lt.s32.totalorder %s22, 8
      %s235 = scalar_select %p234, %s22, 8
      %s236 = smul.addr %s233, 9
      %s237 = sadd.s32 %s235, %s236
      %s238 = smul.addr %s237, 4
      %s239 = scalar_lea.vmem %s0, %s238
      %p240 = pneg %p57
      %p241 = pneg %p54
      %s242 = smul.u32 16, %s22
      %p243 = scmp.lt.s32.totalorder %s242, 143
      %s244 = scalar_select %p243, %s242, 143
      %p245 = scmp.lt.s32.totalorder %s21, 0
      %s246 = scalar_select %p245, %s21, 0
      %s247 = sadd.s32 %s246, %s244
      %s248 = smul.addr %s247, 4
      %s249 = scalar_lea.vmem %s1, %s248
      %p250 = pneg %p85
      %p251 = pneg %p82
      %p252 = scmp.lt.s32.totalorder %s21, 0
      %s253 = scalar_select %p252, %s21, 0
      %s254 = scalar_lea.vmem %s2, %s253
      %p255 = pneg %p111
      %p256 = pneg %p108
      %p257 = scmp.lt.s32.totalorder %s20, 0
      %s258 = scalar_select %p257, %s20, 0
      %p259 = scmp.lt.s32.totalorder %s21, 0
      %s260 = scalar_select %p259, %s21, 0
      %s261 = sadd.s32 %s260, %s258
      %s262 = smul.addr %s261, 4
      %s263 = scalar_lea.vmem %s3, %s262
      %p264 = pneg %p139
      %p265 = pneg %p136
      %p266 = pneg %p167
      %p267 = pneg %p164
      %p268 = scmp.lt.s32.totalorder %s20, 0
      %s269 = scalar_select %p268, %s20, 0
      %p270 = scmp.lt.s32.totalorder %s21, 0
      %s271 = scalar_select %p270, %s21, 0
      %s272 = sadd.s32 %s271, %s269
      %s273 = smul.addr %s272, 4
      %s274 = scalar_lea.vmem %s4, %s273
      %p275 = scmp.lt.s32.totalorder %s20, 0
      %s276 = scalar_select %p275, %s20, 0
      %p277 = scmp.lt.s32.totalorder %s22, 8
      %s278 = scalar_select %p277, %s22, 8
      %s279 = smul.addr %s276, 9
      %s280 = sadd.s32 %s278, %s279
      %s281 = smul.addr %s280, 4
      %s282 = scalar_lea.vmem %s0, %s281
      %s283 = smul.u32 16, %s22
      %p284 = scmp.lt.s32.totalorder %s283, 143
      %s285 = scalar_select %p284, %s283, 143
      %p286 = scmp.lt.s32.totalorder %s21, 0
      %s287 = scalar_select %p286, %s21, 0
      %s288 = sadd.s32 %s287, %s285
      %s289 = smul.addr %s288, 4
      %s290 = scalar_lea.vmem %s1, %s289
      %s291 = smul.u32 16, %s22
      %p292 = scmp.lt.s32.totalorder %s21, 0
      %s293 = scalar_select %p292, %s21, 0
      %s294 = scalar_lea.vmem %s2, %s293
      %p295 = scmp.lt.s32.totalorder %s20, 0
      %s296 = scalar_select %p295, %s20, 0
      %p297 = scmp.lt.s32.totalorder %s21, 0
      %s298 = scalar_select %p297, %s21, 0
      %s299 = sadd.s32 %s298, %s296
      %s300 = smul.addr %s299, 4
      %s301 = scalar_lea.vmem %s3, %s300
      %p302 = scmp.lt.s32.totalorder %s20, 0
      %s303 = scalar_select %p302, %s20, 0
      %p304 = scmp.lt.s32.totalorder %s21, 0
      %s305 = scalar_select %p304, %s21, 0
      %s306 = sadd.s32 %s305, %s303
      %s307 = smul.addr %s306, 4
      %s308 = scalar_lea.vmem %s4, %s307
      %p310 = scmp.eq.s32.totalorder %s22, 0
      // Predicated region
      $region37: #{forward.32} parent=35 // pred_check
        %p311 = pneg %p310
      $region38: #{forward.32} parent=35 // pred_check_branch
        %313 = sbr.rel (%p311) target = $region40
      $region39: #{forward.32} parent=35 // pred_region
        %314 = vst [vmem:[#allocation2] sm:$0xff] 0.0
      $region40: #{forward.32} parent=35 // pred_fallthru
        _
      %v315 = vld [vmem:[#allocation2] sm:$0xff]
      %v316 = vld [vmem:[%s282] sm:$0xf]
      %v317 = vld [vmem:[%s290] sm:$0xf]
      %v318 = vld [vmem:[%s290 + $0x4] sm:$0xf]
      %v319 = vld [vmem:[%s290 + $0x8] sm:$0xf]
      %v320 = vld [vmem:[%s290 + $0xc] sm:$0xf]
      %v321 = vld [vmem:[%s290 + $0x10] sm:$0xf]
      %v322 = vld [vmem:[%s290 + $0x14] sm:$0xf]
      %v323 = vld [vmem:[%s290 + $0x18] sm:$0xf]
      %v324 = vld [vmem:[%s290 + $0x1c] sm:$0xf]
      %v325 = vld [vmem:[%s290 + $0x20] sm:$0xf]
      %v326 = vld [vmem:[%s290 + $0x24] sm:$0xf]
      %v327 = vld [vmem:[%s290 + $0x28] sm:$0xf]
      %v328 = vld [vmem:[%s290 + $0x2c] sm:$0xf]
      %v329 = vld [vmem:[%s290 + $0x30] sm:$0xf]
      %v330 = vld [vmem:[%s290 + $0x34] sm:$0xf]
      %v331 = vld [vmem:[%s290 + $0x38] sm:$0xf]
      %v332 = vld [vmem:[%s290 + $0x3c] sm:$0xf]
      %v349 = vunpack.c.l.b16 %v317
      %v350 = vunpack.c.l.b16 %v318
      %v351 = vunpack.c.l.b16 %v319
      %v352 = vunpack.c.l.b16 %v320
      %v353 = vunpack.c.l.b16 %v321
      %v354 = vunpack.c.l.b16 %v322
      %v355 = vunpack.c.l.b16 %v323
      %v356 = vunpack.c.l.b16 %v324
      %v357 = vunpack.c.l.b16 %v325
      %v358 = vunpack.c.l.b16 %v326
      %v359 = vunpack.c.l.b16 %v327
      %v360 = vunpack.c.l.b16 %v328
      %v361 = vunpack.c.l.b16 %v329
      %v362 = vunpack.c.l.b16 %v330
      %v363 = vunpack.c.l.b16 %v331
      %v364 = vunpack.c.l.b16 %v332
      %v365 = vpack.c.b16 %v350, %v349
      %v366 = vpack.c.b16 %v352, %v351
      %v367 = vpack.c.b16 %v354, %v353
      %v368 = vpack.c.b16 %v356, %v355
      %v369 = vpack.c.b16 %v358, %v357
      %v370 = vpack.c.b16 %v360, %v359
      %v371 = vpack.c.b16 %v362, %v361
      %v372 = vpack.c.b16 %v364, %v363
      %381 = vmatprep.subr.bf16.mxu0 0
      %382 = vmatpush1.bf16.msra.mxu0 %v365
      %383 = vmatprep.subr.bf16.mxu0 0
      %384 = vmatpush1.bf16.msra.mxu0 %v366
      %385 = vmatprep.subr.bf16.mxu0 0
      %386 = vmatpush1.bf16.msra.mxu0 %v367
      %387 = vmatprep.subr.bf16.mxu0 0
      %388 = vmatpush1.bf16.msra.mxu0 %v368
      %389 = vmatprep.subr.bf16.mxu0 0
      %390 = vmatpush1.bf16.msra.mxu0 %v369
      %391 = vmatprep.subr.bf16.mxu0 0
      %392 = vmatpush1.bf16.msra.mxu0 %v370
      %393 = vmatprep.subr.bf16.mxu0 0
      %394 = vmatpush1.bf16.msra.mxu0 %v371
      %395 = vmatprep.subr.bf16.mxu0 0
      %396 = vmatpush1.bf16.msra.mxu0 %v372
      %397 = vmatprep.subr.bf16.mxu0 0
      %398 = vmatpush1.bf16.msra.mxu0 0
      %399 = vmatprep.subr.bf16.mxu0 0
      %400 = vmatpush1.bf16.msra.mxu0 0
      %401 = vmatprep.subr.bf16.mxu0 0
      %402 = vmatpush1.bf16.msra.mxu0 0
      %403 = vmatprep.subr.bf16.mxu0 0
      %404 = vmatpush1.bf16.msra.mxu0 0
      %405 = vmatprep.subr.bf16.mxu0 0
      %406 = vmatpush1.bf16.msra.mxu0 0
      %407 = vmatprep.subr.bf16.mxu0 0
      %408 = vmatpush1.bf16.msra.mxu0 0
      %409 = vmatprep.subr.bf16.mxu0 0
      %410 = vmatpush1.bf16.msra.mxu0 0
      %411 = vmatprep.subr.bf16.mxu0 0
      %412 = vmatpush1.bf16.msra.mxu0 0
      %413 = vmatprep.mubr.bf16.mxu0 0
      %414 = vmatmul.mubr.bf16.gmra.mrb[0].mxu0 %v316
      %v415 = vpop.f32.mrb[0].mxu0
      %v416 = vadd.f32 0.0, %v415
      %v417 = vpop.f32.mrb[0].mxu0
      %v418 = vpop.f32.mrb[0].mxu0
      %v419 = vpop.f32.mrb[0].mxu0
      %420 = vdwg.mxu0
      %v421 = vadd.f32 %v315, %v416
      %422 = vst [vmem:[#allocation2] sm:$0xff] %v421
      %p423 = scmp.eq.s32.totalorder %s22, 8
      // Predicated region
      $region41: #{forward.32} parent=35 // pred_check
        %p424 = pneg %p423
      $region42: #{forward.32} parent=35 // pred_check_branch
        %426 = sbr.rel (%p424) target = $region44
      $region43: #{forward.32} parent=35 // pred_region
        %v427 = vld [vmem:[#allocation2] sm:$0xff]
        %v428 = vld [vmem:[%s294] sm:$0x1]
        %v430 = vlaneseq
        %v431 = vshrl.u32 %v430, 7
        %v432 = vsub.s32 0, %v431
        %v433 = vrot.slane %v428, %v432
        %v435 = vadd.f32 %v427, %v433
        %v436 = vld [vmem:[%s301] sm:$0xf]
        %v437 = vunpack.c.l.bf16 %v436
        %v438 = vadd.f32 %v435, %v437
        %v439 = vmax.f32 %v438, 0.0
        %v440 = vpack.c.bf16 %v439, %v439
        %441 = vst [vmem:[%s308] sm:$0xf] %v440
      $region44: #{forward.32} parent=35 // pred_fallthru
        _
      %p442 = scmp.lt.s32.totalorder %s20, 0
      %s443 = scalar_select %p442, %s20, 0
      %p444 = scmp.lt.s32.totalorder %s21, 0
      %s445 = scalar_select %p444, %s21, 0
      %s446 = sadd.s32 %s445, %s443
      %s447 = smul.addr %s446, 4
      %s448 = scalar_lea.vmem %s4, %s447
      // Predicated region
      $region45: #{forward.32} parent=35 // pred_check
        %p449 = pneg %p164
      $region46: #{forward.32} parent=35 // pred_check_branch
        %451 = sbr.rel (%p449) target = $region48
      $region47: #{forward.32} parent=35 // pred_region
        _
      $region48: #{forward.32} parent=35 // pred_fallthru
        _
      // Predicated region
      $region49: #{forward.32} parent=35 // pred_check
        %p452 = pneg %p164
      $region50: #{forward.32} parent=35 // pred_check_branch
        %454 = sbr.rel (%p452) target = $region52
      $region51: #{forward.32} parent=35 // pred_region
        %p455 = scmp.lt.s32.totalorder %s20, 0
        %s456 = scalar_select %p455, %s20, 0
        %p457 = scmp.lt.s32.totalorder %s21, 0
        %s458 = scalar_select %p457, %s21, 0
        %s459 = sadd.s32 %s458, %s456
        %s460 = smul.addr %s459, 4
        %s461 = scalar_lea.vmem %s4, %s460
      $region52: #{forward.32} parent=35 // pred_fallthru
        _
    $region36: #{forward.32} parent=5 // pred_fallthru
      _
    %p462 = scmp.le.s32.totalorder 2, %s10
    // Predicated region
    $region53: #{forward.32} parent=5 // pred_check
      %p463 = pneg %p462
    $region54: #{forward.32} parent=5 // pred_check_branch
      %465 = sbr.rel (%p463) target = $region56
    $region55: #{forward.32} parent=5 // pred_region
      %s466 = ssub.s32 %s10, 2
    $region56: #{forward.32} parent=5 // pred_fallthru
      _
  $region6: #{forward.32} parent=0 // loop_footer
    %s14 = sadd.s32 1, %s10
  $region7: #{forward.32} parent=0 // loop_footer_branch
    %9 = sbr.rel target = $region3
  $region8: #{forward.32} parent=0 // loop_exit
    _

// kernel: forward.42
$region0: #{forward.42}
  #allocation0 [shape = 'u32[]', space=smem, size = 0x4, offset = 0x4, fixed_abs, tag = 'smem constant byte address 0x4 - core index']
  #allocation1 [shape = 'u32[144,128]{1,0:T(1,128)}', space=vmem, size = 0x12000, scoped, tag = 'internal scratch']
  #allocation2 [shape = 'f32[2,256]{1,0:T(2,128)}', space=vmem, size = 0x800, scoped, tag = 'scratch operand']
  %s0 = inlined_call_operand.vmem [shape: bf16[2,1,1,9,256], index: 0, kind: input, shape index: {}, may-alias: {0,4}]
  %s1 = inlined_call_operand.vmem [shape: bf16[2,1152], index: 1, kind: input, shape index: {}]
  %s2 = inlined_call_operand.vmem [shape: bf16[1152,256], index: 2, kind: input, shape index: {}]
  %s3 = inlined_call_operand.vmem [shape: f32[1,256], index: 3, kind: input, shape index: {}]
  %s4 = inlined_call_operand.vmem [shape: bf16[2,1,1,9,256], index: 4, kind: output, shape index: {}, may-alias: {0,4}]
  %s5 = scalar_lea.vmem %s4, 8
  %s6 = sld [smem:[#allocation0]]
  $region83: #{forward.42} parent=0
    _
  %s8 = ssub.s32 1, %s6
  %s9 = scalar_select 0, %s8, %s6
  $region1: #{forward.42} parent=0
    #allocation3 [shape = 'u8[1024]{0}', space=vmem, size = 0x400, scoped, tag = 'output window, operand 0, single buffered']
    loop: start=0, step=1, limit=11
    $region2: #{forward.42} parent=1 // loop_pre_header
      _
    $region3: #{forward.42} parent=1 // loop_header
      %s11 = sphi 0, %s15
      %p12 = scmp.ge.s32.totalorder %s11, 11
      %s18 = sphi 0, %s37
      %s19 = sphi 0, %s33
      %s20 = sphi 0, %s29
      %s21 = sphi 0, %s18
      %s22 = sphi 0, %s19
      %s23 = sphi 0, %s20
      %s24 = sphi 0, %s21
      %s25 = sphi 0, %s22
      %s26 = sphi 0, %s23
      %s42 = sphi 0, %s44
      %s45 = sphi 0, %s42
      %s46 = sphi 0, %s45
      %s62 = sphi 0, %s46
      %s70 = sphi 0, %s72
      %s73 = sphi 0, %s70
      %s74 = sphi 0, %s73
      %s90 = sphi 0, %s74
      %s96 = sphi 0, %s98
      %s99 = sphi 0, %s96
      %s100 = sphi 0, %s99
      %s116 = sphi 0, %s100
      %s124 = sphi 0, %s126
      %s127 = sphi 0, %s124
      %s128 = sphi 0, %s127
      %s144 = sphi 0, %s128
    $region4: #{forward.42} parent=1 // loop_header_branch
      %14 = sbr.rel (%p12) target = $region8
    $region5: #{forward.42} parent=1 // loop_body
      %s16 = ssub.s32 %s11, 1
      %s17 = ssub.s32 %s11, 2
      %s27 = sadd.s32 1, %s20
      %p28 = scmp.ge.s32.totalorder %s27, 9
      %s29 = scalar_select %p28, 0, %s27
      %s30 = sadd.s32 1, %s19
      %s31 = scalar_select %p28, %s30, %s19
      %p32 = scmp.ge.s32.totalorder %s31, 1
      %s33 = scalar_select %p32, 0, %s31
      %s34 = sadd.s32 1, %s18
      %s35 = scalar_select %p32, %s34, %s18
      %p36 = scmp.ge.s32.totalorder %s35, 1
      %s37 = scalar_select %p36, 0, %s35
      %s38 = ssub.s32 %s18, %s37
      %s39 = ssub.s32 %s20, %s29
      %s40 = sor.u32 %s38, %s39
      %p41 = scmp.eq.s32.totalorder %s40, 0
      %s43 = sadd.s32 %s42, 1
      %s44 = scalar_select %p41, %s42, %s43
      %p47 = pneg %p41
      %p48 = scmp.eq.s32.totalorder %s11, 8
      %p49 = por %p47, %p48
      %p50 = scmp.ne.s32.totalorder %s42, %s45
      %p51 = scmp.eq.s32.totalorder %s11, 0
      %p52 = por %p50, %p51
      %p53 = scmp.ne.s32.totalorder %s42, %s45
      %p54 = scmp.eq.s32.totalorder %s16, 8
      %p55 = por %p53, %p54
      %p56 = scmp.ne.s32.totalorder %s45, %s46
      %p57 = scmp.eq.s32.totalorder %s16, 0
      %p58 = por %p56, %p57
      %p59 = scmp.ne.s32.totalorder %s45, %s46
      %p60 = scmp.eq.s32.totalorder %s17, 8
      %p61 = por %p59, %p60
      %p63 = scmp.ne.s32.totalorder %s46, %s62
      %p64 = scmp.eq.s32.totalorder %s17, 0
      %p65 = por %p63, %p64
      %s66 = ssub.s32 %s20, %s29
      %s67 = ssub.s32 %s19, %s33
      %s68 = sor.u32 %s66, %s67
      %p69 = scmp.eq.s32.totalorder %s68, 0
      %s71 = sadd.s32 %s70, 1
      %s72 = scalar_select %p69, %s70, %s71
      %p75 = pneg %p69
      %p76 = scmp.eq.s32.totalorder %s11, 8
      %p77 = por %p75, %p76
      %p78 = scmp.ne.s32.totalorder %s70, %s73
      %p79 = scmp.eq.s32.totalorder %s11, 0
      %p80 = por %p78, %p79
      %p81 = scmp.ne.s32.totalorder %s70, %s73
      %p82 = scmp.eq.s32.totalorder %s16, 8
      %p83 = por %p81, %p82
      %p84 = scmp.ne.s32.totalorder %s73, %s74
      %p85 = scmp.eq.s32.totalorder %s16, 0
      %p86 = por %p84, %p85
      %p87 = scmp.ne.s32.totalorder %s73, %s74
      %p88 = scmp.eq.s32.totalorder %s17, 8
      %p89 = por %p87, %p88
      %p91 = scmp.ne.s32.totalorder %s74, %s90
      %p92 = scmp.eq.s32.totalorder %s17, 0
      %p93 = por %p91, %p92
      %s94 = ssub.s32 %s19, %s33
      %p95 = scmp.eq.s32.totalorder %s94, 0
      %s97 = sadd.s32 %s96, 1
      %s98 = scalar_select %p95, %s96, %s97
      %p101 = pneg %p95
      %p102 = scmp.eq.s32.totalorder %s11, 8
      %p103 = por %p101, %p102
      %p104 = scmp.ne.s32.totalorder %s96, %s99
      %p105 = scmp.eq.s32.totalorder %s11, 0
      %p106 = por %p104, %p105
      %p107 = scmp.ne.s32.totalorder %s96, %s99
      %p108 = scmp.eq.s32.totalorder %s16, 8
      %p109 = por %p107, %p108
      %p110 = scmp.ne.s32.totalorder %s99, %s100
      %p111 = scmp.eq.s32.totalorder %s16, 0
      %p112 = por %p110, %p111
      %p113 = scmp.ne.s32.totalorder %s99, %s100
      %p114 = scmp.eq.s32.totalorder %s17, 8
      %p115 = por %p113, %p114
      %p117 = scmp.ne.s32.totalorder %s100, %s116
      %p118 = scmp.eq.s32.totalorder %s17, 0
      %p119 = por %p117, %p118
      %s120 = ssub.s32 %s18, %s37
      %s121 = ssub.s32 %s19, %s33
      %s122 = sor.u32 %s120, %s121
      %p123 = scmp.eq.s32.totalorder %s122, 0
      %s125 = sadd.s32 %s124, 1
      %s126 = scalar_select %p123, %s124, %s125
      %p129 = pneg %p123
      %p130 = scmp.eq.s32.totalorder %s11, 8
      %p131 = por %p129, %p130
      %p132 = scmp.ne.s32.totalorder %s124, %s127
      %p133 = scmp.eq.s32.totalorder %s11, 0
      %p134 = por %p132, %p133
      %p135 = scmp.ne.s32.totalorder %s124, %s127
      %p136 = scmp.eq.s32.totalorder %s16, 8
      %p137 = por %p135, %p136
      %p138 = scmp.ne.s32.totalorder %s127, %s128
      %p139 = scmp.eq.s32.totalorder %s16, 0
      %p140 = por %p138, %p139
      %p141 = scmp.ne.s32.totalorder %s127, %s128
      %p142 = scmp.eq.s32.totalorder %s17, 8
      %p143 = por %p141, %p142
      %p145 = scmp.ne.s32.totalorder %s128, %s144
      %p146 = scmp.eq.s32.totalorder %s17, 0
      %p147 = por %p145, %p146
      %p148 = scmp.le.s32.totalorder 1, %s11
      %p149 = scmp.lt.s32.totalorder %s11, 10
      %p150 = pnand %p148, %p149
      %p151 = pneg %p150
      // Predicated region
      $region9: #{forward.42} parent=5 // pred_check
        _
      $region10: #{forward.42} parent=5 // pred_check_branch
        %153 = sbr.rel (%p150) target = $region12
      $region11: #{forward.42} parent=5 // pred_region
        %s154 = ssub.s32 %s11, 1
        // Predicated region
        $region13: #{forward.42} parent=11 // pred_check
          %p155 = pneg %p112
        $region14: #{forward.42} parent=11 // pred_check_branch
          %157 = sbr.rel (%p155) target = $region16
        $region15: #{forward.42} parent=11 // pred_region
          %s158 = smul.u32 2, %s22
          %p159 = scmp.lt.s32.totalorder %s158, 1
          %s160 = scalar_select %p159, %s158, 1
          %s161 = scalar_lea.vmem %s3, %s160
          %s162 = smul.u32 2, %s22
        $region16: #{forward.42} parent=11 // pred_fallthru
          _
      $region12: #{forward.42} parent=5 // pred_fallthru
        _
      %p163 = scmp.lt.s32.totalorder %s11, 9
      // Predicated region
      $region17: #{forward.42} parent=5 // pred_check
        %p164 = pneg %p163
      $region18: #{forward.42} parent=5 // pred_check_branch
        %166 = sbr.rel (%p164) target = $region20
      $region19: #{forward.42} parent=5 // pred_region
        // Predicated region
        $region21: #{forward.42} parent=19 // pred_check
          %p167 = pneg %p52
        $region22: #{forward.42} parent=19 // pred_check_branch
          %169 = sbr.rel (%p167) target = $region24
        $region23: #{forward.42} parent=19 // pred_region
          %p170 = scmp.lt.s32.totalorder %s18, 0
          %s171 = scalar_select %p170, %s18, 0
          %p172 = scmp.lt.s32.totalorder %s20, 8
          %s173 = scalar_select %p172, %s20, 8
          %s174 = smul.addr %s171, 9
          %s175 = sadd.s32 %s173, %s174
          %s176 = scalar_lea.vmem %s1, %s175
        $region24: #{forward.42} parent=19 // pred_fallthru
          _
        // Predicated region
        $region25: #{forward.42} parent=19 // pred_check
          %p177 = pneg %p80
        $region26: #{forward.42} parent=19 // pred_check_branch
          %179 = sbr.rel (%p177) target = $region28
        $region27: #{forward.42} parent=19 // pred_region
          %s180 = smul.u32 16, %s20
          %s181 = smul.u32 2, %s19
          %p182 = scmp.lt.s32.totalorder %s180, 143
          %s183 = scalar_select %p182, %s180, 143
          %p184 = scmp.lt.s32.totalorder %s181, 1
          %s185 = scalar_select %p184, %s181, 1
          %s186 = smul.addr %s183, 2
          %s187 = sadd.s32 %s185, %s186
          %s188 = smul.addr %s187, 4
          %s189 = scalar_lea.vmem %s2, %s188
          %s190 = smul.u32 16, %s20
          %s191 = smul.u32 2, %s19
        $region28: #{forward.42} parent=19 // pred_fallthru
          _
      $region20: #{forward.42} parent=5 // pred_fallthru
        _
      %p192 = scmp.le.s32.totalorder 1, %s11
      %p193 = scmp.lt.s32.totalorder %s11, 10
      %p194 = pnand %p192, %p193
      %p195 = pneg %p194
      // Predicated region
      $region29: #{forward.42} parent=5 // pred_check
        _
      $region30: #{forward.42} parent=5 // pred_check_branch
        %197 = sbr.rel (%p194) target = $region32
      $region31: #{forward.42} parent=5 // pred_region
        %s198 = ssub.s32 %s11, 1
        %p199 = scmp.lt.s32.totalorder %s21, 0
        %s200 = scalar_select %p199, %s21, 0
        %p201 = scmp.lt.s32.totalorder %s23, 8
        %s202 = scalar_select %p201, %s23, 8
        %s203 = smul.addr %s200, 9
        %s204 = sadd.s32 %s202, %s203
        %s205 = scalar_lea.vmem %s1, %s204
        %p206 = pneg %p58
        %p207 = pneg %p55
        %s208 = smul.u32 16, %s23
        %s209 = smul.u32 2, %s22
        %p210 = scmp.lt.s32.totalorder %s208, 143
        %s211 = scalar_select %p210, %s208, 143
        %p212 = scmp.lt.s32.totalorder %s209, 1
        %s213 = scalar_select %p212, %s209, 1
        %s214 = smul.addr %s211, 2
        %s215 = sadd.s32 %s213, %s214
        %s216 = smul.addr %s215, 4
        %s217 = scalar_lea.vmem %s2, %s216
        %p218 = pneg %p86
        %p219 = pneg %p83
        %s220 = smul.u32 2, %s22
        %p221 = scmp.lt.s32.totalorder %s220, 1
        %s222 = scalar_select %p221, %s220, 1
        %s223 = scalar_lea.vmem %s3, %s222
        %p224 = pneg %p112
        %p225 = pneg %p109
        %p226 = pneg %p140
        %p227 = pneg %p137
        %p228 = scmp.lt.s32.totalorder %s21, 0
        %s229 = scalar_select %p228, %s21, 0
        %p230 = scmp.lt.s32.totalorder %s23, 8
        %s231 = scalar_select %p230, %s23, 8
        %s232 = smul.addr %s229, 9
        %s233 = sadd.s32 %s231, %s232
        %s234 = scalar_lea.vmem %s1, %s233
        %s235 = smul.u32 16, %s23
        %s236 = smul.u32 2, %s22
        %p237 = scmp.lt.s32.totalorder %s235, 143
        %s238 = scalar_select %p237, %s235, 143
        %p239 = scmp.lt.s32.totalorder %s236, 1
        %s240 = scalar_select %p239, %s236, 1
        %s241 = smul.addr %s238, 2
        %s242 = sadd.s32 %s240, %s241
        %s243 = smul.addr %s242, 4
        %s244 = scalar_lea.vmem %s2, %s243
        %s245 = smul.u32 16, %s23
        %s246 = smul.u32 2, %s22
        %s247 = smul.u32 2, %s22
        %p248 = scmp.lt.s32.totalorder %s247, 1
        %s249 = scalar_select %p248, %s247, 1
        %s250 = scalar_lea.vmem %s3, %s249
        %s251 = smul.u32 2, %s22
        %s252 = smul.u32 2, %s22
        %p254 = scmp.eq.s32.totalorder %s23, 0
        // Predicated region
        $region33: #{forward.42} parent=31 // pred_check
          %p255 = pneg %p254
        $region34: #{forward.42} parent=31 // pred_check_branch
          %257 = sbr.rel (%p255) target = $region36
        $region35: #{forward.42} parent=31 // pred_region
          %258 = vst [vmem:[#allocation2] sm:$0xf] 0.0
        $region36: #{forward.42} parent=31 // pred_fallthru
          _
        %v259 = vld [vmem:[#allocation2] sm:$0xf]
        %v260 = vld [vmem:[%s234] sm:$0x1]
        %v261 = vld [vmem:[%s244] sm:$0xff]
        %v262 = vld [vmem:[%s244 + $0x8] sm:$0xff]
        %v263 = vld [vmem:[%s244 + $0x10] sm:$0xff]
        %v264 = vld [vmem:[%s244 + $0x18] sm:$0xff]
        %v265 = vld [vmem:[%s244 + $0x20] sm:$0xff]
        %v266 = vld [vmem:[%s244 + $0x28] sm:$0xff]
        %v267 = vld [vmem:[%s244 + $0x30] sm:$0xff]
        %v268 = vld [vmem:[%s244 + $0x38] sm:$0xff]
        %v269 = vld [vmem:[%s244 + $0x40] sm:$0xff]
        %v270 = vld [vmem:[%s244 + $0x48] sm:$0xff]
        %v271 = vld [vmem:[%s244 + $0x50] sm:$0xff]
        %v272 = vld [vmem:[%s244 + $0x58] sm:$0xff]
        %v273 = vld [vmem:[%s244 + $0x60] sm:$0xff]
        %v274 = vld [vmem:[%s244 + $0x68] sm:$0xff]
        %v275 = vld [vmem:[%s244 + $0x70] sm:$0xff]
        %v276 = vld [vmem:[%s244 + $0x78] sm:$0xff]
        %v293 = vunpack.c.l.b16 %v261
        %v294 = vunpack.c.h.b16 %v261
        %v295 = vunpack.c.l.b16 %v262
        %v296 = vunpack.c.h.b16 %v262
        %v297 = vunpack.c.l.b16 %v263
        %v298 = vunpack.c.h.b16 %v263
        %v299 = vunpack.c.l.b16 %v264
        %v300 = vunpack.c.h.b16 %v264
        %v301 = vunpack.c.l.b16 %v265
        %v302 = vunpack.c.h.b16 %v265
        %v303 = vunpack.c.l.b16 %v266
        %v304 = vunpack.c.h.b16 %v266
        %v305 = vunpack.c.l.b16 %v267
        %v306 = vunpack.c.h.b16 %v267
        %v307 = vunpack.c.l.b16 %v268
        %v308 = vunpack.c.h.b16 %v268
        %v309 = vunpack.c.l.b16 %v269
        %v310 = vunpack.c.h.b16 %v269
        %v311 = vunpack.c.l.b16 %v270
        %v312 = vunpack.c.h.b16 %v270
        %v313 = vunpack.c.l.b16 %v271
        %v314 = vunpack.c.h.b16 %v271
        %v315 = vunpack.c.l.b16 %v272
        %v316 = vunpack.c.h.b16 %v272
        %v317 = vunpack.c.l.b16 %v273
        %v318 = vunpack.c.h.b16 %v273
        %v319 = vunpack.c.l.b16 %v274
        %v320 = vunpack.c.h.b16 %v274
        %v321 = vunpack.c.l.b16 %v275
        %v322 = vunpack.c.h.b16 %v275
        %v323 = vunpack.c.l.b16 %v276
        %v324 = vunpack.c.h.b16 %v276
        %v325 = vpack.c.b16 %v295, %v293
        %v326 = vpack.c.b16 %v296, %v294
        %v327 = vpack.c.b16 %v299, %v297
        %v328 = vpack.c.b16 %v300, %v298
        %v329 = vpack.c.b16 %v303, %v301
        %v330 = vpack.c.b16 %v304, %v302
        %v331 = vpack.c.b16 %v307, %v305
        %v332 = vpack.c.b16 %v308, %v306
        %v333 = vpack.c.b16 %v311, %v309
        %v334 = vpack.c.b16 %v312, %v310
        %v335 = vpack.c.b16 %v315, %v313
        %v336 = vpack.c.b16 %v316, %v314
        %v337 = vpack.c.b16 %v319, %v317
        %v338 = vpack.c.b16 %v320, %v318
        %v339 = vpack.c.b16 %v323, %v321
        %v340 = vpack.c.b16 %v324, %v322
        %357 = vmatprep.subr.bf16.mxu0 %v326
        %358 = vmatpush1.bf16.msra.mxu0 %v325
        %359 = vmatprep.subr.bf16.mxu0 %v328
        %360 = vmatpush1.bf16.msra.mxu0 %v327
        %361 = vmatprep.subr.bf16.mxu0 %v330
        %362 = vmatpush1.bf16.msra.mxu0 %v329
        %363 = vmatprep.subr.bf16.mxu0 %v332
        %364 = vmatpush1.bf16.msra.mxu0 %v331
        %365 = vmatprep.subr.bf16.mxu0 %v334
        %366 = vmatpush1.bf16.msra.mxu0 %v333
        %367 = vmatprep.subr.bf16.mxu0 %v336
        %368 = vmatpush1.bf16.msra.mxu0 %v335
        %369 = vmatprep.subr.bf16.mxu0 %v338
        %370 = vmatpush1.bf16.msra.mxu0 %v337
        %371 = vmatprep.subr.bf16.mxu0 %v340
        %372 = vmatpush1.bf16.msra.mxu0 %v339
        %373 = vmatprep.subr.bf16.mxu0 0
        %374 = vmatpush1.bf16.msra.mxu0 0
        %375 = vmatprep.subr.bf16.mxu0 0
        %376 = vmatpush1.bf16.msra.mxu0 0
        %377 = vmatprep.subr.bf16.mxu0 0
        %378 = vmatpush1.bf16.msra.mxu0 0
        %379 = vmatprep.subr.bf16.mxu0 0
        %380 = vmatpush1.bf16.msra.mxu0 0
        %381 = vmatprep.subr.bf16.mxu0 0
        %382 = vmatpush1.bf16.msra.mxu0 0
        %383 = vmatprep.subr.bf16.mxu0 0
        %384 = vmatpush1.bf16.msra.mxu0 0
        %385 = vmatprep.subr.bf16.mxu0 0
        %386 = vmatpush1.bf16.msra.mxu0 0
        %387 = vmatprep.subr.bf16.mxu0 0
        %388 = vmatpush1.bf16.msra.mxu0 0
        %389 = vmatprep.mubr.bf16.mxu0 0
        %390 = vmatmul.mubr.bf16.gmra.mrb[0].mxu0 %v260
        %v391 = vpop.f32.mrb[0].mxu0
        %v392 = vadd.f32 0.0, %v391
        %v393 = vpop.f32.mrb[0].mxu0
        %v394 = vadd.f32 0.0, %v393
        %v395 = vpop.f32.mrb[0].mxu0
        %v396 = vpop.f32.mrb[0].mxu0
        %397 = vdwg.mxu0
        %v400 = vcombine.low %v392, %v394
        %v402 = vunpack.c.l.s4 1983009808
        %v403 = vunpack.c.0.s8 %v402
        %v404 = vlaneseq
        %v405 = vshrl.u32 %v404, 7
        %v406 = vsub.s32 %v403, %v405
        %v407 = vrot.slane %v400, %v406
        %v409 = vadd.f32 %v259, %v407
        %410 = vst [vmem:[#allocation2] sm:$0xf] %v409
        %p411 = scmp.eq.s32.totalorder %s23, 8
        // Predicated region
        $region37: #{forward.42} parent=31 // pred_check
          %p412 = pneg %p411
        $region38: #{forward.42} parent=31 // pred_check_branch
          %414 = sbr.rel (%p412) target = $region40
        $region39: #{forward.42} parent=31 // pred_region
          %v415 = vld [vmem:[#allocation2] sm:$0xf]
          %v416 = vld [vmem:[%s250] sm:$0x3]
          %v418 = vlaneseq
          %v419 = vshrl.u32 %v418, 7
          %v420 = vsub.s32 0, %v419
          %v421 = vrot.slane %v416, %v420
          %v422 = vlaneseq
          %v423 = vshrl.u32 %v422, 7
          %v424 = vsub.s32 1, %v423
          %v425 = vrot.slane %v416, %v424
          %v426 = vcombine.low %v421, %v425
          %v428 = vunpack.c.l.s4 1983009808
          %v429 = vunpack.c.0.s8 %v428
          %v430 = vlaneseq
          %v431 = vshrl.u32 %v430, 7
          %v432 = vsub.s32 %v429, %v431
          %v433 = vrot.slane %v426, %v432
          %v435 = vadd.f32 %v415, %v433
          %v436 = vmax.f32 %v435, 0.0
          %v439 = vunpack.c.l.s4 1983009808
          %v440 = vunpack.c.0.s8 %v439
          %v441 = vlaneseq
          %v442 = vshrl.u32 %v441, 7
          %v443 = vsub.s32 %v440, %v442
          %v444 = vrot.slane %v436, %v443
          %v445 = vcombine.high %v444, %v444
          %v448 = vpack.c.bf16 %v444, %v444
          %v449 = vpack.c.bf16 %v445, %v445
          %v452 = vcombine.low %v448, %v449
          %v454 = vunpack.c.l.s4 1966171168
          %v455 = vunpack.c.0.s8 %v454
          %v456 = vlaneseq
          %v457 = vshrl.u32 %v456, 7
          %v458 = vsub.s32 %v455, %v457
          %v459 = vrot.slane %v452, %v458
          %v461 = vunpack.c.l.s4 1966171168
          %v462 = vunpack.c.0.s8 %v461
          %v463 = vlaneseq
          %v464 = vshrl.u32 %v463, 7
          %v465 = vsub.s32 %v462, %v464
          %v466 = vrot.slane %v459, %v465
          %468 = vst [vmem:[#allocation3] sm:$0x3] %v466
        $region40: #{forward.42} parent=31 // pred_fallthru
          _
        // Predicated region
        $region41: #{forward.42} parent=31 // pred_check
          %p469 = pneg %p137
        $region42: #{forward.42} parent=31 // pred_check_branch
          %471 = sbr.rel (%p469) target = $region44
        $region43: #{forward.42} parent=31 // pred_region
          %s472 = smul.u32 2, %s22
          %s473 = smul.addr %s21, 2
          %s474 = sadd.s32 %s472, %s473
          %s475 = scalar_lea.vmem %s5, %s474
          // Predicated region
          $region45: #{forward.42} parent=43 // pred_check
            _
          $region46: #{forward.42} parent=43 // pred_check_branch
            %477 = sbr.rel (0) target = $region48
          $region47: #{forward.42} parent=43 // pred_region
            // Predicated region
            $region49: #{forward.42} parent=47 // pred_check
              _
            $region50: #{forward.42} parent=47 // pred_check_branch
              %479 = sbr.rel target = $region52
            $region51: #{forward.42} parent=47 // pred_region
              // Predicated region
              $region64: #{forward.42} parent=51 // pred_check
                _
              $region65: #{forward.42} parent=51 // pred_check_branch
                %494 = sbr.rel (0) target = $region67
              $region66: #{forward.42} parent=51 // pred_region
                loop: start=0, step=1, limit=1
                $region68: #{forward.42} parent=66 // loop_pre_header
                  _
                $region69: #{forward.42} parent=66 // loop_header
                  %s497 = sphi 0, %s501
                  %p498 = scmp.ge.s32.totalorder %s497, 1
                  %s502 = sphi [#allocation3], [#allocation3]
                  %s503 = sphi %s475, %s475
                $region70: #{forward.42} parent=66 // loop_header_branch
                  %500 = sbr.rel (%p498) target = $region74
                $region71: #{forward.42} parent=66 // loop_body
                  %v504 = vld [vmem:[%s502] sm:$0x3]
                  %505 = vst [vmem:[%s503] sm:$0x3] %v504
                $region72: #{forward.42} parent=66 // loop_footer
                  %s501 = sadd.s32 1, %s497
                $region73: #{forward.42} parent=66 // loop_footer_branch
                  %496 = sbr.rel target = $region69
                $region74: #{forward.42} parent=66 // loop_exit
                  _
              $region67: #{forward.42} parent=51 // pred_fallthru
                _
            $region52: #{forward.42} parent=47 // pred_fallthru
              _
            // Predicated region
            $region53: #{forward.42} parent=47 // pred_check
              _
            $region54: #{forward.42} parent=47 // pred_check_branch
              %481 = sbr.rel (0) target = $region56
            $region55: #{forward.42} parent=47 // pred_region
              loop: start=0, step=1, limit=1
              $region57: #{forward.42} parent=55 // loop_pre_header
                _
              $region58: #{forward.42} parent=55 // loop_header
                %s484 = sphi 0, %s488
                %p485 = scmp.ge.s32.totalorder %s484, 1
                %s489 = sphi [#allocation3], [#allocation3]
                %s490 = sphi %s475, %s475
              $region59: #{forward.42} parent=55 // loop_header_branch
                %487 = sbr.rel (%p485) target = $region63
              $region60: #{forward.42} parent=55 // loop_body
                %v491 = vld [vmem:[%s489] sm:$0x3]
                %492 = vst [vmem:[%s490] sm:$0x3] %v491
              $region61: #{forward.42} parent=55 // loop_footer
                %s488 = sadd.s32 1, %s484
              $region62: #{forward.42} parent=55 // loop_footer_branch
                %483 = sbr.rel target = $region58
              $region63: #{forward.42} parent=55 // loop_exit
                _
            $region56: #{forward.42} parent=47 // pred_fallthru
              _
          $region48: #{forward.42} parent=43 // pred_fallthru
            _
          %506 = vnop
        $region44: #{forward.42} parent=31 // pred_fallthru
          _
        // Predicated region
        $region75: #{forward.42} parent=31 // pred_check
          %p507 = pneg %p137
        $region76: #{forward.42} parent=31 // pred_check_branch
          %509 = sbr.rel (%p507) target = $region78
        $region77: #{forward.42} parent=31 // pred_region
          _
        $region78: #{forward.42} parent=31 // pred_fallthru
          _
      $region32: #{forward.42} parent=5 // pred_fallthru
        _
      %p510 = scmp.le.s32.totalorder 2, %s11
      // Predicated region
      $region79: #{forward.42} parent=5 // pred_check
        %p511 = pneg %p510
      $region80: #{forward.42} parent=5 // pred_check_branch
        %513 = sbr.rel (%p511) target = $region82
      $region81: #{forward.42} parent=5 // pred_region
        %s514 = ssub.s32 %s11, 2
      $region82: #{forward.42} parent=5 // pred_fallthru
        _
    $region6: #{forward.42} parent=1 // loop_footer
      %s15 = sadd.s32 1, %s11
    $region7: #{forward.42} parent=1 // loop_footer_branch
      %10 = sbr.rel target = $region3
    $region8: #{forward.42} parent=1 // loop_exit
      _

// kernel: forward.35
$region0: #{forward.35}
  #allocation0 [shape = 'u32[]', space=smem, size = 0x4, offset = 0x4, fixed_abs, tag = 'smem constant byte address 0x4 - core index']
  #allocation1 [shape = 'u32[144,128]{1,0:T(1,128)}', space=vmem, size = 0x12000, scoped, tag = 'internal scratch']
  #allocation2 [shape = 'f32[2,256]{1,0:T(2,128)}', space=vmem, size = 0x800, scoped, tag = 'scratch operand']
  %s0 = inlined_call_operand.vmem [shape: bf16[2,128], index: 0, kind: input, shape index: {}]
  %s1 = inlined_call_operand.vmem [shape: bf16[128,256], index: 1, kind: input, shape index: {}]
  %s2 = inlined_call_operand.vmem [shape: f32[1,256], index: 2, kind: input, shape index: {}]
  %s3 = inlined_call_operand.vmem [shape: bf16[2,256], index: 3, kind: output, shape index: {}]
  %s4 = sld [smem:[#allocation0]]
  $region30: #{forward.35} parent=0
    _
  %s6 = ssub.s32 1, %s4
  %s7 = scalar_select 0, %s6, %s4
  // Predicated region
  $region2: #{forward.35} parent=0 // pred_check
    _
  $region3: #{forward.35} parent=0 // pred_check_branch
    %9 = sbr.rel (0) target = $region5
  $region4: #{forward.35} parent=0 // pred_region
    _
  $region5: #{forward.35} parent=0 // pred_fallthru
    _
  // Predicated region
  $region6: #{forward.35} parent=0 // pred_check
    _
  $region7: #{forward.35} parent=0 // pred_check_branch
    %11 = sbr.rel (0) target = $region9
  $region8: #{forward.35} parent=0 // pred_region
    _
  $region9: #{forward.35} parent=0 // pred_fallthru
    _
  // Predicated region
  $region10: #{forward.35} parent=0 // pred_check
    _
  $region11: #{forward.35} parent=0 // pred_check_branch
    %13 = sbr.rel (0) target = $region13
  $region12: #{forward.35} parent=0 // pred_region
    _
  $region13: #{forward.35} parent=0 // pred_fallthru
    _
  %p15 = scmp.eq.s32.totalorder 0, 0
  // Predicated region
  $region14: #{forward.35} parent=0 // pred_check
    %p16 = pneg %p15
  $region15: #{forward.35} parent=0 // pred_check_branch
    %18 = sbr.rel (%p16) target = $region17
  $region16: #{forward.35} parent=0 // pred_region
    %19 = vst [vmem:[#allocation2] sm:$0xf] 0.0
  $region17: #{forward.35} parent=0 // pred_fallthru
    _
  %v20 = vld [vmem:[#allocation2] sm:$0xf]
  %v21 = vld [vmem:[%s0] sm:$0x1]
  %v22 = vld [vmem:[%s1] sm:$0xff]
  %v23 = vld [vmem:[%s1 + $0x8] sm:$0xff]
  %v24 = vld [vmem:[%s1 + $0x10] sm:$0xff]
  %v25 = vld [vmem:[%s1 + $0x18] sm:$0xff]
  %v26 = vld [vmem:[%s1 + $0x20] sm:$0xff]
  %v27 = vld [vmem:[%s1 + $0x28] sm:$0xff]
  %v28 = vld [vmem:[%s1 + $0x30] sm:$0xff]
  %v29 = vld [vmem:[%s1 + $0x38] sm:$0xff]
  %v30 = vld [vmem:[%s1 + $0x40] sm:$0xff]
  %v31 = vld [vmem:[%s1 + $0x48] sm:$0xff]
  %v32 = vld [vmem:[%s1 + $0x50] sm:$0xff]
  %v33 = vld [vmem:[%s1 + $0x58] sm:$0xff]
  %v34 = vld [vmem:[%s1 + $0x60] sm:$0xff]
  %v35 = vld [vmem:[%s1 + $0x68] sm:$0xff]
  %v36 = vld [vmem:[%s1 + $0x70] sm:$0xff]
  %v37 = vld [vmem:[%s1 + $0x78] sm:$0xff]
  %v54 = vunpack.c.l.b16 %v22
  %v55 = vunpack.c.h.b16 %v22
  %v56 = vunpack.c.l.b16 %v23
  %v57 = vunpack.c.h.b16 %v23
  %v58 = vunpack.c.l.b16 %v24
  %v59 = vunpack.c.h.b16 %v24
  %v60 = vunpack.c.l.b16 %v25
  %v61 = vunpack.c.h.b16 %v25
  %v62 = vunpack.c.l.b16 %v26
  %v63 = vunpack.c.h.b16 %v26
  %v64 = vunpack.c.l.b16 %v27
  %v65 = vunpack.c.h.b16 %v27
  %v66 = vunpack.c.l.b16 %v28
  %v67 = vunpack.c.h.b16 %v28
  %v68 = vunpack.c.l.b16 %v29
  %v69 = vunpack.c.h.b16 %v29
  %v70 = vunpack.c.l.b16 %v30
  %v71 = vunpack.c.h.b16 %v30
  %v72 = vunpack.c.l.b16 %v31
  %v73 = vunpack.c.h.b16 %v31
  %v74 = vunpack.c.l.b16 %v32
  %v75 = vunpack.c.h.b16 %v32
  %v76 = vunpack.c.l.b16 %v33
  %v77 = vunpack.c.h.b16 %v33
  %v78 = vunpack.c.l.b16 %v34
  %v79 = vunpack.c.h.b16 %v34
  %v80 = vunpack.c.l.b16 %v35
  %v81 = vunpack.c.h.b16 %v35
  %v82 = vunpack.c.l.b16 %v36
  %v83 = vunpack.c.h.b16 %v36
  %v84 = vunpack.c.l.b16 %v37
  %v85 = vunpack.c.h.b16 %v37
  %v86 = vpack.c.b16 %v56, %v54
  %v87 = vpack.c.b16 %v57, %v55
  %v88 = vpack.c.b16 %v60, %v58
  %v89 = vpack.c.b16 %v61, %v59
  %v90 = vpack.c.b16 %v64, %v62
  %v91 = vpack.c.b16 %v65, %v63
  %v92 = vpack.c.b16 %v68, %v66
  %v93 = vpack.c.b16 %v69, %v67
  %v94 = vpack.c.b16 %v72, %v70
  %v95 = vpack.c.b16 %v73, %v71
  %v96 = vpack.c.b16 %v76, %v74
  %v97 = vpack.c.b16 %v77, %v75
  %v98 = vpack.c.b16 %v80, %v78
  %v99 = vpack.c.b16 %v81, %v79
  %v100 = vpack.c.b16 %v84, %v82
  %v101 = vpack.c.b16 %v85, %v83
  %118 = vmatprep.subr.bf16.mxu0 %v87
  %119 = vmatpush1.bf16.msra.mxu0 %v86
  %120 = vmatprep.subr.bf16.mxu0 %v89
  %121 = vmatpush1.bf16.msra.mxu0 %v88
  %122 = vmatprep.subr.bf16.mxu0 %v91
  %123 = vmatpush1.bf16.msra.mxu0 %v90
  %124 = vmatprep.subr.bf16.mxu0 %v93
  %125 = vmatpush1.bf16.msra.mxu0 %v92
  %126 = vmatprep.subr.bf16.mxu0 %v95
  %127 = vmatpush1.bf16.msra.mxu0 %v94
  %128 = vmatprep.subr.bf16.mxu0 %v97
  %129 = vmatpush1.bf16.msra.mxu0 %v96
  %130 = vmatprep.subr.bf16.mxu0 %v99
  %131 = vmatpush1.bf16.msra.mxu0 %v98
  %132 = vmatprep.subr.bf16.mxu0 %v101
  %133 = vmatpush1.bf16.msra.mxu0 %v100
  %134 = vmatprep.subr.bf16.mxu0 0
  %135 = vmatpush1.bf16.msra.mxu0 0
  %136 = vmatprep.subr.bf16.mxu0 0
  %137 = vmatpush1.bf16.msra.mxu0 0
  %138 = vmatprep.subr.bf16.mxu0 0
  %139 = vmatpush1.bf16.msra.mxu0 0
  %140 = vmatprep.subr.bf16.mxu0 0
  %141 = vmatpush1.bf16.msra.mxu0 0
  %142 = vmatprep.subr.bf16.mxu0 0
  %143 = vmatpush1.bf16.msra.mxu0 0
  %144 = vmatprep.subr.bf16.mxu0 0
  %145 = vmatpush1.bf16.msra.mxu0 0
  %146 = vmatprep.subr.bf16.mxu0 0
  %147 = vmatpush1.bf16.msra.mxu0 0
  %148 = vmatprep.subr.bf16.mxu0 0
  %149 = vmatpush1.bf16.msra.mxu0 0
  %150 = vmatprep.mubr.bf16.mxu0 0
  %151 = vmatmul.mubr.bf16.gmra.mrb[0].mxu0 %v21
  %v152 = vpop.f32.mrb[0].mxu0
  %v153 = vadd.f32 0.0, %v152
  %v154 = vpop.f32.mrb[0].mxu0
  %v155 = vadd.f32 0.0, %v154
  %v156 = vpop.f32.mrb[0].mxu0
  %v157 = vpop.f32.mrb[0].mxu0
  %158 = vdwg.mxu0
  %v161 = vcombine.low %v153, %v155
  %v163 = vunpack.c.l.s4 1983009808
  %v164 = vunpack.c.0.s8 %v163
  %v165 = vlaneseq
  %v166 = vshrl.u32 %v165, 7
  %v167 = vsub.s32 %v164, %v166
  %v168 = vrot.slane %v161, %v167
  %v170 = vadd.f32 %v20, %v168
  %171 = vst [vmem:[#allocation2] sm:$0xf] %v170
  // Predicated region
  $region18: #{forward.35} parent=0 // pred_check
    %p172 = pneg %p15
  $region19: #{forward.35} parent=0 // pred_check_branch
    %174 = sbr.rel (%p172) target = $region21
  $region20: #{forward.35} parent=0 // pred_region
    %v175 = vld [vmem:[#allocation2] sm:$0xf]
    %v176 = vld [vmem:[%s2] sm:$0x3]
    %v178 = vlaneseq
    %v179 = vshrl.u32 %v178, 7
    %v180 = vsub.s32 0, %v179
    %v181 = vrot.slane %v176, %v180
    %v182 = vlaneseq
    %v183 = vshrl.u32 %v182, 7
    %v184 = vsub.s32 1, %v183
    %v185 = vrot.slane %v176, %v184
    %v186 = vcombine.low %v181, %v185
    %v188 = vunpack.c.l.s4 1983009808
    %v189 = vunpack.c.0.s8 %v188
    %v190 = vlaneseq
    %v191 = vshrl.u32 %v190, 7
    %v192 = vsub.s32 %v189, %v191
    %v193 = vrot.slane %v186, %v192
    %v195 = vadd.f32 %v175, %v193
    %v198 = vunpack.c.l.s4 1983009808
    %v199 = vunpack.c.0.s8 %v198
    %v200 = vlaneseq
    %v201 = vshrl.u32 %v200, 7
    %v202 = vsub.s32 %v199, %v201
    %v203 = vrot.slane %v195, %v202
    %v204 = vcombine.high %v203, %v203
    %v207 = vpack.c.bf16 %v203, %v203
    %v208 = vpack.c.bf16 %v204, %v204
    %v211 = vcombine.low %v207, %v208
    %v213 = vunpack.c.l.s4 1966171168
    %v214 = vunpack.c.0.s8 %v213
    %v215 = vlaneseq
    %v216 = vshrl.u32 %v215, 7
    %v217 = vsub.s32 %v214, %v216
    %v218 = vrot.slane %v211, %v217
    %v220 = vunpack.c.l.s4 1966171168
    %v221 = vunpack.c.0.s8 %v220
    %v222 = vlaneseq
    %v223 = vshrl.u32 %v222, 7
    %v224 = vsub.s32 %v221, %v223
    %v225 = vrot.slane %v218, %v224
    %227 = vst [vmem:[%s3] sm:$0x3] %v225
  $region21: #{forward.35} parent=0 // pred_fallthru
    _
  // Predicated region
  $region22: #{forward.35} parent=0 // pred_check
    _
  $region23: #{forward.35} parent=0 // pred_check_branch
    %229 = sbr.rel (0) target = $region25
  $region24: #{forward.35} parent=0 // pred_region
    _
  $region25: #{forward.35} parent=0 // pred_fallthru
    _
  // Predicated region
  $region26: #{forward.35} parent=0 // pred_check
    _
  $region27: #{forward.35} parent=0 // pred_check_branch
    %231 = sbr.rel (0) target = $region29
  $region28: #{forward.35} parent=0 // pred_region
    _
  $region29: #{forward.35} parent=0 // pred_fallthru
    _

// kernel: forward.36
$region0: #{forward.36}
  #allocation0 [shape = 'u32[]', space=smem, size = 0x4, offset = 0x4, fixed_abs, tag = 'smem constant byte address 0x4 - core index']
  #allocation1 [shape = 'u32[144,128]{1,0:T(1,128)}', space=vmem, size = 0x12000, scoped, tag = 'internal scratch']
  #allocation2 [shape = 'f32[2,256]{1,0:T(2,128)}', space=vmem, size = 0x800, scoped, tag = 'scratch operand']
  %s0 = inlined_call_operand.vmem [shape: bf16[2,2304], index: 0, kind: input, shape index: {}]
  %s1 = inlined_call_operand.vmem [shape: bf16[2304,256], index: 1, kind: input, shape index: {}]
  %s2 = inlined_call_operand.vmem [shape: f32[1,256], index: 2, kind: input, shape index: {}]
  %s3 = inlined_call_operand.vmem [shape: bf16[2,256], index: 3, kind: input, shape index: {}]
  %s4 = inlined_call_operand.vmem [shape: bf16[2,256], index: 4, kind: output, shape index: {}]
  %s5 = sld [smem:[#allocation0]]
  $region57: #{forward.36} parent=0
    _
  %s7 = ssub.s32 1, %s5
  %s8 = scalar_select 0, %s7, %s5
  loop: start=0, step=1, limit=11
  $region2: #{forward.36} parent=0 // loop_pre_header
    _
  $region3: #{forward.36} parent=0 // loop_header
    %s10 = sphi 0, %s14
    %p11 = scmp.ge.s32.totalorder %s10, 11
    %s17 = sphi 0, %s36
    %s18 = sphi 0, %s32
    %s19 = sphi 0, %s28
    %s20 = sphi 0, %s17
    %s21 = sphi 0, %s18
    %s22 = sphi 0, %s19
    %s23 = sphi 0, %s20
    %s24 = sphi 0, %s21
    %s25 = sphi 0, %s22
    %s41 = sphi 0, %s43
    %s44 = sphi 0, %s41
    %s45 = sphi 0, %s44
    %s61 = sphi 0, %s45
    %s69 = sphi 0, %s71
    %s72 = sphi 0, %s69
    %s73 = sphi 0, %s72
    %s89 = sphi 0, %s73
    %s95 = sphi 0, %s97
    %s98 = sphi 0, %s95
    %s99 = sphi 0, %s98
    %s115 = sphi 0, %s99
    %s123 = sphi 0, %s125
    %s126 = sphi 0, %s123
    %s127 = sphi 0, %s126
    %s143 = sphi 0, %s127
    %s151 = sphi 0, %s153
    %s154 = sphi 0, %s151
    %s155 = sphi 0, %s154
    %s171 = sphi 0, %s155
  $region4: #{forward.36} parent=0 // loop_header_branch
    %13 = sbr.rel (%p11) target = $region8
  $region5: #{forward.36} parent=0 // loop_body
    %s15 = ssub.s32 %s10, 1
    %s16 = ssub.s32 %s10, 2
    %s26 = sadd.s32 1, %s19
    %p27 = scmp.ge.s32.totalorder %s26, 9
    %s28 = scalar_select %p27, 0, %s26
    %s29 = sadd.s32 1, %s18
    %s30 = scalar_select %p27, %s29, %s18
    %p31 = scmp.ge.s32.totalorder %s30, 1
    %s32 = scalar_select %p31, 0, %s30
    %s33 = sadd.s32 1, %s17
    %s34 = scalar_select %p31, %s33, %s17
    %p35 = scmp.ge.s32.totalorder %s34, 1
    %s36 = scalar_select %p35, 0, %s34
    %s37 = ssub.s32 %s17, %s36
    %s38 = ssub.s32 %s19, %s28
    %s39 = sor.u32 %s37, %s38
    %p40 = scmp.eq.s32.totalorder %s39, 0
    %s42 = sadd.s32 %s41, 1
    %s43 = scalar_select %p40, %s41, %s42
    %p46 = pneg %p40
    %p47 = scmp.eq.s32.totalorder %s10, 8
    %p48 = por %p46, %p47
    %p49 = scmp.ne.s32.totalorder %s41, %s44
    %p50 = scmp.eq.s32.totalorder %s10, 0
    %p51 = por %p49, %p50
    %p52 = scmp.ne.s32.totalorder %s41, %s44
    %p53 = scmp.eq.s32.totalorder %s15, 8
    %p54 = por %p52, %p53
    %p55 = scmp.ne.s32.totalorder %s44, %s45
    %p56 = scmp.eq.s32.totalorder %s15, 0
    %p57 = por %p55, %p56
    %p58 = scmp.ne.s32.totalorder %s44, %s45
    %p59 = scmp.eq.s32.totalorder %s16, 8
    %p60 = por %p58, %p59
    %p62 = scmp.ne.s32.totalorder %s45, %s61
    %p63 = scmp.eq.s32.totalorder %s16, 0
    %p64 = por %p62, %p63
    %s65 = ssub.s32 %s19, %s28
    %s66 = ssub.s32 %s18, %s32
    %s67 = sor.u32 %s65, %s66
    %p68 = scmp.eq.s32.totalorder %s67, 0
    %s70 = sadd.s32 %s69, 1
    %s71 = scalar_select %p68, %s69, %s70
    %p74 = pneg %p68
    %p75 = scmp.eq.s32.totalorder %s10, 8
    %p76 = por %p74, %p75
    %p77 = scmp.ne.s32.totalorder %s69, %s72
    %p78 = scmp.eq.s32.totalorder %s10, 0
    %p79 = por %p77, %p78
    %p80 = scmp.ne.s32.totalorder %s69, %s72
    %p81 = scmp.eq.s32.totalorder %s15, 8
    %p82 = por %p80, %p81
    %p83 = scmp.ne.s32.totalorder %s72, %s73
    %p84 = scmp.eq.s32.totalorder %s15, 0
    %p85 = por %p83, %p84
    %p86 = scmp.ne.s32.totalorder %s72, %s73
    %p87 = scmp.eq.s32.totalorder %s16, 8
    %p88 = por %p86, %p87
    %p90 = scmp.ne.s32.totalorder %s73, %s89
    %p91 = scmp.eq.s32.totalorder %s16, 0
    %p92 = por %p90, %p91
    %s93 = ssub.s32 %s18, %s32
    %p94 = scmp.eq.s32.totalorder %s93, 0
    %s96 = sadd.s32 %s95, 1
    %s97 = scalar_select %p94, %s95, %s96
    %p100 = pneg %p94
    %p101 = scmp.eq.s32.totalorder %s10, 8
    %p102 = por %p100, %p101
    %p103 = scmp.ne.s32.totalorder %s95, %s98
    %p104 = scmp.eq.s32.totalorder %s10, 0
    %p105 = por %p103, %p104
    %p106 = scmp.ne.s32.totalorder %s95, %s98
    %p107 = scmp.eq.s32.totalorder %s15, 8
    %p108 = por %p106, %p107
    %p109 = scmp.ne.s32.totalorder %s98, %s99
    %p110 = scmp.eq.s32.totalorder %s15, 0
    %p111 = por %p109, %p110
    %p112 = scmp.ne.s32.totalorder %s98, %s99
    %p113 = scmp.eq.s32.totalorder %s16, 8
    %p114 = por %p112, %p113
    %p116 = scmp.ne.s32.totalorder %s99, %s115
    %p117 = scmp.eq.s32.totalorder %s16, 0
    %p118 = por %p116, %p117
    %s119 = ssub.s32 %s17, %s36
    %s120 = ssub.s32 %s18, %s32
    %s121 = sor.u32 %s119, %s120
    %p122 = scmp.eq.s32.totalorder %s121, 0
    %s124 = sadd.s32 %s123, 1
    %s125 = scalar_select %p122, %s123, %s124
    %p128 = pneg %p122
    %p129 = scmp.eq.s32.totalorder %s10, 8
    %p130 = por %p128, %p129
    %p131 = scmp.ne.s32.totalorder %s123, %s126
    %p132 = scmp.eq.s32.totalorder %s10, 0
    %p133 = por %p131, %p132
    %p134 = scmp.ne.s32.totalorder %s123, %s126
    %p135 = scmp.eq.s32.totalorder %s15, 8
    %p136 = por %p134, %p135
    %p137 = scmp.ne.s32.totalorder %s126, %s127
    %p138 = scmp.eq.s32.totalorder %s15, 0
    %p139 = por %p137, %p138
    %p140 = scmp.ne.s32.totalorder %s126, %s127
    %p141 = scmp.eq.s32.totalorder %s16, 8
    %p142 = por %p140, %p141
    %p144 = scmp.ne.s32.totalorder %s127, %s143
    %p145 = scmp.eq.s32.totalorder %s16, 0
    %p146 = por %p144, %p145
    %s147 = ssub.s32 %s17, %s36
    %s148 = ssub.s32 %s18, %s32
    %s149 = sor.u32 %s147, %s148
    %p150 = scmp.eq.s32.totalorder %s149, 0
    %s152 = sadd.s32 %s151, 1
    %s153 = scalar_select %p150, %s151, %s152
    %p156 = pneg %p150
    %p157 = scmp.eq.s32.totalorder %s10, 8
    %p158 = por %p156, %p157
    %p159 = scmp.ne.s32.totalorder %s151, %s154
    %p160 = scmp.eq.s32.totalorder %s10, 0
    %p161 = por %p159, %p160
    %p162 = scmp.ne.s32.totalorder %s151, %s154
    %p163 = scmp.eq.s32.totalorder %s15, 8
    %p164 = por %p162, %p163
    %p165 = scmp.ne.s32.totalorder %s154, %s155
    %p166 = scmp.eq.s32.totalorder %s15, 0
    %p167 = por %p165, %p166
    %p168 = scmp.ne.s32.totalorder %s154, %s155
    %p169 = scmp.eq.s32.totalorder %s16, 8
    %p170 = por %p168, %p169
    %p172 = scmp.ne.s32.totalorder %s155, %s171
    %p173 = scmp.eq.s32.totalorder %s16, 0
    %p174 = por %p172, %p173
    %p175 = scmp.le.s32.totalorder 1, %s10
    %p176 = scmp.lt.s32.totalorder %s10, 10
    %p177 = pnand %p175, %p176
    %p178 = pneg %p177
    // Predicated region
    $region9: #{forward.36} parent=5 // pred_check
      _
    $region10: #{forward.36} parent=5 // pred_check_branch
      %180 = sbr.rel (%p177) target = $region12
    $region11: #{forward.36} parent=5 // pred_region
      %s181 = ssub.s32 %s10, 1
      // Predicated region
      $region13: #{forward.36} parent=11 // pred_check
        %p182 = pneg %p111
      $region14: #{forward.36} parent=11 // pred_check_branch
        %184 = sbr.rel (%p182) target = $region16
      $region15: #{forward.36} parent=11 // pred_region
        %s185 = smul.u32 2, %s21
        %p186 = scmp.lt.s32.totalorder %s185, 1
        %s187 = scalar_select %p186, %s185, 1
        %s188 = scalar_lea.vmem %s2, %s187
        %s189 = smul.u32 2, %s21
      $region16: #{forward.36} parent=11 // pred_fallthru
        _
      // Predicated region
      $region17: #{forward.36} parent=11 // pred_check
        %p190 = pneg %p139
      $region18: #{forward.36} parent=11 // pred_check_branch
        %192 = sbr.rel (%p190) target = $region20
      $region19: #{forward.36} parent=11 // pred_region
        %s193 = smul.u32 2, %s21
        %p194 = scmp.lt.s32.totalorder %s20, 0
        %s195 = scalar_select %p194, %s20, 0
        %p196 = scmp.lt.s32.totalorder %s193, 1
        %s197 = scalar_select %p196, %s193, 1
        %s198 = smul.addr %s195, 2
        %s199 = sadd.s32 %s197, %s198
        %s200 = scalar_lea.vmem %s3, %s199
        %s201 = smul.u32 2, %s21
      $region20: #{forward.36} parent=11 // pred_fallthru
        _
    $region12: #{forward.36} parent=5 // pred_fallthru
      _
    %p202 = scmp.lt.s32.totalorder %s10, 9
    // Predicated region
    $region21: #{forward.36} parent=5 // pred_check
      %p203 = pneg %p202
    $region22: #{forward.36} parent=5 // pred_check_branch
      %205 = sbr.rel (%p203) target = $region24
    $region23: #{forward.36} parent=5 // pred_region
      // Predicated region
      $region25: #{forward.36} parent=23 // pred_check
        %p206 = pneg %p51
      $region26: #{forward.36} parent=23 // pred_check_branch
        %208 = sbr.rel (%p206) target = $region28
      $region27: #{forward.36} parent=23 // pred_region
        %s209 = smul.u32 2, %s19
        %p210 = scmp.lt.s32.totalorder %s17, 0
        %s211 = scalar_select %p210, %s17, 0
        %p212 = scmp.lt.s32.totalorder %s209, 17
        %s213 = scalar_select %p212, %s209, 17
        %s214 = smul.addr %s211, 18
        %s215 = sadd.s32 %s213, %s214
        %s216 = scalar_lea.vmem %s0, %s215
        %s217 = smul.u32 2, %s19
      $region28: #{forward.36} parent=23 // pred_fallthru
        _
      // Predicated region
      $region29: #{forward.36} parent=23 // pred_check
        %p218 = pneg %p79
      $region30: #{forward.36} parent=23 // pred_check_branch
        %220 = sbr.rel (%p218) target = $region32
      $region31: #{forward.36} parent=23 // pred_region
        %s221 = smul.u32 32, %s19
        %s222 = smul.u32 2, %s18
        %p223 = scmp.lt.s32.totalorder %s221, 287
        %s224 = scalar_select %p223, %s221, 287
        %p225 = scmp.lt.s32.totalorder %s222, 1
        %s226 = scalar_select %p225, %s222, 1
        %s227 = smul.addr %s224, 2
        %s228 = sadd.s32 %s226, %s227
        %s229 = smul.addr %s228, 4
        %s230 = scalar_lea.vmem %s1, %s229
        %s231 = smul.u32 32, %s19
        %s232 = smul.u32 2, %s18
      $region32: #{forward.36} parent=23 // pred_fallthru
        _
    $region24: #{forward.36} parent=5 // pred_fallthru
      _
    %p233 = scmp.le.s32.totalorder 1, %s10
    %p234 = scmp.lt.s32.totalorder %s10, 10
    %p235 = pnand %p233, %p234
    %p236 = pneg %p235
    // Predicated region
    $region33: #{forward.36} parent=5 // pred_check
      _
    $region34: #{forward.36} parent=5 // pred_check_branch
      %238 = sbr.rel (%p235) target = $region36
    $region35: #{forward.36} parent=5 // pred_region
      %s239 = ssub.s32 %s10, 1
      %s240 = smul.u32 2, %s22
      %p241 = scmp.lt.s32.totalorder %s20, 0
      %s242 = scalar_select %p241, %s20, 0
      %p243 = scmp.lt.s32.totalorder %s240, 17
      %s244 = scalar_select %p243, %s240, 17
      %s245 = smul.addr %s242, 18
      %s246 = sadd.s32 %s244, %s245
      %s247 = scalar_lea.vmem %s0, %s246
      %p248 = pneg %p57
      %p249 = pneg %p54
      %s250 = smul.u32 32, %s22
      %s251 = smul.u32 2, %s21
      %p252 = scmp.lt.s32.totalorder %s250, 287
      %s253 = scalar_select %p252, %s250, 287
      %p254 = scmp.lt.s32.totalorder %s251, 1
      %s255 = scalar_select %p254, %s251, 1
      %s256 = smul.addr %s253, 2
      %s257 = sadd.s32 %s255, %s256
      %s258 = smul.addr %s257, 4
      %s259 = scalar_lea.vmem %s1, %s258
      %p260 = pneg %p85
      %p261 = pneg %p82
      %s262 = smul.u32 2, %s21
      %p263 = scmp.lt.s32.totalorder %s262, 1
      %s264 = scalar_select %p263, %s262, 1
      %s265 = scalar_lea.vmem %s2, %s264
      %p266 = pneg %p111
      %p267 = pneg %p108
      %s268 = smul.u32 2, %s21
      %p269 = scmp.lt.s32.totalorder %s20, 0
      %s270 = scalar_select %p269, %s20, 0
      %p271 = scmp.lt.s32.totalorder %s268, 1
      %s272 = scalar_select %p271, %s268, 1
      %s273 = smul.addr %s270, 2
      %s274 = sadd.s32 %s272, %s273
      %s275 = scalar_lea.vmem %s3, %s274
      %p276 = pneg %p139
      %p277 = pneg %p136
      %p278 = pneg %p167
      %p279 = pneg %p164
      %s280 = smul.u32 2, %s21
      %p281 = scmp.lt.s32.totalorder %s20, 0
      %s282 = scalar_select %p281, %s20, 0
      %p283 = scmp.lt.s32.totalorder %s280, 1
      %s284 = scalar_select %p283, %s280, 1
      %s285 = smul.addr %s282, 2
      %s286 = sadd.s32 %s284, %s285
      %s287 = scalar_lea.vmem %s4, %s286
      %s288 = smul.u32 2, %s22
      %p289 = scmp.lt.s32.totalorder %s20, 0
      %s290 = scalar_select %p289, %s20, 0
      %p291 = scmp.lt.s32.totalorder %s288, 17
      %s292 = scalar_select %p291, %s288, 17
      %s293 = smul.addr %s290, 18
      %s294 = sadd.s32 %s292, %s293
      %s295 = scalar_lea.vmem %s0, %s294
      %s296 = smul.u32 2, %s22
      %s297 = smul.u32 32, %s22
      %s298 = smul.u32 2, %s21
      %p299 = scmp.lt.s32.totalorder %s297, 287
      %s300 = scalar_select %p299, %s297, 287
      %p301 = scmp.lt.s32.totalorder %s298, 1
      %s302 = scalar_select %p301, %s298, 1
      %s303 = smul.addr %s300, 2
      %s304 = sadd.s32 %s302, %s303
      %s305 = smul.addr %s304, 4
      %s306 = scalar_lea.vmem %s1, %s305
      %s307 = smul.u32 32, %s22
      %s308 = smul.u32 2, %s21
      %s309 = smul.u32 2, %s21
      %p310 = scmp.lt.s32.totalorder %s309, 1
      %s311 = scalar_select %p310, %s309, 1
      %s312 = scalar_lea.vmem %s2, %s311
      %s313 = smul.u32 2, %s21
      %s314 = smul.u32 2, %s21
      %p315 = scmp.lt.s32.totalorder %s20, 0
      %s316 = scalar_select %p315, %s20, 0
      %p317 = scmp.lt.s32.totalorder %s314, 1
      %s318 = scalar_select %p317, %s314, 1
      %s319 = smul.addr %s316, 2
      %s320 = sadd.s32 %s318, %s319
      %s321 = scalar_lea.vmem %s3, %s320
      %s322 = smul.u32 2, %s21
      %s323 = smul.u32 2, %s21
      %p324 = scmp.lt.s32.totalorder %s20, 0
      %s325 = scalar_select %p324, %s20, 0
      %p326 = scmp.lt.s32.totalorder %s323, 1
      %s327 = scalar_select %p326, %s323, 1
      %s328 = smul.addr %s325, 2
      %s329 = sadd.s32 %s327, %s328
      %s330 = scalar_lea.vmem %s4, %s329
      %s331 = smul.u32 2, %s21
      %p332 = scmp.eq.s32.totalorder %s22, 0
      // Predicated region
      $region37: #{forward.36} parent=35 // pred_check
        %p333 = pneg %p332
      $region38: #{forward.36} parent=35 // pred_check_branch
        %335 = sbr.rel (%p333) target = $region40
      $region39: #{forward.36} parent=35 // pred_region
        %336 = vst [vmem:[#allocation2] sm:$0xf] 0.0
      $region40: #{forward.36} parent=35 // pred_fallthru
        _
      %v337 = vld [vmem:[#allocation2] sm:$0xf]
      %v338 = vld [vmem:[%s295] sm:$0x3]
      %v339 = vld [vmem:[%s306] sm:$0xff]
      %v340 = vld [vmem:[%s306 + $0x8] sm:$0xff]
      %v341 = vld [vmem:[%s306 + $0x10] sm:$0xff]
      %v342 = vld [vmem:[%s306 + $0x18] sm:$0xff]
      %v343 = vld [vmem:[%s306 + $0x20] sm:$0xff]
      %v344 = vld [vmem:[%s306 + $0x28] sm:$0xff]
      %v345 = vld [vmem:[%s306 + $0x30] sm:$0xff]
      %v346 = vld [vmem:[%s306 + $0x38] sm:$0xff]
      %v347 = vld [vmem:[%s306 + $0x40] sm:$0xff]
      %v348 = vld [vmem:[%s306 + $0x48] sm:$0xff]
      %v349 = vld [vmem:[%s306 + $0x50] sm:$0xff]
      %v350 = vld [vmem:[%s306 + $0x58] sm:$0xff]
      %v351 = vld [vmem:[%s306 + $0x60] sm:$0xff]
      %v352 = vld [vmem:[%s306 + $0x68] sm:$0xff]
      %v353 = vld [vmem:[%s306 + $0x70] sm:$0xff]
      %v354 = vld [vmem:[%s306 + $0x78] sm:$0xff]
      %v355 = vld [vmem:[%s306 + $0x80] sm:$0xff]
      %v356 = vld [vmem:[%s306 + $0x88] sm:$0xff]
      %v357 = vld [vmem:[%s306 + $0x90] sm:$0xff]
      %v358 = vld [vmem:[%s306 + $0x98] sm:$0xff]
      %v359 = vld [vmem:[%s306 + $0xa0] sm:$0xff]
      %v360 = vld [vmem:[%s306 + $0xa8] sm:$0xff]
      %v361 = vld [vmem:[%s306 + $0xb0] sm:$0xff]
      %v362 = vld [vmem:[%s306 + $0xb8] sm:$0xff]
      %v363 = vld [vmem:[%s306 + $0xc0] sm:$0xff]
      %v364 = vld [vmem:[%s306 + $0xc8] sm:$0xff]
      %v365 = vld [vmem:[%s306 + $0xd0] sm:$0xff]
      %v366 = vld [vmem:[%s306 + $0xd8] sm:$0xff]
      %v367 = vld [vmem:[%s306 + $0xe0] sm:$0xff]
      %v368 = vld [vmem:[%s306 + $0xe8] sm:$0xff]
      %v369 = vld [vmem:[%s306 + $0xf0] sm:$0xff]
      %v370 = vld [vmem:[%s306 + $0xf8] sm:$0xff]
      %v373 = vunpack.c.l.s4 1966171168
      %v374 = vunpack.c.0.s8 %v373
      %v375 = vlaneseq
      %v376 = vshrl.u32 %v375, 7
      %v377 = vsub.s32 %v374, %v376
      %v378 = vrot.slane %v338, %v377
      %v379 = vcombine.high %v378, %v378
      %v381 = vunpack.c.l.s4 1966171168
      %v382 = vunpack.c.0.s8 %v381
      %v383 = vlaneseq
      %v384 = vshrl.u32 %v383, 7
      %v385 = vsub.s32 %v382, %v384
      %v386 = vrot.slane %v378, %v385
      %v388 = vunpack.c.l.s4 1966171168
      %v389 = vunpack.c.0.s8 %v388
      %v390 = vlaneseq
      %v391 = vshrl.u32 %v390, 7
      %v392 = vsub.s32 %v389, %v391
      %v393 = vrot.slane %v379, %v392
      %v428 = vunpack.c.l.b16 %v339
      %v429 = vunpack.c.h.b16 %v339
      %v430 = vunpack.c.l.b16 %v340
      %v431 = vunpack.c.h.b16 %v340
      %v432 = vunpack.c.l.b16 %v341
      %v433 = vunpack.c.h.b16 %v341
      %v434 = vunpack.c.l.b16 %v342
      %v435 = vunpack.c.h.b16 %v342
      %v436 = vunpack.c.l.b16 %v343
      %v437 = vunpack.c.h.b16 %v343
      %v438 = vunpack.c.l.b16 %v344
      %v439 = vunpack.c.h.b16 %v344
      %v440 = vunpack.c.l.b16 %v345
      %v441 = vunpack.c.h.b16 %v345
      %v442 = vunpack.c.l.b16 %v346
      %v443 = vunpack.c.h.b16 %v346
      %v444 = vunpack.c.l.b16 %v347
      %v445 = vunpack.c.h.b16 %v347
      %v446 = vunpack.c.l.b16 %v348
      %v447 = vunpack.c.h.b16 %v348
      %v448 = vunpack.c.l.b16 %v349
      %v449 = vunpack.c.h.b16 %v349
      %v450 = vunpack.c.l.b16 %v350
      %v451 = vunpack.c.h.b16 %v350
      %v452 = vunpack.c.l.b16 %v351
      %v453 = vunpack.c.h.b16 %v351
      %v454 = vunpack.c.l.b16 %v352
      %v455 = vunpack.c.h.b16 %v352
      %v456 = vunpack.c.l.b16 %v353
      %v457 = vunpack.c.h.b16 %v353
      %v458 = vunpack.c.l.b16 %v354
      %v459 = vunpack.c.h.b16 %v354
      %v460 = vunpack.c.l.b16 %v355
      %v461 = vunpack.c.h.b16 %v355
      %v462 = vunpack.c.l.b16 %v356
      %v463 = vunpack.c.h.b16 %v356
      %v464 = vunpack.c.l.b16 %v357
      %v465 = vunpack.c.h.b16 %v357
      %v466 = vunpack.c.l.b16 %v358
      %v467 = vunpack.c.h.b16 %v358
      %v468 = vunpack.c.l.b16 %v359
      %v469 = vunpack.c.h.b16 %v359
      %v470 = vunpack.c.l.b16 %v360
      %v471 = vunpack.c.h.b16 %v360
      %v472 = vunpack.c.l.b16 %v361
      %v473 = vunpack.c.h.b16 %v361
      %v474 = vunpack.c.l.b16 %v362
      %v475 = vunpack.c.h.b16 %v362
      %v476 = vunpack.c.l.b16 %v363
      %v477 = vunpack.c.h.b16 %v363
      %v478 = vunpack.c.l.b16 %v364
      %v479 = vunpack.c.h.b16 %v364
      %v480 = vunpack.c.l.b16 %v365
      %v481 = vunpack.c.h.b16 %v365
      %v482 = vunpack.c.l.b16 %v366
      %v483 = vunpack.c.h.b16 %v366
      %v484 = vunpack.c.l.b16 %v367
      %v485 = vunpack.c.h.b16 %v367
      %v486 = vunpack.c.l.b16 %v368
      %v487 = vunpack.c.h.b16 %v368
      %v488 = vunpack.c.l.b16 %v369
      %v489 = vunpack.c.h.b16 %v369
      %v490 = vunpack.c.l.b16 %v370
      %v491 = vunpack.c.h.b16 %v370
      %v492 = vpack.c.b16 %v430, %v428
      %v493 = vpack.c.b16 %v431, %v429
      %v494 = vpack.c.b16 %v434, %v432
      %v495 = vpack.c.b16 %v435, %v433
      %v496 = vpack.c.b16 %v438, %v436
      %v497 = vpack.c.b16 %v439, %v437
      %v498 = vpack.c.b16 %v442, %v440
      %v499 = vpack.c.b16 %v443, %v441
      %v500 = vpack.c.b16 %v446, %v444
      %v501 = vpack.c.b16 %v447, %v445
      %v502 = vpack.c.b16 %v450, %v448
      %v503 = vpack.c.b16 %v451, %v449
      %v504 = vpack.c.b16 %v454, %v452
      %v505 = vpack.c.b16 %v455, %v453
      %v506 = vpack.c.b16 %v458, %v456
      %v507 = vpack.c.b16 %v459, %v457
      %v508 = vpack.c.b16 %v462, %v460
      %v509 = vpack.c.b16 %v463, %v461
      %v510 = vpack.c.b16 %v466, %v464
      %v511 = vpack.c.b16 %v467, %v465
      %v512 = vpack.c.b16 %v470, %v468
      %v513 = vpack.c.b16 %v471, %v469
      %v514 = vpack.c.b16 %v474, %v472
      %v515 = vpack.c.b16 %v475, %v473
      %v516 = vpack.c.b16 %v478, %v476
      %v517 = vpack.c.b16 %v479, %v477
      %v518 = vpack.c.b16 %v482, %v480
      %v519 = vpack.c.b16 %v483, %v481
      %v520 = vpack.c.b16 %v486, %v484
      %v521 = vpack.c.b16 %v487, %v485
      %v522 = vpack.c.b16 %v490, %v488
      %v523 = vpack.c.b16 %v491, %v489
      %556 = vmatprep.subr.bf16.mxu0 %v493
      %557 = vmatpush1.bf16.msra.mxu0 %v492
      %558 = vmatprep.subr.bf16.mxu0 %v495
      %559 = vmatpush1.bf16.msra.mxu0 %v494
      %560 = vmatprep.subr.bf16.mxu0 %v497
      %561 = vmatpush1.bf16.msra.mxu0 %v496
      %562 = vmatprep.subr.bf16.mxu0 %v499
      %563 = vmatpush1.bf16.msra.mxu0 %v498
      %564 = vmatprep.subr.bf16.mxu0 %v501
      %565 = vmatpush1.bf16.msra.mxu0 %v500
      %566 = vmatprep.subr.bf16.mxu0 %v503
      %567 = vmatpush1.bf16.msra.mxu0 %v502
      %568 = vmatprep.subr.bf16.mxu0 %v505
      %569 = vmatpush1.bf16.msra.mxu0 %v504
      %570 = vmatprep.subr.bf16.mxu0 %v507
      %571 = vmatpush1.bf16.msra.mxu0 %v506
      %572 = vmatprep.subr.bf16.mxu0 %v509
      %573 = vmatpush1.bf16.msra.mxu0 %v508
      %574 = vmatprep.subr.bf16.mxu0 %v511
      %575 = vmatpush1.bf16.msra.mxu0 %v510
      %576 = vmatprep.subr.bf16.mxu0 %v513
      %577 = vmatpush1.bf16.msra.mxu0 %v512
      %578 = vmatprep.subr.bf16.mxu0 %v515
      %579 = vmatpush1.bf16.msra.mxu0 %v514
      %580 = vmatprep.subr.bf16.mxu0 %v517
      %581 = vmatpush1.bf16.msra.mxu0 %v516
      %582 = vmatprep.subr.bf16.mxu0 %v519
      %583 = vmatpush1.bf16.msra.mxu0 %v518
      %584 = vmatprep.subr.bf16.mxu0 %v521
      %585 = vmatpush1.bf16.msra.mxu0 %v520
      %586 = vmatprep.subr.bf16.mxu0 %v523
      %587 = vmatpush1.bf16.msra.mxu0 %v522
      %588 = vmatprep.mubr.bf16.mxu0 %v393
      %589 = vmatmul.mubr.bf16.gmra.mrb[0].mxu0 %v386
      %v590 = vpop.f32.mrb[0].mxu0
      %v591 = vadd.f32 0.0, %v590
      %v592 = vpop.f32.mrb[0].mxu0
      %v593 = vadd.f32 0.0, %v592
      %v594 = vpop.f32.mrb[0].mxu0
      %v595 = vpop.f32.mrb[0].mxu0
      %596 = vdwg.mxu0
      %v599 = vcombine.low %v591, %v593
      %v601 = vunpack.c.l.s4 1983009808
      %v602 = vunpack.c.0.s8 %v601
      %v603 = vlaneseq
      %v604 = vshrl.u32 %v603, 7
      %v605 = vsub.s32 %v602, %v604
      %v606 = vrot.slane %v599, %v605
      %v608 = vadd.f32 %v337, %v606
      %609 = vst [vmem:[#allocation2] sm:$0xf] %v608
      %p610 = scmp.eq.s32.totalorder %s22, 8
      // Predicated region
      $region41: #{forward.36} parent=35 // pred_check
        %p611 = pneg %p610
      $region42: #{forward.36} parent=35 // pred_check_branch
        %613 = sbr.rel (%p611) target = $region44
      $region43: #{forward.36} parent=35 // pred_region
        %v614 = vld [vmem:[#allocation2] sm:$0xf]
        %v615 = vld [vmem:[%s312] sm:$0x3]
        %v617 = vlaneseq
        %v618 = vshrl.u32 %v617, 7
        %v619 = vsub.s32 0, %v618
        %v620 = vrot.slane %v615, %v619
        %v621 = vlaneseq
        %v622 = vshrl.u32 %v621, 7
        %v623 = vsub.s32 1, %v622
        %v624 = vrot.slane %v615, %v623
        %v625 = vcombine.low %v620, %v624
        %v627 = vunpack.c.l.s4 1983009808
        %v628 = vunpack.c.0.s8 %v627
        %v629 = vlaneseq
        %v630 = vshrl.u32 %v629, 7
        %v631 = vsub.s32 %v628, %v630
        %v632 = vrot.slane %v625, %v631
        %v634 = vadd.f32 %v614, %v632
        %v635 = vld [vmem:[%s321] sm:$0x3]
        %v636 = vunpack.c.l.bf16 %v635
        %v637 = vadd.f32 %v634, %v636
        %v638 = vmax.f32 %v637, 0.0
        %v641 = vunpack.c.l.s4 1983009808
        %v642 = vunpack.c.0.s8 %v641
        %v643 = vlaneseq
        %v644 = vshrl.u32 %v643, 7
        %v645 = vsub.s32 %v642, %v644
        %v646 = vrot.slane %v638, %v645
        %v647 = vcombine.high %v646, %v646
        %v650 = vpack.c.bf16 %v646, %v646
        %v651 = vpack.c.bf16 %v647, %v647
        %v654 = vcombine.low %v650, %v651
        %v656 = vunpack.c.l.s4 1966171168
        %v657 = vunpack.c.0.s8 %v656
        %v658 = vlaneseq
        %v659 = vshrl.u32 %v658, 7
        %v660 = vsub.s32 %v657, %v659
        %v661 = vrot.slane %v654, %v660
        %v663 = vunpack.c.l.s4 1966171168
        %v664 = vunpack.c.0.s8 %v663
        %v665 = vlaneseq
        %v666 = vshrl.u32 %v665, 7
        %v667 = vsub.s32 %v664, %v666
        %v668 = vrot.slane %v661, %v667
        %670 = vst [vmem:[%s330] sm:$0x3] %v668
      $region44: #{forward.36} parent=35 // pred_fallthru
        _
      %s671 = smul.u32 2, %s21
      %p672 = scmp.lt.s32.totalorder %s20, 0
      %s673 = scalar_select %p672, %s20, 0
      %p674 = scmp.lt.s32.totalorder %s671, 1
      %s675 = scalar_select %p674, %s671, 1
      %s676 = smul.addr %s673, 2
      %s677 = sadd.s32 %s675, %s676
      %s678 = scalar_lea.vmem %s4, %s677
      // Predicated region
      $region45: #{forward.36} parent=35 // pred_check
        %p679 = pneg %p164
      $region46: #{forward.36} parent=35 // pred_check_branch
        %681 = sbr.rel (%p679) target = $region48
      $region47: #{forward.36} parent=35 // pred_region
        %s682 = smul.u32 2, %s21
      $region48: #{forward.36} parent=35 // pred_fallthru
        _
      // Predicated region
      $region49: #{forward.36} parent=35 // pred_check
        %p683 = pneg %p164
      $region50: #{forward.36} parent=35 // pred_check_branch
        %685 = sbr.rel (%p683) target = $region52
      $region51: #{forward.36} parent=35 // pred_region
        %s686 = smul.u32 2, %s21
        %p687 = scmp.lt.s32.totalorder %s20, 0
        %s688 = scalar_select %p687, %s20, 0
        %p689 = scmp.lt.s32.totalorder %s686, 1
        %s690 = scalar_select %p689, %s686, 1
        %s691 = smul.addr %s688, 2
        %s692 = sadd.s32 %s690, %s691
        %s693 = scalar_lea.vmem %s4, %s692
      $region52: #{forward.36} parent=35 // pred_fallthru
        _
    $region36: #{forward.36} parent=5 // pred_fallthru
      _
    %p694 = scmp.le.s32.totalorder 2, %s10
    // Predicated region
    $region53: #{forward.36} parent=5 // pred_check
      %p695 = pneg %p694
    $region54: #{forward.36} parent=5 // pred_check_branch
      %697 = sbr.rel (%p695) target = $region56
    $region55: #{forward.36} parent=5 // pred_region
      %s698 = ssub.s32 %s10, 2
    $region56: #{forward.36} parent=5 // pred_fallthru
      _
  $region6: #{forward.36} parent=0 // loop_footer
    %s14 = sadd.s32 1, %s10
  $region7: #{forward.36} parent=0 // loop_footer_branch
    %9 = sbr.rel target = $region3
  $region8: #{forward.36} parent=0 // loop_exit
    _

// kernel: forward.43
$region0: #{forward.43}
  #allocation0 [shape = 'u32[]', space=smem, size = 0x4, offset = 0x4, fixed_abs, tag = 'smem constant byte address 0x4 - core index']
  #allocation1 [shape = 'u32[144,128]{1,0:T(1,128)}', space=vmem, size = 0x12000, scoped, tag = 'internal scratch']
  #allocation2 [shape = 'f32[2,256]{1,0:T(2,128)}', space=vmem, size = 0x800, scoped, tag = 'scratch operand']
  %s0 = inlined_call_operand.vmem [shape: bf16[2,1,1,9,256], index: 0, kind: input, shape index: {}, may-alias: {0,4}]
  %s1 = inlined_call_operand.vmem [shape: bf16[2,2304], index: 1, kind: input, shape index: {}]
  %s2 = inlined_call_operand.vmem [shape: bf16[2304,256], index: 2, kind: input, shape index: {}]
  %s3 = inlined_call_operand.vmem [shape: f32[1,256], index: 3, kind: input, shape index: {}]
  %s4 = inlined_call_operand.vmem [shape: bf16[2,1,1,9,256], index: 4, kind: output, shape index: {}, may-alias: {0,4}]
  %s5 = scalar_lea.vmem %s4, 8
  %s6 = sld [smem:[#allocation0]]
  $region83: #{forward.43} parent=0
    _
  %s8 = ssub.s32 1, %s6
  %s9 = scalar_select 0, %s8, %s6
  $region1: #{forward.43} parent=0
    #allocation3 [shape = 'u8[1024]{0}', space=vmem, size = 0x400, scoped, tag = 'output window, operand 0, single buffered']
    loop: start=0, step=1, limit=11
    $region2: #{forward.43} parent=1 // loop_pre_header
      _
    $region3: #{forward.43} parent=1 // loop_header
      %s11 = sphi 0, %s15
      %p12 = scmp.ge.s32.totalorder %s11, 11
      %s18 = sphi 0, %s37
      %s19 = sphi 0, %s33
      %s20 = sphi 0, %s29
      %s21 = sphi 0, %s18
      %s22 = sphi 0, %s19
      %s23 = sphi 0, %s20
      %s24 = sphi 0, %s21
      %s25 = sphi 0, %s22
      %s26 = sphi 0, %s23
      %s42 = sphi 0, %s44
      %s45 = sphi 0, %s42
      %s46 = sphi 0, %s45
      %s62 = sphi 0, %s46
      %s70 = sphi 0, %s72
      %s73 = sphi 0, %s70
      %s74 = sphi 0, %s73
      %s90 = sphi 0, %s74
      %s96 = sphi 0, %s98
      %s99 = sphi 0, %s96
      %s100 = sphi 0, %s99
      %s116 = sphi 0, %s100
      %s124 = sphi 0, %s126
      %s127 = sphi 0, %s124
      %s128 = sphi 0, %s127
      %s144 = sphi 0, %s128
    $region4: #{forward.43} parent=1 // loop_header_branch
      %14 = sbr.rel (%p12) target = $region8
    $region5: #{forward.43} parent=1 // loop_body
      %s16 = ssub.s32 %s11, 1
      %s17 = ssub.s32 %s11, 2
      %s27 = sadd.s32 1, %s20
      %p28 = scmp.ge.s32.totalorder %s27, 9
      %s29 = scalar_select %p28, 0, %s27
      %s30 = sadd.s32 1, %s19
      %s31 = scalar_select %p28, %s30, %s19
      %p32 = scmp.ge.s32.totalorder %s31, 1
      %s33 = scalar_select %p32, 0, %s31
      %s34 = sadd.s32 1, %s18
      %s35 = scalar_select %p32, %s34, %s18
      %p36 = scmp.ge.s32.totalorder %s35, 1
      %s37 = scalar_select %p36, 0, %s35
      %s38 = ssub.s32 %s18, %s37
      %s39 = ssub.s32 %s20, %s29
      %s40 = sor.u32 %s38, %s39
      %p41 = scmp.eq.s32.totalorder %s40, 0
      %s43 = sadd.s32 %s42, 1
      %s44 = scalar_select %p41, %s42, %s43
      %p47 = pneg %p41
      %p48 = scmp.eq.s32.totalorder %s11, 8
      %p49 = por %p47, %p48
      %p50 = scmp.ne.s32.totalorder %s42, %s45
      %p51 = scmp.eq.s32.totalorder %s11, 0
      %p52 = por %p50, %p51
      %p53 = scmp.ne.s32.totalorder %s42, %s45
      %p54 = scmp.eq.s32.totalorder %s16, 8
      %p55 = por %p53, %p54
      %p56 = scmp.ne.s32.totalorder %s45, %s46
      %p57 = scmp.eq.s32.totalorder %s16, 0
      %p58 = por %p56, %p57
      %p59 = scmp.ne.s32.totalorder %s45, %s46
      %p60 = scmp.eq.s32.totalorder %s17, 8
      %p61 = por %p59, %p60
      %p63 = scmp.ne.s32.totalorder %s46, %s62
      %p64 = scmp.eq.s32.totalorder %s17, 0
      %p65 = por %p63, %p64
      %s66 = ssub.s32 %s20, %s29
      %s67 = ssub.s32 %s19, %s33
      %s68 = sor.u32 %s66, %s67
      %p69 = scmp.eq.s32.totalorder %s68, 0
      %s71 = sadd.s32 %s70, 1
      %s72 = scalar_select %p69, %s70, %s71
      %p75 = pneg %p69
      %p76 = scmp.eq.s32.totalorder %s11, 8
      %p77 = por %p75, %p76
      %p78 = scmp.ne.s32.totalorder %s70, %s73
      %p79 = scmp.eq.s32.totalorder %s11, 0
      %p80 = por %p78, %p79
      %p81 = scmp.ne.s32.totalorder %s70, %s73
      %p82 = scmp.eq.s32.totalorder %s16, 8
      %p83 = por %p81, %p82
      %p84 = scmp.ne.s32.totalorder %s73, %s74
      %p85 = scmp.eq.s32.totalorder %s16, 0
      %p86 = por %p84, %p85
      %p87 = scmp.ne.s32.totalorder %s73, %s74
      %p88 = scmp.eq.s32.totalorder %s17, 8
      %p89 = por %p87, %p88
      %p91 = scmp.ne.s32.totalorder %s74, %s90
      %p92 = scmp.eq.s32.totalorder %s17, 0
      %p93 = por %p91, %p92
      %s94 = ssub.s32 %s19, %s33
      %p95 = scmp.eq.s32.totalorder %s94, 0
      %s97 = sadd.s32 %s96, 1
      %s98 = scalar_select %p95, %s96, %s97
      %p101 = pneg %p95
      %p102 = scmp.eq.s32.totalorder %s11, 8
      %p103 = por %p101, %p102
      %p104 = scmp.ne.s32.totalorder %s96, %s99
      %p105 = scmp.eq.s32.totalorder %s11, 0
      %p106 = por %p104, %p105
      %p107 = scmp.ne.s32.totalorder %s96, %s99
      %p108 = scmp.eq.s32.totalorder %s16, 8
      %p109 = por %p107, %p108
      %p110 = scmp.ne.s32.totalorder %s99, %s100
      %p111 = scmp.eq.s32.totalorder %s16, 0
      %p112 = por %p110, %p111
      %p113 = scmp.ne.s32.totalorder %s99, %s100
      %p114 = scmp.eq.s32.totalorder %s17, 8
      %p115 = por %p113, %p114
      %p117 = scmp.ne.s32.totalorder %s100, %s116
      %p118 = scmp.eq.s32.totalorder %s17, 0
      %p119 = por %p117, %p118
      %s120 = ssub.s32 %s18, %s37
      %s121 = ssub.s32 %s19, %s33
      %s122 = sor.u32 %s120, %s121
      %p123 = scmp.eq.s32.totalorder %s122, 0
      %s125 = sadd.s32 %s124, 1
      %s126 = scalar_select %p123, %s124, %s125
      %p129 = pneg %p123
      %p130 = scmp.eq.s32.totalorder %s11, 8
      %p131 = por %p129, %p130
      %p132 = scmp.ne.s32.totalorder %s124, %s127
      %p133 = scmp.eq.s32.totalorder %s11, 0
      %p134 = por %p132, %p133
      %p135 = scmp.ne.s32.totalorder %s124, %s127
      %p136 = scmp.eq.s32.totalorder %s16, 8
      %p137 = por %p135, %p136
      %p138 = scmp.ne.s32.totalorder %s127, %s128
      %p139 = scmp.eq.s32.totalorder %s16, 0
      %p140 = por %p138, %p139
      %p141 = scmp.ne.s32.totalorder %s127, %s128
      %p142 = scmp.eq.s32.totalorder %s17, 8
      %p143 = por %p141, %p142
      %p145 = scmp.ne.s32.totalorder %s128, %s144
      %p146 = scmp.eq.s32.totalorder %s17, 0
      %p147 = por %p145, %p146
      %p148 = scmp.le.s32.totalorder 1, %s11
      %p149 = scmp.lt.s32.totalorder %s11, 10
      %p150 = pnand %p148, %p149
      %p151 = pneg %p150
      // Predicated region
      $region9: #{forward.43} parent=5 // pred_check
        _
      $region10: #{forward.43} parent=5 // pred_check_branch
        %153 = sbr.rel (%p150) target = $region12
      $region11: #{forward.43} parent=5 // pred_region
        %s154 = ssub.s32 %s11, 1
        // Predicated region
        $region13: #{forward.43} parent=11 // pred_check
          %p155 = pneg %p112
        $region14: #{forward.43} parent=11 // pred_check_branch
          %157 = sbr.rel (%p155) target = $region16
        $region15: #{forward.43} parent=11 // pred_region
          %s158 = smul.u32 2, %s22
          %p159 = scmp.lt.s32.totalorder %s158, 1
          %s160 = scalar_select %p159, %s158, 1
          %s161 = scalar_lea.vmem %s3, %s160
          %s162 = smul.u32 2, %s22
        $region16: #{forward.43} parent=11 // pred_fallthru
          _
      $region12: #{forward.43} parent=5 // pred_fallthru
        _
      %p163 = scmp.lt.s32.totalorder %s11, 9
      // Predicated region
      $region17: #{forward.43} parent=5 // pred_check
        %p164 = pneg %p163
      $region18: #{forward.43} parent=5 // pred_check_branch
        %166 = sbr.rel (%p164) target = $region20
      $region19: #{forward.43} parent=5 // pred_region
        // Predicated region
        $region21: #{forward.43} parent=19 // pred_check
          %p167 = pneg %p52
        $region22: #{forward.43} parent=19 // pred_check_branch
          %169 = sbr.rel (%p167) target = $region24
        $region23: #{forward.43} parent=19 // pred_region
          %s170 = smul.u32 2, %s20
          %p171 = scmp.lt.s32.totalorder %s18, 0
          %s172 = scalar_select %p171, %s18, 0
          %p173 = scmp.lt.s32.totalorder %s170, 17
          %s174 = scalar_select %p173, %s170, 17
          %s175 = smul.addr %s172, 18
          %s176 = sadd.s32 %s174, %s175
          %s177 = scalar_lea.vmem %s1, %s176
          %s178 = smul.u32 2, %s20
        $region24: #{forward.43} parent=19 // pred_fallthru
          _
        // Predicated region
        $region25: #{forward.43} parent=19 // pred_check
          %p179 = pneg %p80
        $region26: #{forward.43} parent=19 // pred_check_branch
          %181 = sbr.rel (%p179) target = $region28
        $region27: #{forward.43} parent=19 // pred_region
          %s182 = smul.u32 32, %s20
          %s183 = smul.u32 2, %s19
          %p184 = scmp.lt.s32.totalorder %s182, 287
          %s185 = scalar_select %p184, %s182, 287
          %p186 = scmp.lt.s32.totalorder %s183, 1
          %s187 = scalar_select %p186, %s183, 1
          %s188 = smul.addr %s185, 2
          %s189 = sadd.s32 %s187, %s188
          %s190 = smul.addr %s189, 4
          %s191 = scalar_lea.vmem %s2, %s190
          %s192 = smul.u32 32, %s20
          %s193 = smul.u32 2, %s19
        $region28: #{forward.43} parent=19 // pred_fallthru
          _
      $region20: #{forward.43} parent=5 // pred_fallthru
        _
      %p194 = scmp.le.s32.totalorder 1, %s11
      %p195 = scmp.lt.s32.totalorder %s11, 10
      %p196 = pnand %p194, %p195
      %p197 = pneg %p196
      // Predicated region
      $region29: #{forward.43} parent=5 // pred_check
        _
      $region30: #{forward.43} parent=5 // pred_check_branch
        %199 = sbr.rel (%p196) target = $region32
      $region31: #{forward.43} parent=5 // pred_region
        %s200 = ssub.s32 %s11, 1
        %s201 = smul.u32 2, %s23
        %p202 = scmp.lt.s32.totalorder %s21, 0
        %s203 = scalar_select %p202, %s21, 0
        %p204 = scmp.lt.s32.totalorder %s201, 17
        %s205 = scalar_select %p204, %s201, 17
        %s206 = smul.addr %s203, 18
        %s207 = sadd.s32 %s205, %s206
        %s208 = scalar_lea.vmem %s1, %s207
        %p209 = pneg %p58
        %p210 = pneg %p55
        %s211 = smul.u32 32, %s23
        %s212 = smul.u32 2, %s22
        %p213 = scmp.lt.s32.totalorder %s211, 287
        %s214 = scalar_select %p213, %s211, 287
        %p215 = scmp.lt.s32.totalorder %s212, 1
        %s216 = scalar_select %p215, %s212, 1
        %s217 = smul.addr %s214, 2
        %s218 = sadd.s32 %s216, %s217
        %s219 = smul.addr %s218, 4
        %s220 = scalar_lea.vmem %s2, %s219
        %p221 = pneg %p86
        %p222 = pneg %p83
        %s223 = smul.u32 2, %s22
        %p224 = scmp.lt.s32.totalorder %s223, 1
        %s225 = scalar_select %p224, %s223, 1
        %s226 = scalar_lea.vmem %s3, %s225
        %p227 = pneg %p112
        %p228 = pneg %p109
        %p229 = pneg %p140
        %p230 = pneg %p137
        %s231 = smul.u32 2, %s23
        %p232 = scmp.lt.s32.totalorder %s21, 0
        %s233 = scalar_select %p232, %s21, 0
        %p234 = scmp.lt.s32.totalorder %s231, 17
        %s235 = scalar_select %p234, %s231, 17
        %s236 = smul.addr %s233, 18
        %s237 = sadd.s32 %s235, %s236
        %s238 = scalar_lea.vmem %s1, %s237
        %s239 = smul.u32 2, %s23
        %s240 = smul.u32 32, %s23
        %s241 = smul.u32 2, %s22
        %p242 = scmp.lt.s32.totalorder %s240, 287
        %s243 = scalar_select %p242, %s240, 287
        %p244 = scmp.lt.s32.totalorder %s241, 1
        %s245 = scalar_select %p244, %s241, 1
        %s246 = smul.addr %s243, 2
        %s247 = sadd.s32 %s245, %s246
        %s248 = smul.addr %s247, 4
        %s249 = scalar_lea.vmem %s2, %s248
        %s250 = smul.u32 32, %s23
        %s251 = smul.u32 2, %s22
        %s252 = smul.u32 2, %s22
        %p253 = scmp.lt.s32.totalorder %s252, 1
        %s254 = scalar_select %p253, %s252, 1
        %s255 = scalar_lea.vmem %s3, %s254
        %s256 = smul.u32 2, %s22
        %s257 = smul.u32 2, %s22
        %p258 = scmp.eq.s32.totalorder %s23, 0
        // Predicated region
        $region33: #{forward.43} parent=31 // pred_check
          %p259 = pneg %p258
        $region34: #{forward.43} parent=31 // pred_check_branch
          %261 = sbr.rel (%p259) target = $region36
        $region35: #{forward.43} parent=31 // pred_region
          %262 = vst [vmem:[#allocation2] sm:$0xf] 0.0
        $region36: #{forward.43} parent=31 // pred_fallthru
          _
        %v263 = vld [vmem:[#allocation2] sm:$0xf]
        %v264 = vld [vmem:[%s238] sm:$0x3]
        %v265 = vld [vmem:[%s249] sm:$0xff]
        %v266 = vld [vmem:[%s249 + $0x8] sm:$0xff]
        %v267 = vld [vmem:[%s249 + $0x10] sm:$0xff]
        %v268 = vld [vmem:[%s249 + $0x18] sm:$0xff]
        %v269 = vld [vmem:[%s249 + $0x20] sm:$0xff]
        %v270 = vld [vmem:[%s249 + $0x28] sm:$0xff]
        %v271 = vld [vmem:[%s249 + $0x30] sm:$0xff]
        %v272 = vld [vmem:[%s249 + $0x38] sm:$0xff]
        %v273 = vld [vmem:[%s249 + $0x40] sm:$0xff]
        %v274 = vld [vmem:[%s249 + $0x48] sm:$0xff]
        %v275 = vld [vmem:[%s249 + $0x50] sm:$0xff]
        %v276 = vld [vmem:[%s249 + $0x58] sm:$0xff]
        %v277 = vld [vmem:[%s249 + $0x60] sm:$0xff]
        %v278 = vld [vmem:[%s249 + $0x68] sm:$0xff]
        %v279 = vld [vmem:[%s249 + $0x70] sm:$0xff]
        %v280 = vld [vmem:[%s249 + $0x78] sm:$0xff]
        %v281 = vld [vmem:[%s249 + $0x80] sm:$0xff]
        %v282 = vld [vmem:[%s249 + $0x88] sm:$0xff]
        %v283 = vld [vmem:[%s249 + $0x90] sm:$0xff]
        %v284 = vld [vmem:[%s249 + $0x98] sm:$0xff]
        %v285 = vld [vmem:[%s249 + $0xa0] sm:$0xff]
        %v286 = vld [vmem:[%s249 + $0xa8] sm:$0xff]
        %v287 = vld [vmem:[%s249 + $0xb0] sm:$0xff]
        %v288 = vld [vmem:[%s249 + $0xb8] sm:$0xff]
        %v289 = vld [vmem:[%s249 + $0xc0] sm:$0xff]
        %v290 = vld [vmem:[%s249 + $0xc8] sm:$0xff]
        %v291 = vld [vmem:[%s249 + $0xd0] sm:$0xff]
        %v292 = vld [vmem:[%s249 + $0xd8] sm:$0xff]
        %v293 = vld [vmem:[%s249 + $0xe0] sm:$0xff]
        %v294 = vld [vmem:[%s249 + $0xe8] sm:$0xff]
        %v295 = vld [vmem:[%s249 + $0xf0] sm:$0xff]
        %v296 = vld [vmem:[%s249 + $0xf8] sm:$0xff]
        %v299 = vunpack.c.l.s4 1966171168
        %v300 = vunpack.c.0.s8 %v299
        %v301 = vlaneseq
        %v302 = vshrl.u32 %v301, 7
        %v303 = vsub.s32 %v300, %v302
        %v304 = vrot.slane %v264, %v303
        %v305 = vcombine.high %v304, %v304
        %v307 = vunpack.c.l.s4 1966171168
        %v308 = vunpack.c.0.s8 %v307
        %v309 = vlaneseq
        %v310 = vshrl.u32 %v309, 7
        %v311 = vsub.s32 %v308, %v310
        %v312 = vrot.slane %v304, %v311
        %v314 = vunpack.c.l.s4 1966171168
        %v315 = vunpack.c.0.s8 %v314
        %v316 = vlaneseq
        %v317 = vshrl.u32 %v316, 7
        %v318 = vsub.s32 %v315, %v317
        %v319 = vrot.slane %v305, %v318
        %v354 = vunpack.c.l.b16 %v265
        %v355 = vunpack.c.h.b16 %v265
        %v356 = vunpack.c.l.b16 %v266
        %v357 = vunpack.c.h.b16 %v266
        %v358 = vunpack.c.l.b16 %v267
        %v359 = vunpack.c.h.b16 %v267
        %v360 = vunpack.c.l.b16 %v268
        %v361 = vunpack.c.h.b16 %v268
        %v362 = vunpack.c.l.b16 %v269
        %v363 = vunpack.c.h.b16 %v269
        %v364 = vunpack.c.l.b16 %v270
        %v365 = vunpack.c.h.b16 %v270
        %v366 = vunpack.c.l.b16 %v271
        %v367 = vunpack.c.h.b16 %v271
        %v368 = vunpack.c.l.b16 %v272
        %v369 = vunpack.c.h.b16 %v272
        %v370 = vunpack.c.l.b16 %v273
        %v371 = vunpack.c.h.b16 %v273
        %v372 = vunpack.c.l.b16 %v274
        %v373 = vunpack.c.h.b16 %v274
        %v374 = vunpack.c.l.b16 %v275
        %v375 = vunpack.c.h.b16 %v275
        %v376 = vunpack.c.l.b16 %v276
        %v377 = vunpack.c.h.b16 %v276
        %v378 = vunpack.c.l.b16 %v277
        %v379 = vunpack.c.h.b16 %v277
        %v380 = vunpack.c.l.b16 %v278
        %v381 = vunpack.c.h.b16 %v278
        %v382 = vunpack.c.l.b16 %v279
        %v383 = vunpack.c.h.b16 %v279
        %v384 = vunpack.c.l.b16 %v280
        %v385 = vunpack.c.h.b16 %v280
        %v386 = vunpack.c.l.b16 %v281
        %v387 = vunpack.c.h.b16 %v281
        %v388 = vunpack.c.l.b16 %v282
        %v389 = vunpack.c.h.b16 %v282
        %v390 = vunpack.c.l.b16 %v283
        %v391 = vunpack.c.h.b16 %v283
        %v392 = vunpack.c.l.b16 %v284
        %v393 = vunpack.c.h.b16 %v284
        %v394 = vunpack.c.l.b16 %v285
        %v395 = vunpack.c.h.b16 %v285
        %v396 = vunpack.c.l.b16 %v286
        %v397 = vunpack.c.h.b16 %v286
        %v398 = vunpack.c.l.b16 %v287
        %v399 = vunpack.c.h.b16 %v287
        %v400 = vunpack.c.l.b16 %v288
        %v401 = vunpack.c.h.b16 %v288
        %v402 = vunpack.c.l.b16 %v289
        %v403 = vunpack.c.h.b16 %v289
        %v404 = vunpack.c.l.b16 %v290
        %v405 = vunpack.c.h.b16 %v290
        %v406 = vunpack.c.l.b16 %v291
        %v407 = vunpack.c.h.b16 %v291
        %v408 = vunpack.c.l.b16 %v292
        %v409 = vunpack.c.h.b16 %v292
        %v410 = vunpack.c.l.b16 %v293
        %v411 = vunpack.c.h.b16 %v293
        %v412 = vunpack.c.l.b16 %v294
        %v413 = vunpack.c.h.b16 %v294
        %v414 = vunpack.c.l.b16 %v295
        %v415 = vunpack.c.h.b16 %v295
        %v416 = vunpack.c.l.b16 %v296
        %v417 = vunpack.c.h.b16 %v296
        %v418 = vpack.c.b16 %v356, %v354
        %v419 = vpack.c.b16 %v357, %v355
        %v420 = vpack.c.b16 %v360, %v358
        %v421 = vpack.c.b16 %v361, %v359
        %v422 = vpack.c.b16 %v364, %v362
        %v423 = vpack.c.b16 %v365, %v363
        %v424 = vpack.c.b16 %v368, %v366
        %v425 = vpack.c.b16 %v369, %v367
        %v426 = vpack.c.b16 %v372, %v370
        %v427 = vpack.c.b16 %v373, %v371
        %v428 = vpack.c.b16 %v376, %v374
        %v429 = vpack.c.b16 %v377, %v375
        %v430 = vpack.c.b16 %v380, %v378
        %v431 = vpack.c.b16 %v381, %v379
        %v432 = vpack.c.b16 %v384, %v382
        %v433 = vpack.c.b16 %v385, %v383
        %v434 = vpack.c.b16 %v388, %v386
        %v435 = vpack.c.b16 %v389, %v387
        %v436 = vpack.c.b16 %v392, %v390
        %v437 = vpack.c.b16 %v393, %v391
        %v438 = vpack.c.b16 %v396, %v394
        %v439 = vpack.c.b16 %v397, %v395
        %v440 = vpack.c.b16 %v400, %v398
        %v441 = vpack.c.b16 %v401, %v399
        %v442 = vpack.c.b16 %v404, %v402
        %v443 = vpack.c.b16 %v405, %v403
        %v444 = vpack.c.b16 %v408, %v406
        %v445 = vpack.c.b16 %v409, %v407
        %v446 = vpack.c.b16 %v412, %v410
        %v447 = vpack.c.b16 %v413, %v411
        %v448 = vpack.c.b16 %v416, %v414
        %v449 = vpack.c.b16 %v417, %v415
        %482 = vmatprep.subr.bf16.mxu0 %v419
        %483 = vmatpush1.bf16.msra.mxu0 %v418
        %484 = vmatprep.subr.bf16.mxu0 %v421
        %485 = vmatpush1.bf16.msra.mxu0 %v420
        %486 = vmatprep.subr.bf16.mxu0 %v423
        %487 = vmatpush1.bf16.msra.mxu0 %v422
        %488 = vmatprep.subr.bf16.mxu0 %v425
        %489 = vmatpush1.bf16.msra.mxu0 %v424
        %490 = vmatprep.subr.bf16.mxu0 %v427
        %491 = vmatpush1.bf16.msra.mxu0 %v426
        %492 = vmatprep.subr.bf16.mxu0 %v429
        %493 = vmatpush1.bf16.msra.mxu0 %v428
        %494 = vmatprep.subr.bf16.mxu0 %v431
        %495 = vmatpush1.bf16.msra.mxu0 %v430
        %496 = vmatprep.subr.bf16.mxu0 %v433
        %497 = vmatpush1.bf16.msra.mxu0 %v432
        %498 = vmatprep.subr.bf16.mxu0 %v435
        %499 = vmatpush1.bf16.msra.mxu0 %v434
        %500 = vmatprep.subr.bf16.mxu0 %v437
        %501 = vmatpush1.bf16.msra.mxu0 %v436
        %502 = vmatprep.subr.bf16.mxu0 %v439
        %503 = vmatpush1.bf16.msra.mxu0 %v438
        %504 = vmatprep.subr.bf16.mxu0 %v441
        %505 = vmatpush1.bf16.msra.mxu0 %v440
        %506 = vmatprep.subr.bf16.mxu0 %v443
        %507 = vmatpush1.bf16.msra.mxu0 %v442
        %508 = vmatprep.subr.bf16.mxu0 %v445
        %509 = vmatpush1.bf16.msra.mxu0 %v444
        %510 = vmatprep.subr.bf16.mxu0 %v447
        %511 = vmatpush1.bf16.msra.mxu0 %v446
        %512 = vmatprep.subr.bf16.mxu0 %v449
        %513 = vmatpush1.bf16.msra.mxu0 %v448
        %514 = vmatprep.mubr.bf16.mxu0 %v319
        %515 = vmatmul.mubr.bf16.gmra.mrb[0].mxu0 %v312
        %v516 = vpop.f32.mrb[0].mxu0
        %v517 = vadd.f32 0.0, %v516
        %v518 = vpop.f32.mrb[0].mxu0
        %v519 = vadd.f32 0.0, %v518
        %v520 = vpop.f32.mrb[0].mxu0
        %v521 = vpop.f32.mrb[0].mxu0
        %522 = vdwg.mxu0
        %v525 = vcombine.low %v517, %v519
        %v527 = vunpack.c.l.s4 1983009808
        %v528 = vunpack.c.0.s8 %v527
        %v529 = vlaneseq
        %v530 = vshrl.u32 %v529, 7
        %v531 = vsub.s32 %v528, %v530
        %v532 = vrot.slane %v525, %v531
        %v534 = vadd.f32 %v263, %v532
        %535 = vst [vmem:[#allocation2] sm:$0xf] %v534
        %p536 = scmp.eq.s32.totalorder %s23, 8
        // Predicated region
        $region37: #{forward.43} parent=31 // pred_check
          %p537 = pneg %p536
        $region38: #{forward.43} parent=31 // pred_check_branch
          %539 = sbr.rel (%p537) target = $region40
        $region39: #{forward.43} parent=31 // pred_region
          %v540 = vld [vmem:[#allocation2] sm:$0xf]
          %v541 = vld [vmem:[%s255] sm:$0x3]
          %v543 = vlaneseq
          %v544 = vshrl.u32 %v543, 7
          %v545 = vsub.s32 0, %v544
          %v546 = vrot.slane %v541, %v545
          %v547 = vlaneseq
          %v548 = vshrl.u32 %v547, 7
          %v549 = vsub.s32 1, %v548
          %v550 = vrot.slane %v541, %v549
          %v551 = vcombine.low %v546, %v550
          %v553 = vunpack.c.l.s4 1983009808
          %v554 = vunpack.c.0.s8 %v553
          %v555 = vlaneseq
          %v556 = vshrl.u32 %v555, 7
          %v557 = vsub.s32 %v554, %v556
          %v558 = vrot.slane %v551, %v557
          %v560 = vadd.f32 %v540, %v558
          %v561 = vmax.f32 %v560, 0.0
          %v564 = vunpack.c.l.s4 1983009808
          %v565 = vunpack.c.0.s8 %v564
          %v566 = vlaneseq
          %v567 = vshrl.u32 %v566, 7
          %v568 = vsub.s32 %v565, %v567
          %v569 = vrot.slane %v561, %v568
          %v570 = vcombine.high %v569, %v569
          %v573 = vpack.c.bf16 %v569, %v569
          %v574 = vpack.c.bf16 %v570, %v570
          %v577 = vcombine.low %v573, %v574
          %v579 = vunpack.c.l.s4 1966171168
          %v580 = vunpack.c.0.s8 %v579
          %v581 = vlaneseq
          %v582 = vshrl.u32 %v581, 7
          %v583 = vsub.s32 %v580, %v582
          %v584 = vrot.slane %v577, %v583
          %v586 = vunpack.c.l.s4 1966171168
          %v587 = vunpack.c.0.s8 %v586
          %v588 = vlaneseq
          %v589 = vshrl.u32 %v588, 7
          %v590 = vsub.s32 %v587, %v589
          %v591 = vrot.slane %v584, %v590
          %593 = vst [vmem:[#allocation3] sm:$0x3] %v591
        $region40: #{forward.43} parent=31 // pred_fallthru
          _
        // Predicated region
        $region41: #{forward.43} parent=31 // pred_check
          %p594 = pneg %p137
        $region42: #{forward.43} parent=31 // pred_check_branch
          %596 = sbr.rel (%p594) target = $region44
        $region43: #{forward.43} parent=31 // pred_region
          %s597 = smul.u32 2, %s22
          %s598 = smul.addr %s21, 2
          %s599 = sadd.s32 %s597, %s598
          %s600 = scalar_lea.vmem %s5, %s599
          // Predicated region
          $region45: #{forward.43} parent=43 // pred_check
            _
          $region46: #{forward.43} parent=43 // pred_check_branch
            %602 = sbr.rel (0) target = $region48
          $region47: #{forward.43} parent=43 // pred_region
            // Predicated region
            $region49: #{forward.43} parent=47 // pred_check
              _
            $region50: #{forward.43} parent=47 // pred_check_branch
              %604 = sbr.rel target = $region52
            $region51: #{forward.43} parent=47 // pred_region
              // Predicated region
              $region64: #{forward.43} parent=51 // pred_check
                _
              $region65: #{forward.43} parent=51 // pred_check_branch
                %619 = sbr.rel (0) target = $region67
              $region66: #{forward.43} parent=51 // pred_region
                loop: start=0, step=1, limit=1
                $region68: #{forward.43} parent=66 // loop_pre_header
                  _
                $region69: #{forward.43} parent=66 // loop_header
                  %s622 = sphi 0, %s626
                  %p623 = scmp.ge.s32.totalorder %s622, 1
                  %s627 = sphi [#allocation3], [#allocation3]
                  %s628 = sphi %s600, %s600
                $region70: #{forward.43} parent=66 // loop_header_branch
                  %625 = sbr.rel (%p623) target = $region74
                $region71: #{forward.43} parent=66 // loop_body
                  %v629 = vld [vmem:[%s627] sm:$0x3]
                  %630 = vst [vmem:[%s628] sm:$0x3] %v629
                $region72: #{forward.43} parent=66 // loop_footer
                  %s626 = sadd.s32 1, %s622
                $region73: #{forward.43} parent=66 // loop_footer_branch
                  %621 = sbr.rel target = $region69
                $region74: #{forward.43} parent=66 // loop_exit
                  _
              $region67: #{forward.43} parent=51 // pred_fallthru
                _
            $region52: #{forward.43} parent=47 // pred_fallthru
              _
            // Predicated region
            $region53: #{forward.43} parent=47 // pred_check
              _
            $region54: #{forward.43} parent=47 // pred_check_branch
              %606 = sbr.rel (0) target = $region56
            $region55: #{forward.43} parent=47 // pred_region
              loop: start=0, step=1, limit=1
              $region57: #{forward.43} parent=55 // loop_pre_header
                _
              $region58: #{forward.43} parent=55 // loop_header
                %s609 = sphi 0, %s613
                %p610 = scmp.ge.s32.totalorder %s609, 1
                %s614 = sphi [#allocation3], [#allocation3]
                %s615 = sphi %s600, %s600
              $region59: #{forward.43} parent=55 // loop_header_branch
                %612 = sbr.rel (%p610) target = $region63
              $region60: #{forward.43} parent=55 // loop_body
                %v616 = vld [vmem:[%s614] sm:$0x3]
                %617 = vst [vmem:[%s615] sm:$0x3] %v616
              $region61: #{forward.43} parent=55 // loop_footer
                %s613 = sadd.s32 1, %s609
              $region62: #{forward.43} parent=55 // loop_footer_branch
                %608 = sbr.rel target = $region58
              $region63: #{forward.43} parent=55 // loop_exit
                _
            $region56: #{forward.43} parent=47 // pred_fallthru
              _
          $region48: #{forward.43} parent=43 // pred_fallthru
            _
          %631 = vnop
        $region44: #{forward.43} parent=31 // pred_fallthru
          _
        // Predicated region
        $region75: #{forward.43} parent=31 // pred_check
          %p632 = pneg %p137
        $region76: #{forward.43} parent=31 // pred_check_branch
          %634 = sbr.rel (%p632) target = $region78
        $region77: #{forward.43} parent=31 // pred_region
          _
        $region78: #{forward.43} parent=31 // pred_fallthru
          _
      $region32: #{forward.43} parent=5 // pred_fallthru
        _
      %p635 = scmp.le.s32.totalorder 2, %s11
      // Predicated region
      $region79: #{forward.43} parent=5 // pred_check
        %p636 = pneg %p635
      $region80: #{forward.43} parent=5 // pred_check_branch
        %638 = sbr.rel (%p636) target = $region82
      $region81: #{forward.43} parent=5 // pred_region
        %s639 = ssub.s32 %s11, 2
      $region82: #{forward.43} parent=5 // pred_fallthru
        _
    $region6: #{forward.43} parent=1 // loop_footer
      %s15 = sadd.s32 1, %s11
    $region7: #{forward.43} parent=1 // loop_footer_branch
      %10 = sbr.rel target = $region3
    $region8: #{forward.43} parent=1 // loop_exit
      _

// kernel: forward.44
$region0: #{forward.44}
  #allocation0 [shape = 'u32[]', space=smem, size = 0x4, offset = 0x4, fixed_abs, tag = 'smem constant byte address 0x4 - core index']
  #allocation1 [shape = 'u32[144,128]{1,0:T(1,128)}', space=vmem, size = 0x12000, scoped, tag = 'internal scratch']
  #allocation2 [shape = 'f32[2,512]{1,0:T(2,128)}', space=vmem, size = 0x1000, scoped, tag = 'scratch operand']
  %s0 = inlined_call_operand.vmem [shape: bf16[2,1,1,9,512], index: 0, kind: input, shape index: {}, may-alias: {0,4}]
  %s1 = inlined_call_operand.vmem [shape: bf16[2,2304], index: 1, kind: input, shape index: {}]
  %s2 = inlined_call_operand.vmem [shape: bf16[2304,512], index: 2, kind: input, shape index: {}]
  %s3 = inlined_call_operand.vmem [shape: f32[1,512], index: 3, kind: input, shape index: {}]
  %s4 = inlined_call_operand.vmem [shape: bf16[2,1,1,9,512], index: 4, kind: output, shape index: {}, may-alias: {0,4}]
  %s5 = scalar_lea.vmem %s4, 16
  %s6 = sld [smem:[#allocation0]]
  $region83: #{forward.44} parent=0
    _
  %s8 = ssub.s32 1, %s6
  %s9 = scalar_select 0, %s8, %s6
  $region1: #{forward.44} parent=0
    #allocation3 [shape = 'u8[2048]{0}', space=vmem, size = 0x800, scoped, tag = 'output window, operand 0, single buffered']
    loop: start=0, step=1, limit=11
    $region2: #{forward.44} parent=1 // loop_pre_header
      _
    $region3: #{forward.44} parent=1 // loop_header
      %s11 = sphi 0, %s15
      %p12 = scmp.ge.s32.totalorder %s11, 11
      %s18 = sphi 0, %s37
      %s19 = sphi 0, %s33
      %s20 = sphi 0, %s29
      %s21 = sphi 0, %s18
      %s22 = sphi 0, %s19
      %s23 = sphi 0, %s20
      %s24 = sphi 0, %s21
      %s25 = sphi 0, %s22
      %s26 = sphi 0, %s23
      %s42 = sphi 0, %s44
      %s45 = sphi 0, %s42
      %s46 = sphi 0, %s45
      %s62 = sphi 0, %s46
      %s70 = sphi 0, %s72
      %s73 = sphi 0, %s70
      %s74 = sphi 0, %s73
      %s90 = sphi 0, %s74
      %s96 = sphi 0, %s98
      %s99 = sphi 0, %s96
      %s100 = sphi 0, %s99
      %s116 = sphi 0, %s100
      %s124 = sphi 0, %s126
      %s127 = sphi 0, %s124
      %s128 = sphi 0, %s127
      %s144 = sphi 0, %s128
    $region4: #{forward.44} parent=1 // loop_header_branch
      %14 = sbr.rel (%p12) target = $region8
    $region5: #{forward.44} parent=1 // loop_body
      %s16 = ssub.s32 %s11, 1
      %s17 = ssub.s32 %s11, 2
      %s27 = sadd.s32 1, %s20
      %p28 = scmp.ge.s32.totalorder %s27, 9
      %s29 = scalar_select %p28, 0, %s27
      %s30 = sadd.s32 1, %s19
      %s31 = scalar_select %p28, %s30, %s19
      %p32 = scmp.ge.s32.totalorder %s31, 1
      %s33 = scalar_select %p32, 0, %s31
      %s34 = sadd.s32 1, %s18
      %s35 = scalar_select %p32, %s34, %s18
      %p36 = scmp.ge.s32.totalorder %s35, 1
      %s37 = scalar_select %p36, 0, %s35
      %s38 = ssub.s32 %s18, %s37
      %s39 = ssub.s32 %s20, %s29
      %s40 = sor.u32 %s38, %s39
      %p41 = scmp.eq.s32.totalorder %s40, 0
      %s43 = sadd.s32 %s42, 1
      %s44 = scalar_select %p41, %s42, %s43
      %p47 = pneg %p41
      %p48 = scmp.eq.s32.totalorder %s11, 8
      %p49 = por %p47, %p48
      %p50 = scmp.ne.s32.totalorder %s42, %s45
      %p51 = scmp.eq.s32.totalorder %s11, 0
      %p52 = por %p50, %p51
      %p53 = scmp.ne.s32.totalorder %s42, %s45
      %p54 = scmp.eq.s32.totalorder %s16, 8
      %p55 = por %p53, %p54
      %p56 = scmp.ne.s32.totalorder %s45, %s46
      %p57 = scmp.eq.s32.totalorder %s16, 0
      %p58 = por %p56, %p57
      %p59 = scmp.ne.s32.totalorder %s45, %s46
      %p60 = scmp.eq.s32.totalorder %s17, 8
      %p61 = por %p59, %p60
      %p63 = scmp.ne.s32.totalorder %s46, %s62
      %p64 = scmp.eq.s32.totalorder %s17, 0
      %p65 = por %p63, %p64
      %s66 = ssub.s32 %s20, %s29
      %s67 = ssub.s32 %s19, %s33
      %s68 = sor.u32 %s66, %s67
      %p69 = scmp.eq.s32.totalorder %s68, 0
      %s71 = sadd.s32 %s70, 1
      %s72 = scalar_select %p69, %s70, %s71
      %p75 = pneg %p69
      %p76 = scmp.eq.s32.totalorder %s11, 8
      %p77 = por %p75, %p76
      %p78 = scmp.ne.s32.totalorder %s70, %s73
      %p79 = scmp.eq.s32.totalorder %s11, 0
      %p80 = por %p78, %p79
      %p81 = scmp.ne.s32.totalorder %s70, %s73
      %p82 = scmp.eq.s32.totalorder %s16, 8
      %p83 = por %p81, %p82
      %p84 = scmp.ne.s32.totalorder %s73, %s74
      %p85 = scmp.eq.s32.totalorder %s16, 0
      %p86 = por %p84, %p85
      %p87 = scmp.ne.s32.totalorder %s73, %s74
      %p88 = scmp.eq.s32.totalorder %s17, 8
      %p89 = por %p87, %p88
      %p91 = scmp.ne.s32.totalorder %s74, %s90
      %p92 = scmp.eq.s32.totalorder %s17, 0
      %p93 = por %p91, %p92
      %s94 = ssub.s32 %s19, %s33
      %p95 = scmp.eq.s32.totalorder %s94, 0
      %s97 = sadd.s32 %s96, 1
      %s98 = scalar_select %p95, %s96, %s97
      %p101 = pneg %p95
      %p102 = scmp.eq.s32.totalorder %s11, 8
      %p103 = por %p101, %p102
      %p104 = scmp.ne.s32.totalorder %s96, %s99
      %p105 = scmp.eq.s32.totalorder %s11, 0
      %p106 = por %p104, %p105
      %p107 = scmp.ne.s32.totalorder %s96, %s99
      %p108 = scmp.eq.s32.totalorder %s16, 8
      %p109 = por %p107, %p108
      %p110 = scmp.ne.s32.totalorder %s99, %s100
      %p111 = scmp.eq.s32.totalorder %s16, 0
      %p112 = por %p110, %p111
      %p113 = scmp.ne.s32.totalorder %s99, %s100
      %p114 = scmp.eq.s32.totalorder %s17, 8
      %p115 = por %p113, %p114
      %p117 = scmp.ne.s32.totalorder %s100, %s116
      %p118 = scmp.eq.s32.totalorder %s17, 0
      %p119 = por %p117, %p118
      %s120 = ssub.s32 %s18, %s37
      %s121 = ssub.s32 %s19, %s33
      %s122 = sor.u32 %s120, %s121
      %p123 = scmp.eq.s32.totalorder %s122, 0
      %s125 = sadd.s32 %s124, 1
      %s126 = scalar_select %p123, %s124, %s125
      %p129 = pneg %p123
      %p130 = scmp.eq.s32.totalorder %s11, 8
      %p131 = por %p129, %p130
      %p132 = scmp.ne.s32.totalorder %s124, %s127
      %p133 = scmp.eq.s32.totalorder %s11, 0
      %p134 = por %p132, %p133
      %p135 = scmp.ne.s32.totalorder %s124, %s127
      %p136 = scmp.eq.s32.totalorder %s16, 8
      %p137 = por %p135, %p136
      %p138 = scmp.ne.s32.totalorder %s127, %s128
      %p139 = scmp.eq.s32.totalorder %s16, 0
      %p140 = por %p138, %p139
      %p141 = scmp.ne.s32.totalorder %s127, %s128
      %p142 = scmp.eq.s32.totalorder %s17, 8
      %p143 = por %p141, %p142
      %p145 = scmp.ne.s32.totalorder %s128, %s144
      %p146 = scmp.eq.s32.totalorder %s17, 0
      %p147 = por %p145, %p146
      %p148 = scmp.le.s32.totalorder 1, %s11
      %p149 = scmp.lt.s32.totalorder %s11, 10
      %p150 = pnand %p148, %p149
      %p151 = pneg %p150
      // Predicated region
      $region9: #{forward.44} parent=5 // pred_check
        _
      $region10: #{forward.44} parent=5 // pred_check_branch
        %153 = sbr.rel (%p150) target = $region12
      $region11: #{forward.44} parent=5 // pred_region
        %s154 = ssub.s32 %s11, 1
        // Predicated region
        $region13: #{forward.44} parent=11 // pred_check
          %p155 = pneg %p112
        $region14: #{forward.44} parent=11 // pred_check_branch
          %157 = sbr.rel (%p155) target = $region16
        $region15: #{forward.44} parent=11 // pred_region
          %s158 = smul.u32 4, %s22
          %p159 = scmp.lt.s32.totalorder %s158, 3
          %s160 = scalar_select %p159, %s158, 3
          %s161 = scalar_lea.vmem %s3, %s160
          %s162 = smul.u32 4, %s22
        $region16: #{forward.44} parent=11 // pred_fallthru
          _
      $region12: #{forward.44} parent=5 // pred_fallthru
        _
      %p163 = scmp.lt.s32.totalorder %s11, 9
      // Predicated region
      $region17: #{forward.44} parent=5 // pred_check
        %p164 = pneg %p163
      $region18: #{forward.44} parent=5 // pred_check_branch
        %166 = sbr.rel (%p164) target = $region20
      $region19: #{forward.44} parent=5 // pred_region
        // Predicated region
        $region21: #{forward.44} parent=19 // pred_check
          %p167 = pneg %p52
        $region22: #{forward.44} parent=19 // pred_check_branch
          %169 = sbr.rel (%p167) target = $region24
        $region23: #{forward.44} parent=19 // pred_region
          %s170 = smul.u32 2, %s20
          %p171 = scmp.lt.s32.totalorder %s18, 0
          %s172 = scalar_select %p171, %s18, 0
          %p173 = scmp.lt.s32.totalorder %s170, 17
          %s174 = scalar_select %p173, %s170, 17
          %s175 = smul.addr %s172, 18
          %s176 = sadd.s32 %s174, %s175
          %s177 = scalar_lea.vmem %s1, %s176
          %s178 = smul.u32 2, %s20
        $region24: #{forward.44} parent=19 // pred_fallthru
          _
        // Predicated region
        $region25: #{forward.44} parent=19 // pred_check
          %p179 = pneg %p80
        $region26: #{forward.44} parent=19 // pred_check_branch
          %181 = sbr.rel (%p179) target = $region28
        $region27: #{forward.44} parent=19 // pred_region
          %s182 = smul.u32 32, %s20
          %s183 = smul.u32 4, %s19
          %p184 = scmp.lt.s32.totalorder %s182, 287
          %s185 = scalar_select %p184, %s182, 287
          %p186 = scmp.lt.s32.totalorder %s183, 3
          %s187 = scalar_select %p186, %s183, 3
          %s188 = smul.addr %s185, 4
          %s189 = sadd.s32 %s187, %s188
          %s190 = smul.addr %s189, 4
          %s191 = scalar_lea.vmem %s2, %s190
          %s192 = smul.u32 32, %s20
          %s193 = smul.u32 4, %s19
        $region28: #{forward.44} parent=19 // pred_fallthru
          _
      $region20: #{forward.44} parent=5 // pred_fallthru
        _
      %p194 = scmp.le.s32.totalorder 1, %s11
      %p195 = scmp.lt.s32.totalorder %s11, 10
      %p196 = pnand %p194, %p195
      %p197 = pneg %p196
      // Predicated region
      $region29: #{forward.44} parent=5 // pred_check
        _
      $region30: #{forward.44} parent=5 // pred_check_branch
        %199 = sbr.rel (%p196) target = $region32
      $region31: #{forward.44} parent=5 // pred_region
        %s200 = ssub.s32 %s11, 1
        %s201 = smul.u32 2, %s23
        %p202 = scmp.lt.s32.totalorder %s21, 0
        %s203 = scalar_select %p202, %s21, 0
        %p204 = scmp.lt.s32.totalorder %s201, 17
        %s205 = scalar_select %p204, %s201, 17
        %s206 = smul.addr %s203, 18
        %s207 = sadd.s32 %s205, %s206
        %s208 = scalar_lea.vmem %s1, %s207
        %p209 = pneg %p58
        %p210 = pneg %p55
        %s211 = smul.u32 32, %s23
        %s212 = smul.u32 4, %s22
        %p213 = scmp.lt.s32.totalorder %s211, 287
        %s214 = scalar_select %p213, %s211, 287
        %p215 = scmp.lt.s32.totalorder %s212, 3
        %s216 = scalar_select %p215, %s212, 3
        %s217 = smul.addr %s214, 4
        %s218 = sadd.s32 %s216, %s217
        %s219 = smul.addr %s218, 4
        %s220 = scalar_lea.vmem %s2, %s219
        %p221 = pneg %p86
        %p222 = pneg %p83
        %s223 = smul.u32 4, %s22
        %p224 = scmp.lt.s32.totalorder %s223, 3
        %s225 = scalar_select %p224, %s223, 3
        %s226 = scalar_lea.vmem %s3, %s225
        %p227 = pneg %p112
        %p228 = pneg %p109
        %p229 = pneg %p140
        %p230 = pneg %p137
        %s231 = smul.u32 2, %s23
        %p232 = scmp.lt.s32.totalorder %s21, 0
        %s233 = scalar_select %p232, %s21, 0
        %p234 = scmp.lt.s32.totalorder %s231, 17
        %s235 = scalar_select %p234, %s231, 17
        %s236 = smul.addr %s233, 18
        %s237 = sadd.s32 %s235, %s236
        %s238 = scalar_lea.vmem %s1, %s237
        %s239 = smul.u32 2, %s23
        %s240 = smul.u32 32, %s23
        %s241 = smul.u32 4, %s22
        %p242 = scmp.lt.s32.totalorder %s240, 287
        %s243 = scalar_select %p242, %s240, 287
        %p244 = scmp.lt.s32.totalorder %s241, 3
        %s245 = scalar_select %p244, %s241, 3
        %s246 = smul.addr %s243, 4
        %s247 = sadd.s32 %s245, %s246
        %s248 = smul.addr %s247, 4
        %s249 = scalar_lea.vmem %s2, %s248
        %s250 = smul.u32 32, %s23
        %s251 = smul.u32 4, %s22
        %s252 = smul.u32 4, %s22
        %p253 = scmp.lt.s32.totalorder %s252, 3
        %s254 = scalar_select %p253, %s252, 3
        %s255 = scalar_lea.vmem %s3, %s254
        %s256 = smul.u32 4, %s22
        %s257 = smul.u32 4, %s22
        %p258 = scmp.eq.s32.totalorder %s23, 0
        // Predicated region
        $region33: #{forward.44} parent=31 // pred_check
          %p259 = pneg %p258
        $region34: #{forward.44} parent=31 // pred_check_branch
          %261 = sbr.rel (%p259) target = $region36
        $region35: #{forward.44} parent=31 // pred_region
          %262 = vst [vmem:[#allocation2] sm:$0xff] 0.0
        $region36: #{forward.44} parent=31 // pred_fallthru
          _
        %v263 = vld [vmem:[#allocation2] sm:$0xff]
        %v264 = vld [vmem:[%s238] sm:$0x3]
        %v265 = vld [vmem:[%s249] sm:$0xff]
        %v266 = vld [vmem:[%s249 + $0x8] sm:$0xff]
        %v267 = vld [vmem:[%s249 + $0x10] sm:$0xff]
        %v268 = vld [vmem:[%s249 + $0x18] sm:$0xff]
        %v269 = vld [vmem:[%s249 + $0x20] sm:$0xff]
        %v270 = vld [vmem:[%s249 + $0x28] sm:$0xff]
        %v271 = vld [vmem:[%s249 + $0x30] sm:$0xff]
        %v272 = vld [vmem:[%s249 + $0x38] sm:$0xff]
        %v273 = vld [vmem:[%s249 + $0x40] sm:$0xff]
        %v274 = vld [vmem:[%s249 + $0x48] sm:$0xff]
        %v275 = vld [vmem:[%s249 + $0x50] sm:$0xff]
        %v276 = vld [vmem:[%s249 + $0x58] sm:$0xff]
        %v277 = vld [vmem:[%s249 + $0x60] sm:$0xff]
        %v278 = vld [vmem:[%s249 + $0x68] sm:$0xff]
        %v279 = vld [vmem:[%s249 + $0x70] sm:$0xff]
        %v280 = vld [vmem:[%s249 + $0x78] sm:$0xff]
        %v281 = vld [vmem:[%s249 + $0x80] sm:$0xff]
        %v282 = vld [vmem:[%s249 + $0x88] sm:$0xff]
        %v283 = vld [vmem:[%s249 + $0x90] sm:$0xff]
        %v284 = vld [vmem:[%s249 + $0x98] sm:$0xff]
        %v285 = vld [vmem:[%s249 + $0xa0] sm:$0xff]
        %v286 = vld [vmem:[%s249 + $0xa8] sm:$0xff]
        %v287 = vld [vmem:[%s249 + $0xb0] sm:$0xff]
        %v288 = vld [vmem:[%s249 + $0xb8] sm:$0xff]
        %v289 = vld [vmem:[%s249 + $0xc0] sm:$0xff]
        %v290 = vld [vmem:[%s249 + $0xc8] sm:$0xff]
        %v291 = vld [vmem:[%s249 + $0xd0] sm:$0xff]
        %v292 = vld [vmem:[%s249 + $0xd8] sm:$0xff]
        %v293 = vld [vmem:[%s249 + $0xe0] sm:$0xff]
        %v294 = vld [vmem:[%s249 + $0xe8] sm:$0xff]
        %v295 = vld [vmem:[%s249 + $0xf0] sm:$0xff]
        %v296 = vld [vmem:[%s249 + $0xf8] sm:$0xff]
        %v297 = vld [vmem:[%s249 + $0x100] sm:$0xff]
        %v298 = vld [vmem:[%s249 + $0x108] sm:$0xff]
        %v299 = vld [vmem:[%s249 + $0x110] sm:$0xff]
        %v300 = vld [vmem:[%s249 + $0x118] sm:$0xff]
        %v301 = vld [vmem:[%s249 + $0x120] sm:$0xff]
        %v302 = vld [vmem:[%s249 + $0x128] sm:$0xff]
        %v303 = vld [vmem:[%s249 + $0x130] sm:$0xff]
        %v304 = vld [vmem:[%s249 + $0x138] sm:$0xff]
        %v305 = vld [vmem:[%s249 + $0x140] sm:$0xff]
        %v306 = vld [vmem:[%s249 + $0x148] sm:$0xff]
        %v307 = vld [vmem:[%s249 + $0x150] sm:$0xff]
        %v308 = vld [vmem:[%s249 + $0x158] sm:$0xff]
        %v309 = vld [vmem:[%s249 + $0x160] sm:$0xff]
        %v310 = vld [vmem:[%s249 + $0x168] sm:$0xff]
        %v311 = vld [vmem:[%s249 + $0x170] sm:$0xff]
        %v312 = vld [vmem:[%s249 + $0x178] sm:$0xff]
        %v313 = vld [vmem:[%s249 + $0x180] sm:$0xff]
        %v314 = vld [vmem:[%s249 + $0x188] sm:$0xff]
        %v315 = vld [vmem:[%s249 + $0x190] sm:$0xff]
        %v316 = vld [vmem:[%s249 + $0x198] sm:$0xff]
        %v317 = vld [vmem:[%s249 + $0x1a0] sm:$0xff]
        %v318 = vld [vmem:[%s249 + $0x1a8] sm:$0xff]
        %v319 = vld [vmem:[%s249 + $0x1b0] sm:$0xff]
        %v320 = vld [vmem:[%s249 + $0x1b8] sm:$0xff]
        %v321 = vld [vmem:[%s249 + $0x1c0] sm:$0xff]
        %v322 = vld [vmem:[%s249 + $0x1c8] sm:$0xff]
        %v323 = vld [vmem:[%s249 + $0x1d0] sm:$0xff]
        %v324 = vld [vmem:[%s249 + $0x1d8] sm:$0xff]
        %v325 = vld [vmem:[%s249 + $0x1e0] sm:$0xff]
        %v326 = vld [vmem:[%s249 + $0x1e8] sm:$0xff]
        %v327 = vld [vmem:[%s249 + $0x1f0] sm:$0xff]
        %v328 = vld [vmem:[%s249 + $0x1f8] sm:$0xff]
        %v331 = vunpack.c.l.s4 1966171168
        %v332 = vunpack.c.0.s8 %v331
        %v333 = vlaneseq
        %v334 = vshrl.u32 %v333, 7
        %v335 = vsub.s32 %v332, %v334
        %v336 = vrot.slane %v264, %v335
        %v337 = vcombine.high %v336, %v336
        %v339 = vunpack.c.l.s4 1966171168
        %v340 = vunpack.c.0.s8 %v339
        %v341 = vlaneseq
        %v342 = vshrl.u32 %v341, 7
        %v343 = vsub.s32 %v340, %v342
        %v344 = vrot.slane %v336, %v343
        %v346 = vunpack.c.l.s4 1966171168
        %v347 = vunpack.c.0.s8 %v346
        %v348 = vlaneseq
        %v349 = vshrl.u32 %v348, 7
        %v350 = vsub.s32 %v347, %v349
        %v351 = vrot.slane %v337, %v350
        %v418 = vunpack.c.l.b16 %v265
        %v419 = vunpack.c.h.b16 %v265
        %v420 = vunpack.c.l.b16 %v266
        %v421 = vunpack.c.h.b16 %v266
        %v422 = vunpack.c.l.b16 %v267
        %v423 = vunpack.c.h.b16 %v267
        %v424 = vunpack.c.l.b16 %v268
        %v425 = vunpack.c.h.b16 %v268
        %v426 = vunpack.c.l.b16 %v269
        %v427 = vunpack.c.h.b16 %v269
        %v428 = vunpack.c.l.b16 %v270
        %v429 = vunpack.c.h.b16 %v270
        %v430 = vunpack.c.l.b16 %v271
        %v431 = vunpack.c.h.b16 %v271
        %v432 = vunpack.c.l.b16 %v272
        %v433 = vunpack.c.h.b16 %v272
        %v434 = vunpack.c.l.b16 %v273
        %v435 = vunpack.c.h.b16 %v273
        %v436 = vunpack.c.l.b16 %v274
        %v437 = vunpack.c.h.b16 %v274
        %v438 = vunpack.c.l.b16 %v275
        %v439 = vunpack.c.h.b16 %v275
        %v440 = vunpack.c.l.b16 %v276
        %v441 = vunpack.c.h.b16 %v276
        %v442 = vunpack.c.l.b16 %v277
        %v443 = vunpack.c.h.b16 %v277
        %v444 = vunpack.c.l.b16 %v278
        %v445 = vunpack.c.h.b16 %v278
        %v446 = vunpack.c.l.b16 %v279
        %v447 = vunpack.c.h.b16 %v279
        %v448 = vunpack.c.l.b16 %v280
        %v449 = vunpack.c.h.b16 %v280
        %v450 = vunpack.c.l.b16 %v281
        %v451 = vunpack.c.h.b16 %v281
        %v452 = vunpack.c.l.b16 %v282
        %v453 = vunpack.c.h.b16 %v282
        %v454 = vunpack.c.l.b16 %v283
        %v455 = vunpack.c.h.b16 %v283
        %v456 = vunpack.c.l.b16 %v284
        %v457 = vunpack.c.h.b16 %v284
        %v458 = vunpack.c.l.b16 %v285
        %v459 = vunpack.c.h.b16 %v285
        %v460 = vunpack.c.l.b16 %v286
        %v461 = vunpack.c.h.b16 %v286
        %v462 = vunpack.c.l.b16 %v287
        %v463 = vunpack.c.h.b16 %v287
        %v464 = vunpack.c.l.b16 %v288
        %v465 = vunpack.c.h.b16 %v288
        %v466 = vunpack.c.l.b16 %v289
        %v467 = vunpack.c.h.b16 %v289
        %v468 = vunpack.c.l.b16 %v290
        %v469 = vunpack.c.h.b16 %v290
        %v470 = vunpack.c.l.b16 %v291
        %v471 = vunpack.c.h.b16 %v291
        %v472 = vunpack.c.l.b16 %v292
        %v473 = vunpack.c.h.b16 %v292
        %v474 = vunpack.c.l.b16 %v293
        %v475 = vunpack.c.h.b16 %v293
        %v476 = vunpack.c.l.b16 %v294
        %v477 = vunpack.c.h.b16 %v294
        %v478 = vunpack.c.l.b16 %v295
        %v479 = vunpack.c.h.b16 %v295
        %v480 = vunpack.c.l.b16 %v296
        %v481 = vunpack.c.h.b16 %v296
        %v482 = vunpack.c.l.b16 %v297
        %v483 = vunpack.c.h.b16 %v297
        %v484 = vunpack.c.l.b16 %v298
        %v485 = vunpack.c.h.b16 %v298
        %v486 = vunpack.c.l.b16 %v299
        %v487 = vunpack.c.h.b16 %v299
        %v488 = vunpack.c.l.b16 %v300
        %v489 = vunpack.c.h.b16 %v300
        %v490 = vunpack.c.l.b16 %v301
        %v491 = vunpack.c.h.b16 %v301
        %v492 = vunpack.c.l.b16 %v302
        %v493 = vunpack.c.h.b16 %v302
        %v494 = vunpack.c.l.b16 %v303
        %v495 = vunpack.c.h.b16 %v303
        %v496 = vunpack.c.l.b16 %v304
        %v497 = vunpack.c.h.b16 %v304
        %v498 = vunpack.c.l.b16 %v305
        %v499 = vunpack.c.h.b16 %v305
        %v500 = vunpack.c.l.b16 %v306
        %v501 = vunpack.c.h.b16 %v306
        %v502 = vunpack.c.l.b16 %v307
        %v503 = vunpack.c.h.b16 %v307
        %v504 = vunpack.c.l.b16 %v308
        %v505 = vunpack.c.h.b16 %v308
        %v506 = vunpack.c.l.b16 %v309
        %v507 = vunpack.c.h.b16 %v309
        %v508 = vunpack.c.l.b16 %v310
        %v509 = vunpack.c.h.b16 %v310
        %v510 = vunpack.c.l.b16 %v311
        %v511 = vunpack.c.h.b16 %v311
        %v512 = vunpack.c.l.b16 %v312
        %v513 = vunpack.c.h.b16 %v312
        %v514 = vunpack.c.l.b16 %v313
        %v515 = vunpack.c.h.b16 %v313
        %v516 = vunpack.c.l.b16 %v314
        %v517 = vunpack.c.h.b16 %v314
        %v518 = vunpack.c.l.b16 %v315
        %v519 = vunpack.c.h.b16 %v315
        %v520 = vunpack.c.l.b16 %v316
        %v521 = vunpack.c.h.b16 %v316
        %v522 = vunpack.c.l.b16 %v317
        %v523 = vunpack.c.h.b16 %v317
        %v524 = vunpack.c.l.b16 %v318
        %v525 = vunpack.c.h.b16 %v318
        %v526 = vunpack.c.l.b16 %v319
        %v527 = vunpack.c.h.b16 %v319
        %v528 = vunpack.c.l.b16 %v320
        %v529 = vunpack.c.h.b16 %v320
        %v530 = vunpack.c.l.b16 %v321
        %v531 = vunpack.c.h.b16 %v321
        %v532 = vunpack.c.l.b16 %v322
        %v533 = vunpack.c.h.b16 %v322
        %v534 = vunpack.c.l.b16 %v323
        %v535 = vunpack.c.h.b16 %v323
        %v536 = vunpack.c.l.b16 %v324
        %v537 = vunpack.c.h.b16 %v324
        %v538 = vunpack.c.l.b16 %v325
        %v539 = vunpack.c.h.b16 %v325
        %v540 = vunpack.c.l.b16 %v326
        %v541 = vunpack.c.h.b16 %v326
        %v542 = vunpack.c.l.b16 %v327
        %v543 = vunpack.c.h.b16 %v327
        %v544 = vunpack.c.l.b16 %v328
        %v545 = vunpack.c.h.b16 %v328
        %v546 = vpack.c.b16 %v422, %v418
        %v547 = vpack.c.b16 %v423, %v419
        %v548 = vpack.c.b16 %v424, %v420
        %v549 = vpack.c.b16 %v425, %v421
        %v550 = vpack.c.b16 %v430, %v426
        %v551 = vpack.c.b16 %v431, %v427
        %v552 = vpack.c.b16 %v432, %v428
        %v553 = vpack.c.b16 %v433, %v429
        %v554 = vpack.c.b16 %v438, %v434
        %v555 = vpack.c.b16 %v439, %v435
        %v556 = vpack.c.b16 %v440, %v436
        %v557 = vpack.c.b16 %v441, %v437
        %v558 = vpack.c.b16 %v446, %v442
        %v559 = vpack.c.b16 %v447, %v443
        %v560 = vpack.c.b16 %v448, %v444
        %v561 = vpack.c.b16 %v449, %v445
        %v562 = vpack.c.b16 %v454, %v450
        %v563 = vpack.c.b16 %v455, %v451
        %v564 = vpack.c.b16 %v456, %v452
        %v565 = vpack.c.b16 %v457, %v453
        %v566 = vpack.c.b16 %v462, %v458
        %v567 = vpack.c.b16 %v463, %v459
        %v568 = vpack.c.b16 %v464, %v460
        %v569 = vpack.c.b16 %v465, %v461
        %v570 = vpack.c.b16 %v470, %v466
        %v571 = vpack.c.b16 %v471, %v467
        %v572 = vpack.c.b16 %v472, %v468
        %v573 = vpack.c.b16 %v473, %v469
        %v574 = vpack.c.b16 %v478, %v474
        %v575 = vpack.c.b16 %v479, %v475
        %v576 = vpack.c.b16 %v480, %v476
        %v577 = vpack.c.b16 %v481, %v477
        %v578 = vpack.c.b16 %v486, %v482
        %v579 = vpack.c.b16 %v487, %v483
        %v580 = vpack.c.b16 %v488, %v484
        %v581 = vpack.c.b16 %v489, %v485
        %v582 = vpack.c.b16 %v494, %v490
        %v583 = vpack.c.b16 %v495, %v491
        %v584 = vpack.c.b16 %v496, %v492
        %v585 = vpack.c.b16 %v497, %v493
        %v586 = vpack.c.b16 %v502, %v498
        %v587 = vpack.c.b16 %v503, %v499
        %v588 = vpack.c.b16 %v504, %v500
        %v589 = vpack.c.b16 %v505, %v501
        %v590 = vpack.c.b16 %v510, %v506
        %v591 = vpack.c.b16 %v511, %v507
        %v592 = vpack.c.b16 %v512, %v508
        %v593 = vpack.c.b16 %v513, %v509
        %v594 = vpack.c.b16 %v518, %v514
        %v595 = vpack.c.b16 %v519, %v515
        %v596 = vpack.c.b16 %v520, %v516
        %v597 = vpack.c.b16 %v521, %v517
        %v598 = vpack.c.b16 %v526, %v522
        %v599 = vpack.c.b16 %v527, %v523
        %v600 = vpack.c.b16 %v528, %v524
        %v601 = vpack.c.b16 %v529, %v525
        %v602 = vpack.c.b16 %v534, %v530
        %v603 = vpack.c.b16 %v535, %v531
        %v604 = vpack.c.b16 %v536, %v532
        %v605 = vpack.c.b16 %v537, %v533
        %v606 = vpack.c.b16 %v542, %v538
        %v607 = vpack.c.b16 %v543, %v539
        %v608 = vpack.c.b16 %v544, %v540
        %v609 = vpack.c.b16 %v545, %v541
        %674 = vmatprep.subr.bf16.mxu0 %v547
        %675 = vmatpush1.bf16.msra.mxu0 %v546
        %676 = vmatprep.subr.bf16.mxu0 %v551
        %677 = vmatpush1.bf16.msra.mxu0 %v550
        %678 = vmatprep.subr.bf16.mxu0 %v555
        %679 = vmatpush1.bf16.msra.mxu0 %v554
        %680 = vmatprep.subr.bf16.mxu0 %v559
        %681 = vmatpush1.bf16.msra.mxu0 %v558
        %682 = vmatprep.subr.bf16.mxu0 %v563
        %683 = vmatpush1.bf16.msra.mxu0 %v562
        %684 = vmatprep.subr.bf16.mxu0 %v567
        %685 = vmatpush1.bf16.msra.mxu0 %v566
        %686 = vmatprep.subr.bf16.mxu0 %v571
        %687 = vmatpush1.bf16.msra.mxu0 %v570
        %688 = vmatprep.subr.bf16.mxu0 %v575
        %689 = vmatpush1.bf16.msra.mxu0 %v574
        %690 = vmatprep.subr.bf16.mxu0 %v579
        %691 = vmatpush1.bf16.msra.mxu0 %v578
        %692 = vmatprep.subr.bf16.mxu0 %v583
        %693 = vmatpush1.bf16.msra.mxu0 %v582
        %694 = vmatprep.subr.bf16.mxu0 %v587
        %695 = vmatpush1.bf16.msra.mxu0 %v586
        %696 = vmatprep.subr.bf16.mxu0 %v591
        %697 = vmatpush1.bf16.msra.mxu0 %v590
        %698 = vmatprep.subr.bf16.mxu0 %v595
        %699 = vmatpush1.bf16.msra.mxu0 %v594
        %700 = vmatprep.subr.bf16.mxu0 %v599
        %701 = vmatpush1.bf16.msra.mxu0 %v598
        %702 = vmatprep.subr.bf16.mxu0 %v603
        %703 = vmatpush1.bf16.msra.mxu0 %v602
        %704 = vmatprep.subr.bf16.mxu0 %v607
        %705 = vmatpush1.bf16.msra.mxu0 %v606
        %706 = vmatprep.mubr.bf16.mxu0 %v351
        %707 = vmatmul.mubr.bf16.gmra.mrb[0].mxu0 %v344
        %v708 = vpop.f32.mrb[0].mxu0
        %v709 = vadd.f32 0.0, %v708
        %v710 = vpop.f32.mrb[0].mxu0
        %v711 = vadd.f32 0.0, %v710
        %v712 = vpop.f32.mrb[0].mxu0
        %v713 = vpop.f32.mrb[0].mxu0
        %714 = vdwg.mxu0
        %715 = vmatprep.subr.bf16.mxu0 %v549
        %716 = vmatpush1.bf16.msra.mxu0 %v548
        %717 = vmatprep.subr.bf16.mxu0 %v553
        %718 = vmatpush1.bf16.msra.mxu0 %v552
        %719 = vmatprep.subr.bf16.mxu0 %v557
        %720 = vmatpush1.bf16.msra.mxu0 %v556
        %721 = vmatprep.subr.bf16.mxu0 %v561
        %722 = vmatpush1.bf16.msra.mxu0 %v560
        %723 = vmatprep.subr.bf16.mxu0 %v565
        %724 = vmatpush1.bf16.msra.mxu0 %v564
        %725 = vmatprep.subr.bf16.mxu0 %v569
        %726 = vmatpush1.bf16.msra.mxu0 %v568
        %727 = vmatprep.subr.bf16.mxu0 %v573
        %728 = vmatpush1.bf16.msra.mxu0 %v572
        %729 = vmatprep.subr.bf16.mxu0 %v577
        %730 = vmatpush1.bf16.msra.mxu0 %v576
        %731 = vmatprep.subr.bf16.mxu0 %v581
        %732 = vmatpush1.bf16.msra.mxu0 %v580
        %733 = vmatprep.subr.bf16.mxu0 %v585
        %734 = vmatpush1.bf16.msra.mxu0 %v584
        %735 = vmatprep.subr.bf16.mxu0 %v589
        %736 = vmatpush1.bf16.msra.mxu0 %v588
        %737 = vmatprep.subr.bf16.mxu0 %v593
        %738 = vmatpush1.bf16.msra.mxu0 %v592
        %739 = vmatprep.subr.bf16.mxu0 %v597
        %740 = vmatpush1.bf16.msra.mxu0 %v596
        %741 = vmatprep.subr.bf16.mxu0 %v601
        %742 = vmatpush1.bf16.msra.mxu0 %v600
        %743 = vmatprep.subr.bf16.mxu0 %v605
        %744 = vmatpush1.bf16.msra.mxu0 %v604
        %745 = vmatprep.subr.bf16.mxu0 %v609
        %746 = vmatpush1.bf16.msra.mxu0 %v608
        %747 = vmatprep.mubr.bf16.mxu0 %v351
        %748 = vmatmul.mubr.bf16.gmra.mrb[0].mxu0 %v344
        %v749 = vpop.f32.mrb[0].mxu0
        %v750 = vadd.f32 0.0, %v749
        %v751 = vpop.f32.mrb[0].mxu0
        %v752 = vadd.f32 0.0, %v751
        %v753 = vpop.f32.mrb[0].mxu0
        %v754 = vpop.f32.mrb[0].mxu0
        %755 = vdwg.mxu0
        %v760 = vcombine.low %v709, %v711
        %v761 = vcombine.low %v750, %v752
        %v763 = vunpack.c.l.s4 1983009808
        %v764 = vunpack.c.0.s8 %v763
        %v765 = vlaneseq
        %v766 = vshrl.u32 %v765, 7
        %v767 = vsub.s32 %v764, %v766
        %v768 = vrot.slane %v760, %v767
        %v770 = vunpack.c.l.s4 1983009808
        %v771 = vunpack.c.0.s8 %v770
        %v772 = vlaneseq
        %v773 = vshrl.u32 %v772, 7
        %v774 = vsub.s32 %v771, %v773
        %v775 = vrot.slane %v761, %v774
        %v776 = vcombine.low %v768, %v775
        %v778 = vadd.f32 %v263, %v776
        %779 = vst [vmem:[#allocation2] sm:$0xff] %v778
        %p780 = scmp.eq.s32.totalorder %s23, 8
        // Predicated region
        $region37: #{forward.44} parent=31 // pred_check
          %p781 = pneg %p780
        $region38: #{forward.44} parent=31 // pred_check_branch
          %783 = sbr.rel (%p781) target = $region40
        $region39: #{forward.44} parent=31 // pred_region
          %v784 = vld [vmem:[#allocation2] sm:$0xff]
          %v785 = vld [vmem:[%s255] sm:$0xf]
          %v787 = vlaneseq
          %v788 = vshrl.u32 %v787, 7
          %v789 = vsub.s32 0, %v788
          %v790 = vrot.slane %v785, %v789
          %v791 = vlaneseq
          %v792 = vshrl.u32 %v791, 7
          %v793 = vsub.s32 1, %v792
          %v794 = vrot.slane %v785, %v793
          %v795 = vlaneseq
          %v796 = vshrl.u32 %v795, 7
          %v797 = vsub.s32 2, %v796
          %v798 = vrot.slane %v785, %v797
          %v799 = vlaneseq
          %v800 = vshrl.u32 %v799, 7
          %v801 = vsub.s32 3, %v800
          %v802 = vrot.slane %v785, %v801
          %v803 = vcombine.low %v790, %v794
          %v804 = vcombine.low %v798, %v802
          %v806 = vunpack.c.l.s4 1983009808
          %v807 = vunpack.c.0.s8 %v806
          %v808 = vlaneseq
          %v809 = vshrl.u32 %v808, 7
          %v810 = vsub.s32 %v807, %v809
          %v811 = vrot.slane %v803, %v810
          %v813 = vunpack.c.l.s4 1983009808
          %v814 = vunpack.c.0.s8 %v813
          %v815 = vlaneseq
          %v816 = vshrl.u32 %v815, 7
          %v817 = vsub.s32 %v814, %v816
          %v818 = vrot.slane %v804, %v817
          %v819 = vcombine.low %v811, %v818
          %v821 = vadd.f32 %v784, %v819
          %v822 = vmax.f32 %v821, 0.0
          %v824 = vcombine.high %v822, %v822
          %v826 = vunpack.c.l.s4 1983009808
          %v827 = vunpack.c.0.s8 %v826
          %v828 = vlaneseq
          %v829 = vshrl.u32 %v828, 7
          %v830 = vsub.s32 %v827, %v829
          %v831 = vrot.slane %v822, %v830
          %v833 = vunpack.c.l.s4 1983009808
          %v834 = vunpack.c.0.s8 %v833
          %v835 = vlaneseq
          %v836 = vshrl.u32 %v835, 7
          %v837 = vsub.s32 %v834, %v836
          %v838 = vrot.slane %v824, %v837
          %v839 = vcombine.high %v831, %v831
          %v840 = vcombine.high %v838, %v838
          %v845 = vpack.c.bf16 %v831, %v831
          %v846 = vpack.c.bf16 %v839, %v839
          %v847 = vpack.c.bf16 %v838, %v838
          %v848 = vpack.c.bf16 %v840, %v840
          %v853 = vcombine.low %v845, %v846
          %v854 = vcombine.low %v847, %v848
          %v856 = vunpack.c.l.s4 1966171168
          %v857 = vunpack.c.0.s8 %v856
          %v858 = vlaneseq
          %v859 = vshrl.u32 %v858, 7
          %v860 = vsub.s32 %v857, %v859
          %v861 = vrot.slane %v853, %v860
          %v863 = vunpack.c.l.s4 1966171168
          %v864 = vunpack.c.0.s8 %v863
          %v865 = vlaneseq
          %v866 = vshrl.u32 %v865, 7
          %v867 = vsub.s32 %v864, %v866
          %v868 = vrot.slane %v854, %v867
          %v869 = vcombine.low %v861, %v868
          %v871 = vunpack.c.l.s4 1966171168
          %v872 = vunpack.c.0.s8 %v871
          %v873 = vlaneseq
          %v874 = vshrl.u32 %v873, 7
          %v875 = vsub.s32 %v872, %v874
          %v876 = vrot.slane %v869, %v875
          %878 = vst [vmem:[#allocation3] sm:$0xf] %v876
        $region40: #{forward.44} parent=31 // pred_fallthru
          _
        // Predicated region
        $region41: #{forward.44} parent=31 // pred_check
          %p879 = pneg %p137
        $region42: #{forward.44} parent=31 // pred_check_branch
          %881 = sbr.rel (%p879) target = $region44
        $region43: #{forward.44} parent=31 // pred_region
          %s882 = smul.u32 4, %s22
          %s883 = smul.addr %s21, 4
          %s884 = sadd.s32 %s882, %s883
          %s885 = scalar_lea.vmem %s5, %s884
          // Predicated region
          $region45: #{forward.44} parent=43 // pred_check
            _
          $region46: #{forward.44} parent=43 // pred_check_branch
            %887 = sbr.rel (0) target = $region48
          $region47: #{forward.44} parent=43 // pred_region
            // Predicated region
            $region49: #{forward.44} parent=47 // pred_check
              _
            $region50: #{forward.44} parent=47 // pred_check_branch
              %889 = sbr.rel target = $region52
            $region51: #{forward.44} parent=47 // pred_region
              // Predicated region
              $region64: #{forward.44} parent=51 // pred_check
                _
              $region65: #{forward.44} parent=51 // pred_check_branch
                %904 = sbr.rel (0) target = $region67
              $region66: #{forward.44} parent=51 // pred_region
                loop: start=0, step=1, limit=1
                $region68: #{forward.44} parent=66 // loop_pre_header
                  _
                $region69: #{forward.44} parent=66 // loop_header
                  %s907 = sphi 0, %s911
                  %p908 = scmp.ge.s32.totalorder %s907, 1
                  %s912 = sphi [#allocation3], [#allocation3]
                  %s913 = sphi %s885, %s885
                $region70: #{forward.44} parent=66 // loop_header_branch
                  %910 = sbr.rel (%p908) target = $region74
                $region71: #{forward.44} parent=66 // loop_body
                  %v914 = vld [vmem:[%s912] sm:$0xf]
                  %915 = vst [vmem:[%s913] sm:$0xf] %v914
                $region72: #{forward.44} parent=66 // loop_footer
                  %s911 = sadd.s32 1, %s907
                $region73: #{forward.44} parent=66 // loop_footer_branch
                  %906 = sbr.rel target = $region69
                $region74: #{forward.44} parent=66 // loop_exit
                  _
              $region67: #{forward.44} parent=51 // pred_fallthru
                _
            $region52: #{forward.44} parent=47 // pred_fallthru
              _
            // Predicated region
            $region53: #{forward.44} parent=47 // pred_check
              _
            $region54: #{forward.44} parent=47 // pred_check_branch
              %891 = sbr.rel (0) target = $region56
            $region55: #{forward.44} parent=47 // pred_region
              loop: start=0, step=1, limit=1
              $region57: #{forward.44} parent=55 // loop_pre_header
                _
              $region58: #{forward.44} parent=55 // loop_header
                %s894 = sphi 0, %s898
                %p895 = scmp.ge.s32.totalorder %s894, 1
                %s899 = sphi [#allocation3], [#allocation3]
                %s900 = sphi %s885, %s885
              $region59: #{forward.44} parent=55 // loop_header_branch
                %897 = sbr.rel (%p895) target = $region63
              $region60: #{forward.44} parent=55 // loop_body
                %v901 = vld [vmem:[%s899] sm:$0xf]
                %902 = vst [vmem:[%s900] sm:$0xf] %v901
              $region61: #{forward.44} parent=55 // loop_footer
                %s898 = sadd.s32 1, %s894
              $region62: #{forward.44} parent=55 // loop_footer_branch
                %893 = sbr.rel target = $region58
              $region63: #{forward.44} parent=55 // loop_exit
                _
            $region56: #{forward.44} parent=47 // pred_fallthru
              _
          $region48: #{forward.44} parent=43 // pred_fallthru
            _
          %916 = vnop
        $region44: #{forward.44} parent=31 // pred_fallthru
          _
        // Predicated region
        $region75: #{forward.44} parent=31 // pred_check
          %p917 = pneg %p137
        $region76: #{forward.44} parent=31 // pred_check_branch
          %919 = sbr.rel (%p917) target = $region78
        $region77: #{forward.44} parent=31 // pred_region
          _
        $region78: #{forward.44} parent=31 // pred_fallthru
          _
      $region32: #{forward.44} parent=5 // pred_fallthru
        _
      %p920 = scmp.le.s32.totalorder 2, %s11
      // Predicated region
      $region79: #{forward.44} parent=5 // pred_check
        %p921 = pneg %p920
      $region80: #{forward.44} parent=5 // pred_check_branch
        %923 = sbr.rel (%p921) target = $region82
      $region81: #{forward.44} parent=5 // pred_region
        %s924 = ssub.s32 %s11, 2
      $region82: #{forward.44} parent=5 // pred_fallthru
        _
    $region6: #{forward.44} parent=1 // loop_footer
      %s15 = sadd.s32 1, %s11
    $region7: #{forward.44} parent=1 // loop_footer_branch
      %10 = sbr.rel target = $region3
    $region8: #{forward.44} parent=1 // loop_exit
      _

// kernel: forward.38
$region0: #{forward.38}
  #allocation0 [shape = 'u32[]', space=smem, size = 0x4, offset = 0x4, fixed_abs, tag = 'smem constant byte address 0x4 - core index']
  #allocation1 [shape = 'u32[144,128]{1,0:T(1,128)}', space=vmem, size = 0x12000, scoped, tag = 'internal scratch']
  #allocation2 [shape = 'f32[2,512]{1,0:T(2,128)}', space=vmem, size = 0x1000, scoped, tag = 'scratch operand']
  %s0 = inlined_call_operand.vmem [shape: bf16[2,256], index: 0, kind: input, shape index: {}]
  %s1 = inlined_call_operand.vmem [shape: bf16[256,512], index: 1, kind: input, shape index: {}]
  %s2 = inlined_call_operand.vmem [shape: f32[1,512], index: 2, kind: input, shape index: {}]
  %s3 = inlined_call_operand.vmem [shape: bf16[2,512], index: 3, kind: output, shape index: {}]
  %s4 = sld [smem:[#allocation0]]
  $region30: #{forward.38} parent=0
    _
  %s6 = ssub.s32 1, %s4
  %s7 = scalar_select 0, %s6, %s4
  // Predicated region
  $region2: #{forward.38} parent=0 // pred_check
    _
  $region3: #{forward.38} parent=0 // pred_check_branch
    %9 = sbr.rel (0) target = $region5
  $region4: #{forward.38} parent=0 // pred_region
    _
  $region5: #{forward.38} parent=0 // pred_fallthru
    _
  // Predicated region
  $region6: #{forward.38} parent=0 // pred_check
    _
  $region7: #{forward.38} parent=0 // pred_check_branch
    %11 = sbr.rel (0) target = $region9
  $region8: #{forward.38} parent=0 // pred_region
    _
  $region9: #{forward.38} parent=0 // pred_fallthru
    _
  // Predicated region
  $region10: #{forward.38} parent=0 // pred_check
    _
  $region11: #{forward.38} parent=0 // pred_check_branch
    %13 = sbr.rel (0) target = $region13
  $region12: #{forward.38} parent=0 // pred_region
    _
  $region13: #{forward.38} parent=0 // pred_fallthru
    _
  %p14 = scmp.eq.s32.totalorder 0, 0
  // Predicated region
  $region14: #{forward.38} parent=0 // pred_check
    %p15 = pneg %p14
  $region15: #{forward.38} parent=0 // pred_check_branch
    %17 = sbr.rel (%p15) target = $region17
  $region16: #{forward.38} parent=0 // pred_region
    %18 = vst [vmem:[#allocation2] sm:$0xff] 0.0
  $region17: #{forward.38} parent=0 // pred_fallthru
    _
  %v19 = vld [vmem:[#allocation2] sm:$0xff]
  %v20 = vld [vmem:[%s0] sm:$0x3]
  %v21 = vld [vmem:[%s1] sm:$0xff]
  %v22 = vld [vmem:[%s1 + $0x8] sm:$0xff]
  %v23 = vld [vmem:[%s1 + $0x10] sm:$0xff]
  %v24 = vld [vmem:[%s1 + $0x18] sm:$0xff]
  %v25 = vld [vmem:[%s1 + $0x20] sm:$0xff]
  %v26 = vld [vmem:[%s1 + $0x28] sm:$0xff]
  %v27 = vld [vmem:[%s1 + $0x30] sm:$0xff]
  %v28 = vld [vmem:[%s1 + $0x38] sm:$0xff]
  %v29 = vld [vmem:[%s1 + $0x40] sm:$0xff]
  %v30 = vld [vmem:[%s1 + $0x48] sm:$0xff]
  %v31 = vld [vmem:[%s1 + $0x50] sm:$0xff]
  %v32 = vld [vmem:[%s1 + $0x58] sm:$0xff]
  %v33 = vld [vmem:[%s1 + $0x60] sm:$0xff]
  %v34 = vld [vmem:[%s1 + $0x68] sm:$0xff]
  %v35 = vld [vmem:[%s1 + $0x70] sm:$0xff]
  %v36 = vld [vmem:[%s1 + $0x78] sm:$0xff]
  %v37 = vld [vmem:[%s1 + $0x80] sm:$0xff]
  %v38 = vld [vmem:[%s1 + $0x88] sm:$0xff]
  %v39 = vld [vmem:[%s1 + $0x90] sm:$0xff]
  %v40 = vld [vmem:[%s1 + $0x98] sm:$0xff]
  %v41 = vld [vmem:[%s1 + $0xa0] sm:$0xff]
  %v42 = vld [vmem:[%s1 + $0xa8] sm:$0xff]
  %v43 = vld [vmem:[%s1 + $0xb0] sm:$0xff]
  %v44 = vld [vmem:[%s1 + $0xb8] sm:$0xff]
  %v45 = vld [vmem:[%s1 + $0xc0] sm:$0xff]
  %v46 = vld [vmem:[%s1 + $0xc8] sm:$0xff]
  %v47 = vld [vmem:[%s1 + $0xd0] sm:$0xff]
  %v48 = vld [vmem:[%s1 + $0xd8] sm:$0xff]
  %v49 = vld [vmem:[%s1 + $0xe0] sm:$0xff]
  %v50 = vld [vmem:[%s1 + $0xe8] sm:$0xff]
  %v51 = vld [vmem:[%s1 + $0xf0] sm:$0xff]
  %v52 = vld [vmem:[%s1 + $0xf8] sm:$0xff]
  %v53 = vld [vmem:[%s1 + $0x100] sm:$0xff]
  %v54 = vld [vmem:[%s1 + $0x108] sm:$0xff]
  %v55 = vld [vmem:[%s1 + $0x110] sm:$0xff]
  %v56 = vld [vmem:[%s1 + $0x118] sm:$0xff]
  %v57 = vld [vmem:[%s1 + $0x120] sm:$0xff]
  %v58 = vld [vmem:[%s1 + $0x128] sm:$0xff]
  %v59 = vld [vmem:[%s1 + $0x130] sm:$0xff]
  %v60 = vld [vmem:[%s1 + $0x138] sm:$0xff]
  %v61 = vld [vmem:[%s1 + $0x140] sm:$0xff]
  %v62 = vld [vmem:[%s1 + $0x148] sm:$0xff]
  %v63 = vld [vmem:[%s1 + $0x150] sm:$0xff]
  %v64 = vld [vmem:[%s1 + $0x158] sm:$0xff]
  %v65 = vld [vmem:[%s1 + $0x160] sm:$0xff]
  %v66 = vld [vmem:[%s1 + $0x168] sm:$0xff]
  %v67 = vld [vmem:[%s1 + $0x170] sm:$0xff]
  %v68 = vld [vmem:[%s1 + $0x178] sm:$0xff]
  %v69 = vld [vmem:[%s1 + $0x180] sm:$0xff]
  %v70 = vld [vmem:[%s1 + $0x188] sm:$0xff]
  %v71 = vld [vmem:[%s1 + $0x190] sm:$0xff]
  %v72 = vld [vmem:[%s1 + $0x198] sm:$0xff]
  %v73 = vld [vmem:[%s1 + $0x1a0] sm:$0xff]
  %v74 = vld [vmem:[%s1 + $0x1a8] sm:$0xff]
  %v75 = vld [vmem:[%s1 + $0x1b0] sm:$0xff]
  %v76 = vld [vmem:[%s1 + $0x1b8] sm:$0xff]
  %v77 = vld [vmem:[%s1 + $0x1c0] sm:$0xff]
  %v78 = vld [vmem:[%s1 + $0x1c8] sm:$0xff]
  %v79 = vld [vmem:[%s1 + $0x1d0] sm:$0xff]
  %v80 = vld [vmem:[%s1 + $0x1d8] sm:$0xff]
  %v81 = vld [vmem:[%s1 + $0x1e0] sm:$0xff]
  %v82 = vld [vmem:[%s1 + $0x1e8] sm:$0xff]
  %v83 = vld [vmem:[%s1 + $0x1f0] sm:$0xff]
  %v84 = vld [vmem:[%s1 + $0x1f8] sm:$0xff]
  %v87 = vunpack.c.l.s4 1966171168
  %v88 = vunpack.c.0.s8 %v87
  %v89 = vlaneseq
  %v90 = vshrl.u32 %v89, 7
  %v91 = vsub.s32 %v88, %v90
  %v92 = vrot.slane %v20, %v91
  %v93 = vcombine.high %v92, %v92
  %v95 = vunpack.c.l.s4 1966171168
  %v96 = vunpack.c.0.s8 %v95
  %v97 = vlaneseq
  %v98 = vshrl.u32 %v97, 7
  %v99 = vsub.s32 %v96, %v98
  %v100 = vrot.slane %v92, %v99
  %v102 = vunpack.c.l.s4 1966171168
  %v103 = vunpack.c.0.s8 %v102
  %v104 = vlaneseq
  %v105 = vshrl.u32 %v104, 7
  %v106 = vsub.s32 %v103, %v105
  %v107 = vrot.slane %v93, %v106
  %v174 = vunpack.c.l.b16 %v21
  %v175 = vunpack.c.h.b16 %v21
  %v176 = vunpack.c.l.b16 %v22
  %v177 = vunpack.c.h.b16 %v22
  %v178 = vunpack.c.l.b16 %v23
  %v179 = vunpack.c.h.b16 %v23
  %v180 = vunpack.c.l.b16 %v24
  %v181 = vunpack.c.h.b16 %v24
  %v182 = vunpack.c.l.b16 %v25
  %v183 = vunpack.c.h.b16 %v25
  %v184 = vunpack.c.l.b16 %v26
  %v185 = vunpack.c.h.b16 %v26
  %v186 = vunpack.c.l.b16 %v27
  %v187 = vunpack.c.h.b16 %v27
  %v188 = vunpack.c.l.b16 %v28
  %v189 = vunpack.c.h.b16 %v28
  %v190 = vunpack.c.l.b16 %v29
  %v191 = vunpack.c.h.b16 %v29
  %v192 = vunpack.c.l.b16 %v30
  %v193 = vunpack.c.h.b16 %v30
  %v194 = vunpack.c.l.b16 %v31
  %v195 = vunpack.c.h.b16 %v31
  %v196 = vunpack.c.l.b16 %v32
  %v197 = vunpack.c.h.b16 %v32
  %v198 = vunpack.c.l.b16 %v33
  %v199 = vunpack.c.h.b16 %v33
  %v200 = vunpack.c.l.b16 %v34
  %v201 = vunpack.c.h.b16 %v34
  %v202 = vunpack.c.l.b16 %v35
  %v203 = vunpack.c.h.b16 %v35
  %v204 = vunpack.c.l.b16 %v36
  %v205 = vunpack.c.h.b16 %v36
  %v206 = vunpack.c.l.b16 %v37
  %v207 = vunpack.c.h.b16 %v37
  %v208 = vunpack.c.l.b16 %v38
  %v209 = vunpack.c.h.b16 %v38
  %v210 = vunpack.c.l.b16 %v39
  %v211 = vunpack.c.h.b16 %v39
  %v212 = vunpack.c.l.b16 %v40
  %v213 = vunpack.c.h.b16 %v40
  %v214 = vunpack.c.l.b16 %v41
  %v215 = vunpack.c.h.b16 %v41
  %v216 = vunpack.c.l.b16 %v42
  %v217 = vunpack.c.h.b16 %v42
  %v218 = vunpack.c.l.b16 %v43
  %v219 = vunpack.c.h.b16 %v43
  %v220 = vunpack.c.l.b16 %v44
  %v221 = vunpack.c.h.b16 %v44
  %v222 = vunpack.c.l.b16 %v45
  %v223 = vunpack.c.h.b16 %v45
  %v224 = vunpack.c.l.b16 %v46
  %v225 = vunpack.c.h.b16 %v46
  %v226 = vunpack.c.l.b16 %v47
  %v227 = vunpack.c.h.b16 %v47
  %v228 = vunpack.c.l.b16 %v48
  %v229 = vunpack.c.h.b16 %v48
  %v230 = vunpack.c.l.b16 %v49
  %v231 = vunpack.c.h.b16 %v49
  %v232 = vunpack.c.l.b16 %v50
  %v233 = vunpack.c.h.b16 %v50
  %v234 = vunpack.c.l.b16 %v51
  %v235 = vunpack.c.h.b16 %v51
  %v236 = vunpack.c.l.b16 %v52
  %v237 = vunpack.c.h.b16 %v52
  %v238 = vunpack.c.l.b16 %v53
  %v239 = vunpack.c.h.b16 %v53
  %v240 = vunpack.c.l.b16 %v54
  %v241 = vunpack.c.h.b16 %v54
  %v242 = vunpack.c.l.b16 %v55
  %v243 = vunpack.c.h.b16 %v55
  %v244 = vunpack.c.l.b16 %v56
  %v245 = vunpack.c.h.b16 %v56
  %v246 = vunpack.c.l.b16 %v57
  %v247 = vunpack.c.h.b16 %v57
  %v248 = vunpack.c.l.b16 %v58
  %v249 = vunpack.c.h.b16 %v58
  %v250 = vunpack.c.l.b16 %v59
  %v251 = vunpack.c.h.b16 %v59
  %v252 = vunpack.c.l.b16 %v60
  %v253 = vunpack.c.h.b16 %v60
  %v254 = vunpack.c.l.b16 %v61
  %v255 = vunpack.c.h.b16 %v61
  %v256 = vunpack.c.l.b16 %v62
  %v257 = vunpack.c.h.b16 %v62
  %v258 = vunpack.c.l.b16 %v63
  %v259 = vunpack.c.h.b16 %v63
  %v260 = vunpack.c.l.b16 %v64
  %v261 = vunpack.c.h.b16 %v64
  %v262 = vunpack.c.l.b16 %v65
  %v263 = vunpack.c.h.b16 %v65
  %v264 = vunpack.c.l.b16 %v66
  %v265 = vunpack.c.h.b16 %v66
  %v266 = vunpack.c.l.b16 %v67
  %v267 = vunpack.c.h.b16 %v67
  %v268 = vunpack.c.l.b16 %v68
  %v269 = vunpack.c.h.b16 %v68
  %v270 = vunpack.c.l.b16 %v69
  %v271 = vunpack.c.h.b16 %v69
  %v272 = vunpack.c.l.b16 %v70
  %v273 = vunpack.c.h.b16 %v70
  %v274 = vunpack.c.l.b16 %v71
  %v275 = vunpack.c.h.b16 %v71
  %v276 = vunpack.c.l.b16 %v72
  %v277 = vunpack.c.h.b16 %v72
  %v278 = vunpack.c.l.b16 %v73
  %v279 = vunpack.c.h.b16 %v73
  %v280 = vunpack.c.l.b16 %v74
  %v281 = vunpack.c.h.b16 %v74
  %v282 = vunpack.c.l.b16 %v75
  %v283 = vunpack.c.h.b16 %v75
  %v284 = vunpack.c.l.b16 %v76
  %v285 = vunpack.c.h.b16 %v76
  %v286 = vunpack.c.l.b16 %v77
  %v287 = vunpack.c.h.b16 %v77
  %v288 = vunpack.c.l.b16 %v78
  %v289 = vunpack.c.h.b16 %v78
  %v290 = vunpack.c.l.b16 %v79
  %v291 = vunpack.c.h.b16 %v79
  %v292 = vunpack.c.l.b16 %v80
  %v293 = vunpack.c.h.b16 %v80
  %v294 = vunpack.c.l.b16 %v81
  %v295 = vunpack.c.h.b16 %v81
  %v296 = vunpack.c.l.b16 %v82
  %v297 = vunpack.c.h.b16 %v82
  %v298 = vunpack.c.l.b16 %v83
  %v299 = vunpack.c.h.b16 %v83
  %v300 = vunpack.c.l.b16 %v84
  %v301 = vunpack.c.h.b16 %v84
  %v302 = vpack.c.b16 %v178, %v174
  %v303 = vpack.c.b16 %v179, %v175
  %v304 = vpack.c.b16 %v180, %v176
  %v305 = vpack.c.b16 %v181, %v177
  %v306 = vpack.c.b16 %v186, %v182
  %v307 = vpack.c.b16 %v187, %v183
  %v308 = vpack.c.b16 %v188, %v184
  %v309 = vpack.c.b16 %v189, %v185
  %v310 = vpack.c.b16 %v194, %v190
  %v311 = vpack.c.b16 %v195, %v191
  %v312 = vpack.c.b16 %v196, %v192
  %v313 = vpack.c.b16 %v197, %v193
  %v314 = vpack.c.b16 %v202, %v198
  %v315 = vpack.c.b16 %v203, %v199
  %v316 = vpack.c.b16 %v204, %v200
  %v317 = vpack.c.b16 %v205, %v201
  %v318 = vpack.c.b16 %v210, %v206
  %v319 = vpack.c.b16 %v211, %v207
  %v320 = vpack.c.b16 %v212, %v208
  %v321 = vpack.c.b16 %v213, %v209
  %v322 = vpack.c.b16 %v218, %v214
  %v323 = vpack.c.b16 %v219, %v215
  %v324 = vpack.c.b16 %v220, %v216
  %v325 = vpack.c.b16 %v221, %v217
  %v326 = vpack.c.b16 %v226, %v222
  %v327 = vpack.c.b16 %v227, %v223
  %v328 = vpack.c.b16 %v228, %v224
  %v329 = vpack.c.b16 %v229, %v225
  %v330 = vpack.c.b16 %v234, %v230
  %v331 = vpack.c.b16 %v235, %v231
  %v332 = vpack.c.b16 %v236, %v232
  %v333 = vpack.c.b16 %v237, %v233
  %v334 = vpack.c.b16 %v242, %v238
  %v335 = vpack.c.b16 %v243, %v239
  %v336 = vpack.c.b16 %v244, %v240
  %v337 = vpack.c.b16 %v245, %v241
  %v338 = vpack.c.b16 %v250, %v246
  %v339 = vpack.c.b16 %v251, %v247
  %v340 = vpack.c.b16 %v252, %v248
  %v341 = vpack.c.b16 %v253, %v249
  %v342 = vpack.c.b16 %v258, %v254
  %v343 = vpack.c.b16 %v259, %v255
  %v344 = vpack.c.b16 %v260, %v256
  %v345 = vpack.c.b16 %v261, %v257
  %v346 = vpack.c.b16 %v266, %v262
  %v347 = vpack.c.b16 %v267, %v263
  %v348 = vpack.c.b16 %v268, %v264
  %v349 = vpack.c.b16 %v269, %v265
  %v350 = vpack.c.b16 %v274, %v270
  %v351 = vpack.c.b16 %v275, %v271
  %v352 = vpack.c.b16 %v276, %v272
  %v353 = vpack.c.b16 %v277, %v273
  %v354 = vpack.c.b16 %v282, %v278
  %v355 = vpack.c.b16 %v283, %v279
  %v356 = vpack.c.b16 %v284, %v280
  %v357 = vpack.c.b16 %v285, %v281
  %v358 = vpack.c.b16 %v290, %v286
  %v359 = vpack.c.b16 %v291, %v287
  %v360 = vpack.c.b16 %v292, %v288
  %v361 = vpack.c.b16 %v293, %v289
  %v362 = vpack.c.b16 %v298, %v294
  %v363 = vpack.c.b16 %v299, %v295
  %v364 = vpack.c.b16 %v300, %v296
  %v365 = vpack.c.b16 %v301, %v297
  %430 = vmatprep.subr.bf16.mxu0 %v303
  %431 = vmatpush1.bf16.msra.mxu0 %v302
  %432 = vmatprep.subr.bf16.mxu0 %v307
  %433 = vmatpush1.bf16.msra.mxu0 %v306
  %434 = vmatprep.subr.bf16.mxu0 %v311
  %435 = vmatpush1.bf16.msra.mxu0 %v310
  %436 = vmatprep.subr.bf16.mxu0 %v315
  %437 = vmatpush1.bf16.msra.mxu0 %v314
  %438 = vmatprep.subr.bf16.mxu0 %v319
  %439 = vmatpush1.bf16.msra.mxu0 %v318
  %440 = vmatprep.subr.bf16.mxu0 %v323
  %441 = vmatpush1.bf16.msra.mxu0 %v322
  %442 = vmatprep.subr.bf16.mxu0 %v327
  %443 = vmatpush1.bf16.msra.mxu0 %v326
  %444 = vmatprep.subr.bf16.mxu0 %v331
  %445 = vmatpush1.bf16.msra.mxu0 %v330
  %446 = vmatprep.subr.bf16.mxu0 %v335
  %447 = vmatpush1.bf16.msra.mxu0 %v334
  %448 = vmatprep.subr.bf16.mxu0 %v339
  %449 = vmatpush1.bf16.msra.mxu0 %v338
  %450 = vmatprep.subr.bf16.mxu0 %v343
  %451 = vmatpush1.bf16.msra.mxu0 %v342
  %452 = vmatprep.subr.bf16.mxu0 %v347
  %453 = vmatpush1.bf16.msra.mxu0 %v346
  %454 = vmatprep.subr.bf16.mxu0 %v351
  %455 = vmatpush1.bf16.msra.mxu0 %v350
  %456 = vmatprep.subr.bf16.mxu0 %v355
  %457 = vmatpush1.bf16.msra.mxu0 %v354
  %458 = vmatprep.subr.bf16.mxu0 %v359
  %459 = vmatpush1.bf16.msra.mxu0 %v358
  %460 = vmatprep.subr.bf16.mxu0 %v363
  %461 = vmatpush1.bf16.msra.mxu0 %v362
  %462 = vmatprep.mubr.bf16.mxu0 %v107
  %463 = vmatmul.mubr.bf16.gmra.mrb[0].mxu0 %v100
  %v464 = vpop.f32.mrb[0].mxu0
  %v465 = vadd.f32 0.0, %v464
  %v466 = vpop.f32.mrb[0].mxu0
  %v467 = vadd.f32 0.0, %v466
  %v468 = vpop.f32.mrb[0].mxu0
  %v469 = vpop.f32.mrb[0].mxu0
  %470 = vdwg.mxu0
  %471 = vmatprep.subr.bf16.mxu0 %v305
  %472 = vmatpush1.bf16.msra.mxu0 %v304
  %473 = vmatprep.subr.bf16.mxu0 %v309
  %474 = vmatpush1.bf16.msra.mxu0 %v308
  %475 = vmatprep.subr.bf16.mxu0 %v313
  %476 = vmatpush1.bf16.msra.mxu0 %v312
  %477 = vmatprep.subr.bf16.mxu0 %v317
  %478 = vmatpush1.bf16.msra.mxu0 %v316
  %479 = vmatprep.subr.bf16.mxu0 %v321
  %480 = vmatpush1.bf16.msra.mxu0 %v320
  %481 = vmatprep.subr.bf16.mxu0 %v325
  %482 = vmatpush1.bf16.msra.mxu0 %v324
  %483 = vmatprep.subr.bf16.mxu0 %v329
  %484 = vmatpush1.bf16.msra.mxu0 %v328
  %485 = vmatprep.subr.bf16.mxu0 %v333
  %486 = vmatpush1.bf16.msra.mxu0 %v332
  %487 = vmatprep.subr.bf16.mxu0 %v337
  %488 = vmatpush1.bf16.msra.mxu0 %v336
  %489 = vmatprep.subr.bf16.mxu0 %v341
  %490 = vmatpush1.bf16.msra.mxu0 %v340
  %491 = vmatprep.subr.bf16.mxu0 %v345
  %492 = vmatpush1.bf16.msra.mxu0 %v344
  %493 = vmatprep.subr.bf16.mxu0 %v349
  %494 = vmatpush1.bf16.msra.mxu0 %v348
  %495 = vmatprep.subr.bf16.mxu0 %v353
  %496 = vmatpush1.bf16.msra.mxu0 %v352
  %497 = vmatprep.subr.bf16.mxu0 %v357
  %498 = vmatpush1.bf16.msra.mxu0 %v356
  %499 = vmatprep.subr.bf16.mxu0 %v361
  %500 = vmatpush1.bf16.msra.mxu0 %v360
  %501 = vmatprep.subr.bf16.mxu0 %v365
  %502 = vmatpush1.bf16.msra.mxu0 %v364
  %503 = vmatprep.mubr.bf16.mxu0 %v107
  %504 = vmatmul.mubr.bf16.gmra.mrb[0].mxu0 %v100
  %v505 = vpop.f32.mrb[0].mxu0
  %v506 = vadd.f32 0.0, %v505
  %v507 = vpop.f32.mrb[0].mxu0
  %v508 = vadd.f32 0.0, %v507
  %v509 = vpop.f32.mrb[0].mxu0
  %v510 = vpop.f32.mrb[0].mxu0
  %511 = vdwg.mxu0
  %v516 = vcombine.low %v465, %v467
  %v517 = vcombine.low %v506, %v508
  %v519 = vunpack.c.l.s4 1983009808
  %v520 = vunpack.c.0.s8 %v519
  %v521 = vlaneseq
  %v522 = vshrl.u32 %v521, 7
  %v523 = vsub.s32 %v520, %v522
  %v524 = vrot.slane %v516, %v523
  %v526 = vunpack.c.l.s4 1983009808
  %v527 = vunpack.c.0.s8 %v526
  %v528 = vlaneseq
  %v529 = vshrl.u32 %v528, 7
  %v530 = vsub.s32 %v527, %v529
  %v531 = vrot.slane %v517, %v530
  %v532 = vcombine.low %v524, %v531
  %v534 = vadd.f32 %v19, %v532
  %535 = vst [vmem:[#allocation2] sm:$0xff] %v534
  // Predicated region
  $region18: #{forward.38} parent=0 // pred_check
    %p536 = pneg %p14
  $region19: #{forward.38} parent=0 // pred_check_branch
    %538 = sbr.rel (%p536) target = $region21
  $region20: #{forward.38} parent=0 // pred_region
    %v539 = vld [vmem:[#allocation2] sm:$0xff]
    %v540 = vld [vmem:[%s2] sm:$0xf]
    %v542 = vlaneseq
    %v543 = vshrl.u32 %v542, 7
    %v544 = vsub.s32 0, %v543
    %v545 = vrot.slane %v540, %v544
    %v546 = vlaneseq
    %v547 = vshrl.u32 %v546, 7
    %v548 = vsub.s32 1, %v547
    %v549 = vrot.slane %v540, %v548
    %v550 = vlaneseq
    %v551 = vshrl.u32 %v550, 7
    %v552 = vsub.s32 2, %v551
    %v553 = vrot.slane %v540, %v552
    %v554 = vlaneseq
    %v555 = vshrl.u32 %v554, 7
    %v556 = vsub.s32 3, %v555
    %v557 = vrot.slane %v540, %v556
    %v558 = vcombine.low %v545, %v549
    %v559 = vcombine.low %v553, %v557
    %v561 = vunpack.c.l.s4 1983009808
    %v562 = vunpack.c.0.s8 %v561
    %v563 = vlaneseq
    %v564 = vshrl.u32 %v563, 7
    %v565 = vsub.s32 %v562, %v564
    %v566 = vrot.slane %v558, %v565
    %v568 = vunpack.c.l.s4 1983009808
    %v569 = vunpack.c.0.s8 %v568
    %v570 = vlaneseq
    %v571 = vshrl.u32 %v570, 7
    %v572 = vsub.s32 %v569, %v571
    %v573 = vrot.slane %v559, %v572
    %v574 = vcombine.low %v566, %v573
    %v576 = vadd.f32 %v539, %v574
    %v578 = vcombine.high %v576, %v576
    %v580 = vunpack.c.l.s4 1983009808
    %v581 = vunpack.c.0.s8 %v580
    %v582 = vlaneseq
    %v583 = vshrl.u32 %v582, 7
    %v584 = vsub.s32 %v581, %v583
    %v585 = vrot.slane %v576, %v584
    %v587 = vunpack.c.l.s4 1983009808
    %v588 = vunpack.c.0.s8 %v587
    %v589 = vlaneseq
    %v590 = vshrl.u32 %v589, 7
    %v591 = vsub.s32 %v588, %v590
    %v592 = vrot.slane %v578, %v591
    %v593 = vcombine.high %v585, %v585
    %v594 = vcombine.high %v592, %v592
    %v599 = vpack.c.bf16 %v585, %v585
    %v600 = vpack.c.bf16 %v593, %v593
    %v601 = vpack.c.bf16 %v592, %v592
    %v602 = vpack.c.bf16 %v594, %v594
    %v607 = vcombine.low %v599, %v600
    %v608 = vcombine.low %v601, %v602
    %v610 = vunpack.c.l.s4 1966171168
    %v611 = vunpack.c.0.s8 %v610
    %v612 = vlaneseq
    %v613 = vshrl.u32 %v612, 7
    %v614 = vsub.s32 %v611, %v613
    %v615 = vrot.slane %v607, %v614
    %v617 = vunpack.c.l.s4 1966171168
    %v618 = vunpack.c.0.s8 %v617
    %v619 = vlaneseq
    %v620 = vshrl.u32 %v619, 7
    %v621 = vsub.s32 %v618, %v620
    %v622 = vrot.slane %v608, %v621
    %v623 = vcombine.low %v615, %v622
    %v625 = vunpack.c.l.s4 1966171168
    %v626 = vunpack.c.0.s8 %v625
    %v627 = vlaneseq
    %v628 = vshrl.u32 %v627, 7
    %v629 = vsub.s32 %v626, %v628
    %v630 = vrot.slane %v623, %v629
    %632 = vst [vmem:[%s3] sm:$0xf] %v630
  $region21: #{forward.38} parent=0 // pred_fallthru
    _
  // Predicated region
  $region22: #{forward.38} parent=0 // pred_check
    _
  $region23: #{forward.38} parent=0 // pred_check_branch
    %634 = sbr.rel (0) target = $region25
  $region24: #{forward.38} parent=0 // pred_region
    _
  $region25: #{forward.38} parent=0 // pred_fallthru
    _
  // Predicated region
  $region26: #{forward.38} parent=0 // pred_check
    _
  $region27: #{forward.38} parent=0 // pred_check_branch
    %636 = sbr.rel (0) target = $region29
  $region28: #{forward.38} parent=0 // pred_region
    _
  $region29: #{forward.38} parent=0 // pred_fallthru
    _

// kernel: forward.39
$region0: #{forward.39}
  #allocation0 [shape = 'u32[]', space=smem, size = 0x4, offset = 0x4, fixed_abs, tag = 'smem constant byte address 0x4 - core index']
  #allocation1 [shape = 'u32[144,128]{1,0:T(1,128)}', space=vmem, size = 0x12000, scoped, tag = 'internal scratch']
  #allocation2 [shape = 'f32[2,512]{1,0:T(2,128)}', space=vmem, size = 0x1000, scoped, tag = 'scratch operand']
  %s0 = inlined_call_operand.vmem [shape: bf16[2,4608], index: 0, kind: input, shape index: {}]
  %s1 = inlined_call_operand.vmem [shape: bf16[4608,512], index: 1, kind: input, shape index: {}]
  %s2 = inlined_call_operand.vmem [shape: f32[1,512], index: 2, kind: input, shape index: {}]
  %s3 = inlined_call_operand.vmem [shape: bf16[2,512], index: 3, kind: input, shape index: {}]
  %s4 = inlined_call_operand.vmem [shape: bf16[2,512], index: 4, kind: output, shape index: {}]
  %s5 = sld [smem:[#allocation0]]
  $region57: #{forward.39} parent=0
    _
  %s7 = ssub.s32 1, %s5
  %s8 = scalar_select 0, %s7, %s5
  loop: start=0, step=1, limit=11
  $region2: #{forward.39} parent=0 // loop_pre_header
    _
  $region3: #{forward.39} parent=0 // loop_header
    %s10 = sphi 0, %s14
    %p11 = scmp.ge.s32.totalorder %s10, 11
    %s17 = sphi 0, %s36
    %s18 = sphi 0, %s32
    %s19 = sphi 0, %s28
    %s20 = sphi 0, %s17
    %s21 = sphi 0, %s18
    %s22 = sphi 0, %s19
    %s23 = sphi 0, %s20
    %s24 = sphi 0, %s21
    %s25 = sphi 0, %s22
    %s41 = sphi 0, %s43
    %s44 = sphi 0, %s41
    %s45 = sphi 0, %s44
    %s61 = sphi 0, %s45
    %s69 = sphi 0, %s71
    %s72 = sphi 0, %s69
    %s73 = sphi 0, %s72
    %s89 = sphi 0, %s73
    %s95 = sphi 0, %s97
    %s98 = sphi 0, %s95
    %s99 = sphi 0, %s98
    %s115 = sphi 0, %s99
    %s123 = sphi 0, %s125
    %s126 = sphi 0, %s123
    %s127 = sphi 0, %s126
    %s143 = sphi 0, %s127
    %s151 = sphi 0, %s153
    %s154 = sphi 0, %s151
    %s155 = sphi 0, %s154
    %s171 = sphi 0, %s155
  $region4: #{forward.39} parent=0 // loop_header_branch
    %13 = sbr.rel (%p11) target = $region8
  $region5: #{forward.39} parent=0 // loop_body
    %s15 = ssub.s32 %s10, 1
    %s16 = ssub.s32 %s10, 2
    %s26 = sadd.s32 1, %s19
    %p27 = scmp.ge.s32.totalorder %s26, 9
    %s28 = scalar_select %p27, 0, %s26
    %s29 = sadd.s32 1, %s18
    %s30 = scalar_select %p27, %s29, %s18
    %p31 = scmp.ge.s32.totalorder %s30, 1
    %s32 = scalar_select %p31, 0, %s30
    %s33 = sadd.s32 1, %s17
    %s34 = scalar_select %p31, %s33, %s17
    %p35 = scmp.ge.s32.totalorder %s34, 1
    %s36 = scalar_select %p35, 0, %s34
    %s37 = ssub.s32 %s17, %s36
    %s38 = ssub.s32 %s19, %s28
    %s39 = sor.u32 %s37, %s38
    %p40 = scmp.eq.s32.totalorder %s39, 0
    %s42 = sadd.s32 %s41, 1
    %s43 = scalar_select %p40, %s41, %s42
    %p46 = pneg %p40
    %p47 = scmp.eq.s32.totalorder %s10, 8
    %p48 = por %p46, %p47
    %p49 = scmp.ne.s32.totalorder %s41, %s44
    %p50 = scmp.eq.s32.totalorder %s10, 0
    %p51 = por %p49, %p50
    %p52 = scmp.ne.s32.totalorder %s41, %s44
    %p53 = scmp.eq.s32.totalorder %s15, 8
    %p54 = por %p52, %p53
    %p55 = scmp.ne.s32.totalorder %s44, %s45
    %p56 = scmp.eq.s32.totalorder %s15, 0
    %p57 = por %p55, %p56
    %p58 = scmp.ne.s32.totalorder %s44, %s45
    %p59 = scmp.eq.s32.totalorder %s16, 8
    %p60 = por %p58, %p59
    %p62 = scmp.ne.s32.totalorder %s45, %s61
    %p63 = scmp.eq.s32.totalorder %s16, 0
    %p64 = por %p62, %p63
    %s65 = ssub.s32 %s19, %s28
    %s66 = ssub.s32 %s18, %s32
    %s67 = sor.u32 %s65, %s66
    %p68 = scmp.eq.s32.totalorder %s67, 0
    %s70 = sadd.s32 %s69, 1
    %s71 = scalar_select %p68, %s69, %s70
    %p74 = pneg %p68
    %p75 = scmp.eq.s32.totalorder %s10, 8
    %p76 = por %p74, %p75
    %p77 = scmp.ne.s32.totalorder %s69, %s72
    %p78 = scmp.eq.s32.totalorder %s10, 0
    %p79 = por %p77, %p78
    %p80 = scmp.ne.s32.totalorder %s69, %s72
    %p81 = scmp.eq.s32.totalorder %s15, 8
    %p82 = por %p80, %p81
    %p83 = scmp.ne.s32.totalorder %s72, %s73
    %p84 = scmp.eq.s32.totalorder %s15, 0
    %p85 = por %p83, %p84
    %p86 = scmp.ne.s32.totalorder %s72, %s73
    %p87 = scmp.eq.s32.totalorder %s16, 8
    %p88 = por %p86, %p87
    %p90 = scmp.ne.s32.totalorder %s73, %s89
    %p91 = scmp.eq.s32.totalorder %s16, 0
    %p92 = por %p90, %p91
    %s93 = ssub.s32 %s18, %s32
    %p94 = scmp.eq.s32.totalorder %s93, 0
    %s96 = sadd.s32 %s95, 1
    %s97 = scalar_select %p94, %s95, %s96
    %p100 = pneg %p94
    %p101 = scmp.eq.s32.totalorder %s10, 8
    %p102 = por %p100, %p101
    %p103 = scmp.ne.s32.totalorder %s95, %s98
    %p104 = scmp.eq.s32.totalorder %s10, 0
    %p105 = por %p103, %p104
    %p106 = scmp.ne.s32.totalorder %s95, %s98
    %p107 = scmp.eq.s32.totalorder %s15, 8
    %p108 = por %p106, %p107
    %p109 = scmp.ne.s32.totalorder %s98, %s99
    %p110 = scmp.eq.s32.totalorder %s15, 0
    %p111 = por %p109, %p110
    %p112 = scmp.ne.s32.totalorder %s98, %s99
    %p113 = scmp.eq.s32.totalorder %s16, 8
    %p114 = por %p112, %p113
    %p116 = scmp.ne.s32.totalorder %s99, %s115
    %p117 = scmp.eq.s32.totalorder %s16, 0
    %p118 = por %p116, %p117
    %s119 = ssub.s32 %s17, %s36
    %s120 = ssub.s32 %s18, %s32
    %s121 = sor.u32 %s119, %s120
    %p122 = scmp.eq.s32.totalorder %s121, 0
    %s124 = sadd.s32 %s123, 1
    %s125 = scalar_select %p122, %s123, %s124
    %p128 = pneg %p122
    %p129 = scmp.eq.s32.totalorder %s10, 8
    %p130 = por %p128, %p129
    %p131 = scmp.ne.s32.totalorder %s123, %s126
    %p132 = scmp.eq.s32.totalorder %s10, 0
    %p133 = por %p131, %p132
    %p134 = scmp.ne.s32.totalorder %s123, %s126
    %p135 = scmp.eq.s32.totalorder %s15, 8
    %p136 = por %p134, %p135
    %p137 = scmp.ne.s32.totalorder %s126, %s127
    %p138 = scmp.eq.s32.totalorder %s15, 0
    %p139 = por %p137, %p138
    %p140 = scmp.ne.s32.totalorder %s126, %s127
    %p141 = scmp.eq.s32.totalorder %s16, 8
    %p142 = por %p140, %p141
    %p144 = scmp.ne.s32.totalorder %s127, %s143
    %p145 = scmp.eq.s32.totalorder %s16, 0
    %p146 = por %p144, %p145
    %s147 = ssub.s32 %s17, %s36
    %s148 = ssub.s32 %s18, %s32
    %s149 = sor.u32 %s147, %s148
    %p150 = scmp.eq.s32.totalorder %s149, 0
    %s152 = sadd.s32 %s151, 1
    %s153 = scalar_select %p150, %s151, %s152
    %p156 = pneg %p150
    %p157 = scmp.eq.s32.totalorder %s10, 8
    %p158 = por %p156, %p157
    %p159 = scmp.ne.s32.totalorder %s151, %s154
    %p160 = scmp.eq.s32.totalorder %s10, 0
    %p161 = por %p159, %p160
    %p162 = scmp.ne.s32.totalorder %s151, %s154
    %p163 = scmp.eq.s32.totalorder %s15, 8
    %p164 = por %p162, %p163
    %p165 = scmp.ne.s32.totalorder %s154, %s155
    %p166 = scmp.eq.s32.totalorder %s15, 0
    %p167 = por %p165, %p166
    %p168 = scmp.ne.s32.totalorder %s154, %s155
    %p169 = scmp.eq.s32.totalorder %s16, 8
    %p170 = por %p168, %p169
    %p172 = scmp.ne.s32.totalorder %s155, %s171
    %p173 = scmp.eq.s32.totalorder %s16, 0
    %p174 = por %p172, %p173
    %p175 = scmp.le.s32.totalorder 1, %s10
    %p176 = scmp.lt.s32.totalorder %s10, 10
    %p177 = pnand %p175, %p176
    %p178 = pneg %p177
    // Predicated region
    $region9: #{forward.39} parent=5 // pred_check
      _
    $region10: #{forward.39} parent=5 // pred_check_branch
      %180 = sbr.rel (%p177) target = $region12
    $region11: #{forward.39} parent=5 // pred_region
      %s181 = ssub.s32 %s10, 1
      // Predicated region
      $region13: #{forward.39} parent=11 // pred_check
        %p182 = pneg %p111
      $region14: #{forward.39} parent=11 // pred_check_branch
        %184 = sbr.rel (%p182) target = $region16
      $region15: #{forward.39} parent=11 // pred_region
        %s185 = smul.u32 4, %s21
        %p186 = scmp.lt.s32.totalorder %s185, 3
        %s187 = scalar_select %p186, %s185, 3
        %s188 = scalar_lea.vmem %s2, %s187
        %s189 = smul.u32 4, %s21
      $region16: #{forward.39} parent=11 // pred_fallthru
        _
      // Predicated region
      $region17: #{forward.39} parent=11 // pred_check
        %p190 = pneg %p139
      $region18: #{forward.39} parent=11 // pred_check_branch
        %192 = sbr.rel (%p190) target = $region20
      $region19: #{forward.39} parent=11 // pred_region
        %s193 = smul.u32 4, %s21
        %p194 = scmp.lt.s32.totalorder %s20, 0
        %s195 = scalar_select %p194, %s20, 0
        %p196 = scmp.lt.s32.totalorder %s193, 3
        %s197 = scalar_select %p196, %s193, 3
        %s198 = smul.addr %s195, 4
        %s199 = sadd.s32 %s197, %s198
        %s200 = scalar_lea.vmem %s3, %s199
        %s201 = smul.u32 4, %s21
      $region20: #{forward.39} parent=11 // pred_fallthru
        _
    $region12: #{forward.39} parent=5 // pred_fallthru
      _
    %p202 = scmp.lt.s32.totalorder %s10, 9
    // Predicated region
    $region21: #{forward.39} parent=5 // pred_check
      %p203 = pneg %p202
    $region22: #{forward.39} parent=5 // pred_check_branch
      %205 = sbr.rel (%p203) target = $region24
    $region23: #{forward.39} parent=5 // pred_region
      // Predicated region
      $region25: #{forward.39} parent=23 // pred_check
        %p206 = pneg %p51
      $region26: #{forward.39} parent=23 // pred_check_branch
        %208 = sbr.rel (%p206) target = $region28
      $region27: #{forward.39} parent=23 // pred_region
        %s209 = smul.u32 4, %s19
        %p210 = scmp.lt.s32.totalorder %s17, 0
        %s211 = scalar_select %p210, %s17, 0
        %p212 = scmp.lt.s32.totalorder %s209, 35
        %s213 = scalar_select %p212, %s209, 35
        %s214 = smul.addr %s211, 36
        %s215 = sadd.s32 %s213, %s214
        %s216 = scalar_lea.vmem %s0, %s215
        %s217 = smul.u32 4, %s19
      $region28: #{forward.39} parent=23 // pred_fallthru
        _
      // Predicated region
      $region29: #{forward.39} parent=23 // pred_check
        %p218 = pneg %p79
      $region30: #{forward.39} parent=23 // pred_check_branch
        %220 = sbr.rel (%p218) target = $region32
      $region31: #{forward.39} parent=23 // pred_region
        %s221 = smul.u32 64, %s19
        %s222 = smul.u32 4, %s18
        %p223 = scmp.lt.s32.totalorder %s221, 575
        %s224 = scalar_select %p223, %s221, 575
        %p225 = scmp.lt.s32.totalorder %s222, 3
        %s226 = scalar_select %p225, %s222, 3
        %s227 = smul.addr %s224, 4
        %s228 = sadd.s32 %s226, %s227
        %s229 = smul.addr %s228, 4
        %s230 = scalar_lea.vmem %s1, %s229
        %s231 = smul.u32 64, %s19
        %s232 = smul.u32 4, %s18
      $region32: #{forward.39} parent=23 // pred_fallthru
        _
    $region24: #{forward.39} parent=5 // pred_fallthru
      _
    %p233 = scmp.le.s32.totalorder 1, %s10
    %p234 = scmp.lt.s32.totalorder %s10, 10
    %p235 = pnand %p233, %p234
    %p236 = pneg %p235
    // Predicated region
    $region33: #{forward.39} parent=5 // pred_check
      _
    $region34: #{forward.39} parent=5 // pred_check_branch
      %238 = sbr.rel (%p235) target = $region36
    $region35: #{forward.39} parent=5 // pred_region
      %s239 = ssub.s32 %s10, 1
      %s240 = smul.u32 4, %s22
      %p241 = scmp.lt.s32.totalorder %s20, 0
      %s242 = scalar_select %p241, %s20, 0
      %p243 = scmp.lt.s32.totalorder %s240, 35
      %s244 = scalar_select %p243, %s240, 35
      %s245 = smul.addr %s242, 36
      %s246 = sadd.s32 %s244, %s245
      %s247 = scalar_lea.vmem %s0, %s246
      %p248 = pneg %p57
      %p249 = pneg %p54
      %s250 = smul.u32 64, %s22
      %s251 = smul.u32 4, %s21
      %p252 = scmp.lt.s32.totalorder %s250, 575
      %s253 = scalar_select %p252, %s250, 575
      %p254 = scmp.lt.s32.totalorder %s251, 3
      %s255 = scalar_select %p254, %s251, 3
      %s256 = smul.addr %s253, 4
      %s257 = sadd.s32 %s255, %s256
      %s258 = smul.addr %s257, 4
      %s259 = scalar_lea.vmem %s1, %s258
      %p260 = pneg %p85
      %p261 = pneg %p82
      %s262 = smul.u32 4, %s21
      %p263 = scmp.lt.s32.totalorder %s262, 3
      %s264 = scalar_select %p263, %s262, 3
      %s265 = scalar_lea.vmem %s2, %s264
      %p266 = pneg %p111
      %p267 = pneg %p108
      %s268 = smul.u32 4, %s21
      %p269 = scmp.lt.s32.totalorder %s20, 0
      %s270 = scalar_select %p269, %s20, 0
      %p271 = scmp.lt.s32.totalorder %s268, 3
      %s272 = scalar_select %p271, %s268, 3
      %s273 = smul.addr %s270, 4
      %s274 = sadd.s32 %s272, %s273
      %s275 = scalar_lea.vmem %s3, %s274
      %p276 = pneg %p139
      %p277 = pneg %p136
      %p278 = pneg %p167
      %p279 = pneg %p164
      %s280 = smul.u32 4, %s21
      %p281 = scmp.lt.s32.totalorder %s20, 0
      %s282 = scalar_select %p281, %s20, 0
      %p283 = scmp.lt.s32.totalorder %s280, 3
      %s284 = scalar_select %p283, %s280, 3
      %s285 = smul.addr %s282, 4
      %s286 = sadd.s32 %s284, %s285
      %s287 = scalar_lea.vmem %s4, %s286
      %s288 = smul.u32 4, %s22
      %p289 = scmp.lt.s32.totalorder %s20, 0
      %s290 = scalar_select %p289, %s20, 0
      %p291 = scmp.lt.s32.totalorder %s288, 35
      %s292 = scalar_select %p291, %s288, 35
      %s293 = smul.addr %s290, 36
      %s294 = sadd.s32 %s292, %s293
      %s295 = scalar_lea.vmem %s0, %s294
      %s296 = smul.u32 4, %s22
      %s297 = smul.u32 64, %s22
      %s298 = smul.u32 4, %s21
      %p299 = scmp.lt.s32.totalorder %s297, 575
      %s300 = scalar_select %p299, %s297, 575
      %p301 = scmp.lt.s32.totalorder %s298, 3
      %s302 = scalar_select %p301, %s298, 3
      %s303 = smul.addr %s300, 4
      %s304 = sadd.s32 %s302, %s303
      %s305 = smul.addr %s304, 4
      %s306 = scalar_lea.vmem %s1, %s305
      %s307 = smul.u32 64, %s22
      %s308 = smul.u32 4, %s21
      %s309 = smul.u32 4, %s21
      %p310 = scmp.lt.s32.totalorder %s309, 3
      %s311 = scalar_select %p310, %s309, 3
      %s312 = scalar_lea.vmem %s2, %s311
      %s313 = smul.u32 4, %s21
      %s314 = smul.u32 4, %s21
      %p315 = scmp.lt.s32.totalorder %s20, 0
      %s316 = scalar_select %p315, %s20, 0
      %p317 = scmp.lt.s32.totalorder %s314, 3
      %s318 = scalar_select %p317, %s314, 3
      %s319 = smul.addr %s316, 4
      %s320 = sadd.s32 %s318, %s319
      %s321 = scalar_lea.vmem %s3, %s320
      %s322 = smul.u32 4, %s21
      %s323 = smul.u32 4, %s21
      %p324 = scmp.lt.s32.totalorder %s20, 0
      %s325 = scalar_select %p324, %s20, 0
      %p326 = scmp.lt.s32.totalorder %s323, 3
      %s327 = scalar_select %p326, %s323, 3
      %s328 = smul.addr %s325, 4
      %s329 = sadd.s32 %s327, %s328
      %s330 = scalar_lea.vmem %s4, %s329
      %s331 = smul.u32 4, %s21
      %p332 = scmp.eq.s32.totalorder %s22, 0
      // Predicated region
      $region37: #{forward.39} parent=35 // pred_check
        %p333 = pneg %p332
      $region38: #{forward.39} parent=35 // pred_check_branch
        %335 = sbr.rel (%p333) target = $region40
      $region39: #{forward.39} parent=35 // pred_region
        %336 = vst [vmem:[#allocation2] sm:$0xff] 0.0
      $region40: #{forward.39} parent=35 // pred_fallthru
        _
      %v337 = vld [vmem:[#allocation2] sm:$0xff]
      %v338 = vld [vmem:[%s295] sm:$0xf]
      %v339 = vld [vmem:[%s306] sm:$0xff]
      %v340 = vld [vmem:[%s306 + $0x8] sm:$0xff]
      %v341 = vld [vmem:[%s306 + $0x10] sm:$0xff]
      %v342 = vld [vmem:[%s306 + $0x18] sm:$0xff]
      %v343 = vld [vmem:[%s306 + $0x20] sm:$0xff]
      %v344 = vld [vmem:[%s306 + $0x28] sm:$0xff]
      %v345 = vld [vmem:[%s306 + $0x30] sm:$0xff]
      %v346 = vld [vmem:[%s306 + $0x38] sm:$0xff]
      %v347 = vld [vmem:[%s306 + $0x40] sm:$0xff]
      %v348 = vld [vmem:[%s306 + $0x48] sm:$0xff]
      %v349 = vld [vmem:[%s306 + $0x50] sm:$0xff]
      %v350 = vld [vmem:[%s306 + $0x58] sm:$0xff]
      %v351 = vld [vmem:[%s306 + $0x60] sm:$0xff]
      %v352 = vld [vmem:[%s306 + $0x68] sm:$0xff]
      %v353 = vld [vmem:[%s306 + $0x70] sm:$0xff]
      %v354 = vld [vmem:[%s306 + $0x78] sm:$0xff]
      %v355 = vld [vmem:[%s306 + $0x80] sm:$0xff]
      %v356 = vld [vmem:[%s306 + $0x88] sm:$0xff]
      %v357 = vld [vmem:[%s306 + $0x90] sm:$0xff]
      %v358 = vld [vmem:[%s306 + $0x98] sm:$0xff]
      %v359 = vld [vmem:[%s306 + $0xa0] sm:$0xff]
      %v360 = vld [vmem:[%s306 + $0xa8] sm:$0xff]
      %v361 = vld [vmem:[%s306 + $0xb0] sm:$0xff]
      %v362 = vld [vmem:[%s306 + $0xb8] sm:$0xff]
      %v363 = vld [vmem:[%s306 + $0xc0] sm:$0xff]
      %v364 = vld [vmem:[%s306 + $0xc8] sm:$0xff]
      %v365 = vld [vmem:[%s306 + $0xd0] sm:$0xff]
      %v366 = vld [vmem:[%s306 + $0xd8] sm:$0xff]
      %v367 = vld [vmem:[%s306 + $0xe0] sm:$0xff]
      %v368 = vld [vmem:[%s306 + $0xe8] sm:$0xff]
      %v369 = vld [vmem:[%s306 + $0xf0] sm:$0xff]
      %v370 = vld [vmem:[%s306 + $0xf8] sm:$0xff]
      %v371 = vld [vmem:[%s306 + $0x100] sm:$0xff]
      %v372 = vld [vmem:[%s306 + $0x108] sm:$0xff]
      %v373 = vld [vmem:[%s306 + $0x110] sm:$0xff]
      %v374 = vld [vmem:[%s306 + $0x118] sm:$0xff]
      %v375 = vld [vmem:[%s306 + $0x120] sm:$0xff]
      %v376 = vld [vmem:[%s306 + $0x128] sm:$0xff]
      %v377 = vld [vmem:[%s306 + $0x130] sm:$0xff]
      %v378 = vld [vmem:[%s306 + $0x138] sm:$0xff]
      %v379 = vld [vmem:[%s306 + $0x140] sm:$0xff]
      %v380 = vld [vmem:[%s306 + $0x148] sm:$0xff]
      %v381 = vld [vmem:[%s306 + $0x150] sm:$0xff]
      %v382 = vld [vmem:[%s306 + $0x158] sm:$0xff]
      %v383 = vld [vmem:[%s306 + $0x160] sm:$0xff]
      %v384 = vld [vmem:[%s306 + $0x168] sm:$0xff]
      %v385 = vld [vmem:[%s306 + $0x170] sm:$0xff]
      %v386 = vld [vmem:[%s306 + $0x178] sm:$0xff]
      %v387 = vld [vmem:[%s306 + $0x180] sm:$0xff]
      %v388 = vld [vmem:[%s306 + $0x188] sm:$0xff]
      %v389 = vld [vmem:[%s306 + $0x190] sm:$0xff]
      %v390 = vld [vmem:[%s306 + $0x198] sm:$0xff]
      %v391 = vld [vmem:[%s306 + $0x1a0] sm:$0xff]
      %v392 = vld [vmem:[%s306 + $0x1a8] sm:$0xff]
      %v393 = vld [vmem:[%s306 + $0x1b0] sm:$0xff]
      %v394 = vld [vmem:[%s306 + $0x1b8] sm:$0xff]
      %v395 = vld [vmem:[%s306 + $0x1c0] sm:$0xff]
      %v396 = vld [vmem:[%s306 + $0x1c8] sm:$0xff]
      %v397 = vld [vmem:[%s306 + $0x1d0] sm:$0xff]
      %v398 = vld [vmem:[%s306 + $0x1d8] sm:$0xff]
      %v399 = vld [vmem:[%s306 + $0x1e0] sm:$0xff]
      %v400 = vld [vmem:[%s306 + $0x1e8] sm:$0xff]
      %v401 = vld [vmem:[%s306 + $0x1f0] sm:$0xff]
      %v402 = vld [vmem:[%s306 + $0x1f8] sm:$0xff]
      %v403 = vld [vmem:[%s306 + $0x200] sm:$0xff]
      %v404 = vld [vmem:[%s306 + $0x208] sm:$0xff]
      %v405 = vld [vmem:[%s306 + $0x210] sm:$0xff]
      %v406 = vld [vmem:[%s306 + $0x218] sm:$0xff]
      %v407 = vld [vmem:[%s306 + $0x220] sm:$0xff]
      %v408 = vld [vmem:[%s306 + $0x228] sm:$0xff]
      %v409 = vld [vmem:[%s306 + $0x230] sm:$0xff]
      %v410 = vld [vmem:[%s306 + $0x238] sm:$0xff]
      %v411 = vld [vmem:[%s306 + $0x240] sm:$0xff]
      %v412 = vld [vmem:[%s306 + $0x248] sm:$0xff]
      %v413 = vld [vmem:[%s306 + $0x250] sm:$0xff]
      %v414 = vld [vmem:[%s306 + $0x258] sm:$0xff]
      %v415 = vld [vmem:[%s306 + $0x260] sm:$0xff]
      %v416 = vld [vmem:[%s306 + $0x268] sm:$0xff]
      %v417 = vld [vmem:[%s306 + $0x270] sm:$0xff]
      %v418 = vld [vmem:[%s306 + $0x278] sm:$0xff]
      %v419 = vld [vmem:[%s306 + $0x280] sm:$0xff]
      %v420 = vld [vmem:[%s306 + $0x288] sm:$0xff]
      %v421 = vld [vmem:[%s306 + $0x290] sm:$0xff]
      %v422 = vld [vmem:[%s306 + $0x298] sm:$0xff]
      %v423 = vld [vmem:[%s306 + $0x2a0] sm:$0xff]
      %v424 = vld [vmem:[%s306 + $0x2a8] sm:$0xff]
      %v425 = vld [vmem:[%s306 + $0x2b0] sm:$0xff]
      %v426 = vld [vmem:[%s306 + $0x2b8] sm:$0xff]
      %v427 = vld [vmem:[%s306 + $0x2c0] sm:$0xff]
      %v428 = vld [vmem:[%s306 + $0x2c8] sm:$0xff]
      %v429 = vld [vmem:[%s306 + $0x2d0] sm:$0xff]
      %v430 = vld [vmem:[%s306 + $0x2d8] sm:$0xff]
      %v431 = vld [vmem:[%s306 + $0x2e0] sm:$0xff]
      %v432 = vld [vmem:[%s306 + $0x2e8] sm:$0xff]
      %v433 = vld [vmem:[%s306 + $0x2f0] sm:$0xff]
      %v434 = vld [vmem:[%s306 + $0x2f8] sm:$0xff]
      %v435 = vld [vmem:[%s306 + $0x300] sm:$0xff]
      %v436 = vld [vmem:[%s306 + $0x308] sm:$0xff]
      %v437 = vld [vmem:[%s306 + $0x310] sm:$0xff]
      %v438 = vld [vmem:[%s306 + $0x318] sm:$0xff]
      %v439 = vld [vmem:[%s306 + $0x320] sm:$0xff]
      %v440 = vld [vmem:[%s306 + $0x328] sm:$0xff]
      %v441 = vld [vmem:[%s306 + $0x330] sm:$0xff]
      %v442 = vld [vmem:[%s306 + $0x338] sm:$0xff]
      %v443 = vld [vmem:[%s306 + $0x340] sm:$0xff]
      %v444 = vld [vmem:[%s306 + $0x348] sm:$0xff]
      %v445 = vld [vmem:[%s306 + $0x350] sm:$0xff]
      %v446 = vld [vmem:[%s306 + $0x358] sm:$0xff]
      %v447 = vld [vmem:[%s306 + $0x360] sm:$0xff]
      %v448 = vld [vmem:[%s306 + $0x368] sm:$0xff]
      %v449 = vld [vmem:[%s306 + $0x370] sm:$0xff]
      %v450 = vld [vmem:[%s306 + $0x378] sm:$0xff]
      %v451 = vld [vmem:[%s306 + $0x380] sm:$0xff]
      %v452 = vld [vmem:[%s306 + $0x388] sm:$0xff]
      %v453 = vld [vmem:[%s306 + $0x390] sm:$0xff]
      %v454 = vld [vmem:[%s306 + $0x398] sm:$0xff]
      %v455 = vld [vmem:[%s306 + $0x3a0] sm:$0xff]
      %v456 = vld [vmem:[%s306 + $0x3a8] sm:$0xff]
      %v457 = vld [vmem:[%s306 + $0x3b0] sm:$0xff]
      %v458 = vld [vmem:[%s306 + $0x3b8] sm:$0xff]
      %v459 = vld [vmem:[%s306 + $0x3c0] sm:$0xff]
      %v460 = vld [vmem:[%s306 + $0x3c8] sm:$0xff]
      %v461 = vld [vmem:[%s306 + $0x3d0] sm:$0xff]
      %v462 = vld [vmem:[%s306 + $0x3d8] sm:$0xff]
      %v463 = vld [vmem:[%s306 + $0x3e0] sm:$0xff]
      %v464 = vld [vmem:[%s306 + $0x3e8] sm:$0xff]
      %v465 = vld [vmem:[%s306 + $0x3f0] sm:$0xff]
      %v466 = vld [vmem:[%s306 + $0x3f8] sm:$0xff]
      %v469 = vunpack.c.l.s4 1966171168
      %v470 = vunpack.c.0.s8 %v469
      %v471 = vlaneseq
      %v472 = vshrl.u32 %v471, 7
      %v473 = vsub.s32 %v470, %v472
      %v474 = vrot.slane %v338, %v473
      %v475 = vcombine.high %v474, %v474
      %v477 = vunpack.c.l.s4 1966171168
      %v478 = vunpack.c.0.s8 %v477
      %v479 = vlaneseq
      %v480 = vshrl.u32 %v479, 7
      %v481 = vsub.s32 %v478, %v480
      %v482 = vrot.slane %v474, %v481
      %v484 = vunpack.c.l.s4 1966171168
      %v485 = vunpack.c.0.s8 %v484
      %v486 = vlaneseq
      %v487 = vshrl.u32 %v486, 7
      %v488 = vsub.s32 %v485, %v487
      %v489 = vrot.slane %v475, %v488
      %v490 = vcombine.high %v482, %v482
      %v491 = vcombine.high %v489, %v489
      %v624 = vunpack.c.l.b16 %v339
      %v625 = vunpack.c.h.b16 %v339
      %v626 = vunpack.c.l.b16 %v340
      %v627 = vunpack.c.h.b16 %v340
      %v628 = vunpack.c.l.b16 %v341
      %v629 = vunpack.c.h.b16 %v341
      %v630 = vunpack.c.l.b16 %v342
      %v631 = vunpack.c.h.b16 %v342
      %v632 = vunpack.c.l.b16 %v343
      %v633 = vunpack.c.h.b16 %v343
      %v634 = vunpack.c.l.b16 %v344
      %v635 = vunpack.c.h.b16 %v344
      %v636 = vunpack.c.l.b16 %v345
      %v637 = vunpack.c.h.b16 %v345
      %v638 = vunpack.c.l.b16 %v346
      %v639 = vunpack.c.h.b16 %v346
      %v640 = vunpack.c.l.b16 %v347
      %v641 = vunpack.c.h.b16 %v347
      %v642 = vunpack.c.l.b16 %v348
      %v643 = vunpack.c.h.b16 %v348
      %v644 = vunpack.c.l.b16 %v349
      %v645 = vunpack.c.h.b16 %v349
      %v646 = vunpack.c.l.b16 %v350
      %v647 = vunpack.c.h.b16 %v350
      %v648 = vunpack.c.l.b16 %v351
      %v649 = vunpack.c.h.b16 %v351
      %v650 = vunpack.c.l.b16 %v352
      %v651 = vunpack.c.h.b16 %v352
      %v652 = vunpack.c.l.b16 %v353
      %v653 = vunpack.c.h.b16 %v353
      %v654 = vunpack.c.l.b16 %v354
      %v655 = vunpack.c.h.b16 %v354
      %v656 = vunpack.c.l.b16 %v355
      %v657 = vunpack.c.h.b16 %v355
      %v658 = vunpack.c.l.b16 %v356
      %v659 = vunpack.c.h.b16 %v356
      %v660 = vunpack.c.l.b16 %v357
      %v661 = vunpack.c.h.b16 %v357
      %v662 = vunpack.c.l.b16 %v358
      %v663 = vunpack.c.h.b16 %v358
      %v664 = vunpack.c.l.b16 %v359
      %v665 = vunpack.c.h.b16 %v359
      %v666 = vunpack.c.l.b16 %v360
      %v667 = vunpack.c.h.b16 %v360
      %v668 = vunpack.c.l.b16 %v361
      %v669 = vunpack.c.h.b16 %v361
      %v670 = vunpack.c.l.b16 %v362
      %v671 = vunpack.c.h.b16 %v362
      %v672 = vunpack.c.l.b16 %v363
      %v673 = vunpack.c.h.b16 %v363
      %v674 = vunpack.c.l.b16 %v364
      %v675 = vunpack.c.h.b16 %v364
      %v676 = vunpack.c.l.b16 %v365
      %v677 = vunpack.c.h.b16 %v365
      %v678 = vunpack.c.l.b16 %v366
      %v679 = vunpack.c.h.b16 %v366
      %v680 = vunpack.c.l.b16 %v367
      %v681 = vunpack.c.h.b16 %v367
      %v682 = vunpack.c.l.b16 %v368
      %v683 = vunpack.c.h.b16 %v368
      %v684 = vunpack.c.l.b16 %v369
      %v685 = vunpack.c.h.b16 %v369
      %v686 = vunpack.c.l.b16 %v370
      %v687 = vunpack.c.h.b16 %v370
      %v688 = vunpack.c.l.b16 %v371
      %v689 = vunpack.c.h.b16 %v371
      %v690 = vunpack.c.l.b16 %v372
      %v691 = vunpack.c.h.b16 %v372
      %v692 = vunpack.c.l.b16 %v373
      %v693 = vunpack.c.h.b16 %v373
      %v694 = vunpack.c.l.b16 %v374
      %v695 = vunpack.c.h.b16 %v374
      %v696 = vunpack.c.l.b16 %v375
      %v697 = vunpack.c.h.b16 %v375
      %v698 = vunpack.c.l.b16 %v376
      %v699 = vunpack.c.h.b16 %v376
      %v700 = vunpack.c.l.b16 %v377
      %v701 = vunpack.c.h.b16 %v377
      %v702 = vunpack.c.l.b16 %v378
      %v703 = vunpack.c.h.b16 %v378
      %v704 = vunpack.c.l.b16 %v379
      %v705 = vunpack.c.h.b16 %v379
      %v706 = vunpack.c.l.b16 %v380
      %v707 = vunpack.c.h.b16 %v380
      %v708 = vunpack.c.l.b16 %v381
      %v709 = vunpack.c.h.b16 %v381
      %v710 = vunpack.c.l.b16 %v382
      %v711 = vunpack.c.h.b16 %v382
      %v712 = vunpack.c.l.b16 %v383
      %v713 = vunpack.c.h.b16 %v383
      %v714 = vunpack.c.l.b16 %v384
      %v715 = vunpack.c.h.b16 %v384
      %v716 = vunpack.c.l.b16 %v385
      %v717 = vunpack.c.h.b16 %v385
      %v718 = vunpack.c.l.b16 %v386
      %v719 = vunpack.c.h.b16 %v386
      %v720 = vunpack.c.l.b16 %v387
      %v721 = vunpack.c.h.b16 %v387
      %v722 = vunpack.c.l.b16 %v388
      %v723 = vunpack.c.h.b16 %v388
      %v724 = vunpack.c.l.b16 %v389
      %v725 = vunpack.c.h.b16 %v389
      %v726 = vunpack.c.l.b16 %v390
      %v727 = vunpack.c.h.b16 %v390
      %v728 = vunpack.c.l.b16 %v391
      %v729 = vunpack.c.h.b16 %v391
      %v730 = vunpack.c.l.b16 %v392
      %v731 = vunpack.c.h.b16 %v392
      %v732 = vunpack.c.l.b16 %v393
      %v733 = vunpack.c.h.b16 %v393
      %v734 = vunpack.c.l.b16 %v394
      %v735 = vunpack.c.h.b16 %v394
      %v736 = vunpack.c.l.b16 %v395
      %v737 = vunpack.c.h.b16 %v395
      %v738 = vunpack.c.l.b16 %v396
      %v739 = vunpack.c.h.b16 %v396
      %v740 = vunpack.c.l.b16 %v397
      %v741 = vunpack.c.h.b16 %v397
      %v742 = vunpack.c.l.b16 %v398
      %v743 = vunpack.c.h.b16 %v398
      %v744 = vunpack.c.l.b16 %v399
      %v745 = vunpack.c.h.b16 %v399
      %v746 = vunpack.c.l.b16 %v400
      %v747 = vunpack.c.h.b16 %v400
      %v748 = vunpack.c.l.b16 %v401
      %v749 = vunpack.c.h.b16 %v401
      %v750 = vunpack.c.l.b16 %v402
      %v751 = vunpack.c.h.b16 %v402
      %v752 = vunpack.c.l.b16 %v403
      %v753 = vunpack.c.h.b16 %v403
      %v754 = vunpack.c.l.b16 %v404
      %v755 = vunpack.c.h.b16 %v404
      %v756 = vunpack.c.l.b16 %v405
      %v757 = vunpack.c.h.b16 %v405
      %v758 = vunpack.c.l.b16 %v406
      %v759 = vunpack.c.h.b16 %v406
      %v760 = vunpack.c.l.b16 %v407
      %v761 = vunpack.c.h.b16 %v407
      %v762 = vunpack.c.l.b16 %v408
      %v763 = vunpack.c.h.b16 %v408
      %v764 = vunpack.c.l.b16 %v409
      %v765 = vunpack.c.h.b16 %v409
      %v766 = vunpack.c.l.b16 %v410
      %v767 = vunpack.c.h.b16 %v410
      %v768 = vunpack.c.l.b16 %v411
      %v769 = vunpack.c.h.b16 %v411
      %v770 = vunpack.c.l.b16 %v412
      %v771 = vunpack.c.h.b16 %v412
      %v772 = vunpack.c.l.b16 %v413
      %v773 = vunpack.c.h.b16 %v413
      %v774 = vunpack.c.l.b16 %v414
      %v775 = vunpack.c.h.b16 %v414
      %v776 = vunpack.c.l.b16 %v415
      %v777 = vunpack.c.h.b16 %v415
      %v778 = vunpack.c.l.b16 %v416
      %v779 = vunpack.c.h.b16 %v416
      %v780 = vunpack.c.l.b16 %v417
      %v781 = vunpack.c.h.b16 %v417
      %v782 = vunpack.c.l.b16 %v418
      %v783 = vunpack.c.h.b16 %v418
      %v784 = vunpack.c.l.b16 %v419
      %v785 = vunpack.c.h.b16 %v419
      %v786 = vunpack.c.l.b16 %v420
      %v787 = vunpack.c.h.b16 %v420
      %v788 = vunpack.c.l.b16 %v421
      %v789 = vunpack.c.h.b16 %v421
      %v790 = vunpack.c.l.b16 %v422
      %v791 = vunpack.c.h.b16 %v422
      %v792 = vunpack.c.l.b16 %v423
      %v793 = vunpack.c.h.b16 %v423
      %v794 = vunpack.c.l.b16 %v424
      %v795 = vunpack.c.h.b16 %v424
      %v796 = vunpack.c.l.b16 %v425
      %v797 = vunpack.c.h.b16 %v425
      %v798 = vunpack.c.l.b16 %v426
      %v799 = vunpack.c.h.b16 %v426
      %v800 = vunpack.c.l.b16 %v427
      %v801 = vunpack.c.h.b16 %v427
      %v802 = vunpack.c.l.b16 %v428
      %v803 = vunpack.c.h.b16 %v428
      %v804 = vunpack.c.l.b16 %v429
      %v805 = vunpack.c.h.b16 %v429
      %v806 = vunpack.c.l.b16 %v430
      %v807 = vunpack.c.h.b16 %v430
      %v808 = vunpack.c.l.b16 %v431
      %v809 = vunpack.c.h.b16 %v431
      %v810 = vunpack.c.l.b16 %v432
      %v811 = vunpack.c.h.b16 %v432
      %v812 = vunpack.c.l.b16 %v433
      %v813 = vunpack.c.h.b16 %v433
      %v814 = vunpack.c.l.b16 %v434
      %v815 = vunpack.c.h.b16 %v434
      %v816 = vunpack.c.l.b16 %v435
      %v817 = vunpack.c.h.b16 %v435
      %v818 = vunpack.c.l.b16 %v436
      %v819 = vunpack.c.h.b16 %v436
      %v820 = vunpack.c.l.b16 %v437
      %v821 = vunpack.c.h.b16 %v437
      %v822 = vunpack.c.l.b16 %v438
      %v823 = vunpack.c.h.b16 %v438
      %v824 = vunpack.c.l.b16 %v439
      %v825 = vunpack.c.h.b16 %v439
      %v826 = vunpack.c.l.b16 %v440
      %v827 = vunpack.c.h.b16 %v440
      %v828 = vunpack.c.l.b16 %v441
      %v829 = vunpack.c.h.b16 %v441
      %v830 = vunpack.c.l.b16 %v442
      %v831 = vunpack.c.h.b16 %v442
      %v832 = vunpack.c.l.b16 %v443
      %v833 = vunpack.c.h.b16 %v443
      %v834 = vunpack.c.l.b16 %v444
      %v835 = vunpack.c.h.b16 %v444
      %v836 = vunpack.c.l.b16 %v445
      %v837 = vunpack.c.h.b16 %v445
      %v838 = vunpack.c.l.b16 %v446
      %v839 = vunpack.c.h.b16 %v446
      %v840 = vunpack.c.l.b16 %v447
      %v841 = vunpack.c.h.b16 %v447
      %v842 = vunpack.c.l.b16 %v448
      %v843 = vunpack.c.h.b16 %v448
      %v844 = vunpack.c.l.b16 %v449
      %v845 = vunpack.c.h.b16 %v449
      %v846 = vunpack.c.l.b16 %v450
      %v847 = vunpack.c.h.b16 %v450
      %v848 = vunpack.c.l.b16 %v451
      %v849 = vunpack.c.h.b16 %v451
      %v850 = vunpack.c.l.b16 %v452
      %v851 = vunpack.c.h.b16 %v452
      %v852 = vunpack.c.l.b16 %v453
      %v853 = vunpack.c.h.b16 %v453
      %v854 = vunpack.c.l.b16 %v454
      %v855 = vunpack.c.h.b16 %v454
      %v856 = vunpack.c.l.b16 %v455
      %v857 = vunpack.c.h.b16 %v455
      %v858 = vunpack.c.l.b16 %v456
      %v859 = vunpack.c.h.b16 %v456
      %v860 = vunpack.c.l.b16 %v457
      %v861 = vunpack.c.h.b16 %v457
      %v862 = vunpack.c.l.b16 %v458
      %v863 = vunpack.c.h.b16 %v458
      %v864 = vunpack.c.l.b16 %v459
      %v865 = vunpack.c.h.b16 %v459
      %v866 = vunpack.c.l.b16 %v460
      %v867 = vunpack.c.h.b16 %v460
      %v868 = vunpack.c.l.b16 %v461
      %v869 = vunpack.c.h.b16 %v461
      %v870 = vunpack.c.l.b16 %v462
      %v871 = vunpack.c.h.b16 %v462
      %v872 = vunpack.c.l.b16 %v463
      %v873 = vunpack.c.h.b16 %v463
      %v874 = vunpack.c.l.b16 %v464
      %v875 = vunpack.c.h.b16 %v464
      %v876 = vunpack.c.l.b16 %v465
      %v877 = vunpack.c.h.b16 %v465
      %v878 = vunpack.c.l.b16 %v466
      %v879 = vunpack.c.h.b16 %v466
      %v880 = vpack.c.b16 %v628, %v624
      %v881 = vpack.c.b16 %v629, %v625
      %v882 = vpack.c.b16 %v630, %v626
      %v883 = vpack.c.b16 %v631, %v627
      %v884 = vpack.c.b16 %v636, %v632
      %v885 = vpack.c.b16 %v637, %v633
      %v886 = vpack.c.b16 %v638, %v634
      %v887 = vpack.c.b16 %v639, %v635
      %v888 = vpack.c.b16 %v644, %v640
      %v889 = vpack.c.b16 %v645, %v641
      %v890 = vpack.c.b16 %v646, %v642
      %v891 = vpack.c.b16 %v647, %v643
      %v892 = vpack.c.b16 %v652, %v648
      %v893 = vpack.c.b16 %v653, %v649
      %v894 = vpack.c.b16 %v654, %v650
      %v895 = vpack.c.b16 %v655, %v651
      %v896 = vpack.c.b16 %v660, %v656
      %v897 = vpack.c.b16 %v661, %v657
      %v898 = vpack.c.b16 %v662, %v658
      %v899 = vpack.c.b16 %v663, %v659
      %v900 = vpack.c.b16 %v668, %v664
      %v901 = vpack.c.b16 %v669, %v665
      %v902 = vpack.c.b16 %v670, %v666
      %v903 = vpack.c.b16 %v671, %v667
      %v904 = vpack.c.b16 %v676, %v672
      %v905 = vpack.c.b16 %v677, %v673
      %v906 = vpack.c.b16 %v678, %v674
      %v907 = vpack.c.b16 %v679, %v675
      %v908 = vpack.c.b16 %v684, %v680
      %v909 = vpack.c.b16 %v685, %v681
      %v910 = vpack.c.b16 %v686, %v682
      %v911 = vpack.c.b16 %v687, %v683
      %v912 = vpack.c.b16 %v692, %v688
      %v913 = vpack.c.b16 %v693, %v689
      %v914 = vpack.c.b16 %v694, %v690
      %v915 = vpack.c.b16 %v695, %v691
      %v916 = vpack.c.b16 %v700, %v696
      %v917 = vpack.c.b16 %v701, %v697
      %v918 = vpack.c.b16 %v702, %v698
      %v919 = vpack.c.b16 %v703, %v699
      %v920 = vpack.c.b16 %v708, %v704
      %v921 = vpack.c.b16 %v709, %v705
      %v922 = vpack.c.b16 %v710, %v706
      %v923 = vpack.c.b16 %v711, %v707
      %v924 = vpack.c.b16 %v716, %v712
      %v925 = vpack.c.b16 %v717, %v713
      %v926 = vpack.c.b16 %v718, %v714
      %v927 = vpack.c.b16 %v719, %v715
      %v928 = vpack.c.b16 %v724, %v720
      %v929 = vpack.c.b16 %v725, %v721
      %v930 = vpack.c.b16 %v726, %v722
      %v931 = vpack.c.b16 %v727, %v723
      %v932 = vpack.c.b16 %v732, %v728
      %v933 = vpack.c.b16 %v733, %v729
      %v934 = vpack.c.b16 %v734, %v730
      %v935 = vpack.c.b16 %v735, %v731
      %v936 = vpack.c.b16 %v740, %v736
      %v937 = vpack.c.b16 %v741, %v737
      %v938 = vpack.c.b16 %v742, %v738
      %v939 = vpack.c.b16 %v743, %v739
      %v940 = vpack.c.b16 %v748, %v744
      %v941 = vpack.c.b16 %v749, %v745
      %v942 = vpack.c.b16 %v750, %v746
      %v943 = vpack.c.b16 %v751, %v747
      %v944 = vpack.c.b16 %v756, %v752
      %v945 = vpack.c.b16 %v757, %v753
      %v946 = vpack.c.b16 %v758, %v754
      %v947 = vpack.c.b16 %v759, %v755
      %v948 = vpack.c.b16 %v764, %v760
      %v949 = vpack.c.b16 %v765, %v761
      %v950 = vpack.c.b16 %v766, %v762
      %v951 = vpack.c.b16 %v767, %v763
      %v952 = vpack.c.b16 %v772, %v768
      %v953 = vpack.c.b16 %v773, %v769
      %v954 = vpack.c.b16 %v774, %v770
      %v955 = vpack.c.b16 %v775, %v771
      %v956 = vpack.c.b16 %v780, %v776
      %v957 = vpack.c.b16 %v781, %v777
      %v958 = vpack.c.b16 %v782, %v778
      %v959 = vpack.c.b16 %v783, %v779
      %v960 = vpack.c.b16 %v788, %v784
      %v961 = vpack.c.b16 %v789, %v785
      %v962 = vpack.c.b16 %v790, %v786
      %v963 = vpack.c.b16 %v791, %v787
      %v964 = vpack.c.b16 %v796, %v792
      %v965 = vpack.c.b16 %v797, %v793
      %v966 = vpack.c.b16 %v798, %v794
      %v967 = vpack.c.b16 %v799, %v795
      %v968 = vpack.c.b16 %v804, %v800
      %v969 = vpack.c.b16 %v805, %v801
      %v970 = vpack.c.b16 %v806, %v802
      %v971 = vpack.c.b16 %v807, %v803
      %v972 = vpack.c.b16 %v812, %v808
      %v973 = vpack.c.b16 %v813, %v809
      %v974 = vpack.c.b16 %v814, %v810
      %v975 = vpack.c.b16 %v815, %v811
      %v976 = vpack.c.b16 %v820, %v816
      %v977 = vpack.c.b16 %v821, %v817
      %v978 = vpack.c.b16 %v822, %v818
      %v979 = vpack.c.b16 %v823, %v819
      %v980 = vpack.c.b16 %v828, %v824
      %v981 = vpack.c.b16 %v829, %v825
      %v982 = vpack.c.b16 %v830, %v826
      %v983 = vpack.c.b16 %v831, %v827
      %v984 = vpack.c.b16 %v836, %v832
      %v985 = vpack.c.b16 %v837, %v833
      %v986 = vpack.c.b16 %v838, %v834
      %v987 = vpack.c.b16 %v839, %v835
      %v988 = vpack.c.b16 %v844, %v840
      %v989 = vpack.c.b16 %v845, %v841
      %v990 = vpack.c.b16 %v846, %v842
      %v991 = vpack.c.b16 %v847, %v843
      %v992 = vpack.c.b16 %v852, %v848
      %v993 = vpack.c.b16 %v853, %v849
      %v994 = vpack.c.b16 %v854, %v850
      %v995 = vpack.c.b16 %v855, %v851
      %v996 = vpack.c.b16 %v860, %v856
      %v997 = vpack.c.b16 %v861, %v857
      %v998 = vpack.c.b16 %v862, %v858
      %v999 = vpack.c.b16 %v863, %v859
      %v1000 = vpack.c.b16 %v868, %v864
      %v1001 = vpack.c.b16 %v869, %v865
      %v1002 = vpack.c.b16 %v870, %v866
      %v1003 = vpack.c.b16 %v871, %v867
      %v1004 = vpack.c.b16 %v876, %v872
      %v1005 = vpack.c.b16 %v877, %v873
      %v1006 = vpack.c.b16 %v878, %v874
      %v1007 = vpack.c.b16 %v879, %v875
      %1136 = vmatprep.subr.bf16.mxu0 %v881
      %1137 = vmatpush1.bf16.msra.mxu0 %v880
      %1138 = vmatprep.subr.bf16.mxu0 %v885
      %1139 = vmatpush1.bf16.msra.mxu0 %v884
      %1140 = vmatprep.subr.bf16.mxu0 %v889
      %1141 = vmatpush1.bf16.msra.mxu0 %v888
      %1142 = vmatprep.subr.bf16.mxu0 %v893
      %1143 = vmatpush1.bf16.msra.mxu0 %v892
      %1144 = vmatprep.subr.bf16.mxu0 %v897
      %1145 = vmatpush1.bf16.msra.mxu0 %v896
      %1146 = vmatprep.subr.bf16.mxu0 %v901
      %1147 = vmatpush1.bf16.msra.mxu0 %v900
      %1148 = vmatprep.subr.bf16.mxu0 %v905
      %1149 = vmatpush1.bf16.msra.mxu0 %v904
      %1150 = vmatprep.subr.bf16.mxu0 %v909
      %1151 = vmatpush1.bf16.msra.mxu0 %v908
      %1152 = vmatprep.subr.bf16.mxu0 %v913
      %1153 = vmatpush1.bf16.msra.mxu0 %v912
      %1154 = vmatprep.subr.bf16.mxu0 %v917
      %1155 = vmatpush1.bf16.msra.mxu0 %v916
      %1156 = vmatprep.subr.bf16.mxu0 %v921
      %1157 = vmatpush1.bf16.msra.mxu0 %v920
      %1158 = vmatprep.subr.bf16.mxu0 %v925
      %1159 = vmatpush1.bf16.msra.mxu0 %v924
      %1160 = vmatprep.subr.bf16.mxu0 %v929
      %1161 = vmatpush1.bf16.msra.mxu0 %v928
      %1162 = vmatprep.subr.bf16.mxu0 %v933
      %1163 = vmatpush1.bf16.msra.mxu0 %v932
      %1164 = vmatprep.subr.bf16.mxu0 %v937
      %1165 = vmatpush1.bf16.msra.mxu0 %v936
      %1166 = vmatprep.subr.bf16.mxu0 %v941
      %1167 = vmatpush1.bf16.msra.mxu0 %v940
      %1168 = vmatprep.mubr.bf16.mxu0 %v489
      %1169 = vmatmul.mubr.bf16.gmra.mrb[0].mxu0 %v482
      %v1170 = vpop.f32.mrb[0].mxu0
      %v1171 = vadd.f32 0.0, %v1170
      %v1172 = vpop.f32.mrb[0].mxu0
      %v1173 = vadd.f32 0.0, %v1172
      %v1174 = vpop.f32.mrb[0].mxu0
      %v1175 = vpop.f32.mrb[0].mxu0
      %1176 = vdwg.mxu0
      %1177 = vmatprep.subr.bf16.mxu0 %v945
      %1178 = vmatpush1.bf16.msra.mxu0 %v944
      %1179 = vmatprep.subr.bf16.mxu0 %v949
      %1180 = vmatpush1.bf16.msra.mxu0 %v948
      %1181 = vmatprep.subr.bf16.mxu0 %v953
      %1182 = vmatpush1.bf16.msra.mxu0 %v952
      %1183 = vmatprep.subr.bf16.mxu0 %v957
      %1184 = vmatpush1.bf16.msra.mxu0 %v956
      %1185 = vmatprep.subr.bf16.mxu0 %v961
      %1186 = vmatpush1.bf16.msra.mxu0 %v960
      %1187 = vmatprep.subr.bf16.mxu0 %v965
      %1188 = vmatpush1.bf16.msra.mxu0 %v964
      %1189 = vmatprep.subr.bf16.mxu0 %v969
      %1190 = vmatpush1.bf16.msra.mxu0 %v968
      %1191 = vmatprep.subr.bf16.mxu0 %v973
      %1192 = vmatpush1.bf16.msra.mxu0 %v972
      %1193 = vmatprep.subr.bf16.mxu0 %v977
      %1194 = vmatpush1.bf16.msra.mxu0 %v976
      %1195 = vmatprep.subr.bf16.mxu0 %v981
      %1196 = vmatpush1.bf16.msra.mxu0 %v980
      %1197 = vmatprep.subr.bf16.mxu0 %v985
      %1198 = vmatpush1.bf16.msra.mxu0 %v984
      %1199 = vmatprep.subr.bf16.mxu0 %v989
      %1200 = vmatpush1.bf16.msra.mxu0 %v988
      %1201 = vmatprep.subr.bf16.mxu0 %v993
      %1202 = vmatpush1.bf16.msra.mxu0 %v992
      %1203 = vmatprep.subr.bf16.mxu0 %v997
      %1204 = vmatpush1.bf16.msra.mxu0 %v996
      %1205 = vmatprep.subr.bf16.mxu0 %v1001
      %1206 = vmatpush1.bf16.msra.mxu0 %v1000
      %1207 = vmatprep.subr.bf16.mxu0 %v1005
      %1208 = vmatpush1.bf16.msra.mxu0 %v1004
      %1209 = vmatprep.mubr.bf16.mxu0 %v491
      %1210 = vmatmul.mubr.bf16.gmra.mrb[0].mxu0 %v490
      %v1211 = vpop.f32.mrb[0].mxu0
      %v1212 = vadd.f32 %v1171, %v1211
      %v1213 = vpop.f32.mrb[0].mxu0
      %v1214 = vadd.f32 %v1173, %v1213
      %v1215 = vpop.f32.mrb[0].mxu0
      %v1216 = vpop.f32.mrb[0].mxu0
      %1217 = vdwg.mxu0
      %1218 = vmatprep.subr.bf16.mxu0 %v883
      %1219 = vmatpush1.bf16.msra.mxu0 %v882
      %1220 = vmatprep.subr.bf16.mxu0 %v887
      %1221 = vmatpush1.bf16.msra.mxu0 %v886
      %1222 = vmatprep.subr.bf16.mxu0 %v891
      %1223 = vmatpush1.bf16.msra.mxu0 %v890
      %1224 = vmatprep.subr.bf16.mxu0 %v895
      %1225 = vmatpush1.bf16.msra.mxu0 %v894
      %1226 = vmatprep.subr.bf16.mxu0 %v899
      %1227 = vmatpush1.bf16.msra.mxu0 %v898
      %1228 = vmatprep.subr.bf16.mxu0 %v903
      %1229 = vmatpush1.bf16.msra.mxu0 %v902
      %1230 = vmatprep.subr.bf16.mxu0 %v907
      %1231 = vmatpush1.bf16.msra.mxu0 %v906
      %1232 = vmatprep.subr.bf16.mxu0 %v911
      %1233 = vmatpush1.bf16.msra.mxu0 %v910
      %1234 = vmatprep.subr.bf16.mxu0 %v915
      %1235 = vmatpush1.bf16.msra.mxu0 %v914
      %1236 = vmatprep.subr.bf16.mxu0 %v919
      %1237 = vmatpush1.bf16.msra.mxu0 %v918
      %1238 = vmatprep.subr.bf16.mxu0 %v923
      %1239 = vmatpush1.bf16.msra.mxu0 %v922
      %1240 = vmatprep.subr.bf16.mxu0 %v927
      %1241 = vmatpush1.bf16.msra.mxu0 %v926
      %1242 = vmatprep.subr.bf16.mxu0 %v931
      %1243 = vmatpush1.bf16.msra.mxu0 %v930
      %1244 = vmatprep.subr.bf16.mxu0 %v935
      %1245 = vmatpush1.bf16.msra.mxu0 %v934
      %1246 = vmatprep.subr.bf16.mxu0 %v939
      %1247 = vmatpush1.bf16.msra.mxu0 %v938
      %1248 = vmatprep.subr.bf16.mxu0 %v943
      %1249 = vmatpush1.bf16.msra.mxu0 %v942
      %1250 = vmatprep.mubr.bf16.mxu0 %v489
      %1251 = vmatmul.mubr.bf16.gmra.mrb[0].mxu0 %v482
      %v1252 = vpop.f32.mrb[0].mxu0
      %v1253 = vadd.f32 0.0, %v1252
      %v1254 = vpop.f32.mrb[0].mxu0
      %v1255 = vadd.f32 0.0, %v1254
      %v1256 = vpop.f32.mrb[0].mxu0
      %v1257 = vpop.f32.mrb[0].mxu0
      %1258 = vdwg.mxu0
      %1259 = vmatprep.subr.bf16.mxu0 %v947
      %1260 = vmatpush1.bf16.msra.mxu0 %v946
      %1261 = vmatprep.subr.bf16.mxu0 %v951
      %1262 = vmatpush1.bf16.msra.mxu0 %v950
      %1263 = vmatprep.subr.bf16.mxu0 %v955
      %1264 = vmatpush1.bf16.msra.mxu0 %v954
      %1265 = vmatprep.subr.bf16.mxu0 %v959
      %1266 = vmatpush1.bf16.msra.mxu0 %v958
      %1267 = vmatprep.subr.bf16.mxu0 %v963
      %1268 = vmatpush1.bf16.msra.mxu0 %v962
      %1269 = vmatprep.subr.bf16.mxu0 %v967
      %1270 = vmatpush1.bf16.msra.mxu0 %v966
      %1271 = vmatprep.subr.bf16.mxu0 %v971
      %1272 = vmatpush1.bf16.msra.mxu0 %v970
      %1273 = vmatprep.subr.bf16.mxu0 %v975
      %1274 = vmatpush1.bf16.msra.mxu0 %v974
      %1275 = vmatprep.subr.bf16.mxu0 %v979
      %1276 = vmatpush1.bf16.msra.mxu0 %v978
      %1277 = vmatprep.subr.bf16.mxu0 %v983
      %1278 = vmatpush1.bf16.msra.mxu0 %v982
      %1279 = vmatprep.subr.bf16.mxu0 %v987
      %1280 = vmatpush1.bf16.msra.mxu0 %v986
      %1281 = vmatprep.subr.bf16.mxu0 %v991
      %1282 = vmatpush1.bf16.msra.mxu0 %v990
      %1283 = vmatprep.subr.bf16.mxu0 %v995
      %1284 = vmatpush1.bf16.msra.mxu0 %v994
      %1285 = vmatprep.subr.bf16.mxu0 %v999
      %1286 = vmatpush1.bf16.msra.mxu0 %v998
      %1287 = vmatprep.subr.bf16.mxu0 %v1003
      %1288 = vmatpush1.bf16.msra.mxu0 %v1002
      %1289 = vmatprep.subr.bf16.mxu0 %v1007
      %1290 = vmatpush1.bf16.msra.mxu0 %v1006
      %1291 = vmatprep.mubr.bf16.mxu0 %v491
      %1292 = vmatmul.mubr.bf16.gmra.mrb[0].mxu0 %v490
      %v1293 = vpop.f32.mrb[0].mxu0
      %v1294 = vadd.f32 %v1253, %v1293
      %v1295 = vpop.f32.mrb[0].mxu0
      %v1296 = vadd.f32 %v1255, %v1295
      %v1297 = vpop.f32.mrb[0].mxu0
      %v1298 = vpop.f32.mrb[0].mxu0
      %1299 = vdwg.mxu0
      %v1304 = vcombine.low %v1212, %v1214
      %v1305 = vcombine.low %v1294, %v1296
      %v1307 = vunpack.c.l.s4 1983009808
      %v1308 = vunpack.c.0.s8 %v1307
      %v1309 = vlaneseq
      %v1310 = vshrl.u32 %v1309, 7
      %v1311 = vsub.s32 %v1308, %v1310
      %v1312 = vrot.slane %v1304, %v1311
      %v1314 = vunpack.c.l.s4 1983009808
      %v1315 = vunpack.c.0.s8 %v1314
      %v1316 = vlaneseq
      %v1317 = vshrl.u32 %v1316, 7
      %v1318 = vsub.s32 %v1315, %v1317
      %v1319 = vrot.slane %v1305, %v1318
      %v1320 = vcombine.low %v1312, %v1319
      %v1322 = vadd.f32 %v337, %v1320
      %1323 = vst [vmem:[#allocation2] sm:$0xff] %v1322
      %p1324 = scmp.eq.s32.totalorder %s22, 8
      // Predicated region
      $region41: #{forward.39} parent=35 // pred_check
        %p1325 = pneg %p1324
      $region42: #{forward.39} parent=35 // pred_check_branch
        %1327 = sbr.rel (%p1325) target = $region44
      $region43: #{forward.39} parent=35 // pred_region
        %v1328 = vld [vmem:[#allocation2] sm:$0xff]
        %v1329 = vld [vmem:[%s312] sm:$0xf]
        %v1331 = vlaneseq
        %v1332 = vshrl.u32 %v1331, 7
        %v1333 = vsub.s32 0, %v1332
        %v1334 = vrot.slane %v1329, %v1333
        %v1335 = vlaneseq
        %v1336 = vshrl.u32 %v1335, 7
        %v1337 = vsub.s32 1, %v1336
        %v1338 = vrot.slane %v1329, %v1337
        %v1339 = vlaneseq
        %v1340 = vshrl.u32 %v1339, 7
        %v1341 = vsub.s32 2, %v1340
        %v1342 = vrot.slane %v1329, %v1341
        %v1343 = vlaneseq
        %v1344 = vshrl.u32 %v1343, 7
        %v1345 = vsub.s32 3, %v1344
        %v1346 = vrot.slane %v1329, %v1345
        %v1347 = vcombine.low %v1334, %v1338
        %v1348 = vcombine.low %v1342, %v1346
        %v1350 = vunpack.c.l.s4 1983009808
        %v1351 = vunpack.c.0.s8 %v1350
        %v1352 = vlaneseq
        %v1353 = vshrl.u32 %v1352, 7
        %v1354 = vsub.s32 %v1351, %v1353
        %v1355 = vrot.slane %v1347, %v1354
        %v1357 = vunpack.c.l.s4 1983009808
        %v1358 = vunpack.c.0.s8 %v1357
        %v1359 = vlaneseq
        %v1360 = vshrl.u32 %v1359, 7
        %v1361 = vsub.s32 %v1358, %v1360
        %v1362 = vrot.slane %v1348, %v1361
        %v1363 = vcombine.low %v1355, %v1362
        %v1365 = vadd.f32 %v1328, %v1363
        %v1366 = vld [vmem:[%s321] sm:$0xf]
        %v1367 = vunpack.c.l.bf16 %v1366
        %v1368 = vadd.f32 %v1365, %v1367
        %v1369 = vmax.f32 %v1368, 0.0
        %v1371 = vcombine.high %v1369, %v1369
        %v1373 = vunpack.c.l.s4 1983009808
        %v1374 = vunpack.c.0.s8 %v1373
        %v1375 = vlaneseq
        %v1376 = vshrl.u32 %v1375, 7
        %v1377 = vsub.s32 %v1374, %v1376
        %v1378 = vrot.slane %v1369, %v1377
        %v1380 = vunpack.c.l.s4 1983009808
        %v1381 = vunpack.c.0.s8 %v1380
        %v1382 = vlaneseq
        %v1383 = vshrl.u32 %v1382, 7
        %v1384 = vsub.s32 %v1381, %v1383
        %v1385 = vrot.slane %v1371, %v1384
        %v1386 = vcombine.high %v1378, %v1378
        %v1387 = vcombine.high %v1385, %v1385
        %v1392 = vpack.c.bf16 %v1378, %v1378
        %v1393 = vpack.c.bf16 %v1386, %v1386
        %v1394 = vpack.c.bf16 %v1385, %v1385
        %v1395 = vpack.c.bf16 %v1387, %v1387
        %v1400 = vcombine.low %v1392, %v1393
        %v1401 = vcombine.low %v1394, %v1395
        %v1403 = vunpack.c.l.s4 1966171168
        %v1404 = vunpack.c.0.s8 %v1403
        %v1405 = vlaneseq
        %v1406 = vshrl.u32 %v1405, 7
        %v1407 = vsub.s32 %v1404, %v1406
        %v1408 = vrot.slane %v1400, %v1407
        %v1410 = vunpack.c.l.s4 1966171168
        %v1411 = vunpack.c.0.s8 %v1410
        %v1412 = vlaneseq
        %v1413 = vshrl.u32 %v1412, 7
        %v1414 = vsub.s32 %v1411, %v1413
        %v1415 = vrot.slane %v1401, %v1414
        %v1416 = vcombine.low %v1408, %v1415
        %v1418 = vunpack.c.l.s4 1966171168
        %v1419 = vunpack.c.0.s8 %v1418
        %v1420 = vlaneseq
        %v1421 = vshrl.u32 %v1420, 7
        %v1422 = vsub.s32 %v1419, %v1421
        %v1423 = vrot.slane %v1416, %v1422
        %1425 = vst [vmem:[%s330] sm:$0xf] %v1423
      $region44: #{forward.39} parent=35 // pred_fallthru
        _
      %s1426 = smul.u32 4, %s21
      %p1427 = scmp.lt.s32.totalorder %s20, 0
      %s1428 = scalar_select %p1427, %s20, 0
      %p1429 = scmp.lt.s32.totalorder %s1426, 3
      %s1430 = scalar_select %p1429, %s1426, 3
      %s1431 = smul.addr %s1428, 4
      %s1432 = sadd.s32 %s1430, %s1431
      %s1433 = scalar_lea.vmem %s4, %s1432
      // Predicated region
      $region45: #{forward.39} parent=35 // pred_check
        %p1434 = pneg %p164
      $region46: #{forward.39} parent=35 // pred_check_branch
        %1436 = sbr.rel (%p1434) target = $region48
      $region47: #{forward.39} parent=35 // pred_region
        %s1437 = smul.u32 4, %s21
      $region48: #{forward.39} parent=35 // pred_fallthru
        _
      // Predicated region
      $region49: #{forward.39} parent=35 // pred_check
        %p1438 = pneg %p164
      $region50: #{forward.39} parent=35 // pred_check_branch
        %1440 = sbr.rel (%p1438) target = $region52
      $region51: #{forward.39} parent=35 // pred_region
        %s1441 = smul.u32 4, %s21
        %p1442 = scmp.lt.s32.totalorder %s20, 0
        %s1443 = scalar_select %p1442, %s20, 0
        %p1444 = scmp.lt.s32.totalorder %s1441, 3
        %s1445 = scalar_select %p1444, %s1441, 3
        %s1446 = smul.addr %s1443, 4
        %s1447 = sadd.s32 %s1445, %s1446
        %s1448 = scalar_lea.vmem %s4, %s1447
      $region52: #{forward.39} parent=35 // pred_fallthru
        _
    $region36: #{forward.39} parent=5 // pred_fallthru
      _
    %p1449 = scmp.le.s32.totalorder 2, %s10
    // Predicated region
    $region53: #{forward.39} parent=5 // pred_check
      %p1450 = pneg %p1449
    $region54: #{forward.39} parent=5 // pred_check_branch
      %1452 = sbr.rel (%p1450) target = $region56
    $region55: #{forward.39} parent=5 // pred_region
      %s1453 = ssub.s32 %s10, 2
    $region56: #{forward.39} parent=5 // pred_fallthru
      _
  $region6: #{forward.39} parent=0 // loop_footer
    %s14 = sadd.s32 1, %s10
  $region7: #{forward.39} parent=0 // loop_footer_branch
    %9 = sbr.rel target = $region3
  $region8: #{forward.39} parent=0 // loop_exit
    _

// kernel: forward.41
$region0: #{forward.41}
  #allocation0 [shape = 'u32[]', space=smem, size = 0x4, offset = 0x4, fixed_abs, tag = 'smem constant byte address 0x4 - core index']
  #allocation1 [shape = 'u32[144,128]{1,0:T(1,128)}', space=vmem, size = 0x12000, scoped, tag = 'internal scratch']
  #allocation2 [shape = 'f32[2,128]{1,0:T(2,128)}', space=vmem, size = 0x400, scoped, tag = 'scratch operand']
  %s0 = inlined_call_operand.vmem [shape: bf16[2,512], index: 0, kind: input, shape index: {}]
  %s1 = inlined_call_operand.vmem [shape: bf16[512,128], index: 1, kind: input, shape index: {}]
  %s2 = inlined_call_operand.vmem [shape: f32[1,128], index: 2, kind: input, shape index: {}]
  %s3 = inlined_call_operand.hbm [shape: f32[2,128], index: 3, kind: output, shape index: {}]
  %s4 = sld [smem:[#allocation0]]
  $region30: #{forward.41} parent=0
    _
  %s6 = ssub.s32 1, %s4
  %s7 = scalar_select 0, %s6, %s4
  $region1: #{forward.41} parent=0
    #allocation3 [shape = 'u8[1024]{0}', space=vmem, size = 0x400, scoped, tag = 'output window, operand 0, single buffered']
    #allocation4 [shape = 's32[1]{0}', space=sflag, size = 0x4, scoped, tag = 'scoped memory for forward.41']
    %8 = vsyncpa [#allocation4], 0
    // Predicated region
    $region2: #{forward.41} parent=1 // pred_check
      _
    $region3: #{forward.41} parent=1 // pred_check_branch
      %10 = sbr.rel (0) target = $region5
    $region4: #{forward.41} parent=1 // pred_region
      _
    $region5: #{forward.41} parent=1 // pred_fallthru
      _
    // Predicated region
    $region6: #{forward.41} parent=1 // pred_check
      _
    $region7: #{forward.41} parent=1 // pred_check_branch
      %12 = sbr.rel (0) target = $region9
    $region8: #{forward.41} parent=1 // pred_region
      _
    $region9: #{forward.41} parent=1 // pred_fallthru
      _
    // Predicated region
    $region10: #{forward.41} parent=1 // pred_check
      _
    $region11: #{forward.41} parent=1 // pred_check_branch
      %14 = sbr.rel (0) target = $region13
    $region12: #{forward.41} parent=1 // pred_region
      _
    $region13: #{forward.41} parent=1 // pred_fallthru
      _
    %p16 = scmp.eq.s32.totalorder 0, 0
    // Predicated region
    $region14: #{forward.41} parent=1 // pred_check
      %p17 = pneg %p16
    $region15: #{forward.41} parent=1 // pred_check_branch
      %19 = sbr.rel (%p17) target = $region17
    $region16: #{forward.41} parent=1 // pred_region
      %20 = vst [vmem:[#allocation2] sm:$0x3] 0.0
    $region17: #{forward.41} parent=1 // pred_fallthru
      _
    %v21 = vld [vmem:[#allocation2] sm:$0x3]
    %v22 = vld [vmem:[%s0] sm:$0xf]
    %v23 = vld [vmem:[%s1] sm:$0xf]
    %v24 = vld [vmem:[%s1 + $0x4] sm:$0xf]
    %v25 = vld [vmem:[%s1 + $0x8] sm:$0xf]
    %v26 = vld [vmem:[%s1 + $0xc] sm:$0xf]
    %v27 = vld [vmem:[%s1 + $0x10] sm:$0xf]
    %v28 = vld [vmem:[%s1 + $0x14] sm:$0xf]
    %v29 = vld [vmem:[%s1 + $0x18] sm:$0xf]
    %v30 = vld [vmem:[%s1 + $0x1c] sm:$0xf]
    %v31 = vld [vmem:[%s1 + $0x20] sm:$0xf]
    %v32 = vld [vmem:[%s1 + $0x24] sm:$0xf]
    %v33 = vld [vmem:[%s1 + $0x28] sm:$0xf]
    %v34 = vld [vmem:[%s1 + $0x2c] sm:$0xf]
    %v35 = vld [vmem:[%s1 + $0x30] sm:$0xf]
    %v36 = vld [vmem:[%s1 + $0x34] sm:$0xf]
    %v37 = vld [vmem:[%s1 + $0x38] sm:$0xf]
    %v38 = vld [vmem:[%s1 + $0x3c] sm:$0xf]
    %v39 = vld [vmem:[%s1 + $0x40] sm:$0xf]
    %v40 = vld [vmem:[%s1 + $0x44] sm:$0xf]
    %v41 = vld [vmem:[%s1 + $0x48] sm:$0xf]
    %v42 = vld [vmem:[%s1 + $0x4c] sm:$0xf]
    %v43 = vld [vmem:[%s1 + $0x50] sm:$0xf]
    %v44 = vld [vmem:[%s1 + $0x54] sm:$0xf]
    %v45 = vld [vmem:[%s1 + $0x58] sm:$0xf]
    %v46 = vld [vmem:[%s1 + $0x5c] sm:$0xf]
    %v47 = vld [vmem:[%s1 + $0x60] sm:$0xf]
    %v48 = vld [vmem:[%s1 + $0x64] sm:$0xf]
    %v49 = vld [vmem:[%s1 + $0x68] sm:$0xf]
    %v50 = vld [vmem:[%s1 + $0x6c] sm:$0xf]
    %v51 = vld [vmem:[%s1 + $0x70] sm:$0xf]
    %v52 = vld [vmem:[%s1 + $0x74] sm:$0xf]
    %v53 = vld [vmem:[%s1 + $0x78] sm:$0xf]
    %v54 = vld [vmem:[%s1 + $0x7c] sm:$0xf]
    %v55 = vld [vmem:[%s1 + $0x80] sm:$0xf]
    %v56 = vld [vmem:[%s1 + $0x84] sm:$0xf]
    %v57 = vld [vmem:[%s1 + $0x88] sm:$0xf]
    %v58 = vld [vmem:[%s1 + $0x8c] sm:$0xf]
    %v59 = vld [vmem:[%s1 + $0x90] sm:$0xf]
    %v60 = vld [vmem:[%s1 + $0x94] sm:$0xf]
    %v61 = vld [vmem:[%s1 + $0x98] sm:$0xf]
    %v62 = vld [vmem:[%s1 + $0x9c] sm:$0xf]
    %v63 = vld [vmem:[%s1 + $0xa0] sm:$0xf]
    %v64 = vld [vmem:[%s1 + $0xa4] sm:$0xf]
    %v65 = vld [vmem:[%s1 + $0xa8] sm:$0xf]
    %v66 = vld [vmem:[%s1 + $0xac] sm:$0xf]
    %v67 = vld [vmem:[%s1 + $0xb0] sm:$0xf]
    %v68 = vld [vmem:[%s1 + $0xb4] sm:$0xf]
    %v69 = vld [vmem:[%s1 + $0xb8] sm:$0xf]
    %v70 = vld [vmem:[%s1 + $0xbc] sm:$0xf]
    %v71 = vld [vmem:[%s1 + $0xc0] sm:$0xf]
    %v72 = vld [vmem:[%s1 + $0xc4] sm:$0xf]
    %v73 = vld [vmem:[%s1 + $0xc8] sm:$0xf]
    %v74 = vld [vmem:[%s1 + $0xcc] sm:$0xf]
    %v75 = vld [vmem:[%s1 + $0xd0] sm:$0xf]
    %v76 = vld [vmem:[%s1 + $0xd4] sm:$0xf]
    %v77 = vld [vmem:[%s1 + $0xd8] sm:$0xf]
    %v78 = vld [vmem:[%s1 + $0xdc] sm:$0xf]
    %v79 = vld [vmem:[%s1 + $0xe0] sm:$0xf]
    %v80 = vld [vmem:[%s1 + $0xe4] sm:$0xf]
    %v81 = vld [vmem:[%s1 + $0xe8] sm:$0xf]
    %v82 = vld [vmem:[%s1 + $0xec] sm:$0xf]
    %v83 = vld [vmem:[%s1 + $0xf0] sm:$0xf]
    %v84 = vld [vmem:[%s1 + $0xf4] sm:$0xf]
    %v85 = vld [vmem:[%s1 + $0xf8] sm:$0xf]
    %v86 = vld [vmem:[%s1 + $0xfc] sm:$0xf]
    %v89 = vunpack.c.l.s4 1966171168
    %v90 = vunpack.c.0.s8 %v89
    %v91 = vlaneseq
    %v92 = vshrl.u32 %v91, 7
    %v93 = vsub.s32 %v90, %v92
    %v94 = vrot.slane %v22, %v93
    %v95 = vcombine.high %v94, %v94
    %v97 = vunpack.c.l.s4 1966171168
    %v98 = vunpack.c.0.s8 %v97
    %v99 = vlaneseq
    %v100 = vshrl.u32 %v99, 7
    %v101 = vsub.s32 %v98, %v100
    %v102 = vrot.slane %v94, %v101
    %v104 = vunpack.c.l.s4 1966171168
    %v105 = vunpack.c.0.s8 %v104
    %v106 = vlaneseq
    %v107 = vshrl.u32 %v106, 7
    %v108 = vsub.s32 %v105, %v107
    %v109 = vrot.slane %v95, %v108
    %v110 = vcombine.high %v102, %v102
    %v111 = vcombine.high %v109, %v109
    %v180 = vunpack.c.l.b16 %v23
    %v181 = vunpack.c.l.b16 %v24
    %v182 = vunpack.c.l.b16 %v25
    %v183 = vunpack.c.l.b16 %v26
    %v184 = vunpack.c.l.b16 %v27
    %v185 = vunpack.c.l.b16 %v28
    %v186 = vunpack.c.l.b16 %v29
    %v187 = vunpack.c.l.b16 %v30
    %v188 = vunpack.c.l.b16 %v31
    %v189 = vunpack.c.l.b16 %v32
    %v190 = vunpack.c.l.b16 %v33
    %v191 = vunpack.c.l.b16 %v34
    %v192 = vunpack.c.l.b16 %v35
    %v193 = vunpack.c.l.b16 %v36
    %v194 = vunpack.c.l.b16 %v37
    %v195 = vunpack.c.l.b16 %v38
    %v196 = vunpack.c.l.b16 %v39
    %v197 = vunpack.c.l.b16 %v40
    %v198 = vunpack.c.l.b16 %v41
    %v199 = vunpack.c.l.b16 %v42
    %v200 = vunpack.c.l.b16 %v43
    %v201 = vunpack.c.l.b16 %v44
    %v202 = vunpack.c.l.b16 %v45
    %v203 = vunpack.c.l.b16 %v46
    %v204 = vunpack.c.l.b16 %v47
    %v205 = vunpack.c.l.b16 %v48
    %v206 = vunpack.c.l.b16 %v49
    %v207 = vunpack.c.l.b16 %v50
    %v208 = vunpack.c.l.b16 %v51
    %v209 = vunpack.c.l.b16 %v52
    %v210 = vunpack.c.l.b16 %v53
    %v211 = vunpack.c.l.b16 %v54
    %v212 = vunpack.c.l.b16 %v55
    %v213 = vunpack.c.l.b16 %v56
    %v214 = vunpack.c.l.b16 %v57
    %v215 = vunpack.c.l.b16 %v58
    %v216 = vunpack.c.l.b16 %v59
    %v217 = vunpack.c.l.b16 %v60
    %v218 = vunpack.c.l.b16 %v61
    %v219 = vunpack.c.l.b16 %v62
    %v220 = vunpack.c.l.b16 %v63
    %v221 = vunpack.c.l.b16 %v64
    %v222 = vunpack.c.l.b16 %v65
    %v223 = vunpack.c.l.b16 %v66
    %v224 = vunpack.c.l.b16 %v67
    %v225 = vunpack.c.l.b16 %v68
    %v226 = vunpack.c.l.b16 %v69
    %v227 = vunpack.c.l.b16 %v70
    %v228 = vunpack.c.l.b16 %v71
    %v229 = vunpack.c.l.b16 %v72
    %v230 = vunpack.c.l.b16 %v73
    %v231 = vunpack.c.l.b16 %v74
    %v232 = vunpack.c.l.b16 %v75
    %v233 = vunpack.c.l.b16 %v76
    %v234 = vunpack.c.l.b16 %v77
    %v235 = vunpack.c.l.b16 %v78
    %v236 = vunpack.c.l.b16 %v79
    %v237 = vunpack.c.l.b16 %v80
    %v238 = vunpack.c.l.b16 %v81
    %v239 = vunpack.c.l.b16 %v82
    %v240 = vunpack.c.l.b16 %v83
    %v241 = vunpack.c.l.b16 %v84
    %v242 = vunpack.c.l.b16 %v85
    %v243 = vunpack.c.l.b16 %v86
    %v244 = vpack.c.b16 %v181, %v180
    %v245 = vpack.c.b16 %v183, %v182
    %v246 = vpack.c.b16 %v185, %v184
    %v247 = vpack.c.b16 %v187, %v186
    %v248 = vpack.c.b16 %v189, %v188
    %v249 = vpack.c.b16 %v191, %v190
    %v250 = vpack.c.b16 %v193, %v192
    %v251 = vpack.c.b16 %v195, %v194
    %v252 = vpack.c.b16 %v197, %v196
    %v253 = vpack.c.b16 %v199, %v198
    %v254 = vpack.c.b16 %v201, %v200
    %v255 = vpack.c.b16 %v203, %v202
    %v256 = vpack.c.b16 %v205, %v204
    %v257 = vpack.c.b16 %v207, %v206
    %v258 = vpack.c.b16 %v209, %v208
    %v259 = vpack.c.b16 %v211, %v210
    %v260 = vpack.c.b16 %v213, %v212
    %v261 = vpack.c.b16 %v215, %v214
    %v262 = vpack.c.b16 %v217, %v216
    %v263 = vpack.c.b16 %v219, %v218
    %v264 = vpack.c.b16 %v221, %v220
    %v265 = vpack.c.b16 %v223, %v222
    %v266 = vpack.c.b16 %v225, %v224
    %v267 = vpack.c.b16 %v227, %v226
    %v268 = vpack.c.b16 %v229, %v228
    %v269 = vpack.c.b16 %v231, %v230
    %v270 = vpack.c.b16 %v233, %v232
    %v271 = vpack.c.b16 %v235, %v234
    %v272 = vpack.c.b16 %v237, %v236
    %v273 = vpack.c.b16 %v239, %v238
    %v274 = vpack.c.b16 %v241, %v240
    %v275 = vpack.c.b16 %v243, %v242
    %308 = vmatprep.subr.bf16.mxu0 0
    %309 = vmatpush1.bf16.msra.mxu0 %v244
    %310 = vmatprep.subr.bf16.mxu0 0
    %311 = vmatpush1.bf16.msra.mxu0 %v245
    %312 = vmatprep.subr.bf16.mxu0 0
    %313 = vmatpush1.bf16.msra.mxu0 %v246
    %314 = vmatprep.subr.bf16.mxu0 0
    %315 = vmatpush1.bf16.msra.mxu0 %v247
    %316 = vmatprep.subr.bf16.mxu0 0
    %317 = vmatpush1.bf16.msra.mxu0 %v248
    %318 = vmatprep.subr.bf16.mxu0 0
    %319 = vmatpush1.bf16.msra.mxu0 %v249
    %320 = vmatprep.subr.bf16.mxu0 0
    %321 = vmatpush1.bf16.msra.mxu0 %v250
    %322 = vmatprep.subr.bf16.mxu0 0
    %323 = vmatpush1.bf16.msra.mxu0 %v251
    %324 = vmatprep.subr.bf16.mxu0 0
    %325 = vmatpush1.bf16.msra.mxu0 %v252
    %326 = vmatprep.subr.bf16.mxu0 0
    %327 = vmatpush1.bf16.msra.mxu0 %v253
    %328 = vmatprep.subr.bf16.mxu0 0
    %329 = vmatpush1.bf16.msra.mxu0 %v254
    %330 = vmatprep.subr.bf16.mxu0 0
    %331 = vmatpush1.bf16.msra.mxu0 %v255
    %332 = vmatprep.subr.bf16.mxu0 0
    %333 = vmatpush1.bf16.msra.mxu0 %v256
    %334 = vmatprep.subr.bf16.mxu0 0
    %335 = vmatpush1.bf16.msra.mxu0 %v257
    %336 = vmatprep.subr.bf16.mxu0 0
    %337 = vmatpush1.bf16.msra.mxu0 %v258
    %338 = vmatprep.subr.bf16.mxu0 0
    %339 = vmatpush1.bf16.msra.mxu0 %v259
    %340 = vmatprep.mubr.bf16.mxu0 %v109
    %341 = vmatmul.mubr.bf16.gmra.mrb[0].mxu0 %v102
    %v342 = vpop.f32.mrb[0].mxu0
    %v343 = vadd.f32 0.0, %v342
    %v344 = vpop.f32.mrb[0].mxu0
    %v345 = vpop.f32.mrb[0].mxu0
    %v346 = vpop.f32.mrb[0].mxu0
    %347 = vdwg.mxu0
    %348 = vmatprep.subr.bf16.mxu0 0
    %349 = vmatpush1.bf16.msra.mxu0 %v260
    %350 = vmatprep.subr.bf16.mxu0 0
    %351 = vmatpush1.bf16.msra.mxu0 %v261
    %352 = vmatprep.subr.bf16.mxu0 0
    %353 = vmatpush1.bf16.msra.mxu0 %v262
    %354 = vmatprep.subr.bf16.mxu0 0
    %355 = vmatpush1.bf16.msra.mxu0 %v263
    %356 = vmatprep.subr.bf16.mxu0 0
    %357 = vmatpush1.bf16.msra.mxu0 %v264
    %358 = vmatprep.subr.bf16.mxu0 0
    %359 = vmatpush1.bf16.msra.mxu0 %v265
    %360 = vmatprep.subr.bf16.mxu0 0
    %361 = vmatpush1.bf16.msra.mxu0 %v266
    %362 = vmatprep.subr.bf16.mxu0 0
    %363 = vmatpush1.bf16.msra.mxu0 %v267
    %364 = vmatprep.subr.bf16.mxu0 0
    %365 = vmatpush1.bf16.msra.mxu0 %v268
    %366 = vmatprep.subr.bf16.mxu0 0
    %367 = vmatpush1.bf16.msra.mxu0 %v269
    %368 = vmatprep.subr.bf16.mxu0 0
    %369 = vmatpush1.bf16.msra.mxu0 %v270
    %370 = vmatprep.subr.bf16.mxu0 0
    %371 = vmatpush1.bf16.msra.mxu0 %v271
    %372 = vmatprep.subr.bf16.mxu0 0
    %373 = vmatpush1.bf16.msra.mxu0 %v272
    %374 = vmatprep.subr.bf16.mxu0 0
    %375 = vmatpush1.bf16.msra.mxu0 %v273
    %376 = vmatprep.subr.bf16.mxu0 0
    %377 = vmatpush1.bf16.msra.mxu0 %v274
    %378 = vmatprep.subr.bf16.mxu0 0
    %379 = vmatpush1.bf16.msra.mxu0 %v275
    %380 = vmatprep.mubr.bf16.mxu0 %v111
    %381 = vmatmul.mubr.bf16.gmra.mrb[0].mxu0 %v110
    %v382 = vpop.f32.mrb[0].mxu0
    %v383 = vadd.f32 %v343, %v382
    %v384 = vpop.f32.mrb[0].mxu0
    %v385 = vpop.f32.mrb[0].mxu0
    %v386 = vpop.f32.mrb[0].mxu0
    %387 = vdwg.mxu0
    %v388 = vadd.f32 %v21, %v383
    %389 = vst [vmem:[#allocation2] sm:$0x3] %v388
    // Predicated region
    $region18: #{forward.41} parent=1 // pred_check
      %p390 = pneg %p16
    $region19: #{forward.41} parent=1 // pred_check_branch
      %392 = sbr.rel (%p390) target = $region21
    $region20: #{forward.41} parent=1 // pred_region
      %v393 = vld [vmem:[#allocation2] sm:$0x3]
      %v394 = vld [vmem:[%s2] sm:$0x1]
      %v396 = vlaneseq
      %v397 = vshrl.u32 %v396, 7
      %v398 = vsub.s32 0, %v397
      %v399 = vrot.slane %v394, %v398
      %v401 = vadd.f32 %v393, %v399
      %402 = vst [vmem:[#allocation3] sm:$0x3] %v401
    $region21: #{forward.41} parent=1 // pred_fallthru
      _
    // Predicated region
    $region22: #{forward.41} parent=1 // pred_check
      _
    $region23: #{forward.41} parent=1 // pred_check_branch
      %404 = sbr.rel (0) target = $region25
    $region24: #{forward.41} parent=1 // pred_region
      %s406 = ssub.s32 32, 32
      %407 = vsyncadd [#allocation4], %s406
      %s409 = sshll.u32 [#allocation3], 4
      %s410 = int_to_ptr.vmem [resolvable:$true] %s409
      %412 = dma.vmem_to_hbm [thread:$0]  %s410, 32, %s3, [#allocation4]
    $region25: #{forward.41} parent=1 // pred_fallthru
      _
    // Predicated region
    $region26: #{forward.41} parent=1 // pred_check
      _
    $region27: #{forward.41} parent=1 // pred_check_branch
      %414 = sbr.rel (0) target = $region29
    $region28: #{forward.41} parent=1 // pred_region
      %415 = dma.done [#allocation4], 32
    $region29: #{forward.41} parent=1 // pred_fallthru
      _
    %416 = vsyncpa [#allocation4], 1

// kernel: forward.45
$region0: #{forward.45}
  #allocation0 [shape = 'u32[]', space=smem, size = 0x4, offset = 0x4, fixed_abs, tag = 'smem constant byte address 0x4 - core index']
  #allocation1 [shape = 'u32[144,128]{1,0:T(1,128)}', space=vmem, size = 0x12000, scoped, tag = 'internal scratch']
  #allocation2 [shape = 'f32[2,512]{1,0:T(2,128)}', space=vmem, size = 0x1000, scoped, tag = 'scratch operand']
  %s0 = inlined_call_operand.vmem [shape: bf16[2,1,1,9,512], index: 0, kind: input, shape index: {}, may-alias: {0,4}]
  %s1 = inlined_call_operand.vmem [shape: bf16[2,4608], index: 1, kind: input, shape index: {}]
  %s2 = inlined_call_operand.vmem [shape: bf16[4608,512], index: 2, kind: input, shape index: {}]
  %s3 = inlined_call_operand.vmem [shape: f32[1,512], index: 3, kind: input, shape index: {}]
  %s4 = inlined_call_operand.vmem [shape: bf16[2,1,1,9,512], index: 4, kind: output, shape index: {}, may-alias: {0,4}]
  %s5 = scalar_lea.vmem %s4, 16
  %s6 = sld [smem:[#allocation0]]
  $region83: #{forward.45} parent=0
    _
  %s8 = ssub.s32 1, %s6
  %s9 = scalar_select 0, %s8, %s6
  $region1: #{forward.45} parent=0
    #allocation3 [shape = 'u8[2048]{0}', space=vmem, size = 0x800, scoped, tag = 'output window, operand 0, single buffered']
    loop: start=0, step=1, limit=11
    $region2: #{forward.45} parent=1 // loop_pre_header
      _
    $region3: #{forward.45} parent=1 // loop_header
      %s11 = sphi 0, %s15
      %p12 = scmp.ge.s32.totalorder %s11, 11
      %s18 = sphi 0, %s37
      %s19 = sphi 0, %s33
      %s20 = sphi 0, %s29
      %s21 = sphi 0, %s18
      %s22 = sphi 0, %s19
      %s23 = sphi 0, %s20
      %s24 = sphi 0, %s21
      %s25 = sphi 0, %s22
      %s26 = sphi 0, %s23
      %s42 = sphi 0, %s44
      %s45 = sphi 0, %s42
      %s46 = sphi 0, %s45
      %s62 = sphi 0, %s46
      %s70 = sphi 0, %s72
      %s73 = sphi 0, %s70
      %s74 = sphi 0, %s73
      %s90 = sphi 0, %s74
      %s96 = sphi 0, %s98
      %s99 = sphi 0, %s96
      %s100 = sphi 0, %s99
      %s116 = sphi 0, %s100
      %s124 = sphi 0, %s126
      %s127 = sphi 0, %s124
      %s128 = sphi 0, %s127
      %s144 = sphi 0, %s128
    $region4: #{forward.45} parent=1 // loop_header_branch
      %14 = sbr.rel (%p12) target = $region8
    $region5: #{forward.45} parent=1 // loop_body
      %s16 = ssub.s32 %s11, 1
      %s17 = ssub.s32 %s11, 2
      %s27 = sadd.s32 1, %s20
      %p28 = scmp.ge.s32.totalorder %s27, 9
      %s29 = scalar_select %p28, 0, %s27
      %s30 = sadd.s32 1, %s19
      %s31 = scalar_select %p28, %s30, %s19
      %p32 = scmp.ge.s32.totalorder %s31, 1
      %s33 = scalar_select %p32, 0, %s31
      %s34 = sadd.s32 1, %s18
      %s35 = scalar_select %p32, %s34, %s18
      %p36 = scmp.ge.s32.totalorder %s35, 1
      %s37 = scalar_select %p36, 0, %s35
      %s38 = ssub.s32 %s18, %s37
      %s39 = ssub.s32 %s20, %s29
      %s40 = sor.u32 %s38, %s39
      %p41 = scmp.eq.s32.totalorder %s40, 0
      %s43 = sadd.s32 %s42, 1
      %s44 = scalar_select %p41, %s42, %s43
      %p47 = pneg %p41
      %p48 = scmp.eq.s32.totalorder %s11, 8
      %p49 = por %p47, %p48
      %p50 = scmp.ne.s32.totalorder %s42, %s45
      %p51 = scmp.eq.s32.totalorder %s11, 0
      %p52 = por %p50, %p51
      %p53 = scmp.ne.s32.totalorder %s42, %s45
      %p54 = scmp.eq.s32.totalorder %s16, 8
      %p55 = por %p53, %p54
      %p56 = scmp.ne.s32.totalorder %s45, %s46
      %p57 = scmp.eq.s32.totalorder %s16, 0
      %p58 = por %p56, %p57
      %p59 = scmp.ne.s32.totalorder %s45, %s46
      %p60 = scmp.eq.s32.totalorder %s17, 8
      %p61 = por %p59, %p60
      %p63 = scmp.ne.s32.totalorder %s46, %s62
      %p64 = scmp.eq.s32.totalorder %s17, 0
      %p65 = por %p63, %p64
      %s66 = ssub.s32 %s20, %s29
      %s67 = ssub.s32 %s19, %s33
      %s68 = sor.u32 %s66, %s67
      %p69 = scmp.eq.s32.totalorder %s68, 0
      %s71 = sadd.s32 %s70, 1
      %s72 = scalar_select %p69, %s70, %s71
      %p75 = pneg %p69
      %p76 = scmp.eq.s32.totalorder %s11, 8
      %p77 = por %p75, %p76
      %p78 = scmp.ne.s32.totalorder %s70, %s73
      %p79 = scmp.eq.s32.totalorder %s11, 0
      %p80 = por %p78, %p79
      %p81 = scmp.ne.s32.totalorder %s70, %s73
      %p82 = scmp.eq.s32.totalorder %s16, 8
      %p83 = por %p81, %p82
      %p84 = scmp.ne.s32.totalorder %s73, %s74
      %p85 = scmp.eq.s32.totalorder %s16, 0
      %p86 = por %p84, %p85
      %p87 = scmp.ne.s32.totalorder %s73, %s74
      %p88 = scmp.eq.s32.totalorder %s17, 8
      %p89 = por %p87, %p88
      %p91 = scmp.ne.s32.totalorder %s74, %s90
      %p92 = scmp.eq.s32.totalorder %s17, 0
      %p93 = por %p91, %p92
      %s94 = ssub.s32 %s19, %s33
      %p95 = scmp.eq.s32.totalorder %s94, 0
      %s97 = sadd.s32 %s96, 1
      %s98 = scalar_select %p95, %s96, %s97
      %p101 = pneg %p95
      %p102 = scmp.eq.s32.totalorder %s11, 8
      %p103 = por %p101, %p102
      %p104 = scmp.ne.s32.totalorder %s96, %s99
      %p105 = scmp.eq.s32.totalorder %s11, 0
      %p106 = por %p104, %p105
      %p107 = scmp.ne.s32.totalorder %s96, %s99
      %p108 = scmp.eq.s32.totalorder %s16, 8
      %p109 = por %p107, %p108
      %p110 = scmp.ne.s32.totalorder %s99, %s100
      %p111 = scmp.eq.s32.totalorder %s16, 0
      %p112 = por %p110, %p111
      %p113 = scmp.ne.s32.totalorder %s99, %s100
      %p114 = scmp.eq.s32.totalorder %s17, 8
      %p115 = por %p113, %p114
      %p117 = scmp.ne.s32.totalorder %s100, %s116
      %p118 = scmp.eq.s32.totalorder %s17, 0
      %p119 = por %p117, %p118
      %s120 = ssub.s32 %s18, %s37
      %s121 = ssub.s32 %s19, %s33
      %s122 = sor.u32 %s120, %s121
      %p123 = scmp.eq.s32.totalorder %s122, 0
      %s125 = sadd.s32 %s124, 1
      %s126 = scalar_select %p123, %s124, %s125
      %p129 = pneg %p123
      %p130 = scmp.eq.s32.totalorder %s11, 8
      %p131 = por %p129, %p130
      %p132 = scmp.ne.s32.totalorder %s124, %s127
      %p133 = scmp.eq.s32.totalorder %s11, 0
      %p134 = por %p132, %p133
      %p135 = scmp.ne.s32.totalorder %s124, %s127
      %p136 = scmp.eq.s32.totalorder %s16, 8
      %p137 = por %p135, %p136
      %p138 = scmp.ne.s32.totalorder %s127, %s128
      %p139 = scmp.eq.s32.totalorder %s16, 0
      %p140 = por %p138, %p139
      %p141 = scmp.ne.s32.totalorder %s127, %s128
      %p142 = scmp.eq.s32.totalorder %s17, 8
      %p143 = por %p141, %p142
      %p145 = scmp.ne.s32.totalorder %s128, %s144
      %p146 = scmp.eq.s32.totalorder %s17, 0
      %p147 = por %p145, %p146
      %p148 = scmp.le.s32.totalorder 1, %s11
      %p149 = scmp.lt.s32.totalorder %s11, 10
      %p150 = pnand %p148, %p149
      %p151 = pneg %p150
      // Predicated region
      $region9: #{forward.45} parent=5 // pred_check
        _
      $region10: #{forward.45} parent=5 // pred_check_branch
        %153 = sbr.rel (%p150) target = $region12
      $region11: #{forward.45} parent=5 // pred_region
        %s154 = ssub.s32 %s11, 1
        // Predicated region
        $region13: #{forward.45} parent=11 // pred_check
          %p155 = pneg %p112
        $region14: #{forward.45} parent=11 // pred_check_branch
          %157 = sbr.rel (%p155) target = $region16
        $region15: #{forward.45} parent=11 // pred_region
          %s158 = smul.u32 4, %s22
          %p159 = scmp.lt.s32.totalorder %s158, 3
          %s160 = scalar_select %p159, %s158, 3
          %s161 = scalar_lea.vmem %s3, %s160
          %s162 = smul.u32 4, %s22
        $region16: #{forward.45} parent=11 // pred_fallthru
          _
      $region12: #{forward.45} parent=5 // pred_fallthru
        _
      %p163 = scmp.lt.s32.totalorder %s11, 9
      // Predicated region
      $region17: #{forward.45} parent=5 // pred_check
        %p164 = pneg %p163
      $region18: #{forward.45} parent=5 // pred_check_branch
        %166 = sbr.rel (%p164) target = $region20
      $region19: #{forward.45} parent=5 // pred_region
        // Predicated region
        $region21: #{forward.45} parent=19 // pred_check
          %p167 = pneg %p52
        $region22: #{forward.45} parent=19 // pred_check_branch
          %169 = sbr.rel (%p167) target = $region24
        $region23: #{forward.45} parent=19 // pred_region
          %s170 = smul.u32 4, %s20
          %p171 = scmp.lt.s32.totalorder %s18, 0
          %s172 = scalar_select %p171, %s18, 0
          %p173 = scmp.lt.s32.totalorder %s170, 35
          %s174 = scalar_select %p173, %s170, 35
          %s175 = smul.addr %s172, 36
          %s176 = sadd.s32 %s174, %s175
          %s177 = scalar_lea.vmem %s1, %s176
          %s178 = smul.u32 4, %s20
        $region24: #{forward.45} parent=19 // pred_fallthru
          _
        // Predicated region
        $region25: #{forward.45} parent=19 // pred_check
          %p179 = pneg %p80
        $region26: #{forward.45} parent=19 // pred_check_branch
          %181 = sbr.rel (%p179) target = $region28
        $region27: #{forward.45} parent=19 // pred_region
          %s182 = smul.u32 64, %s20
          %s183 = smul.u32 4, %s19
          %p184 = scmp.lt.s32.totalorder %s182, 575
          %s185 = scalar_select %p184, %s182, 575
          %p186 = scmp.lt.s32.totalorder %s183, 3
          %s187 = scalar_select %p186, %s183, 3
          %s188 = smul.addr %s185, 4
          %s189 = sadd.s32 %s187, %s188
          %s190 = smul.addr %s189, 4
          %s191 = scalar_lea.vmem %s2, %s190
          %s192 = smul.u32 64, %s20
          %s193 = smul.u32 4, %s19
        $region28: #{forward.45} parent=19 // pred_fallthru
          _
      $region20: #{forward.45} parent=5 // pred_fallthru
        _
      %p194 = scmp.le.s32.totalorder 1, %s11
      %p195 = scmp.lt.s32.totalorder %s11, 10
      %p196 = pnand %p194, %p195
      %p197 = pneg %p196
      // Predicated region
      $region29: #{forward.45} parent=5 // pred_check
        _
      $region30: #{forward.45} parent=5 // pred_check_branch
        %199 = sbr.rel (%p196) target = $region32
      $region31: #{forward.45} parent=5 // pred_region
        %s200 = ssub.s32 %s11, 1
        %s201 = smul.u32 4, %s23
        %p202 = scmp.lt.s32.totalorder %s21, 0
        %s203 = scalar_select %p202, %s21, 0
        %p204 = scmp.lt.s32.totalorder %s201, 35
        %s205 = scalar_select %p204, %s201, 35
        %s206 = smul.addr %s203, 36
        %s207 = sadd.s32 %s205, %s206
        %s208 = scalar_lea.vmem %s1, %s207
        %p209 = pneg %p58
        %p210 = pneg %p55
        %s211 = smul.u32 64, %s23
        %s212 = smul.u32 4, %s22
        %p213 = scmp.lt.s32.totalorder %s211, 575
        %s214 = scalar_select %p213, %s211, 575
        %p215 = scmp.lt.s32.totalorder %s212, 3
        %s216 = scalar_select %p215, %s212, 3
        %s217 = smul.addr %s214, 4
        %s218 = sadd.s32 %s216, %s217
        %s219 = smul.addr %s218, 4
        %s220 = scalar_lea.vmem %s2, %s219
        %p221 = pneg %p86
        %p222 = pneg %p83
        %s223 = smul.u32 4, %s22
        %p224 = scmp.lt.s32.totalorder %s223, 3
        %s225 = scalar_select %p224, %s223, 3
        %s226 = scalar_lea.vmem %s3, %s225
        %p227 = pneg %p112
        %p228 = pneg %p109
        %p229 = pneg %p140
        %p230 = pneg %p137
        %s231 = smul.u32 4, %s23
        %p232 = scmp.lt.s32.totalorder %s21, 0
        %s233 = scalar_select %p232, %s21, 0
        %p234 = scmp.lt.s32.totalorder %s231, 35
        %s235 = scalar_select %p234, %s231, 35
        %s236 = smul.addr %s233, 36
        %s237 = sadd.s32 %s235, %s236
        %s238 = scalar_lea.vmem %s1, %s237
        %s239 = smul.u32 4, %s23
        %s240 = smul.u32 64, %s23
        %s241 = smul.u32 4, %s22
        %p242 = scmp.lt.s32.totalorder %s240, 575
        %s243 = scalar_select %p242, %s240, 575
        %p244 = scmp.lt.s32.totalorder %s241, 3
        %s245 = scalar_select %p244, %s241, 3
        %s246 = smul.addr %s243, 4
        %s247 = sadd.s32 %s245, %s246
        %s248 = smul.addr %s247, 4
        %s249 = scalar_lea.vmem %s2, %s248
        %s250 = smul.u32 64, %s23
        %s251 = smul.u32 4, %s22
        %s252 = smul.u32 4, %s22
        %p253 = scmp.lt.s32.totalorder %s252, 3
        %s254 = scalar_select %p253, %s252, 3
        %s255 = scalar_lea.vmem %s3, %s254
        %s256 = smul.u32 4, %s22
        %s257 = smul.u32 4, %s22
        %p258 = scmp.eq.s32.totalorder %s23, 0
        // Predicated region
        $region33: #{forward.45} parent=31 // pred_check
          %p259 = pneg %p258
        $region34: #{forward.45} parent=31 // pred_check_branch
          %261 = sbr.rel (%p259) target = $region36
        $region35: #{forward.45} parent=31 // pred_region
          %262 = vst [vmem:[#allocation2] sm:$0xff] 0.0
        $region36: #{forward.45} parent=31 // pred_fallthru
          _
        %v263 = vld [vmem:[#allocation2] sm:$0xff]
        %v264 = vld [vmem:[%s238] sm:$0xf]
        %v265 = vld [vmem:[%s249] sm:$0xff]
        %v266 = vld [vmem:[%s249 + $0x8] sm:$0xff]
        %v267 = vld [vmem:[%s249 + $0x10] sm:$0xff]
        %v268 = vld [vmem:[%s249 + $0x18] sm:$0xff]
        %v269 = vld [vmem:[%s249 + $0x20] sm:$0xff]
        %v270 = vld [vmem:[%s249 + $0x28] sm:$0xff]
        %v271 = vld [vmem:[%s249 + $0x30] sm:$0xff]
        %v272 = vld [vmem:[%s249 + $0x38] sm:$0xff]
        %v273 = vld [vmem:[%s249 + $0x40] sm:$0xff]
        %v274 = vld [vmem:[%s249 + $0x48] sm:$0xff]
        %v275 = vld [vmem:[%s249 + $0x50] sm:$0xff]
        %v276 = vld [vmem:[%s249 + $0x58] sm:$0xff]
        %v277 = vld [vmem:[%s249 + $0x60] sm:$0xff]
        %v278 = vld [vmem:[%s249 + $0x68] sm:$0xff]
        %v279 = vld [vmem:[%s249 + $0x70] sm:$0xff]
        %v280 = vld [vmem:[%s249 + $0x78] sm:$0xff]
        %v281 = vld [vmem:[%s249 + $0x80] sm:$0xff]
        %v282 = vld [vmem:[%s249 + $0x88] sm:$0xff]
        %v283 = vld [vmem:[%s249 + $0x90] sm:$0xff]
        %v284 = vld [vmem:[%s249 + $0x98] sm:$0xff]
        %v285 = vld [vmem:[%s249 + $0xa0] sm:$0xff]
        %v286 = vld [vmem:[%s249 + $0xa8] sm:$0xff]
        %v287 = vld [vmem:[%s249 + $0xb0] sm:$0xff]
        %v288 = vld [vmem:[%s249 + $0xb8] sm:$0xff]
        %v289 = vld [vmem:[%s249 + $0xc0] sm:$0xff]
        %v290 = vld [vmem:[%s249 + $0xc8] sm:$0xff]
        %v291 = vld [vmem:[%s249 + $0xd0] sm:$0xff]
        %v292 = vld [vmem:[%s249 + $0xd8] sm:$0xff]
        %v293 = vld [vmem:[%s249 + $0xe0] sm:$0xff]
        %v294 = vld [vmem:[%s249 + $0xe8] sm:$0xff]
        %v295 = vld [vmem:[%s249 + $0xf0] sm:$0xff]
        %v296 = vld [vmem:[%s249 + $0xf8] sm:$0xff]
        %v297 = vld [vmem:[%s249 + $0x100] sm:$0xff]
        %v298 = vld [vmem:[%s249 + $0x108] sm:$0xff]
        %v299 = vld [vmem:[%s249 + $0x110] sm:$0xff]
        %v300 = vld [vmem:[%s249 + $0x118] sm:$0xff]
        %v301 = vld [vmem:[%s249 + $0x120] sm:$0xff]
        %v302 = vld [vmem:[%s249 + $0x128] sm:$0xff]
        %v303 = vld [vmem:[%s249 + $0x130] sm:$0xff]
        %v304 = vld [vmem:[%s249 + $0x138] sm:$0xff]
        %v305 = vld [vmem:[%s249 + $0x140] sm:$0xff]
        %v306 = vld [vmem:[%s249 + $0x148] sm:$0xff]
        %v307 = vld [vmem:[%s249 + $0x150] sm:$0xff]
        %v308 = vld [vmem:[%s249 + $0x158] sm:$0xff]
        %v309 = vld [vmem:[%s249 + $0x160] sm:$0xff]
        %v310 = vld [vmem:[%s249 + $0x168] sm:$0xff]
        %v311 = vld [vmem:[%s249 + $0x170] sm:$0xff]
        %v312 = vld [vmem:[%s249 + $0x178] sm:$0xff]
        %v313 = vld [vmem:[%s249 + $0x180] sm:$0xff]
        %v314 = vld [vmem:[%s249 + $0x188] sm:$0xff]
        %v315 = vld [vmem:[%s249 + $0x190] sm:$0xff]
        %v316 = vld [vmem:[%s249 + $0x198] sm:$0xff]
        %v317 = vld [vmem:[%s249 + $0x1a0] sm:$0xff]
        %v318 = vld [vmem:[%s249 + $0x1a8] sm:$0xff]
        %v319 = vld [vmem:[%s249 + $0x1b0] sm:$0xff]
        %v320 = vld [vmem:[%s249 + $0x1b8] sm:$0xff]
        %v321 = vld [vmem:[%s249 + $0x1c0] sm:$0xff]
        %v322 = vld [vmem:[%s249 + $0x1c8] sm:$0xff]
        %v323 = vld [vmem:[%s249 + $0x1d0] sm:$0xff]
        %v324 = vld [vmem:[%s249 + $0x1d8] sm:$0xff]
        %v325 = vld [vmem:[%s249 + $0x1e0] sm:$0xff]
        %v326 = vld [vmem:[%s249 + $0x1e8] sm:$0xff]
        %v327 = vld [vmem:[%s249 + $0x1f0] sm:$0xff]
        %v328 = vld [vmem:[%s249 + $0x1f8] sm:$0xff]
        %v329 = vld [vmem:[%s249 + $0x200] sm:$0xff]
        %v330 = vld [vmem:[%s249 + $0x208] sm:$0xff]
        %v331 = vld [vmem:[%s249 + $0x210] sm:$0xff]
        %v332 = vld [vmem:[%s249 + $0x218] sm:$0xff]
        %v333 = vld [vmem:[%s249 + $0x220] sm:$0xff]
        %v334 = vld [vmem:[%s249 + $0x228] sm:$0xff]
        %v335 = vld [vmem:[%s249 + $0x230] sm:$0xff]
        %v336 = vld [vmem:[%s249 + $0x238] sm:$0xff]
        %v337 = vld [vmem:[%s249 + $0x240] sm:$0xff]
        %v338 = vld [vmem:[%s249 + $0x248] sm:$0xff]
        %v339 = vld [vmem:[%s249 + $0x250] sm:$0xff]
        %v340 = vld [vmem:[%s249 + $0x258] sm:$0xff]
        %v341 = vld [vmem:[%s249 + $0x260] sm:$0xff]
        %v342 = vld [vmem:[%s249 + $0x268] sm:$0xff]
        %v343 = vld [vmem:[%s249 + $0x270] sm:$0xff]
        %v344 = vld [vmem:[%s249 + $0x278] sm:$0xff]
        %v345 = vld [vmem:[%s249 + $0x280] sm:$0xff]
        %v346 = vld [vmem:[%s249 + $0x288] sm:$0xff]
        %v347 = vld [vmem:[%s249 + $0x290] sm:$0xff]
        %v348 = vld [vmem:[%s249 + $0x298] sm:$0xff]
        %v349 = vld [vmem:[%s249 + $0x2a0] sm:$0xff]
        %v350 = vld [vmem:[%s249 + $0x2a8] sm:$0xff]
        %v351 = vld [vmem:[%s249 + $0x2b0] sm:$0xff]
        %v352 = vld [vmem:[%s249 + $0x2b8] sm:$0xff]
        %v353 = vld [vmem:[%s249 + $0x2c0] sm:$0xff]
        %v354 = vld [vmem:[%s249 + $0x2c8] sm:$0xff]
        %v355 = vld [vmem:[%s249 + $0x2d0] sm:$0xff]
        %v356 = vld [vmem:[%s249 + $0x2d8] sm:$0xff]
        %v357 = vld [vmem:[%s249 + $0x2e0] sm:$0xff]
        %v358 = vld [vmem:[%s249 + $0x2e8] sm:$0xff]
        %v359 = vld [vmem:[%s249 + $0x2f0] sm:$0xff]
        %v360 = vld [vmem:[%s249 + $0x2f8] sm:$0xff]
        %v361 = vld [vmem:[%s249 + $0x300] sm:$0xff]
        %v362 = vld [vmem:[%s249 + $0x308] sm:$0xff]
        %v363 = vld [vmem:[%s249 + $0x310] sm:$0xff]
        %v364 = vld [vmem:[%s249 + $0x318] sm:$0xff]
        %v365 = vld [vmem:[%s249 + $0x320] sm:$0xff]
        %v366 = vld [vmem:[%s249 + $0x328] sm:$0xff]
        %v367 = vld [vmem:[%s249 + $0x330] sm:$0xff]
        %v368 = vld [vmem:[%s249 + $0x338] sm:$0xff]
        %v369 = vld [vmem:[%s249 + $0x340] sm:$0xff]
        %v370 = vld [vmem:[%s249 + $0x348] sm:$0xff]
        %v371 = vld [vmem:[%s249 + $0x350] sm:$0xff]
        %v372 = vld [vmem:[%s249 + $0x358] sm:$0xff]
        %v373 = vld [vmem:[%s249 + $0x360] sm:$0xff]
        %v374 = vld [vmem:[%s249 + $0x368] sm:$0xff]
        %v375 = vld [vmem:[%s249 + $0x370] sm:$0xff]
        %v376 = vld [vmem:[%s249 + $0x378] sm:$0xff]
        %v377 = vld [vmem:[%s249 + $0x380] sm:$0xff]
        %v378 = vld [vmem:[%s249 + $0x388] sm:$0xff]
        %v379 = vld [vmem:[%s249 + $0x390] sm:$0xff]
        %v380 = vld [vmem:[%s249 + $0x398] sm:$0xff]
        %v381 = vld [vmem:[%s249 + $0x3a0] sm:$0xff]
        %v382 = vld [vmem:[%s249 + $0x3a8] sm:$0xff]
        %v383 = vld [vmem:[%s249 + $0x3b0] sm:$0xff]
        %v384 = vld [vmem:[%s249 + $0x3b8] sm:$0xff]
        %v385 = vld [vmem:[%s249 + $0x3c0] sm:$0xff]
        %v386 = vld [vmem:[%s249 + $0x3c8] sm:$0xff]
        %v387 = vld [vmem:[%s249 + $0x3d0] sm:$0xff]
        %v388 = vld [vmem:[%s249 + $0x3d8] sm:$0xff]
        %v389 = vld [vmem:[%s249 + $0x3e0] sm:$0xff]
        %v390 = vld [vmem:[%s249 + $0x3e8] sm:$0xff]
        %v391 = vld [vmem:[%s249 + $0x3f0] sm:$0xff]
        %v392 = vld [vmem:[%s249 + $0x3f8] sm:$0xff]
        %v395 = vunpack.c.l.s4 1966171168
        %v396 = vunpack.c.0.s8 %v395
        %v397 = vlaneseq
        %v398 = vshrl.u32 %v397, 7
        %v399 = vsub.s32 %v396, %v398
        %v400 = vrot.slane %v264, %v399
        %v401 = vcombine.high %v400, %v400
        %v403 = vunpack.c.l.s4 1966171168
        %v404 = vunpack.c.0.s8 %v403
        %v405 = vlaneseq
        %v406 = vshrl.u32 %v405, 7
        %v407 = vsub.s32 %v404, %v406
        %v408 = vrot.slane %v400, %v407
        %v410 = vunpack.c.l.s4 1966171168
        %v411 = vunpack.c.0.s8 %v410
        %v412 = vlaneseq
        %v413 = vshrl.u32 %v412, 7
        %v414 = vsub.s32 %v411, %v413
        %v415 = vrot.slane %v401, %v414
        %v416 = vcombine.high %v408, %v408
        %v417 = vcombine.high %v415, %v415
        %v550 = vunpack.c.l.b16 %v265
        %v551 = vunpack.c.h.b16 %v265
        %v552 = vunpack.c.l.b16 %v266
        %v553 = vunpack.c.h.b16 %v266
        %v554 = vunpack.c.l.b16 %v267
        %v555 = vunpack.c.h.b16 %v267
        %v556 = vunpack.c.l.b16 %v268
        %v557 = vunpack.c.h.b16 %v268
        %v558 = vunpack.c.l.b16 %v269
        %v559 = vunpack.c.h.b16 %v269
        %v560 = vunpack.c.l.b16 %v270
        %v561 = vunpack.c.h.b16 %v270
        %v562 = vunpack.c.l.b16 %v271
        %v563 = vunpack.c.h.b16 %v271
        %v564 = vunpack.c.l.b16 %v272
        %v565 = vunpack.c.h.b16 %v272
        %v566 = vunpack.c.l.b16 %v273
        %v567 = vunpack.c.h.b16 %v273
        %v568 = vunpack.c.l.b16 %v274
        %v569 = vunpack.c.h.b16 %v274
        %v570 = vunpack.c.l.b16 %v275
        %v571 = vunpack.c.h.b16 %v275
        %v572 = vunpack.c.l.b16 %v276
        %v573 = vunpack.c.h.b16 %v276
        %v574 = vunpack.c.l.b16 %v277
        %v575 = vunpack.c.h.b16 %v277
        %v576 = vunpack.c.l.b16 %v278
        %v577 = vunpack.c.h.b16 %v278
        %v578 = vunpack.c.l.b16 %v279
        %v579 = vunpack.c.h.b16 %v279
        %v580 = vunpack.c.l.b16 %v280
        %v581 = vunpack.c.h.b16 %v280
        %v582 = vunpack.c.l.b16 %v281
        %v583 = vunpack.c.h.b16 %v281
        %v584 = vunpack.c.l.b16 %v282
        %v585 = vunpack.c.h.b16 %v282
        %v586 = vunpack.c.l.b16 %v283
        %v587 = vunpack.c.h.b16 %v283
        %v588 = vunpack.c.l.b16 %v284
        %v589 = vunpack.c.h.b16 %v284
        %v590 = vunpack.c.l.b16 %v285
        %v591 = vunpack.c.h.b16 %v285
        %v592 = vunpack.c.l.b16 %v286
        %v593 = vunpack.c.h.b16 %v286
        %v594 = vunpack.c.l.b16 %v287
        %v595 = vunpack.c.h.b16 %v287
        %v596 = vunpack.c.l.b16 %v288
        %v597 = vunpack.c.h.b16 %v288
        %v598 = vunpack.c.l.b16 %v289
        %v599 = vunpack.c.h.b16 %v289
        %v600 = vunpack.c.l.b16 %v290
        %v601 = vunpack.c.h.b16 %v290
        %v602 = vunpack.c.l.b16 %v291
        %v603 = vunpack.c.h.b16 %v291
        %v604 = vunpack.c.l.b16 %v292
        %v605 = vunpack.c.h.b16 %v292
        %v606 = vunpack.c.l.b16 %v293
        %v607 = vunpack.c.h.b16 %v293
        %v608 = vunpack.c.l.b16 %v294
        %v609 = vunpack.c.h.b16 %v294
        %v610 = vunpack.c.l.b16 %v295
        %v611 = vunpack.c.h.b16 %v295
        %v612 = vunpack.c.l.b16 %v296
        %v613 = vunpack.c.h.b16 %v296
        %v614 = vunpack.c.l.b16 %v297
        %v615 = vunpack.c.h.b16 %v297
        %v616 = vunpack.c.l.b16 %v298
        %v617 = vunpack.c.h.b16 %v298
        %v618 = vunpack.c.l.b16 %v299
        %v619 = vunpack.c.h.b16 %v299
        %v620 = vunpack.c.l.b16 %v300
        %v621 = vunpack.c.h.b16 %v300
        %v622 = vunpack.c.l.b16 %v301
        %v623 = vunpack.c.h.b16 %v301
        %v624 = vunpack.c.l.b16 %v302
        %v625 = vunpack.c.h.b16 %v302
        %v626 = vunpack.c.l.b16 %v303
        %v627 = vunpack.c.h.b16 %v303
        %v628 = vunpack.c.l.b16 %v304
        %v629 = vunpack.c.h.b16 %v304
        %v630 = vunpack.c.l.b16 %v305
        %v631 = vunpack.c.h.b16 %v305
        %v632 = vunpack.c.l.b16 %v306
        %v633 = vunpack.c.h.b16 %v306
        %v634 = vunpack.c.l.b16 %v307
        %v635 = vunpack.c.h.b16 %v307
        %v636 = vunpack.c.l.b16 %v308
        %v637 = vunpack.c.h.b16 %v308
        %v638 = vunpack.c.l.b16 %v309
        %v639 = vunpack.c.h.b16 %v309
        %v640 = vunpack.c.l.b16 %v310
        %v641 = vunpack.c.h.b16 %v310
        %v642 = vunpack.c.l.b16 %v311
        %v643 = vunpack.c.h.b16 %v311
        %v644 = vunpack.c.l.b16 %v312
        %v645 = vunpack.c.h.b16 %v312
        %v646 = vunpack.c.l.b16 %v313
        %v647 = vunpack.c.h.b16 %v313
        %v648 = vunpack.c.l.b16 %v314
        %v649 = vunpack.c.h.b16 %v314
        %v650 = vunpack.c.l.b16 %v315
        %v651 = vunpack.c.h.b16 %v315
        %v652 = vunpack.c.l.b16 %v316
        %v653 = vunpack.c.h.b16 %v316
        %v654 = vunpack.c.l.b16 %v317
        %v655 = vunpack.c.h.b16 %v317
        %v656 = vunpack.c.l.b16 %v318
        %v657 = vunpack.c.h.b16 %v318
        %v658 = vunpack.c.l.b16 %v319
        %v659 = vunpack.c.h.b16 %v319
        %v660 = vunpack.c.l.b16 %v320
        %v661 = vunpack.c.h.b16 %v320
        %v662 = vunpack.c.l.b16 %v321
        %v663 = vunpack.c.h.b16 %v321
        %v664 = vunpack.c.l.b16 %v322
        %v665 = vunpack.c.h.b16 %v322
        %v666 = vunpack.c.l.b16 %v323
        %v667 = vunpack.c.h.b16 %v323
        %v668 = vunpack.c.l.b16 %v324
        %v669 = vunpack.c.h.b16 %v324
        %v670 = vunpack.c.l.b16 %v325
        %v671 = vunpack.c.h.b16 %v325
        %v672 = vunpack.c.l.b16 %v326
        %v673 = vunpack.c.h.b16 %v326
        %v674 = vunpack.c.l.b16 %v327
        %v675 = vunpack.c.h.b16 %v327
        %v676 = vunpack.c.l.b16 %v328
        %v677 = vunpack.c.h.b16 %v328
        %v678 = vunpack.c.l.b16 %v329
        %v679 = vunpack.c.h.b16 %v329
        %v680 = vunpack.c.l.b16 %v330
        %v681 = vunpack.c.h.b16 %v330
        %v682 = vunpack.c.l.b16 %v331
        %v683 = vunpack.c.h.b16 %v331
        %v684 = vunpack.c.l.b16 %v332
        %v685 = vunpack.c.h.b16 %v332
        %v686 = vunpack.c.l.b16 %v333
        %v687 = vunpack.c.h.b16 %v333
        %v688 = vunpack.c.l.b16 %v334
        %v689 = vunpack.c.h.b16 %v334
        %v690 = vunpack.c.l.b16 %v335
        %v691 = vunpack.c.h.b16 %v335
        %v692 = vunpack.c.l.b16 %v336
        %v693 = vunpack.c.h.b16 %v336
        %v694 = vunpack.c.l.b16 %v337
        %v695 = vunpack.c.h.b16 %v337
        %v696 = vunpack.c.l.b16 %v338
        %v697 = vunpack.c.h.b16 %v338
        %v698 = vunpack.c.l.b16 %v339
        %v699 = vunpack.c.h.b16 %v339
        %v700 = vunpack.c.l.b16 %v340
        %v701 = vunpack.c.h.b16 %v340
        %v702 = vunpack.c.l.b16 %v341
        %v703 = vunpack.c.h.b16 %v341
        %v704 = vunpack.c.l.b16 %v342
        %v705 = vunpack.c.h.b16 %v342
        %v706 = vunpack.c.l.b16 %v343
        %v707 = vunpack.c.h.b16 %v343
        %v708 = vunpack.c.l.b16 %v344
        %v709 = vunpack.c.h.b16 %v344
        %v710 = vunpack.c.l.b16 %v345
        %v711 = vunpack.c.h.b16 %v345
        %v712 = vunpack.c.l.b16 %v346
        %v713 = vunpack.c.h.b16 %v346
        %v714 = vunpack.c.l.b16 %v347
        %v715 = vunpack.c.h.b16 %v347
        %v716 = vunpack.c.l.b16 %v348
        %v717 = vunpack.c.h.b16 %v348
        %v718 = vunpack.c.l.b16 %v349
        %v719 = vunpack.c.h.b16 %v349
        %v720 = vunpack.c.l.b16 %v350
        %v721 = vunpack.c.h.b16 %v350
        %v722 = vunpack.c.l.b16 %v351
        %v723 = vunpack.c.h.b16 %v351
        %v724 = vunpack.c.l.b16 %v352
        %v725 = vunpack.c.h.b16 %v352
        %v726 = vunpack.c.l.b16 %v353
        %v727 = vunpack.c.h.b16 %v353
        %v728 = vunpack.c.l.b16 %v354
        %v729 = vunpack.c.h.b16 %v354
        %v730 = vunpack.c.l.b16 %v355
        %v731 = vunpack.c.h.b16 %v355
        %v732 = vunpack.c.l.b16 %v356
        %v733 = vunpack.c.h.b16 %v356
        %v734 = vunpack.c.l.b16 %v357
        %v735 = vunpack.c.h.b16 %v357
        %v736 = vunpack.c.l.b16 %v358
        %v737 = vunpack.c.h.b16 %v358
        %v738 = vunpack.c.l.b16 %v359
        %v739 = vunpack.c.h.b16 %v359
        %v740 = vunpack.c.l.b16 %v360
        %v741 = vunpack.c.h.b16 %v360
        %v742 = vunpack.c.l.b16 %v361
        %v743 = vunpack.c.h.b16 %v361
        %v744 = vunpack.c.l.b16 %v362
        %v745 = vunpack.c.h.b16 %v362
        %v746 = vunpack.c.l.b16 %v363
        %v747 = vunpack.c.h.b16 %v363
        %v748 = vunpack.c.l.b16 %v364
        %v749 = vunpack.c.h.b16 %v364
        %v750 = vunpack.c.l.b16 %v365
        %v751 = vunpack.c.h.b16 %v365
        %v752 = vunpack.c.l.b16 %v366
        %v753 = vunpack.c.h.b16 %v366
        %v754 = vunpack.c.l.b16 %v367
        %v755 = vunpack.c.h.b16 %v367
        %v756 = vunpack.c.l.b16 %v368
        %v757 = vunpack.c.h.b16 %v368
        %v758 = vunpack.c.l.b16 %v369
        %v759 = vunpack.c.h.b16 %v369
        %v760 = vunpack.c.l.b16 %v370
        %v761 = vunpack.c.h.b16 %v370
        %v762 = vunpack.c.l.b16 %v371
        %v763 = vunpack.c.h.b16 %v371
        %v764 = vunpack.c.l.b16 %v372
        %v765 = vunpack.c.h.b16 %v372
        %v766 = vunpack.c.l.b16 %v373
        %v767 = vunpack.c.h.b16 %v373
        %v768 = vunpack.c.l.b16 %v374
        %v769 = vunpack.c.h.b16 %v374
        %v770 = vunpack.c.l.b16 %v375
        %v771 = vunpack.c.h.b16 %v375
        %v772 = vunpack.c.l.b16 %v376
        %v773 = vunpack.c.h.b16 %v376
        %v774 = vunpack.c.l.b16 %v377
        %v775 = vunpack.c.h.b16 %v377
        %v776 = vunpack.c.l.b16 %v378
        %v777 = vunpack.c.h.b16 %v378
        %v778 = vunpack.c.l.b16 %v379
        %v779 = vunpack.c.h.b16 %v379
        %v780 = vunpack.c.l.b16 %v380
        %v781 = vunpack.c.h.b16 %v380
        %v782 = vunpack.c.l.b16 %v381
        %v783 = vunpack.c.h.b16 %v381
        %v784 = vunpack.c.l.b16 %v382
        %v785 = vunpack.c.h.b16 %v382
        %v786 = vunpack.c.l.b16 %v383
        %v787 = vunpack.c.h.b16 %v383
        %v788 = vunpack.c.l.b16 %v384
        %v789 = vunpack.c.h.b16 %v384
        %v790 = vunpack.c.l.b16 %v385
        %v791 = vunpack.c.h.b16 %v385
        %v792 = vunpack.c.l.b16 %v386
        %v793 = vunpack.c.h.b16 %v386
        %v794 = vunpack.c.l.b16 %v387
        %v795 = vunpack.c.h.b16 %v387
        %v796 = vunpack.c.l.b16 %v388
        %v797 = vunpack.c.h.b16 %v388
        %v798 = vunpack.c.l.b16 %v389
        %v799 = vunpack.c.h.b16 %v389
        %v800 = vunpack.c.l.b16 %v390
        %v801 = vunpack.c.h.b16 %v390
        %v802 = vunpack.c.l.b16 %v391
        %v803 = vunpack.c.h.b16 %v391
        %v804 = vunpack.c.l.b16 %v392
        %v805 = vunpack.c.h.b16 %v392
        %v806 = vpack.c.b16 %v554, %v550
        %v807 = vpack.c.b16 %v555, %v551
        %v808 = vpack.c.b16 %v556, %v552
        %v809 = vpack.c.b16 %v557, %v553
        %v810 = vpack.c.b16 %v562, %v558
        %v811 = vpack.c.b16 %v563, %v559
        %v812 = vpack.c.b16 %v564, %v560
        %v813 = vpack.c.b16 %v565, %v561
        %v814 = vpack.c.b16 %v570, %v566
        %v815 = vpack.c.b16 %v571, %v567
        %v816 = vpack.c.b16 %v572, %v568
        %v817 = vpack.c.b16 %v573, %v569
        %v818 = vpack.c.b16 %v578, %v574
        %v819 = vpack.c.b16 %v579, %v575
        %v820 = vpack.c.b16 %v580, %v576
        %v821 = vpack.c.b16 %v581, %v577
        %v822 = vpack.c.b16 %v586, %v582
        %v823 = vpack.c.b16 %v587, %v583
        %v824 = vpack.c.b16 %v588, %v584
        %v825 = vpack.c.b16 %v589, %v585
        %v826 = vpack.c.b16 %v594, %v590
        %v827 = vpack.c.b16 %v595, %v591
        %v828 = vpack.c.b16 %v596, %v592
        %v829 = vpack.c.b16 %v597, %v593
        %v830 = vpack.c.b16 %v602, %v598
        %v831 = vpack.c.b16 %v603, %v599
        %v832 = vpack.c.b16 %v604, %v600
        %v833 = vpack.c.b16 %v605, %v601
        %v834 = vpack.c.b16 %v610, %v606
        %v835 = vpack.c.b16 %v611, %v607
        %v836 = vpack.c.b16 %v612, %v608
        %v837 = vpack.c.b16 %v613, %v609
        %v838 = vpack.c.b16 %v618, %v614
        %v839 = vpack.c.b16 %v619, %v615
        %v840 = vpack.c.b16 %v620, %v616
        %v841 = vpack.c.b16 %v621, %v617
        %v842 = vpack.c.b16 %v626, %v622
        %v843 = vpack.c.b16 %v627, %v623
        %v844 = vpack.c.b16 %v628, %v624
        %v845 = vpack.c.b16 %v629, %v625
        %v846 = vpack.c.b16 %v634, %v630
        %v847 = vpack.c.b16 %v635, %v631
        %v848 = vpack.c.b16 %v636, %v632
        %v849 = vpack.c.b16 %v637, %v633
        %v850 = vpack.c.b16 %v642, %v638
        %v851 = vpack.c.b16 %v643, %v639
        %v852 = vpack.c.b16 %v644, %v640
        %v853 = vpack.c.b16 %v645, %v641
        %v854 = vpack.c.b16 %v650, %v646
        %v855 = vpack.c.b16 %v651, %v647
        %v856 = vpack.c.b16 %v652, %v648
        %v857 = vpack.c.b16 %v653, %v649
        %v858 = vpack.c.b16 %v658, %v654
        %v859 = vpack.c.b16 %v659, %v655
        %v860 = vpack.c.b16 %v660, %v656
        %v861 = vpack.c.b16 %v661, %v657
        %v862 = vpack.c.b16 %v666, %v662
        %v863 = vpack.c.b16 %v667, %v663
        %v864 = vpack.c.b16 %v668, %v664
        %v865 = vpack.c.b16 %v669, %v665
        %v866 = vpack.c.b16 %v674, %v670
        %v867 = vpack.c.b16 %v675, %v671
        %v868 = vpack.c.b16 %v676, %v672
        %v869 = vpack.c.b16 %v677, %v673
        %v870 = vpack.c.b16 %v682, %v678
        %v871 = vpack.c.b16 %v683, %v679
        %v872 = vpack.c.b16 %v684, %v680
        %v873 = vpack.c.b16 %v685, %v681
        %v874 = vpack.c.b16 %v690, %v686
        %v875 = vpack.c.b16 %v691, %v687
        %v876 = vpack.c.b16 %v692, %v688
        %v877 = vpack.c.b16 %v693, %v689
        %v878 = vpack.c.b16 %v698, %v694
        %v879 = vpack.c.b16 %v699, %v695
        %v880 = vpack.c.b16 %v700, %v696
        %v881 = vpack.c.b16 %v701, %v697
        %v882 = vpack.c.b16 %v706, %v702
        %v883 = vpack.c.b16 %v707, %v703
        %v884 = vpack.c.b16 %v708, %v704
        %v885 = vpack.c.b16 %v709, %v705
        %v886 = vpack.c.b16 %v714, %v710
        %v887 = vpack.c.b16 %v715, %v711
        %v888 = vpack.c.b16 %v716, %v712
        %v889 = vpack.c.b16 %v717, %v713
        %v890 = vpack.c.b16 %v722, %v718
        %v891 = vpack.c.b16 %v723, %v719
        %v892 = vpack.c.b16 %v724, %v720
        %v893 = vpack.c.b16 %v725, %v721
        %v894 = vpack.c.b16 %v730, %v726
        %v895 = vpack.c.b16 %v731, %v727
        %v896 = vpack.c.b16 %v732, %v728
        %v897 = vpack.c.b16 %v733, %v729
        %v898 = vpack.c.b16 %v738, %v734
        %v899 = vpack.c.b16 %v739, %v735
        %v900 = vpack.c.b16 %v740, %v736
        %v901 = vpack.c.b16 %v741, %v737
        %v902 = vpack.c.b16 %v746, %v742
        %v903 = vpack.c.b16 %v747, %v743
        %v904 = vpack.c.b16 %v748, %v744
        %v905 = vpack.c.b16 %v749, %v745
        %v906 = vpack.c.b16 %v754, %v750
        %v907 = vpack.c.b16 %v755, %v751
        %v908 = vpack.c.b16 %v756, %v752
        %v909 = vpack.c.b16 %v757, %v753
        %v910 = vpack.c.b16 %v762, %v758
        %v911 = vpack.c.b16 %v763, %v759
        %v912 = vpack.c.b16 %v764, %v760
        %v913 = vpack.c.b16 %v765, %v761
        %v914 = vpack.c.b16 %v770, %v766
        %v915 = vpack.c.b16 %v771, %v767
        %v916 = vpack.c.b16 %v772, %v768
        %v917 = vpack.c.b16 %v773, %v769
        %v918 = vpack.c.b16 %v778, %v774
        %v919 = vpack.c.b16 %v779, %v775
        %v920 = vpack.c.b16 %v780, %v776
        %v921 = vpack.c.b16 %v781, %v777
        %v922 = vpack.c.b16 %v786, %v782
        %v923 = vpack.c.b16 %v787, %v783
        %v924 = vpack.c.b16 %v788, %v784
        %v925 = vpack.c.b16 %v789, %v785
        %v926 = vpack.c.b16 %v794, %v790
        %v927 = vpack.c.b16 %v795, %v791
        %v928 = vpack.c.b16 %v796, %v792
        %v929 = vpack.c.b16 %v797, %v793
        %v930 = vpack.c.b16 %v802, %v798
        %v931 = vpack.c.b16 %v803, %v799
        %v932 = vpack.c.b16 %v804, %v800
        %v933 = vpack.c.b16 %v805, %v801
        %1062 = vmatprep.subr.bf16.mxu0 %v807
        %1063 = vmatpush1.bf16.msra.mxu0 %v806
        %1064 = vmatprep.subr.bf16.mxu0 %v811
        %1065 = vmatpush1.bf16.msra.mxu0 %v810
        %1066 = vmatprep.subr.bf16.mxu0 %v815
        %1067 = vmatpush1.bf16.msra.mxu0 %v814
        %1068 = vmatprep.subr.bf16.mxu0 %v819
        %1069 = vmatpush1.bf16.msra.mxu0 %v818
        %1070 = vmatprep.subr.bf16.mxu0 %v823
        %1071 = vmatpush1.bf16.msra.mxu0 %v822
        %1072 = vmatprep.subr.bf16.mxu0 %v827
        %1073 = vmatpush1.bf16.msra.mxu0 %v826
        %1074 = vmatprep.subr.bf16.mxu0 %v831
        %1075 = vmatpush1.bf16.msra.mxu0 %v830
        %1076 = vmatprep.subr.bf16.mxu0 %v835
        %1077 = vmatpush1.bf16.msra.mxu0 %v834
        %1078 = vmatprep.subr.bf16.mxu0 %v839
        %1079 = vmatpush1.bf16.msra.mxu0 %v838
        %1080 = vmatprep.subr.bf16.mxu0 %v843
        %1081 = vmatpush1.bf16.msra.mxu0 %v842
        %1082 = vmatprep.subr.bf16.mxu0 %v847
        %1083 = vmatpush1.bf16.msra.mxu0 %v846
        %1084 = vmatprep.subr.bf16.mxu0 %v851
        %1085 = vmatpush1.bf16.msra.mxu0 %v850
        %1086 = vmatprep.subr.bf16.mxu0 %v855
        %1087 = vmatpush1.bf16.msra.mxu0 %v854
        %1088 = vmatprep.subr.bf16.mxu0 %v859
        %1089 = vmatpush1.bf16.msra.mxu0 %v858
        %1090 = vmatprep.subr.bf16.mxu0 %v863
        %1091 = vmatpush1.bf16.msra.mxu0 %v862
        %1092 = vmatprep.subr.bf16.mxu0 %v867
        %1093 = vmatpush1.bf16.msra.mxu0 %v866
        %1094 = vmatprep.mubr.bf16.mxu0 %v415
        %1095 = vmatmul.mubr.bf16.gmra.mrb[0].mxu0 %v408
        %v1096 = vpop.f32.mrb[0].mxu0
        %v1097 = vadd.f32 0.0, %v1096
        %v1098 = vpop.f32.mrb[0].mxu0
        %v1099 = vadd.f32 0.0, %v1098
        %v1100 = vpop.f32.mrb[0].mxu0
        %v1101 = vpop.f32.mrb[0].mxu0
        %1102 = vdwg.mxu0
        %1103 = vmatprep.subr.bf16.mxu0 %v871
        %1104 = vmatpush1.bf16.msra.mxu0 %v870
        %1105 = vmatprep.subr.bf16.mxu0 %v875
        %1106 = vmatpush1.bf16.msra.mxu0 %v874
        %1107 = vmatprep.subr.bf16.mxu0 %v879
        %1108 = vmatpush1.bf16.msra.mxu0 %v878
        %1109 = vmatprep.subr.bf16.mxu0 %v883
        %1110 = vmatpush1.bf16.msra.mxu0 %v882
        %1111 = vmatprep.subr.bf16.mxu0 %v887
        %1112 = vmatpush1.bf16.msra.mxu0 %v886
        %1113 = vmatprep.subr.bf16.mxu0 %v891
        %1114 = vmatpush1.bf16.msra.mxu0 %v890
        %1115 = vmatprep.subr.bf16.mxu0 %v895
        %1116 = vmatpush1.bf16.msra.mxu0 %v894
        %1117 = vmatprep.subr.bf16.mxu0 %v899
        %1118 = vmatpush1.bf16.msra.mxu0 %v898
        %1119 = vmatprep.subr.bf16.mxu0 %v903
        %1120 = vmatpush1.bf16.msra.mxu0 %v902
        %1121 = vmatprep.subr.bf16.mxu0 %v907
        %1122 = vmatpush1.bf16.msra.mxu0 %v906
        %1123 = vmatprep.subr.bf16.mxu0 %v911
        %1124 = vmatpush1.bf16.msra.mxu0 %v910
        %1125 = vmatprep.subr.bf16.mxu0 %v915
        %1126 = vmatpush1.bf16.msra.mxu0 %v914
        %1127 = vmatprep.subr.bf16.mxu0 %v919
        %1128 = vmatpush1.bf16.msra.mxu0 %v918
        %1129 = vmatprep.subr.bf16.mxu0 %v923
        %1130 = vmatpush1.bf16.msra.mxu0 %v922
        %1131 = vmatprep.subr.bf16.mxu0 %v927
        %1132 = vmatpush1.bf16.msra.mxu0 %v926
        %1133 = vmatprep.subr.bf16.mxu0 %v931
        %1134 = vmatpush1.bf16.msra.mxu0 %v930
        %1135 = vmatprep.mubr.bf16.mxu0 %v417
        %1136 = vmatmul.mubr.bf16.gmra.mrb[0].mxu0 %v416
        %v1137 = vpop.f32.mrb[0].mxu0
        %v1138 = vadd.f32 %v1097, %v1137
        %v1139 = vpop.f32.mrb[0].mxu0
        %v1140 = vadd.f32 %v1099, %v1139
        %v1141 = vpop.f32.mrb[0].mxu0
        %v1142 = vpop.f32.mrb[0].mxu0
        %1143 = vdwg.mxu0
        %1144 = vmatprep.subr.bf16.mxu0 %v809
        %1145 = vmatpush1.bf16.msra.mxu0 %v808
        %1146 = vmatprep.subr.bf16.mxu0 %v813
        %1147 = vmatpush1.bf16.msra.mxu0 %v812
        %1148 = vmatprep.subr.bf16.mxu0 %v817
        %1149 = vmatpush1.bf16.msra.mxu0 %v816
        %1150 = vmatprep.subr.bf16.mxu0 %v821
        %1151 = vmatpush1.bf16.msra.mxu0 %v820
        %1152 = vmatprep.subr.bf16.mxu0 %v825
        %1153 = vmatpush1.bf16.msra.mxu0 %v824
        %1154 = vmatprep.subr.bf16.mxu0 %v829
        %1155 = vmatpush1.bf16.msra.mxu0 %v828
        %1156 = vmatprep.subr.bf16.mxu0 %v833
        %1157 = vmatpush1.bf16.msra.mxu0 %v832
        %1158 = vmatprep.subr.bf16.mxu0 %v837
        %1159 = vmatpush1.bf16.msra.mxu0 %v836
        %1160 = vmatprep.subr.bf16.mxu0 %v841
        %1161 = vmatpush1.bf16.msra.mxu0 %v840
        %1162 = vmatprep.subr.bf16.mxu0 %v845
        %1163 = vmatpush1.bf16.msra.mxu0 %v844
        %1164 = vmatprep.subr.bf16.mxu0 %v849
        %1165 = vmatpush1.bf16.msra.mxu0 %v848
        %1166 = vmatprep.subr.bf16.mxu0 %v853
        %1167 = vmatpush1.bf16.msra.mxu0 %v852
        %1168 = vmatprep.subr.bf16.mxu0 %v857
        %1169 = vmatpush1.bf16.msra.mxu0 %v856
        %1170 = vmatprep.subr.bf16.mxu0 %v861
        %1171 = vmatpush1.bf16.msra.mxu0 %v860
        %1172 = vmatprep.subr.bf16.mxu0 %v865
        %1173 = vmatpush1.bf16.msra.mxu0 %v864
        %1174 = vmatprep.subr.bf16.mxu0 %v869
        %1175 = vmatpush1.bf16.msra.mxu0 %v868
        %1176 = vmatprep.mubr.bf16.mxu0 %v415
        %1177 = vmatmul.mubr.bf16.gmra.mrb[0].mxu0 %v408
        %v1178 = vpop.f32.mrb[0].mxu0
        %v1179 = vadd.f32 0.0, %v1178
        %v1180 = vpop.f32.mrb[0].mxu0
        %v1181 = vadd.f32 0.0, %v1180
        %v1182 = vpop.f32.mrb[0].mxu0
        %v1183 = vpop.f32.mrb[0].mxu0
        %1184 = vdwg.mxu0
        %1185 = vmatprep.subr.bf16.mxu0 %v873
        %1186 = vmatpush1.bf16.msra.mxu0 %v872
        %1187 = vmatprep.subr.bf16.mxu0 %v877
        %1188 = vmatpush1.bf16.msra.mxu0 %v876
        %1189 = vmatprep.subr.bf16.mxu0 %v881
        %1190 = vmatpush1.bf16.msra.mxu0 %v880
        %1191 = vmatprep.subr.bf16.mxu0 %v885
        %1192 = vmatpush1.bf16.msra.mxu0 %v884
        %1193 = vmatprep.subr.bf16.mxu0 %v889
        %1194 = vmatpush1.bf16.msra.mxu0 %v888
        %1195 = vmatprep.subr.bf16.mxu0 %v893
        %1196 = vmatpush1.bf16.msra.mxu0 %v892
        %1197 = vmatprep.subr.bf16.mxu0 %v897
        %1198 = vmatpush1.bf16.msra.mxu0 %v896
        %1199 = vmatprep.subr.bf16.mxu0 %v901
        %1200 = vmatpush1.bf16.msra.mxu0 %v900
        %1201 = vmatprep.subr.bf16.mxu0 %v905
        %1202 = vmatpush1.bf16.msra.mxu0 %v904
        %1203 = vmatprep.subr.bf16.mxu0 %v909
        %1204 = vmatpush1.bf16.msra.mxu0 %v908
        %1205 = vmatprep.subr.bf16.mxu0 %v913
        %1206 = vmatpush1.bf16.msra.mxu0 %v912
        %1207 = vmatprep.subr.bf16.mxu0 %v917
        %1208 = vmatpush1.bf16.msra.mxu0 %v916
        %1209 = vmatprep.subr.bf16.mxu0 %v921
        %1210 = vmatpush1.bf16.msra.mxu0 %v920
        %1211 = vmatprep.subr.bf16.mxu0 %v925
        %1212 = vmatpush1.bf16.msra.mxu0 %v924
        %1213 = vmatprep.subr.bf16.mxu0 %v929
        %1214 = vmatpush1.bf16.msra.mxu0 %v928
        %1215 = vmatprep.subr.bf16.mxu0 %v933
        %1216 = vmatpush1.bf16.msra.mxu0 %v932
        %1217 = vmatprep.mubr.bf16.mxu0 %v417
        %1218 = vmatmul.mubr.bf16.gmra.mrb[0].mxu0 %v416
        %v1219 = vpop.f32.mrb[0].mxu0
        %v1220 = vadd.f32 %v1179, %v1219
        %v1221 = vpop.f32.mrb[0].mxu0
        %v1222 = vadd.f32 %v1181, %v1221
        %v1223 = vpop.f32.mrb[0].mxu0
        %v1224 = vpop.f32.mrb[0].mxu0
        %1225 = vdwg.mxu0
        %v1230 = vcombine.low %v1138, %v1140
        %v1231 = vcombine.low %v1220, %v1222
        %v1233 = vunpack.c.l.s4 1983009808
        %v1234 = vunpack.c.0.s8 %v1233
        %v1235 = vlaneseq
        %v1236 = vshrl.u32 %v1235, 7
        %v1237 = vsub.s32 %v1234, %v1236
        %v1238 = vrot.slane %v1230, %v1237
        %v1240 = vunpack.c.l.s4 1983009808
        %v1241 = vunpack.c.0.s8 %v1240
        %v1242 = vlaneseq
        %v1243 = vshrl.u32 %v1242, 7
        %v1244 = vsub.s32 %v1241, %v1243
        %v1245 = vrot.slane %v1231, %v1244
        %v1246 = vcombine.low %v1238, %v1245
        %v1248 = vadd.f32 %v263, %v1246
        %1249 = vst [vmem:[#allocation2] sm:$0xff] %v1248
        %p1250 = scmp.eq.s32.totalorder %s23, 8
        // Predicated region
        $region37: #{forward.45} parent=31 // pred_check
          %p1251 = pneg %p1250
        $region38: #{forward.45} parent=31 // pred_check_branch
          %1253 = sbr.rel (%p1251) target = $region40
        $region39: #{forward.45} parent=31 // pred_region
          %v1254 = vld [vmem:[#allocation2] sm:$0xff]
          %v1255 = vld [vmem:[%s255] sm:$0xf]
          %v1257 = vlaneseq
          %v1258 = vshrl.u32 %v1257, 7
          %v1259 = vsub.s32 0, %v1258
          %v1260 = vrot.slane %v1255, %v1259
          %v1261 = vlaneseq
          %v1262 = vshrl.u32 %v1261, 7
          %v1263 = vsub.s32 1, %v1262
          %v1264 = vrot.slane %v1255, %v1263
          %v1265 = vlaneseq
          %v1266 = vshrl.u32 %v1265, 7
          %v1267 = vsub.s32 2, %v1266
          %v1268 = vrot.slane %v1255, %v1267
          %v1269 = vlaneseq
          %v1270 = vshrl.u32 %v1269, 7
          %v1271 = vsub.s32 3, %v1270
          %v1272 = vrot.slane %v1255, %v1271
          %v1273 = vcombine.low %v1260, %v1264
          %v1274 = vcombine.low %v1268, %v1272
          %v1276 = vunpack.c.l.s4 1983009808
          %v1277 = vunpack.c.0.s8 %v1276
          %v1278 = vlaneseq
          %v1279 = vshrl.u32 %v1278, 7
          %v1280 = vsub.s32 %v1277, %v1279
          %v1281 = vrot.slane %v1273, %v1280
          %v1283 = vunpack.c.l.s4 1983009808
          %v1284 = vunpack.c.0.s8 %v1283
          %v1285 = vlaneseq
          %v1286 = vshrl.u32 %v1285, 7
          %v1287 = vsub.s32 %v1284, %v1286
          %v1288 = vrot.slane %v1274, %v1287
          %v1289 = vcombine.low %v1281, %v1288
          %v1291 = vadd.f32 %v1254, %v1289
          %v1292 = vmax.f32 %v1291, 0.0
          %v1294 = vcombine.high %v1292, %v1292
          %v1296 = vunpack.c.l.s4 1983009808
          %v1297 = vunpack.c.0.s8 %v1296
          %v1298 = vlaneseq
          %v1299 = vshrl.u32 %v1298, 7
          %v1300 = vsub.s32 %v1297, %v1299
          %v1301 = vrot.slane %v1292, %v1300
          %v1303 = vunpack.c.l.s4 1983009808
          %v1304 = vunpack.c.0.s8 %v1303
          %v1305 = vlaneseq
          %v1306 = vshrl.u32 %v1305, 7
          %v1307 = vsub.s32 %v1304, %v1306
          %v1308 = vrot.slane %v1294, %v1307
          %v1309 = vcombine.high %v1301, %v1301
          %v1310 = vcombine.high %v1308, %v1308
          %v1315 = vpack.c.bf16 %v1301, %v1301
          %v1316 = vpack.c.bf16 %v1309, %v1309
          %v1317 = vpack.c.bf16 %v1308, %v1308
          %v1318 = vpack.c.bf16 %v1310, %v1310
          %v1323 = vcombine.low %v1315, %v1316
          %v1324 = vcombine.low %v1317, %v1318
          %v1326 = vunpack.c.l.s4 1966171168
          %v1327 = vunpack.c.0.s8 %v1326
          %v1328 = vlaneseq
          %v1329 = vshrl.u32 %v1328, 7
          %v1330 = vsub.s32 %v1327, %v1329
          %v1331 = vrot.slane %v1323, %v1330
          %v1333 = vunpack.c.l.s4 1966171168
          %v1334 = vunpack.c.0.s8 %v1333
          %v1335 = vlaneseq
          %v1336 = vshrl.u32 %v1335, 7
          %v1337 = vsub.s32 %v1334, %v1336
          %v1338 = vrot.slane %v1324, %v1337
          %v1339 = vcombine.low %v1331, %v1338
          %v1341 = vunpack.c.l.s4 1966171168
          %v1342 = vunpack.c.0.s8 %v1341
          %v1343 = vlaneseq
          %v1344 = vshrl.u32 %v1343, 7
          %v1345 = vsub.s32 %v1342, %v1344
          %v1346 = vrot.slane %v1339, %v1345
          %1348 = vst [vmem:[#allocation3] sm:$0xf] %v1346
        $region40: #{forward.45} parent=31 // pred_fallthru
          _
        // Predicated region
        $region41: #{forward.45} parent=31 // pred_check
          %p1349 = pneg %p137
        $region42: #{forward.45} parent=31 // pred_check_branch
          %1351 = sbr.rel (%p1349) target = $region44
        $region43: #{forward.45} parent=31 // pred_region
          %s1352 = smul.u32 4, %s22
          %s1353 = smul.addr %s21, 4
          %s1354 = sadd.s32 %s1352, %s1353
          %s1355 = scalar_lea.vmem %s5, %s1354
          // Predicated region
          $region45: #{forward.45} parent=43 // pred_check
            _
          $region46: #{forward.45} parent=43 // pred_check_branch
            %1357 = sbr.rel (0) target = $region48
          $region47: #{forward.45} parent=43 // pred_region
            // Predicated region
            $region49: #{forward.45} parent=47 // pred_check
              _
            $region50: #{forward.45} parent=47 // pred_check_branch
              %1359 = sbr.rel target = $region52
            $region51: #{forward.45} parent=47 // pred_region
              // Predicated region
              $region64: #{forward.45} parent=51 // pred_check
                _
              $region65: #{forward.45} parent=51 // pred_check_branch
                %1374 = sbr.rel (0) target = $region67
              $region66: #{forward.45} parent=51 // pred_region
                loop: start=0, step=1, limit=1
                $region68: #{forward.45} parent=66 // loop_pre_header
                  _
                $region69: #{forward.45} parent=66 // loop_header
                  %s1377 = sphi 0, %s1381
                  %p1378 = scmp.ge.s32.totalorder %s1377, 1
                  %s1382 = sphi [#allocation3], [#allocation3]
                  %s1383 = sphi %s1355, %s1355
                $region70: #{forward.45} parent=66 // loop_header_branch
                  %1380 = sbr.rel (%p1378) target = $region74
                $region71: #{forward.45} parent=66 // loop_body
                  %v1384 = vld [vmem:[%s1382] sm:$0xf]
                  %1385 = vst [vmem:[%s1383] sm:$0xf] %v1384
                $region72: #{forward.45} parent=66 // loop_footer
                  %s1381 = sadd.s32 1, %s1377
                $region73: #{forward.45} parent=66 // loop_footer_branch
                  %1376 = sbr.rel target = $region69
                $region74: #{forward.45} parent=66 // loop_exit
                  _
              $region67: #{forward.45} parent=51 // pred_fallthru
                _
            $region52: #{forward.45} parent=47 // pred_fallthru
              _
            // Predicated region
            $region53: #{forward.45} parent=47 // pred_check
              _
            $region54: #{forward.45} parent=47 // pred_check_branch
              %1361 = sbr.rel (0) target = $region56
            $region55: #{forward.45} parent=47 // pred_region
              loop: start=0, step=1, limit=1
              $region57: #{forward.45} parent=55 // loop_pre_header
                _
              $region58: #{forward.45} parent=55 // loop_header
                %s1364 = sphi 0, %s1368
                %p1365 = scmp.ge.s32.totalorder %s1364, 1
                %s1369 = sphi [#allocation3], [#allocation3]
                %s1370 = sphi %s1355, %s1355
              $region59: #{forward.45} parent=55 // loop_header_branch
                %1367 = sbr.rel (%p1365) target = $region63
              $region60: #{forward.45} parent=55 // loop_body
                %v1371 = vld [vmem:[%s1369] sm:$0xf]
                %1372 = vst [vmem:[%s1370] sm:$0xf] %v1371
              $region61: #{forward.45} parent=55 // loop_footer
                %s1368 = sadd.s32 1, %s1364
              $region62: #{forward.45} parent=55 // loop_footer_branch
                %1363 = sbr.rel target = $region58
              $region63: #{forward.45} parent=55 // loop_exit
                _
            $region56: #{forward.45} parent=47 // pred_fallthru
              _
          $region48: #{forward.45} parent=43 // pred_fallthru
            _
          %1386 = vnop
        $region44: #{forward.45} parent=31 // pred_fallthru
          _
        // Predicated region
        $region75: #{forward.45} parent=31 // pred_check
          %p1387 = pneg %p137
        $region76: #{forward.45} parent=31 // pred_check_branch
          %1389 = sbr.rel (%p1387) target = $region78
        $region77: #{forward.45} parent=31 // pred_region
          _
        $region78: #{forward.45} parent=31 // pred_fallthru
          _
      $region32: #{forward.45} parent=5 // pred_fallthru
        _
      %p1390 = scmp.le.s32.totalorder 2, %s11
      // Predicated region
      $region79: #{forward.45} parent=5 // pred_check
        %p1391 = pneg %p1390
      $region80: #{forward.45} parent=5 // pred_check_branch
        %1393 = sbr.rel (%p1391) target = $region82
      $region81: #{forward.45} parent=5 // pred_region
        %s1394 = ssub.s32 %s11, 2
      $region82: #{forward.45} parent=5 // pred_fallthru
        _
    $region6: #{forward.45} parent=1 // loop_footer
      %s15 = sadd.s32 1, %s11
    $region7: #{forward.45} parent=1 // loop_footer_branch
      %10 = sbr.rel target = $region3
    $region8: #{forward.45} parent=1 // loop_exit
      _

</llo_original>
